<compile_context>
chip_gen: v7x
topology: tpu7x:2x2x1
jax: 0.10.0
libtpu: 0.0.40
codegen_flags: <defaults>
</compile_context>

<pallas_src>
import functools

import jax
import jax.numpy as jnp
from jax import lax
from jax.experimental import pallas as pl
from jax.experimental.pallas import tpu as pltpu


def _generator_kernel(K1, K2, L2, n_even, n_odd, b_tile, neg_slope,
                      zp_ref, w1_ref, bn_b_ref, w2_ref, b2_ref, out_ref):
    # zp_ref  : (1, 4, Lq, b_tile, Cp) bf16  phase planes: zp[0,r,m,b,:] = x[b,:,4m+r]
    # w1_ref  : (K1*Cp, Cp) bf16   im2col weights, BN scale folded in (f32 fold, bf16 cast)
    # w2_ref  : (K2*Cp, Cp) bf16   im2col weights
    # bn_b/b2 : (1, Cp)     f32    per-channel shifts
    # out_ref : (1, L2*b_tile, Cp) f32   sigmoid(conv2), row index = t*b_tile + b
    Cp = out_ref.shape[-1]

    def tap2d(plane, m0, n_out):
        # One tap slice flattened to (n_out * b_tile, Cp) rows (batch innermost).
        if b_tile == 1:
            return zp_ref[0, plane, m0:m0 + n_out, 0, :]
        return zp_ref[0, plane, m0:m0 + n_out, :, :].reshape(n_out * b_tile, Cp)

    def conv1_parity_plane(s, n_out):
        # conv1 output l1 = 2m + s reads input position 2*l1 + k = 4m + (2s + k).
        taps = []
        for k in range(K1):
            q = 2 * s + k
            taps.append(tap2d(q % 4, q // 4, n_out))            # (n_out*b_tile, Cp)
        x = jnp.concatenate(taps, axis=-1)                      # (n_out*b_tile, K1*Cp)
        h = jnp.dot(x, w1_ref[...], preferred_element_type=jnp.float32)
        h = h + bn_b_ref[...]                                   # BN shift (scale in w1)
        h = jnp.where(h >= 0.0, h, neg_slope * h)               # LeakyReLU
        return h.astype(jnp.bfloat16)                           # (n_out*b_tile, Cp)

    # conv1 output split by output-index parity keeps conv2's reads contiguous.
    h_even = conv1_parity_plane(0, n_even)
    h_odd = conv1_parity_plane(1, n_odd)

    # conv2: h1[2t + j] lives in the parity plane of j at plane index t + j//2,
    # i.e. a contiguous row range of h_even / h_odd.
    taps2 = []
    for j in range(K2):
        src = h_even if j % 2 == 0 else h_odd
        a0 = (j // 2) * b_tile
        taps2.append(src[a0:a0 + L2 * b_tile, :])               # (L2*b_tile, Cp)
    x2 = jnp.concatenate(taps2, axis=-1)                        # (L2*b_tile, K2*Cp)
    acc2 = jnp.dot(x2, w2_ref[...], preferred_element_type=jnp.float32)
    out_ref[0] = jax.nn.sigmoid(acc2 + b2_ref[...])


def _choose_batch_tile(B, n_even):
    """Pick b_tile so M = n_even*b_tile lands near 256-512 rows, is a multiple of
    8 when >= 8 (free (m,b) row merge), and never collapses the grid to a single
    step when B >= 2 (v7x has 2 TensorCores fed via the parallel grid axis)."""
    target_rows = 512
    cap = max(1, target_rows // max(n_even, 1))
    if cap >= 8:
        cap = (cap // 8) * 8
    half = max(1, (B + 1) // 2)
    bt = min(cap, half)
    if bt >= 8:
        bt = (bt // 8) * 8
    return max(1, bt)


def generator_network_forward(Z, T, params, *, hidden_dim, max_seq_len):
    """Z: [B, 100, L_in] float32 noise (PyTorch Conv1d layout).  T is unused,
    exactly as in the PyTorch forward.  Returns H: [-1, max_seq_len, hidden_dim]."""
    del T  # the PyTorch GeneratorNetwork.forward never uses T

    B, C_in, L_in = Z.shape
    w1, w2 = params["w1"], params["w2"]
    C_out1, C_in1, K1 = w1.shape
    C_out2, C_in2, K2 = w2.shape
    assert C_in1 == C_in and C_in2 == C_out1
    stride = 2  # fixed by the module
    L1 = (L_in - K1) // stride + 1
    L2 = (L1 - K2) // stride + 1
    assert L1 >= K2 and L2 >= 1
    assert (B * C_out2 * L2) % (max_seq_len * hidden_dim) == 0, \
        "conv output cannot be .view()'d to (-1, max_seq_len, hidden_dim)"

    Cp = ((max(C_in, C_out1, C_out2) + 127) // 128) * 128   # lane-pad channels (keep 128)
    n_even, n_odd = (L1 + 1) // 2, L1 // 2
    L4 = ((L_in + 3) // 4) * 4
    Lq = L4 // 4

    b_tile = _choose_batch_tile(B, n_even)
    G = -(-B // b_tile)
    B_pad = G * b_tile

    # static bounds checks for the phase/parity decomposition
    for s, n_out in ((0, n_even), (1, n_odd)):
        for k in range(K1):
            assert (2 * s + k) // 4 + n_out <= Lq
    for j in range(K2):
        assert j // 2 + L2 <= (n_even if j % 2 == 0 else n_odd)

    # ---- one-time, tiny host-side layout prep --------------------------------
    # channels-last, pad channels/length/batch, split length into 4 phase planes
    # with batch innermost of the GEMM M block: Zp[g,r,m,b,c] = Z[g*b_tile+b, c, 4m+r]
    Zt = jnp.transpose(Z.astype(jnp.float32), (0, 2, 1))                 # (B, L, C)
    Zt = jnp.pad(Zt, ((0, B_pad - B), (0, L4 - L_in), (0, Cp - C_in)))
    Zp = Zt.reshape(G, b_tile, Lq, 4, Cp).transpose(0, 3, 2, 1, 4)       # (G,4,Lq,bt,Cp)
    Zp = Zp.astype(jnp.bfloat16)

    # BatchNorm1d folded to per-channel scale/shift (inference-mode running stats).
    # Scale is folded into the conv1 weights in f32 before the bf16 cast.
    # TODO(synk): training-mode BatchNorm (batch statistics) would need a cross-batch
    # reduction pass; inference/folded semantics are implemented here.
    eps = 1e-5
    scale = params["bn_gamma"] / jnp.sqrt(params["bn_var"] + eps)
    shift = params["bn_beta"] - params["bn_mean"] * scale

    # im2col weights: rows ordered (tap k, input channel ci), padded to 128 lanes.
    W1T = jnp.transpose(w1, (2, 1, 0)) * scale[None, None, :]            # f32 fold
    W1T = jnp.pad(W1T, ((0, 0), (0, Cp - C_in1), (0, Cp - C_out1)))
    W1cat = W1T.reshape(K1 * Cp, Cp).astype(jnp.bfloat16)                # (K1*Cp, Cp)
    W2T = jnp.transpose(w2, (2, 1, 0))
    W2T = jnp.pad(W2T, ((0, 0), (0, Cp - C_in2), (0, Cp - C_out2)))
    W2cat = W2T.reshape(K2 * Cp, Cp).astype(jnp.bfloat16)                # (K2*Cp, Cp)

    bn_b = jnp.pad(shift, (0, Cp - C_out1)).reshape(1, Cp).astype(jnp.float32)
    b2 = jnp.pad(params["b2"], (0, Cp - C_out2)).reshape(1, Cp).astype(jnp.float32)

    # VMEM budget check (double-buffered blocks + weights) — must stay far below
    # the 32 MiB scoped limit; v7x has only 64 MiB of physical VMEM.
    def _rup(a, m):
        return (a + m - 1) // m * m
    in_blk = 4 * Lq * _rup(b_tile, 8) * Cp * 2
    out_blk = _rup(L2 * b_tile, 8) * Cp * 4
    w_bytes = (K1 + K2) * Cp * Cp * 2
    vmem_est = 2 * (in_blk + out_blk + w_bytes + 2 * 8 * Cp * 4)
    assert vmem_est < 24 * 1024 * 1024, f"VMEM estimate too large: {vmem_est}"

    kernel = functools.partial(_generator_kernel, K1, K2, L2, n_even, n_odd,
                               b_tile, 0.01)

    out = pl.pallas_call(
        kernel,
        out_shape=jax.ShapeDtypeStruct((G, L2 * b_tile, Cp), jnp.float32),
        grid_spec=pltpu.PrefetchScalarGridSpec(
            num_scalar_prefetch=0,
            grid=(G,),                                   # one batch tile per step
            in_specs=[
                pl.BlockSpec((1, 4, Lq, b_tile, Cp), lambda g: (g, 0, 0, 0, 0)),
                pl.BlockSpec((K1 * Cp, Cp), lambda g: (0, 0)),
                pl.BlockSpec((1, Cp), lambda g: (0, 0)),
                pl.BlockSpec((K2 * Cp, Cp), lambda g: (0, 0)),
                pl.BlockSpec((1, Cp), lambda g: (0, 0)),
            ],
            out_specs=pl.BlockSpec((1, L2 * b_tile, Cp), lambda g: (g, 0, 0)),
        ),
        compiler_params=pltpu.CompilerParams(
            dimension_semantics=("parallel",),           # shards across v7x's 2 TCs
            vmem_limit_bytes=32 * 1024 * 1024,
        ),
    )(Zp, W1cat, bn_b, W2cat, b2)

    # sigmoid(view(x)) == view(sigmoid(x)); the kernel already applied the sigmoid.
    # Kernel rows are (t, b) flattened with t outer; restore (B, C_out, L2) layout.
    y = out.reshape(G, L2, b_tile, Cp).transpose(0, 2, 3, 1)     # (G, bt, Cp, L2)
    y = y.reshape(B_pad, Cp, L2)[:B, :C_out2, :]                  # (B, C_out, L2)
    return y.reshape(-1, max_seq_len, hidden_dim)


def init_params(key, channels=100, k1=6, k2=9):
    """Deterministic synthetic init (shapes match nn.Conv1d / nn.BatchNorm1d).
    The original weight_init() is unspecified, so a uniform fan-in init is used."""
    keys = jax.random.split(key, 7)
    a1 = 1.0 / (channels * k1) ** 0.5
    a2 = 1.0 / (channels * k2) ** 0.5
    return {
        "w1": jax.random.uniform(keys[0], (channels, channels, k1), jnp.float32, -a1, a1),
        "w2": jax.random.uniform(keys[1], (channels, channels, k2), jnp.float32, -a2, a2),
        "b2": jax.random.uniform(keys[2], (channels,), jnp.float32, -a2, a2),
        "bn_gamma": jax.random.uniform(keys[3], (channels,), jnp.float32, 0.5, 1.5),
        "bn_beta": jax.random.uniform(keys[4], (channels,), jnp.float32, -0.5, 0.5),
        "bn_mean": jax.random.uniform(keys[5], (channels,), jnp.float32, -0.5, 0.5),
        "bn_var": jax.random.uniform(keys[6], (channels,), jnp.float32, 0.5, 1.5),
    }


def reference_forward(Z, T, params, *, hidden_dim, max_seq_len):
    """Pure-JAX (f32) reference reproducing the PyTorch module."""
    del T
    dn = ("NCH", "OIH", "NCH")
    y1 = lax.conv_general_dilated(Z, params["w1"], window_strides=(2,),
                                  padding="VALID", dimension_numbers=dn)
    eps = 1e-5
    g = params["bn_gamma"][None, :, None]
    b = params["bn_beta"][None, :, None]
    mu = params["bn_mean"][None, :, None]
    var = params["bn_var"][None, :, None]
    y1 = (y1 - mu) / jnp.sqrt(var + eps) * g + b
    y1 = jnp.where(y1 >= 0, y1, 0.01 * y1)
    y2 = lax.conv_general_dilated(y1, params["w2"], window_strides=(2,),
                                  padding="VALID", dimension_numbers=dn)
    y2 = y2 + params["b2"][None, :, None]
    return jax.nn.sigmoid(y2.reshape(-1, max_seq_len, hidden_dim))


if __name__ == "__main__":
    batch = 2
    channels = 100          # fixed by the module (Conv1d in/out channels = 100)
    hidden_dim = 32         # == conv stack output length L2
    max_seq_len = 100       # == conv channel count, so .view() is per-batch exact
    noise_len = 146         # L_in: (146-6)//2+1 = 71, (71-9)//2+1 = 32 = hidden_dim

    key = jax.random.PRNGKey(0)
    kz, kp = jax.random.split(key)
    Z = jax.random.normal(kz, (batch, channels, noise_len), jnp.float32)
    T = jnp.full((batch,), max_seq_len, jnp.int32)   # unused by forward (API parity)
    params = init_params(kp, channels)

    out = generator_network_forward(Z, T, params,
                                    hidden_dim=hidden_dim, max_seq_len=max_seq_len)
    out = jax.block_until_ready(out)

    ref = reference_forward(Z, T, params,
                            hidden_dim=hidden_dim, max_seq_len=max_seq_len)

    assert out.shape == (batch, max_seq_len, hidden_dim), out.shape
    err = float(jnp.max(jnp.abs(out - ref)))
    assert err < 3e-2, f"max abs err {err}"   # bf16 MXU operands, f32 accumulation
    print("KERNEL_OK")
</pallas_src>

<mosaic_0001>
module attributes {stable_mosaic.version = 11 : i64} {
  func.func @_generator_kernel(%arg0: i32, %arg1: memref<1x4x37x1x128xbf16, #tpu.memory_space<vmem>>, %arg2: memref<768x128xbf16, #tpu.memory_space<vmem>>, %arg3: memref<1x128xf32, #tpu.memory_space<vmem>>, %arg4: memref<1152x128xbf16, #tpu.memory_space<vmem>>, %arg5: memref<1x128xf32, #tpu.memory_space<vmem>>, %arg6: memref<1x32x128xf32, #tpu.memory_space<vmem>>) attributes {dimension_semantics = [#tpu.dimension_semantics<parallel>], iteration_bounds = array<i64: 2>, scalar_prefetch = 0 : i64, scratch_operands = 0 : i64, tpu.core_type = #tpu.core_type<tc>, window_params = [{transform_indices = @transform_0, window_bounds = array<i64: 1, 4, 37, 1, 128>}, {pipeline_mode = #tpu.pipeline_mode<synchronous>, transform_indices = @transform_1, window_bounds = array<i64: 768, 128>}, {pipeline_mode = #tpu.pipeline_mode<synchronous>, transform_indices = @transform_2, window_bounds = array<i64: 1, 128>}, {pipeline_mode = #tpu.pipeline_mode<synchronous>, transform_indices = @transform_3, window_bounds = array<i64: 1152, 128>}, {pipeline_mode = #tpu.pipeline_mode<synchronous>, transform_indices = @transform_4, window_bounds = array<i64: 1, 128>}, {transform_indices = @transform_5, window_bounds = array<i64: 1, 32, 128>}]} {
    %c0 = arith.constant 0 : index
    %c0_0 = arith.constant 0 : index
    %c0_1 = arith.constant 0 : index
    %c0_2 = arith.constant 0 : index
    %c0_3 = arith.constant 0 : index
    %0 = vector.load %arg1[%c0, %c0_0, %c0_1, %c0_2, %c0_3] : memref<1x4x37x1x128xbf16, #tpu.memory_space<vmem>>, vector<1x1x36x1x128xbf16>
    %1 = vector.shape_cast %0 : vector<1x1x36x1x128xbf16> to vector<36x128xbf16>
    %c0_4 = arith.constant 0 : index
    %c1 = arith.constant 1 : index
    %c0_5 = arith.constant 0 : index
    %c0_6 = arith.constant 0 : index
    %c0_7 = arith.constant 0 : index
    %2 = vector.load %arg1[%c0_4, %c1, %c0_5, %c0_6, %c0_7] : memref<1x4x37x1x128xbf16, #tpu.memory_space<vmem>>, vector<1x1x36x1x128xbf16>
    %3 = vector.shape_cast %2 : vector<1x1x36x1x128xbf16> to vector<36x128xbf16>
    %c0_8 = arith.constant 0 : index
    %c2 = arith.constant 2 : index
    %c0_9 = arith.constant 0 : index
    %c0_10 = arith.constant 0 : index
    %c0_11 = arith.constant 0 : index
    %4 = vector.load %arg1[%c0_8, %c2, %c0_9, %c0_10, %c0_11] : memref<1x4x37x1x128xbf16, #tpu.memory_space<vmem>>, vector<1x1x36x1x128xbf16>
    %5 = vector.shape_cast %4 : vector<1x1x36x1x128xbf16> to vector<36x128xbf16>
    %c0_12 = arith.constant 0 : index
    %c3 = arith.constant 3 : index
    %c0_13 = arith.constant 0 : index
    %c0_14 = arith.constant 0 : index
    %c0_15 = arith.constant 0 : index
    %6 = vector.load %arg1[%c0_12, %c3, %c0_13, %c0_14, %c0_15] : memref<1x4x37x1x128xbf16, #tpu.memory_space<vmem>>, vector<1x1x36x1x128xbf16>
    %7 = vector.shape_cast %6 : vector<1x1x36x1x128xbf16> to vector<36x128xbf16>
    %c0_16 = arith.constant 0 : index
    %c0_17 = arith.constant 0 : index
    %c1_18 = arith.constant 1 : index
    %c0_19 = arith.constant 0 : index
    %c0_20 = arith.constant 0 : index
    %8 = vector.load %arg1[%c0_16, %c0_17, %c1_18, %c0_19, %c0_20] : memref<1x4x37x1x128xbf16, #tpu.memory_space<vmem>>, vector<1x1x36x1x128xbf16>
    %9 = vector.shape_cast %8 : vector<1x1x36x1x128xbf16> to vector<36x128xbf16>
    %c0_21 = arith.constant 0 : index
    %c1_22 = arith.constant 1 : index
    %c1_23 = arith.constant 1 : index
    %c0_24 = arith.constant 0 : index
    %c0_25 = arith.constant 0 : index
    %10 = vector.load %arg1[%c0_21, %c1_22, %c1_23, %c0_24, %c0_25] : memref<1x4x37x1x128xbf16, #tpu.memory_space<vmem>>, vector<1x1x36x1x128xbf16>
    %11 = vector.shape_cast %10 : vector<1x1x36x1x128xbf16> to vector<36x128xbf16>
    %12 = tpu.concatenate %1, %3, %5, %7, %9, %11 in 1 : vector<36x128xbf16>, vector<36x128xbf16>, vector<36x128xbf16>, vector<36x128xbf16>, vector<36x128xbf16>, vector<36x128xbf16> -> vector<36x768xbf16>
    %c0_26 = arith.constant 0 : index
    %c0_27 = arith.constant 0 : index
    %13 = vector.load %arg2[%c0_26, %c0_27] : memref<768x128xbf16, #tpu.memory_space<vmem>>, vector<768x128xbf16>
    %cst = arith.constant dense<0.000000e+00> : vector<36x128xf32>
    %14 = tpu.matmul %12, %13, %cst {dimension_numbers = #tpu.dot_dimension_numbers<[1], [0], [0], [1], [0, 0, 1, 1], [], []>} : vector<36x768xbf16>, vector<768x128xbf16>, vector<36x128xf32> -> vector<36x128xf32>
    %c0_28 = arith.constant 0 : index
    %c0_29 = arith.constant 0 : index
    %15 = vector.load %arg3[%c0_28, %c0_29] : memref<1x128xf32, #tpu.memory_space<vmem>>, vector<1x128xf32>
    %16 = vector.broadcast %15 : vector<1x128xf32> to vector<36x128xf32>
    %17 = arith.addf %14, %16 : vector<36x128xf32>
    %cst_30 = arith.constant 0.000000e+00 : f32
    %18 = vector.broadcast %cst_30 : f32 to vector<36x128xf32>
    %19 = arith.cmpf oge, %17, %18 : vector<36x128xf32>
    %cst_31 = arith.constant 0.00999999977 : f32
    %20 = vector.broadcast %cst_31 : f32 to vector<36x128xf32>
    %21 = arith.mulf %20, %17 : vector<36x128xf32>
    %22 = arith.select %19, %17, %21 : vector<36x128xi1>, vector<36x128xf32>
    %23 = arith.truncf %22 : vector<36x128xf32> to vector<36x128xbf16>
    %c0_32 = arith.constant 0 : index
    %c2_33 = arith.constant 2 : index
    %c0_34 = arith.constant 0 : index
    %c0_35 = arith.constant 0 : index
    %c0_36 = arith.constant 0 : index
    %24 = vector.load %arg1[%c0_32, %c2_33, %c0_34, %c0_35, %c0_36] : memref<1x4x37x1x128xbf16, #tpu.memory_space<vmem>>, vector<1x1x35x1x128xbf16>
    %25 = vector.shape_cast %24 : vector<1x1x35x1x128xbf16> to vector<35x128xbf16>
    %c0_37 = arith.constant 0 : index
    %c3_38 = arith.constant 3 : index
    %c0_39 = arith.constant 0 : index
    %c0_40 = arith.constant 0 : index
    %c0_41 = arith.constant 0 : index
    %26 = vector.load %arg1[%c0_37, %c3_38, %c0_39, %c0_40, %c0_41] : memref<1x4x37x1x128xbf16, #tpu.memory_space<vmem>>, vector<1x1x35x1x128xbf16>
    %27 = vector.shape_cast %26 : vector<1x1x35x1x128xbf16> to vector<35x128xbf16>
    %c0_42 = arith.constant 0 : index
    %c0_43 = arith.constant 0 : index
    %c1_44 = arith.constant 1 : index
    %c0_45 = arith.constant 0 : index
    %c0_46 = arith.constant 0 : index
    %28 = vector.load %arg1[%c0_42, %c0_43, %c1_44, %c0_45, %c0_46] : memref<1x4x37x1x128xbf16, #tpu.memory_space<vmem>>, vector<1x1x35x1x128xbf16>
    %29 = vector.shape_cast %28 : vector<1x1x35x1x128xbf16> to vector<35x128xbf16>
    %c0_47 = arith.constant 0 : index
    %c1_48 = arith.constant 1 : index
    %c1_49 = arith.constant 1 : index
    %c0_50 = arith.constant 0 : index
    %c0_51 = arith.constant 0 : index
    %30 = vector.load %arg1[%c0_47, %c1_48, %c1_49, %c0_50, %c0_51] : memref<1x4x37x1x128xbf16, #tpu.memory_space<vmem>>, vector<1x1x35x1x128xbf16>
    %31 = vector.shape_cast %30 : vector<1x1x35x1x128xbf16> to vector<35x128xbf16>
    %c0_52 = arith.constant 0 : index
    %c2_53 = arith.constant 2 : index
    %c1_54 = arith.constant 1 : index
    %c0_55 = arith.constant 0 : index
    %c0_56 = arith.constant 0 : index
    %32 = vector.load %arg1[%c0_52, %c2_53, %c1_54, %c0_55, %c0_56] : memref<1x4x37x1x128xbf16, #tpu.memory_space<vmem>>, vector<1x1x35x1x128xbf16>
    %33 = vector.shape_cast %32 : vector<1x1x35x1x128xbf16> to vector<35x128xbf16>
    %c0_57 = arith.constant 0 : index
    %c3_58 = arith.constant 3 : index
    %c1_59 = arith.constant 1 : index
    %c0_60 = arith.constant 0 : index
    %c0_61 = arith.constant 0 : index
    %34 = vector.load %arg1[%c0_57, %c3_58, %c1_59, %c0_60, %c0_61] : memref<1x4x37x1x128xbf16, #tpu.memory_space<vmem>>, vector<1x1x35x1x128xbf16>
    %35 = vector.shape_cast %34 : vector<1x1x35x1x128xbf16> to vector<35x128xbf16>
    %36 = tpu.concatenate %25, %27, %29, %31, %33, %35 in 1 : vector<35x128xbf16>, vector<35x128xbf16>, vector<35x128xbf16>, vector<35x128xbf16>, vector<35x128xbf16>, vector<35x128xbf16> -> vector<35x768xbf16>
    %c0_62 = arith.constant 0 : index
    %c0_63 = arith.constant 0 : index
    %37 = vector.load %arg2[%c0_62, %c0_63] : memref<768x128xbf16, #tpu.memory_space<vmem>>, vector<768x128xbf16>
    %cst_64 = arith.constant dense<0.000000e+00> : vector<35x128xf32>
    %38 = tpu.matmul %36, %37, %cst_64 {dimension_numbers = #tpu.dot_dimension_numbers<[1], [0], [0], [1], [0, 0, 1, 1], [], []>} : vector<35x768xbf16>, vector<768x128xbf16>, vector<35x128xf32> -> vector<35x128xf32>
    %c0_65 = arith.constant 0 : index
    %c0_66 = arith.constant 0 : index
    %39 = vector.load %arg3[%c0_65, %c0_66] : memref<1x128xf32, #tpu.memory_space<vmem>>, vector<1x128xf32>
    %40 = vector.broadcast %39 : vector<1x128xf32> to vector<35x128xf32>
    %41 = arith.addf %38, %40 : vector<35x128xf32>
    %cst_67 = arith.constant 0.000000e+00 : f32
    %42 = vector.broadcast %cst_67 : f32 to vector<35x128xf32>
    %43 = arith.cmpf oge, %41, %42 : vector<35x128xf32>
    %cst_68 = arith.constant 0.00999999977 : f32
    %44 = vector.broadcast %cst_68 : f32 to vector<35x128xf32>
    %45 = arith.mulf %44, %41 : vector<35x128xf32>
    %46 = arith.select %43, %41, %45 : vector<35x128xi1>, vector<35x128xf32>
    %47 = arith.truncf %46 : vector<35x128xf32> to vector<35x128xbf16>
    %48 = vector.extract_strided_slice %23 {offsets = [0, 0], sizes = [32, 128], strides = [1, 1]} : vector<36x128xbf16> to vector<32x128xbf16>
    %49 = vector.extract_strided_slice %47 {offsets = [0, 0], sizes = [32, 128], strides = [1, 1]} : vector<35x128xbf16> to vector<32x128xbf16>
    %50 = vector.extract_strided_slice %23 {offsets = [1, 0], sizes = [32, 128], strides = [1, 1]} : vector<36x128xbf16> to vector<32x128xbf16>
    %51 = vector.extract_strided_slice %47 {offsets = [1, 0], sizes = [32, 128], strides = [1, 1]} : vector<35x128xbf16> to vector<32x128xbf16>
    %52 = vector.extract_strided_slice %23 {offsets = [2, 0], sizes = [32, 128], strides = [1, 1]} : vector<36x128xbf16> to vector<32x128xbf16>
    %53 = vector.extract_strided_slice %47 {offsets = [2, 0], sizes = [32, 128], strides = [1, 1]} : vector<35x128xbf16> to vector<32x128xbf16>
    %54 = vector.extract_strided_slice %23 {offsets = [3, 0], sizes = [32, 128], strides = [1, 1]} : vector<36x128xbf16> to vector<32x128xbf16>
    %55 = vector.extract_strided_slice %47 {offsets = [3, 0], sizes = [32, 128], strides = [1, 1]} : vector<35x128xbf16> to vector<32x128xbf16>
    %56 = vector.extract_strided_slice %23 {offsets = [4, 0], sizes = [32, 128], strides = [1, 1]} : vector<36x128xbf16> to vector<32x128xbf16>
    %57 = tpu.concatenate %48, %49, %50, %51, %52, %53, %54, %55, %56 in 1 : vector<32x128xbf16>, vector<32x128xbf16>, vector<32x128xbf16>, vector<32x128xbf16>, vector<32x128xbf16>, vector<32x128xbf16>, vector<32x128xbf16>, vector<32x128xbf16>, vector<32x128xbf16> -> vector<32x1152xbf16>
    %c0_69 = arith.constant 0 : index
    %c0_70 = arith.constant 0 : index
    %58 = vector.load %arg4[%c0_69, %c0_70] : memref<1152x128xbf16, #tpu.memory_space<vmem>>, vector<1152x128xbf16>
    %cst_71 = arith.constant dense<0.000000e+00> : vector<32x128xf32>
    %59 = tpu.matmul %57, %58, %cst_71 {dimension_numbers = #tpu.dot_dimension_numbers<[1], [0], [0], [1], [0, 0, 1, 1], [], []>} : vector<32x1152xbf16>, vector<1152x128xbf16>, vector<32x128xf32> -> vector<32x128xf32>
    %c0_72 = arith.constant 0 : index
    %c0_73 = arith.constant 0 : index
    %60 = vector.load %arg5[%c0_72, %c0_73] : memref<1x128xf32, #tpu.memory_space<vmem>>, vector<1x128xf32>
    %61 = vector.broadcast %60 : vector<1x128xf32> to vector<32x128xf32>
    %62 = arith.addf %59, %61 : vector<32x128xf32>
    %63 = arith.negf %62 : vector<32x128xf32>
    %64 = math.exp %63 : vector<32x128xf32>
    %cst_74 = arith.constant 1.000000e+00 : f32
    %65 = vector.broadcast %cst_74 : f32 to vector<32x128xf32>
    %66 = arith.addf %65, %64 : vector<32x128xf32>
    %67 = arith.divf %65, %66 : vector<32x128xf32>
    %c0_75 = arith.constant 0 : index
    %c0_76 = arith.constant 0 : index
    %c0_77 = arith.constant 0 : index
    %68 = vector.load %arg6[%c0_75, %c0_76, %c0_77] : memref<1x32x128xf32, #tpu.memory_space<vmem>>, vector<1x32x128xf32>
    %69 = vector.shape_cast %68 : vector<1x32x128xf32> to vector<32x128xf32>
    %70 = vector.shape_cast %67 : vector<32x128xf32> to vector<1x32x128xf32>
    tpu.vector_store %arg6[%c0_75, %c0_76, %c0_77], %70 {strides = array<i32>} : memref<1x32x128xf32, #tpu.memory_space<vmem>>, vector<1x32x128xf32>,
    return
  }
  func.func @transform_0(%arg0: i32) -> (i32, i32, i32, i32, i32) {
    %c0_i32 = arith.constant 0 : i32
    %c0_i32_0 = arith.constant 0 : i32
    %c0_i32_1 = arith.constant 0 : i32
    %c0_i32_2 = arith.constant 0 : i32
    %c0_i32_3 = arith.constant 0 : i32
    return %arg0, %c0_i32, %c0_i32_0, %c0_i32_1, %c0_i32_2 : i32, i32, i32, i32, i32
  }
  func.func @transform_1(%arg0: i32) -> (i32, i32) {
    %c0_i32 = arith.constant 0 : i32
    %c0_i32_0 = arith.constant 0 : i32
    %c0_i32_1 = arith.constant 0 : i32
    return %c0_i32, %c0_i32_0 : i32, i32
  }
  func.func @transform_2(%arg0: i32) -> (i32, i32) {
    %c0_i32 = arith.constant 0 : i32
    %c0_i32_0 = arith.constant 0 : i32
    %c0_i32_1 = arith.constant 0 : i32
    return %c0_i32, %c0_i32_0 : i32, i32
  }
  func.func @transform_3(%arg0: i32) -> (i32, i32) {
    %c0_i32 = arith.constant 0 : i32
    %c0_i32_0 = arith.constant 0 : i32
    %c0_i32_1 = arith.constant 0 : i32
    return %c0_i32, %c0_i32_0 : i32, i32
  }
  func.func @transform_4(%arg0: i32) -> (i32, i32) {
    %c0_i32 = arith.constant 0 : i32
    %c0_i32_0 = arith.constant 0 : i32
    %c0_i32_1 = arith.constant 0 : i32
    return %c0_i32, %c0_i32_0 : i32, i32
  }
  func.func @transform_5(%arg0: i32) -> (i32, i32, i32) {
    %c0_i32 = arith.constant 0 : i32
    %c0_i32_0 = arith.constant 0 : i32
    %c0_i32_1 = arith.constant 0 : i32
    return %arg0, %c0_i32, %c0_i32_0 : i32, i32, i32
  }
}

</mosaic_0001>

<llo_original>
// kernel: tpu_custom_call.1
$region0: #{tpu_custom_call.1}
  #allocation0 [shape = 'u32[]', space=smem, size = 0x4, offset = 0x4, fixed_abs, tag = 'smem constant byte address 0x4 - core index']
  #allocation1 [shape = 'u32[144,128]{1,0:T(1,128)}', space=vmem, size = 0x12000, scoped, tag = 'internal scratch']
  %s0 = inlined_call_operand.vmem [shape: bf16[2,4,37,1,128], index: 0, kind: input, shape index: {}]
  %s1 = inlined_call_operand.vmem [shape: bf16[768,128], index: 1, kind: input, shape index: {}]
  %s2 = inlined_call_operand.vmem [shape: f32[1,128], index: 2, kind: input, shape index: {}]
  %s3 = inlined_call_operand.hbm [shape: bf16[1152,128], index: 3, kind: input, shape index: {}]
  %s4 = inlined_call_operand.vmem [shape: f32[1,128], index: 4, kind: input, shape index: {}]
  %s5 = inlined_call_operand.hbm [shape: f32[2,32,128], index: 5, kind: output, shape index: {}]
  %s6 = sld [smem:[#allocation0]]
  $region57: #{tpu_custom_call.1} parent=0
    _
  %s8 = ssub.s32 1, %s6
  %s9 = scalar_select 0, %s8, %s6
  $region1: #{tpu_custom_call.1} parent=0
    #allocation2 [shape = 'u8[294912]{0}', space=vmem, size = 0x48000, scoped, tag = 'input window, operand 3, single buffered']
    #allocation3 [shape = 's32[2]{0}', space=sflag, size = 0x8, scoped, tag = 'scoped memory for tpu_custom_call.1']
    #allocation4 [shape = 's32[2]{0}', space=sflag, size = 0x8, scoped, tag = 'scoped memory for tpu_custom_call.1']
    #allocation5 [shape = 'u8[32768]{0}', space=vmem, size = 0x8000, scoped, tag = 'output window, operand 0']
    %10 = vsyncpa [#allocation3], 0
    %11 = vsyncpa [#allocation4], 0
    %s12 = scalar_lea.sflag [#allocation4], 1
    %13 = vsyncpa %s12, 0
    loop: start=0, step=1, limit=4
    $region2: #{tpu_custom_call.1} parent=1 // loop_pre_header
      _
    $region3: #{tpu_custom_call.1} parent=1 // loop_header
      %s15 = sphi 0, %s19
      %p16 = scmp.ge.s32.totalorder %s15, 4
      %s25 = sphi 0, %s27
      %s28 = sphi 0, %s25
      %s29 = sphi 0, %s28
      %s45 = sphi 0, %s29
      %s49 = sphi 0, %s49
      %s51 = sphi 0, %s49
      %s52 = sphi 0, %s51
      %s66 = sphi 0, %s52
      %s70 = sphi 0, %s70
      %s72 = sphi 0, %s70
      %s73 = sphi 0, %s72
      %s87 = sphi 0, %s73
      %s91 = sphi 0, %s91
      %s93 = sphi 0, %s91
      %s94 = sphi 0, %s93
      %s108 = sphi 0, %s94
      %s112 = sphi 0, %s112
      %s114 = sphi 0, %s112
      %s115 = sphi 0, %s114
      %s129 = sphi 0, %s115
      %s135 = sphi 0, %s137
      %s138 = sphi 0, %s135
      %s139 = sphi 0, %s138
      %s155 = sphi 0, %s139
    $region4: #{tpu_custom_call.1} parent=1 // loop_header_branch
      %18 = sbr.rel (%p16) target = $region8
    $region5: #{tpu_custom_call.1} parent=1 // loop_body
      %s20 = ssub.s32 %s15, 1
      %s21 = ssub.s32 %s15, 2
      %s22 = sadd.s32 %s15, 1
      %s23 = ssub.s32 %s15, %s22
      %p24 = scmp.eq.s32.totalorder %s23, 0
      %s26 = sadd.s32 %s25, 1
      %s27 = scalar_select %p24, %s25, %s26
      %p30 = pneg %p24
      %p31 = scmp.eq.s32.totalorder %s15, 1
      %p32 = por %p30, %p31
      %p33 = scmp.ne.s32.totalorder %s25, %s28
      %p34 = scmp.eq.s32.totalorder %s15, 0
      %p35 = por %p33, %p34
      %p36 = scmp.ne.s32.totalorder %s25, %s28
      %p37 = scmp.eq.s32.totalorder %s20, 1
      %p38 = por %p36, %p37
      %p39 = scmp.ne.s32.totalorder %s28, %s29
      %p40 = scmp.eq.s32.totalorder %s20, 0
      %p41 = por %p39, %p40
      %p42 = scmp.ne.s32.totalorder %s28, %s29
      %p43 = scmp.eq.s32.totalorder %s21, 1
      %p44 = por %p42, %p43
      %p46 = scmp.ne.s32.totalorder %s29, %s45
      %p47 = scmp.eq.s32.totalorder %s21, 0
      %p48 = por %p46, %p47
      %s50 = sadd.s32 %s49, 1
      %p53 = scmp.eq.s32.totalorder %s15, 1
      %p54 = scmp.ne.s32.totalorder %s49, %s51
      %p55 = scmp.eq.s32.totalorder %s15, 0
      %p56 = por %p54, %p55
      %p57 = scmp.ne.s32.totalorder %s49, %s51
      %p58 = scmp.eq.s32.totalorder %s20, 1
      %p59 = por %p57, %p58
      %p60 = scmp.ne.s32.totalorder %s51, %s52
      %p61 = scmp.eq.s32.totalorder %s20, 0
      %p62 = por %p60, %p61
      %p63 = scmp.ne.s32.totalorder %s51, %s52
      %p64 = scmp.eq.s32.totalorder %s21, 1
      %p65 = por %p63, %p64
      %p67 = scmp.ne.s32.totalorder %s52, %s66
      %p68 = scmp.eq.s32.totalorder %s21, 0
      %p69 = por %p67, %p68
      %s71 = sadd.s32 %s70, 1
      %p74 = scmp.eq.s32.totalorder %s15, 1
      %p75 = scmp.ne.s32.totalorder %s70, %s72
      %p76 = scmp.eq.s32.totalorder %s15, 0
      %p77 = por %p75, %p76
      %p78 = scmp.ne.s32.totalorder %s70, %s72
      %p79 = scmp.eq.s32.totalorder %s20, 1
      %p80 = por %p78, %p79
      %p81 = scmp.ne.s32.totalorder %s72, %s73
      %p82 = scmp.eq.s32.totalorder %s20, 0
      %p83 = por %p81, %p82
      %p84 = scmp.ne.s32.totalorder %s72, %s73
      %p85 = scmp.eq.s32.totalorder %s21, 1
      %p86 = por %p84, %p85
      %p88 = scmp.ne.s32.totalorder %s73, %s87
      %p89 = scmp.eq.s32.totalorder %s21, 0
      %p90 = por %p88, %p89
      %s92 = sadd.s32 %s91, 1
      %p95 = scmp.eq.s32.totalorder %s15, 1
      %p96 = scmp.ne.s32.totalorder %s91, %s93
      %p97 = scmp.eq.s32.totalorder %s15, 0
      %p98 = por %p96, %p97
      %p99 = scmp.ne.s32.totalorder %s91, %s93
      %p100 = scmp.eq.s32.totalorder %s20, 1
      %p101 = por %p99, %p100
      %p102 = scmp.ne.s32.totalorder %s93, %s94
      %p103 = scmp.eq.s32.totalorder %s20, 0
      %p104 = por %p102, %p103
      %p105 = scmp.ne.s32.totalorder %s93, %s94
      %p106 = scmp.eq.s32.totalorder %s21, 1
      %p107 = por %p105, %p106
      %p109 = scmp.ne.s32.totalorder %s94, %s108
      %p110 = scmp.eq.s32.totalorder %s21, 0
      %p111 = por %p109, %p110
      %s113 = sadd.s32 %s112, 1
      %p116 = scmp.eq.s32.totalorder %s15, 1
      %p117 = scmp.ne.s32.totalorder %s112, %s114
      %p118 = scmp.eq.s32.totalorder %s15, 0
      %p119 = por %p117, %p118
      %p120 = scmp.ne.s32.totalorder %s112, %s114
      %p121 = scmp.eq.s32.totalorder %s20, 1
      %p122 = por %p120, %p121
      %p123 = scmp.ne.s32.totalorder %s114, %s115
      %p124 = scmp.eq.s32.totalorder %s20, 0
      %p125 = por %p123, %p124
      %p126 = scmp.ne.s32.totalorder %s114, %s115
      %p127 = scmp.eq.s32.totalorder %s21, 1
      %p128 = por %p126, %p127
      %p130 = scmp.ne.s32.totalorder %s115, %s129
      %p131 = scmp.eq.s32.totalorder %s21, 0
      %p132 = por %p130, %p131
      %s133 = ssub.s32 %s15, %s22
      %p134 = scmp.eq.s32.totalorder %s133, 0
      %s136 = sadd.s32 %s135, 1
      %s137 = scalar_select %p134, %s135, %s136
      %p140 = pneg %p134
      %p141 = scmp.eq.s32.totalorder %s15, 1
      %p142 = por %p140, %p141
      %p143 = scmp.ne.s32.totalorder %s135, %s138
      %p144 = scmp.eq.s32.totalorder %s15, 0
      %p145 = por %p143, %p144
      %p146 = scmp.ne.s32.totalorder %s135, %s138
      %p147 = scmp.eq.s32.totalorder %s20, 1
      %p148 = por %p146, %p147
      %p149 = scmp.ne.s32.totalorder %s138, %s139
      %p150 = scmp.eq.s32.totalorder %s20, 0
      %p151 = por %p149, %p150
      %p152 = scmp.ne.s32.totalorder %s138, %s139
      %p153 = scmp.eq.s32.totalorder %s21, 1
      %p154 = por %p152, %p153
      %p156 = scmp.ne.s32.totalorder %s139, %s155
      %p157 = scmp.eq.s32.totalorder %s21, 0
      %p158 = por %p156, %p157
      %p159 = scmp.le.s32.totalorder 1, %s15
      %p160 = scmp.lt.s32.totalorder %s15, 3
      %p161 = pnand %p159, %p160
      %p162 = pneg %p161
      // Predicated region
      $region9: #{tpu_custom_call.1} parent=5 // pred_check
        _
      $region10: #{tpu_custom_call.1} parent=5 // pred_check_branch
        %164 = sbr.rel (%p161) target = $region12
      $region11: #{tpu_custom_call.1} parent=5 // pred_region
        %s165 = ssub.s32 %s15, 1
        // Predicated region
        $region13: #{tpu_custom_call.1} parent=11 // pred_check
          %p166 = pneg %p62
        $region14: #{tpu_custom_call.1} parent=11 // pred_check_branch
          %168 = sbr.rel (%p166) target = $region16
        $region15: #{tpu_custom_call.1} parent=11 // pred_region
          _
        $region16: #{tpu_custom_call.1} parent=11 // pred_fallthru
          _
        // Predicated region
        $region17: #{tpu_custom_call.1} parent=11 // pred_check
          %p169 = pneg %p83
        $region18: #{tpu_custom_call.1} parent=11 // pred_check_branch
          %171 = sbr.rel (%p169) target = $region20
        $region19: #{tpu_custom_call.1} parent=11 // pred_region
          _
        $region20: #{tpu_custom_call.1} parent=11 // pred_fallthru
          _
        // Predicated region
        $region21: #{tpu_custom_call.1} parent=11 // pred_check
          %p172 = pneg %p104
        $region22: #{tpu_custom_call.1} parent=11 // pred_check_branch
          %174 = sbr.rel (%p172) target = $region24
        $region23: #{tpu_custom_call.1} parent=11 // pred_region
          %s176 = ssub.s32 9216, 9216
          %177 = vsyncadd [#allocation3], %s176
          %s178 = sshll.u32 [#allocation2], 4
          %s179 = int_to_ptr.vmem [resolvable:$true] %s178
          %184 = dma.hbm_to_vmem [thread:$0]  %s3, 9216, %s179, [#allocation3], 64, 64, 4
        $region24: #{tpu_custom_call.1} parent=11 // pred_fallthru
          _
        // Predicated region
        $region25: #{tpu_custom_call.1} parent=11 // pred_check
          %p185 = pneg %p125
        $region26: #{tpu_custom_call.1} parent=11 // pred_check_branch
          %187 = sbr.rel (%p185) target = $region28
        $region27: #{tpu_custom_call.1} parent=11 // pred_region
          _
        $region28: #{tpu_custom_call.1} parent=11 // pred_fallthru
          _
      $region12: #{tpu_custom_call.1} parent=5 // pred_fallthru
        _
      %p188 = scmp.lt.s32.totalorder %s15, 2
      // Predicated region
      $region29: #{tpu_custom_call.1} parent=5 // pred_check
        %p189 = pneg %p188
      $region30: #{tpu_custom_call.1} parent=5 // pred_check_branch
        %191 = sbr.rel (%p189) target = $region32
      $region31: #{tpu_custom_call.1} parent=5 // pred_region
        // Predicated region
        $region33: #{tpu_custom_call.1} parent=31 // pred_check
          %p192 = pneg %p35
        $region34: #{tpu_custom_call.1} parent=31 // pred_check_branch
          %194 = sbr.rel (%p192) target = $region36
        $region35: #{tpu_custom_call.1} parent=31 // pred_region
          %p195 = scmp.lt.s32.totalorder %s15, 1
          %s196 = scalar_select %p195, %s15, 1
          %s197 = smul.addr %s196, 148
          %s198 = scalar_lea.vmem %s0, %s197
        $region36: #{tpu_custom_call.1} parent=31 // pred_fallthru
          _
      $region32: #{tpu_custom_call.1} parent=5 // pred_fallthru
        _
      %p199 = scmp.le.s32.totalorder 1, %s15
      %p200 = scmp.lt.s32.totalorder %s15, 3
      %p201 = pnand %p199, %p200
      %p202 = pneg %p201
      // Predicated region
      $region37: #{tpu_custom_call.1} parent=5 // pred_check
        _
      $region38: #{tpu_custom_call.1} parent=5 // pred_check_branch
        %204 = sbr.rel (%p201) target = $region40
      $region39: #{tpu_custom_call.1} parent=5 // pred_region
        %s205 = ssub.s32 %s15, 1
        // Predicated region
        $region41: #{tpu_custom_call.1} parent=39 // pred_check
          %p206 = pneg %p104
        $region42: #{tpu_custom_call.1} parent=39 // pred_check_branch
          %208 = sbr.rel (%p206) target = $region44
        $region43: #{tpu_custom_call.1} parent=39 // pred_region
          %209 = dma.done [#allocation3], 9216
        $region44: #{tpu_custom_call.1} parent=39 // pred_fallthru
          _
        %p210 = scmp.lt.s32.totalorder %s20, 1
        %s211 = scalar_select %p210, %s20, 1
        %s212 = smul.addr %s211, 148
        %s213 = scalar_lea.vmem %s0, %s212
        %p214 = pneg %p41
        %p215 = pneg %p38
        %p216 = pneg %p62
        %p217 = pneg %p59
        %p218 = pneg %p83
        %p219 = pneg %p80
        %p220 = pneg %p104
        %p221 = pneg %p101
        %p222 = pneg %p125
        %p223 = pneg %p122
        %p224 = pneg %p151
        %p225 = pneg %p148
        %s226 = sand.u32 %s138, 1
        %s227 = scalar_lea.sflag [#allocation4], %s226
        %s228 = sand.u32 %s138, 1
        %s229 = smul.addr %s228, 32
        %s230 = scalar_lea.vmem [#allocation5], %s229
        %p231 = scmp.lt.s32.totalorder %s20, 1
        %s232 = scalar_select %p231, %s20, 1
        %s233 = smul.addr %s232, 148
        %s234 = scalar_lea.vmem %s0, %s233
        %v236 = vld [vmem:[%s234] sm:$0x1]
        %v237 = vld [vmem:[%s234 + $0x1] sm:$0x1]
        %v238 = vld [vmem:[%s234 + $0x2] sm:$0x1]
        %v239 = vld [vmem:[%s234 + $0x3] sm:$0x1]
        %v240 = vld [vmem:[%s234 + $0x4] sm:$0x1]
        %v241 = vld [vmem:[%s234 + $0x5] sm:$0x1]
        %v242 = vld [vmem:[%s234 + $0x6] sm:$0x1]
        %v243 = vld [vmem:[%s234 + $0x7] sm:$0x1]
        %v244 = vld [vmem:[%s234 + $0x8] sm:$0x1]
        %v245 = vld [vmem:[%s234 + $0x9] sm:$0x1]
        %v246 = vld [vmem:[%s234 + $0xa] sm:$0x1]
        %v247 = vld [vmem:[%s234 + $0xb] sm:$0x1]
        %v248 = vld [vmem:[%s234 + $0xc] sm:$0x1]
        %v249 = vld [vmem:[%s234 + $0xd] sm:$0x1]
        %v250 = vld [vmem:[%s234 + $0xe] sm:$0x1]
        %v251 = vld [vmem:[%s234 + $0xf] sm:$0x1]
        %v252 = vld [vmem:[%s234 + $0x10] sm:$0x1]
        %v253 = vld [vmem:[%s234 + $0x11] sm:$0x1]
        %v254 = vld [vmem:[%s234 + $0x12] sm:$0x1]
        %v255 = vld [vmem:[%s234 + $0x13] sm:$0x1]
        %v256 = vld [vmem:[%s234 + $0x14] sm:$0x1]
        %v257 = vld [vmem:[%s234 + $0x15] sm:$0x1]
        %v258 = vld [vmem:[%s234 + $0x16] sm:$0x1]
        %v259 = vld [vmem:[%s234 + $0x17] sm:$0x1]
        %v260 = vld [vmem:[%s234 + $0x18] sm:$0x1]
        %v261 = vld [vmem:[%s234 + $0x19] sm:$0x1]
        %v262 = vld [vmem:[%s234 + $0x1a] sm:$0x1]
        %v263 = vld [vmem:[%s234 + $0x1b] sm:$0x1]
        %v264 = vld [vmem:[%s234 + $0x1c] sm:$0x1]
        %v265 = vld [vmem:[%s234 + $0x1d] sm:$0x1]
        %v266 = vld [vmem:[%s234 + $0x1e] sm:$0x1]
        %v267 = vld [vmem:[%s234 + $0x1f] sm:$0x1]
        %v268 = vld [vmem:[%s234 + $0x20] sm:$0x1]
        %v269 = vld [vmem:[%s234 + $0x21] sm:$0x1]
        %v270 = vld [vmem:[%s234 + $0x22] sm:$0x1]
        %v271 = vld [vmem:[%s234 + $0x23] sm:$0x1]
        %s272 = scalar_lea.vmem %s234, 37
        %v273 = vld [vmem:[%s272] sm:$0x1]
        %v274 = vld [vmem:[%s272 + $0x1] sm:$0x1]
        %v275 = vld [vmem:[%s272 + $0x2] sm:$0x1]
        %v276 = vld [vmem:[%s272 + $0x3] sm:$0x1]
        %v277 = vld [vmem:[%s272 + $0x4] sm:$0x1]
        %v278 = vld [vmem:[%s272 + $0x5] sm:$0x1]
        %v279 = vld [vmem:[%s272 + $0x6] sm:$0x1]
        %v280 = vld [vmem:[%s272 + $0x7] sm:$0x1]
        %v281 = vld [vmem:[%s272 + $0x8] sm:$0x1]
        %v282 = vld [vmem:[%s272 + $0x9] sm:$0x1]
        %v283 = vld [vmem:[%s272 + $0xa] sm:$0x1]
        %v284 = vld [vmem:[%s272 + $0xb] sm:$0x1]
        %v285 = vld [vmem:[%s272 + $0xc] sm:$0x1]
        %v286 = vld [vmem:[%s272 + $0xd] sm:$0x1]
        %v287 = vld [vmem:[%s272 + $0xe] sm:$0x1]
        %v288 = vld [vmem:[%s272 + $0xf] sm:$0x1]
        %v289 = vld [vmem:[%s272 + $0x10] sm:$0x1]
        %v290 = vld [vmem:[%s272 + $0x11] sm:$0x1]
        %v291 = vld [vmem:[%s272 + $0x12] sm:$0x1]
        %v292 = vld [vmem:[%s272 + $0x13] sm:$0x1]
        %v293 = vld [vmem:[%s272 + $0x14] sm:$0x1]
        %v294 = vld [vmem:[%s272 + $0x15] sm:$0x1]
        %v295 = vld [vmem:[%s272 + $0x16] sm:$0x1]
        %v296 = vld [vmem:[%s272 + $0x17] sm:$0x1]
        %v297 = vld [vmem:[%s272 + $0x18] sm:$0x1]
        %v298 = vld [vmem:[%s272 + $0x19] sm:$0x1]
        %v299 = vld [vmem:[%s272 + $0x1a] sm:$0x1]
        %v300 = vld [vmem:[%s272 + $0x1b] sm:$0x1]
        %v301 = vld [vmem:[%s272 + $0x1c] sm:$0x1]
        %v302 = vld [vmem:[%s272 + $0x1d] sm:$0x1]
        %v303 = vld [vmem:[%s272 + $0x1e] sm:$0x1]
        %v304 = vld [vmem:[%s272 + $0x1f] sm:$0x1]
        %v305 = vld [vmem:[%s272 + $0x20] sm:$0x1]
        %v306 = vld [vmem:[%s272 + $0x21] sm:$0x1]
        %v307 = vld [vmem:[%s272 + $0x22] sm:$0x1]
        %v308 = vld [vmem:[%s272 + $0x23] sm:$0x1]
        %s309 = scalar_lea.vmem %s234, 74
        %v310 = vld [vmem:[%s309] sm:$0x1]
        %v311 = vld [vmem:[%s309 + $0x1] sm:$0x1]
        %v312 = vld [vmem:[%s309 + $0x2] sm:$0x1]
        %v313 = vld [vmem:[%s309 + $0x3] sm:$0x1]
        %v314 = vld [vmem:[%s309 + $0x4] sm:$0x1]
        %v315 = vld [vmem:[%s309 + $0x5] sm:$0x1]
        %v316 = vld [vmem:[%s309 + $0x6] sm:$0x1]
        %v317 = vld [vmem:[%s309 + $0x7] sm:$0x1]
        %v318 = vld [vmem:[%s309 + $0x8] sm:$0x1]
        %v319 = vld [vmem:[%s309 + $0x9] sm:$0x1]
        %v320 = vld [vmem:[%s309 + $0xa] sm:$0x1]
        %v321 = vld [vmem:[%s309 + $0xb] sm:$0x1]
        %v322 = vld [vmem:[%s309 + $0xc] sm:$0x1]
        %v323 = vld [vmem:[%s309 + $0xd] sm:$0x1]
        %v324 = vld [vmem:[%s309 + $0xe] sm:$0x1]
        %v325 = vld [vmem:[%s309 + $0xf] sm:$0x1]
        %v326 = vld [vmem:[%s309 + $0x10] sm:$0x1]
        %v327 = vld [vmem:[%s309 + $0x11] sm:$0x1]
        %v328 = vld [vmem:[%s309 + $0x12] sm:$0x1]
        %v329 = vld [vmem:[%s309 + $0x13] sm:$0x1]
        %v330 = vld [vmem:[%s309 + $0x14] sm:$0x1]
        %v331 = vld [vmem:[%s309 + $0x15] sm:$0x1]
        %v332 = vld [vmem:[%s309 + $0x16] sm:$0x1]
        %v333 = vld [vmem:[%s309 + $0x17] sm:$0x1]
        %v334 = vld [vmem:[%s309 + $0x18] sm:$0x1]
        %v335 = vld [vmem:[%s309 + $0x19] sm:$0x1]
        %v336 = vld [vmem:[%s309 + $0x1a] sm:$0x1]
        %v337 = vld [vmem:[%s309 + $0x1b] sm:$0x1]
        %v338 = vld [vmem:[%s309 + $0x1c] sm:$0x1]
        %v339 = vld [vmem:[%s309 + $0x1d] sm:$0x1]
        %v340 = vld [vmem:[%s309 + $0x1e] sm:$0x1]
        %v341 = vld [vmem:[%s309 + $0x1f] sm:$0x1]
        %v342 = vld [vmem:[%s309 + $0x20] sm:$0x1]
        %v343 = vld [vmem:[%s309 + $0x21] sm:$0x1]
        %v344 = vld [vmem:[%s309 + $0x22] sm:$0x1]
        %v345 = vld [vmem:[%s309 + $0x23] sm:$0x1]
        %s346 = scalar_lea.vmem %s234, 111
        %v347 = vld [vmem:[%s346] sm:$0x1]
        %v348 = vld [vmem:[%s346 + $0x1] sm:$0x1]
        %v349 = vld [vmem:[%s346 + $0x2] sm:$0x1]
        %v350 = vld [vmem:[%s346 + $0x3] sm:$0x1]
        %v351 = vld [vmem:[%s346 + $0x4] sm:$0x1]
        %v352 = vld [vmem:[%s346 + $0x5] sm:$0x1]
        %v353 = vld [vmem:[%s346 + $0x6] sm:$0x1]
        %v354 = vld [vmem:[%s346 + $0x7] sm:$0x1]
        %v355 = vld [vmem:[%s346 + $0x8] sm:$0x1]
        %v356 = vld [vmem:[%s346 + $0x9] sm:$0x1]
        %v357 = vld [vmem:[%s346 + $0xa] sm:$0x1]
        %v358 = vld [vmem:[%s346 + $0xb] sm:$0x1]
        %v359 = vld [vmem:[%s346 + $0xc] sm:$0x1]
        %v360 = vld [vmem:[%s346 + $0xd] sm:$0x1]
        %v361 = vld [vmem:[%s346 + $0xe] sm:$0x1]
        %v362 = vld [vmem:[%s346 + $0xf] sm:$0x1]
        %v363 = vld [vmem:[%s346 + $0x10] sm:$0x1]
        %v364 = vld [vmem:[%s346 + $0x11] sm:$0x1]
        %v365 = vld [vmem:[%s346 + $0x12] sm:$0x1]
        %v366 = vld [vmem:[%s346 + $0x13] sm:$0x1]
        %v367 = vld [vmem:[%s346 + $0x14] sm:$0x1]
        %v368 = vld [vmem:[%s346 + $0x15] sm:$0x1]
        %v369 = vld [vmem:[%s346 + $0x16] sm:$0x1]
        %v370 = vld [vmem:[%s346 + $0x17] sm:$0x1]
        %v371 = vld [vmem:[%s346 + $0x18] sm:$0x1]
        %v372 = vld [vmem:[%s346 + $0x19] sm:$0x1]
        %v373 = vld [vmem:[%s346 + $0x1a] sm:$0x1]
        %v374 = vld [vmem:[%s346 + $0x1b] sm:$0x1]
        %v375 = vld [vmem:[%s346 + $0x1c] sm:$0x1]
        %v376 = vld [vmem:[%s346 + $0x1d] sm:$0x1]
        %v377 = vld [vmem:[%s346 + $0x1e] sm:$0x1]
        %v378 = vld [vmem:[%s346 + $0x1f] sm:$0x1]
        %v379 = vld [vmem:[%s346 + $0x20] sm:$0x1]
        %v380 = vld [vmem:[%s346 + $0x21] sm:$0x1]
        %v381 = vld [vmem:[%s346 + $0x22] sm:$0x1]
        %v382 = vld [vmem:[%s346 + $0x23] sm:$0x1]
        %s383 = scalar_lea.vmem %s234, 1
        %v384 = vld [vmem:[%s383] sm:$0x1]
        %v385 = vld [vmem:[%s383 + $0x1] sm:$0x1]
        %v386 = vld [vmem:[%s383 + $0x2] sm:$0x1]
        %v387 = vld [vmem:[%s383 + $0x3] sm:$0x1]
        %v388 = vld [vmem:[%s383 + $0x4] sm:$0x1]
        %v389 = vld [vmem:[%s383 + $0x5] sm:$0x1]
        %v390 = vld [vmem:[%s383 + $0x6] sm:$0x1]
        %v391 = vld [vmem:[%s383 + $0x7] sm:$0x1]
        %v392 = vld [vmem:[%s383 + $0x8] sm:$0x1]
        %v393 = vld [vmem:[%s383 + $0x9] sm:$0x1]
        %v394 = vld [vmem:[%s383 + $0xa] sm:$0x1]
        %v395 = vld [vmem:[%s383 + $0xb] sm:$0x1]
        %v396 = vld [vmem:[%s383 + $0xc] sm:$0x1]
        %v397 = vld [vmem:[%s383 + $0xd] sm:$0x1]
        %v398 = vld [vmem:[%s383 + $0xe] sm:$0x1]
        %v399 = vld [vmem:[%s383 + $0xf] sm:$0x1]
        %v400 = vld [vmem:[%s383 + $0x10] sm:$0x1]
        %v401 = vld [vmem:[%s383 + $0x11] sm:$0x1]
        %v402 = vld [vmem:[%s383 + $0x12] sm:$0x1]
        %v403 = vld [vmem:[%s383 + $0x13] sm:$0x1]
        %v404 = vld [vmem:[%s383 + $0x14] sm:$0x1]
        %v405 = vld [vmem:[%s383 + $0x15] sm:$0x1]
        %v406 = vld [vmem:[%s383 + $0x16] sm:$0x1]
        %v407 = vld [vmem:[%s383 + $0x17] sm:$0x1]
        %v408 = vld [vmem:[%s383 + $0x18] sm:$0x1]
        %v409 = vld [vmem:[%s383 + $0x19] sm:$0x1]
        %v410 = vld [vmem:[%s383 + $0x1a] sm:$0x1]
        %v411 = vld [vmem:[%s383 + $0x1b] sm:$0x1]
        %v412 = vld [vmem:[%s383 + $0x1c] sm:$0x1]
        %v413 = vld [vmem:[%s383 + $0x1d] sm:$0x1]
        %v414 = vld [vmem:[%s383 + $0x1e] sm:$0x1]
        %v415 = vld [vmem:[%s383 + $0x1f] sm:$0x1]
        %v416 = vld [vmem:[%s383 + $0x20] sm:$0x1]
        %v417 = vld [vmem:[%s383 + $0x21] sm:$0x1]
        %v418 = vld [vmem:[%s383 + $0x22] sm:$0x1]
        %v419 = vld [vmem:[%s383 + $0x23] sm:$0x1]
        %s420 = scalar_lea.vmem %s234, 38
        %v421 = vld [vmem:[%s420] sm:$0x1]
        %v422 = vld [vmem:[%s420 + $0x1] sm:$0x1]
        %v423 = vld [vmem:[%s420 + $0x2] sm:$0x1]
        %v424 = vld [vmem:[%s420 + $0x3] sm:$0x1]
        %v425 = vld [vmem:[%s420 + $0x4] sm:$0x1]
        %v426 = vld [vmem:[%s420 + $0x5] sm:$0x1]
        %v427 = vld [vmem:[%s420 + $0x6] sm:$0x1]
        %v428 = vld [vmem:[%s420 + $0x7] sm:$0x1]
        %v429 = vld [vmem:[%s420 + $0x8] sm:$0x1]
        %v430 = vld [vmem:[%s420 + $0x9] sm:$0x1]
        %v431 = vld [vmem:[%s420 + $0xa] sm:$0x1]
        %v432 = vld [vmem:[%s420 + $0xb] sm:$0x1]
        %v433 = vld [vmem:[%s420 + $0xc] sm:$0x1]
        %v434 = vld [vmem:[%s420 + $0xd] sm:$0x1]
        %v435 = vld [vmem:[%s420 + $0xe] sm:$0x1]
        %v436 = vld [vmem:[%s420 + $0xf] sm:$0x1]
        %v437 = vld [vmem:[%s420 + $0x10] sm:$0x1]
        %v438 = vld [vmem:[%s420 + $0x11] sm:$0x1]
        %v439 = vld [vmem:[%s420 + $0x12] sm:$0x1]
        %v440 = vld [vmem:[%s420 + $0x13] sm:$0x1]
        %v441 = vld [vmem:[%s420 + $0x14] sm:$0x1]
        %v442 = vld [vmem:[%s420 + $0x15] sm:$0x1]
        %v443 = vld [vmem:[%s420 + $0x16] sm:$0x1]
        %v444 = vld [vmem:[%s420 + $0x17] sm:$0x1]
        %v445 = vld [vmem:[%s420 + $0x18] sm:$0x1]
        %v446 = vld [vmem:[%s420 + $0x19] sm:$0x1]
        %v447 = vld [vmem:[%s420 + $0x1a] sm:$0x1]
        %v448 = vld [vmem:[%s420 + $0x1b] sm:$0x1]
        %v449 = vld [vmem:[%s420 + $0x1c] sm:$0x1]
        %v450 = vld [vmem:[%s420 + $0x1d] sm:$0x1]
        %v451 = vld [vmem:[%s420 + $0x1e] sm:$0x1]
        %v452 = vld [vmem:[%s420 + $0x1f] sm:$0x1]
        %v453 = vld [vmem:[%s420 + $0x20] sm:$0x1]
        %v454 = vld [vmem:[%s420 + $0x21] sm:$0x1]
        %v455 = vld [vmem:[%s420 + $0x22] sm:$0x1]
        %v456 = vld [vmem:[%s420 + $0x23] sm:$0x1]
        %v494 = vunpack.c.l.s4 1966171168
        %v495 = vunpack.c.0.s8 %v494
        %v496 = vlaneseq
        %v497 = vshrl.u32 %v496, 7
        %v498 = vsub.s32 %v495, %v497
        %v499 = vrot.slane %v236, %v498
        %v501 = vunpack.c.l.s4 1966171168
        %v502 = vunpack.c.0.s8 %v501
        %v503 = vlaneseq
        %v504 = vshrl.u32 %v503, 7
        %v505 = vsub.s32 %v502, %v504
        %v506 = vrot.slane %v499, %v505
        %v508 = vunpack.c.l.s4 1966171168
        %v509 = vunpack.c.0.s8 %v508
        %v510 = vlaneseq
        %v511 = vshrl.u32 %v510, 7
        %v512 = vsub.s32 %v509, %v511
        %v513 = vrot.slane %v237, %v512
        %v515 = vunpack.c.l.s4 1966171168
        %v516 = vunpack.c.0.s8 %v515
        %v517 = vlaneseq
        %v518 = vshrl.u32 %v517, 7
        %v519 = vsub.s32 %v516, %v518
        %v520 = vrot.slane %v513, %v519
        %v522 = vunpack.c.l.s4 1966171168
        %v523 = vunpack.c.0.s8 %v522
        %v524 = vlaneseq
        %v525 = vshrl.u32 %v524, 7
        %v526 = vsub.s32 %v523, %v525
        %v527 = vrot.slane %v238, %v526
        %v529 = vunpack.c.l.s4 1966171168
        %v530 = vunpack.c.0.s8 %v529
        %v531 = vlaneseq
        %v532 = vshrl.u32 %v531, 7
        %v533 = vsub.s32 %v530, %v532
        %v534 = vrot.slane %v527, %v533
        %v536 = vunpack.c.l.s4 1966171168
        %v537 = vunpack.c.0.s8 %v536
        %v538 = vlaneseq
        %v539 = vshrl.u32 %v538, 7
        %v540 = vsub.s32 %v537, %v539
        %v541 = vrot.slane %v239, %v540
        %v543 = vunpack.c.l.s4 1966171168
        %v544 = vunpack.c.0.s8 %v543
        %v545 = vlaneseq
        %v546 = vshrl.u32 %v545, 7
        %v547 = vsub.s32 %v544, %v546
        %v548 = vrot.slane %v541, %v547
        %v550 = vunpack.c.l.s4 1966171168
        %v551 = vunpack.c.0.s8 %v550
        %v552 = vlaneseq
        %v553 = vshrl.u32 %v552, 7
        %v554 = vsub.s32 %v551, %v553
        %v555 = vrot.slane %v240, %v554
        %v557 = vunpack.c.l.s4 1966171168
        %v558 = vunpack.c.0.s8 %v557
        %v559 = vlaneseq
        %v560 = vshrl.u32 %v559, 7
        %v561 = vsub.s32 %v558, %v560
        %v562 = vrot.slane %v555, %v561
        %v564 = vunpack.c.l.s4 1966171168
        %v565 = vunpack.c.0.s8 %v564
        %v566 = vlaneseq
        %v567 = vshrl.u32 %v566, 7
        %v568 = vsub.s32 %v565, %v567
        %v569 = vrot.slane %v241, %v568
        %v571 = vunpack.c.l.s4 1966171168
        %v572 = vunpack.c.0.s8 %v571
        %v573 = vlaneseq
        %v574 = vshrl.u32 %v573, 7
        %v575 = vsub.s32 %v572, %v574
        %v576 = vrot.slane %v569, %v575
        %v578 = vunpack.c.l.s4 1966171168
        %v579 = vunpack.c.0.s8 %v578
        %v580 = vlaneseq
        %v581 = vshrl.u32 %v580, 7
        %v582 = vsub.s32 %v579, %v581
        %v583 = vrot.slane %v242, %v582
        %v585 = vunpack.c.l.s4 1966171168
        %v586 = vunpack.c.0.s8 %v585
        %v587 = vlaneseq
        %v588 = vshrl.u32 %v587, 7
        %v589 = vsub.s32 %v586, %v588
        %v590 = vrot.slane %v583, %v589
        %v592 = vunpack.c.l.s4 1966171168
        %v593 = vunpack.c.0.s8 %v592
        %v594 = vlaneseq
        %v595 = vshrl.u32 %v594, 7
        %v596 = vsub.s32 %v593, %v595
        %v597 = vrot.slane %v243, %v596
        %v599 = vunpack.c.l.s4 1966171168
        %v600 = vunpack.c.0.s8 %v599
        %v601 = vlaneseq
        %v602 = vshrl.u32 %v601, 7
        %v603 = vsub.s32 %v600, %v602
        %v604 = vrot.slane %v597, %v603
        %v606 = vunpack.c.l.s4 1966171168
        %v607 = vunpack.c.0.s8 %v606
        %v608 = vlaneseq
        %v609 = vshrl.u32 %v608, 7
        %v610 = vsub.s32 %v607, %v609
        %v611 = vrot.slane %v244, %v610
        %v613 = vunpack.c.l.s4 1966171168
        %v614 = vunpack.c.0.s8 %v613
        %v615 = vlaneseq
        %v616 = vshrl.u32 %v615, 7
        %v617 = vsub.s32 %v614, %v616
        %v618 = vrot.slane %v611, %v617
        %v620 = vunpack.c.l.s4 1966171168
        %v621 = vunpack.c.0.s8 %v620
        %v622 = vlaneseq
        %v623 = vshrl.u32 %v622, 7
        %v624 = vsub.s32 %v621, %v623
        %v625 = vrot.slane %v245, %v624
        %v627 = vunpack.c.l.s4 1966171168
        %v628 = vunpack.c.0.s8 %v627
        %v629 = vlaneseq
        %v630 = vshrl.u32 %v629, 7
        %v631 = vsub.s32 %v628, %v630
        %v632 = vrot.slane %v625, %v631
        %v634 = vunpack.c.l.s4 1966171168
        %v635 = vunpack.c.0.s8 %v634
        %v636 = vlaneseq
        %v637 = vshrl.u32 %v636, 7
        %v638 = vsub.s32 %v635, %v637
        %v639 = vrot.slane %v246, %v638
        %v641 = vunpack.c.l.s4 1966171168
        %v642 = vunpack.c.0.s8 %v641
        %v643 = vlaneseq
        %v644 = vshrl.u32 %v643, 7
        %v645 = vsub.s32 %v642, %v644
        %v646 = vrot.slane %v639, %v645
        %v648 = vunpack.c.l.s4 1966171168
        %v649 = vunpack.c.0.s8 %v648
        %v650 = vlaneseq
        %v651 = vshrl.u32 %v650, 7
        %v652 = vsub.s32 %v649, %v651
        %v653 = vrot.slane %v247, %v652
        %v655 = vunpack.c.l.s4 1966171168
        %v656 = vunpack.c.0.s8 %v655
        %v657 = vlaneseq
        %v658 = vshrl.u32 %v657, 7
        %v659 = vsub.s32 %v656, %v658
        %v660 = vrot.slane %v653, %v659
        %v662 = vunpack.c.l.s4 1966171168
        %v663 = vunpack.c.0.s8 %v662
        %v664 = vlaneseq
        %v665 = vshrl.u32 %v664, 7
        %v666 = vsub.s32 %v663, %v665
        %v667 = vrot.slane %v248, %v666
        %v669 = vunpack.c.l.s4 1966171168
        %v670 = vunpack.c.0.s8 %v669
        %v671 = vlaneseq
        %v672 = vshrl.u32 %v671, 7
        %v673 = vsub.s32 %v670, %v672
        %v674 = vrot.slane %v667, %v673
        %v676 = vunpack.c.l.s4 1966171168
        %v677 = vunpack.c.0.s8 %v676
        %v678 = vlaneseq
        %v679 = vshrl.u32 %v678, 7
        %v680 = vsub.s32 %v677, %v679
        %v681 = vrot.slane %v249, %v680
        %v683 = vunpack.c.l.s4 1966171168
        %v684 = vunpack.c.0.s8 %v683
        %v685 = vlaneseq
        %v686 = vshrl.u32 %v685, 7
        %v687 = vsub.s32 %v684, %v686
        %v688 = vrot.slane %v681, %v687
        %v690 = vunpack.c.l.s4 1966171168
        %v691 = vunpack.c.0.s8 %v690
        %v692 = vlaneseq
        %v693 = vshrl.u32 %v692, 7
        %v694 = vsub.s32 %v691, %v693
        %v695 = vrot.slane %v250, %v694
        %v697 = vunpack.c.l.s4 1966171168
        %v698 = vunpack.c.0.s8 %v697
        %v699 = vlaneseq
        %v700 = vshrl.u32 %v699, 7
        %v701 = vsub.s32 %v698, %v700
        %v702 = vrot.slane %v695, %v701
        %v704 = vunpack.c.l.s4 1966171168
        %v705 = vunpack.c.0.s8 %v704
        %v706 = vlaneseq
        %v707 = vshrl.u32 %v706, 7
        %v708 = vsub.s32 %v705, %v707
        %v709 = vrot.slane %v251, %v708
        %v711 = vunpack.c.l.s4 1966171168
        %v712 = vunpack.c.0.s8 %v711
        %v713 = vlaneseq
        %v714 = vshrl.u32 %v713, 7
        %v715 = vsub.s32 %v712, %v714
        %v716 = vrot.slane %v709, %v715
        %v718 = vunpack.c.l.s4 1966171168
        %v719 = vunpack.c.0.s8 %v718
        %v720 = vlaneseq
        %v721 = vshrl.u32 %v720, 7
        %v722 = vsub.s32 %v719, %v721
        %v723 = vrot.slane %v252, %v722
        %v725 = vunpack.c.l.s4 1966171168
        %v726 = vunpack.c.0.s8 %v725
        %v727 = vlaneseq
        %v728 = vshrl.u32 %v727, 7
        %v729 = vsub.s32 %v726, %v728
        %v730 = vrot.slane %v723, %v729
        %v732 = vunpack.c.l.s4 1966171168
        %v733 = vunpack.c.0.s8 %v732
        %v734 = vlaneseq
        %v735 = vshrl.u32 %v734, 7
        %v736 = vsub.s32 %v733, %v735
        %v737 = vrot.slane %v253, %v736
        %v739 = vunpack.c.l.s4 1966171168
        %v740 = vunpack.c.0.s8 %v739
        %v741 = vlaneseq
        %v742 = vshrl.u32 %v741, 7
        %v743 = vsub.s32 %v740, %v742
        %v744 = vrot.slane %v737, %v743
        %v746 = vunpack.c.l.s4 1966171168
        %v747 = vunpack.c.0.s8 %v746
        %v748 = vlaneseq
        %v749 = vshrl.u32 %v748, 7
        %v750 = vsub.s32 %v747, %v749
        %v751 = vrot.slane %v254, %v750
        %v753 = vunpack.c.l.s4 1966171168
        %v754 = vunpack.c.0.s8 %v753
        %v755 = vlaneseq
        %v756 = vshrl.u32 %v755, 7
        %v757 = vsub.s32 %v754, %v756
        %v758 = vrot.slane %v751, %v757
        %v760 = vunpack.c.l.s4 1966171168
        %v761 = vunpack.c.0.s8 %v760
        %v762 = vlaneseq
        %v763 = vshrl.u32 %v762, 7
        %v764 = vsub.s32 %v761, %v763
        %v765 = vrot.slane %v255, %v764
        %v767 = vunpack.c.l.s4 1966171168
        %v768 = vunpack.c.0.s8 %v767
        %v769 = vlaneseq
        %v770 = vshrl.u32 %v769, 7
        %v771 = vsub.s32 %v768, %v770
        %v772 = vrot.slane %v765, %v771
        %v774 = vunpack.c.l.s4 1966171168
        %v775 = vunpack.c.0.s8 %v774
        %v776 = vlaneseq
        %v777 = vshrl.u32 %v776, 7
        %v778 = vsub.s32 %v775, %v777
        %v779 = vrot.slane %v256, %v778
        %v781 = vunpack.c.l.s4 1966171168
        %v782 = vunpack.c.0.s8 %v781
        %v783 = vlaneseq
        %v784 = vshrl.u32 %v783, 7
        %v785 = vsub.s32 %v782, %v784
        %v786 = vrot.slane %v779, %v785
        %v788 = vunpack.c.l.s4 1966171168
        %v789 = vunpack.c.0.s8 %v788
        %v790 = vlaneseq
        %v791 = vshrl.u32 %v790, 7
        %v792 = vsub.s32 %v789, %v791
        %v793 = vrot.slane %v257, %v792
        %v795 = vunpack.c.l.s4 1966171168
        %v796 = vunpack.c.0.s8 %v795
        %v797 = vlaneseq
        %v798 = vshrl.u32 %v797, 7
        %v799 = vsub.s32 %v796, %v798
        %v800 = vrot.slane %v793, %v799
        %v802 = vunpack.c.l.s4 1966171168
        %v803 = vunpack.c.0.s8 %v802
        %v804 = vlaneseq
        %v805 = vshrl.u32 %v804, 7
        %v806 = vsub.s32 %v803, %v805
        %v807 = vrot.slane %v258, %v806
        %v809 = vunpack.c.l.s4 1966171168
        %v810 = vunpack.c.0.s8 %v809
        %v811 = vlaneseq
        %v812 = vshrl.u32 %v811, 7
        %v813 = vsub.s32 %v810, %v812
        %v814 = vrot.slane %v807, %v813
        %v816 = vunpack.c.l.s4 1966171168
        %v817 = vunpack.c.0.s8 %v816
        %v818 = vlaneseq
        %v819 = vshrl.u32 %v818, 7
        %v820 = vsub.s32 %v817, %v819
        %v821 = vrot.slane %v259, %v820
        %v823 = vunpack.c.l.s4 1966171168
        %v824 = vunpack.c.0.s8 %v823
        %v825 = vlaneseq
        %v826 = vshrl.u32 %v825, 7
        %v827 = vsub.s32 %v824, %v826
        %v828 = vrot.slane %v821, %v827
        %v830 = vunpack.c.l.s4 1966171168
        %v831 = vunpack.c.0.s8 %v830
        %v832 = vlaneseq
        %v833 = vshrl.u32 %v832, 7
        %v834 = vsub.s32 %v831, %v833
        %v835 = vrot.slane %v260, %v834
        %v837 = vunpack.c.l.s4 1966171168
        %v838 = vunpack.c.0.s8 %v837
        %v839 = vlaneseq
        %v840 = vshrl.u32 %v839, 7
        %v841 = vsub.s32 %v838, %v840
        %v842 = vrot.slane %v835, %v841
        %v844 = vunpack.c.l.s4 1966171168
        %v845 = vunpack.c.0.s8 %v844
        %v846 = vlaneseq
        %v847 = vshrl.u32 %v846, 7
        %v848 = vsub.s32 %v845, %v847
        %v849 = vrot.slane %v261, %v848
        %v851 = vunpack.c.l.s4 1966171168
        %v852 = vunpack.c.0.s8 %v851
        %v853 = vlaneseq
        %v854 = vshrl.u32 %v853, 7
        %v855 = vsub.s32 %v852, %v854
        %v856 = vrot.slane %v849, %v855
        %v858 = vunpack.c.l.s4 1966171168
        %v859 = vunpack.c.0.s8 %v858
        %v860 = vlaneseq
        %v861 = vshrl.u32 %v860, 7
        %v862 = vsub.s32 %v859, %v861
        %v863 = vrot.slane %v262, %v862
        %v865 = vunpack.c.l.s4 1966171168
        %v866 = vunpack.c.0.s8 %v865
        %v867 = vlaneseq
        %v868 = vshrl.u32 %v867, 7
        %v869 = vsub.s32 %v866, %v868
        %v870 = vrot.slane %v863, %v869
        %v872 = vunpack.c.l.s4 1966171168
        %v873 = vunpack.c.0.s8 %v872
        %v874 = vlaneseq
        %v875 = vshrl.u32 %v874, 7
        %v876 = vsub.s32 %v873, %v875
        %v877 = vrot.slane %v263, %v876
        %v879 = vunpack.c.l.s4 1966171168
        %v880 = vunpack.c.0.s8 %v879
        %v881 = vlaneseq
        %v882 = vshrl.u32 %v881, 7
        %v883 = vsub.s32 %v880, %v882
        %v884 = vrot.slane %v877, %v883
        %v886 = vunpack.c.l.s4 1966171168
        %v887 = vunpack.c.0.s8 %v886
        %v888 = vlaneseq
        %v889 = vshrl.u32 %v888, 7
        %v890 = vsub.s32 %v887, %v889
        %v891 = vrot.slane %v264, %v890
        %v893 = vunpack.c.l.s4 1966171168
        %v894 = vunpack.c.0.s8 %v893
        %v895 = vlaneseq
        %v896 = vshrl.u32 %v895, 7
        %v897 = vsub.s32 %v894, %v896
        %v898 = vrot.slane %v891, %v897
        %v900 = vunpack.c.l.s4 1966171168
        %v901 = vunpack.c.0.s8 %v900
        %v902 = vlaneseq
        %v903 = vshrl.u32 %v902, 7
        %v904 = vsub.s32 %v901, %v903
        %v905 = vrot.slane %v265, %v904
        %v907 = vunpack.c.l.s4 1966171168
        %v908 = vunpack.c.0.s8 %v907
        %v909 = vlaneseq
        %v910 = vshrl.u32 %v909, 7
        %v911 = vsub.s32 %v908, %v910
        %v912 = vrot.slane %v905, %v911
        %v914 = vunpack.c.l.s4 1966171168
        %v915 = vunpack.c.0.s8 %v914
        %v916 = vlaneseq
        %v917 = vshrl.u32 %v916, 7
        %v918 = vsub.s32 %v915, %v917
        %v919 = vrot.slane %v266, %v918
        %v921 = vunpack.c.l.s4 1966171168
        %v922 = vunpack.c.0.s8 %v921
        %v923 = vlaneseq
        %v924 = vshrl.u32 %v923, 7
        %v925 = vsub.s32 %v922, %v924
        %v926 = vrot.slane %v919, %v925
        %v928 = vunpack.c.l.s4 1966171168
        %v929 = vunpack.c.0.s8 %v928
        %v930 = vlaneseq
        %v931 = vshrl.u32 %v930, 7
        %v932 = vsub.s32 %v929, %v931
        %v933 = vrot.slane %v267, %v932
        %v935 = vunpack.c.l.s4 1966171168
        %v936 = vunpack.c.0.s8 %v935
        %v937 = vlaneseq
        %v938 = vshrl.u32 %v937, 7
        %v939 = vsub.s32 %v936, %v938
        %v940 = vrot.slane %v933, %v939
        %v942 = vunpack.c.l.s4 1966171168
        %v943 = vunpack.c.0.s8 %v942
        %v944 = vlaneseq
        %v945 = vshrl.u32 %v944, 7
        %v946 = vsub.s32 %v943, %v945
        %v947 = vrot.slane %v268, %v946
        %v949 = vunpack.c.l.s4 1966171168
        %v950 = vunpack.c.0.s8 %v949
        %v951 = vlaneseq
        %v952 = vshrl.u32 %v951, 7
        %v953 = vsub.s32 %v950, %v952
        %v954 = vrot.slane %v947, %v953
        %v956 = vunpack.c.l.s4 1966171168
        %v957 = vunpack.c.0.s8 %v956
        %v958 = vlaneseq
        %v959 = vshrl.u32 %v958, 7
        %v960 = vsub.s32 %v957, %v959
        %v961 = vrot.slane %v269, %v960
        %v963 = vunpack.c.l.s4 1966171168
        %v964 = vunpack.c.0.s8 %v963
        %v965 = vlaneseq
        %v966 = vshrl.u32 %v965, 7
        %v967 = vsub.s32 %v964, %v966
        %v968 = vrot.slane %v961, %v967
        %v970 = vunpack.c.l.s4 1966171168
        %v971 = vunpack.c.0.s8 %v970
        %v972 = vlaneseq
        %v973 = vshrl.u32 %v972, 7
        %v974 = vsub.s32 %v971, %v973
        %v975 = vrot.slane %v270, %v974
        %v977 = vunpack.c.l.s4 1966171168
        %v978 = vunpack.c.0.s8 %v977
        %v979 = vlaneseq
        %v980 = vshrl.u32 %v979, 7
        %v981 = vsub.s32 %v978, %v980
        %v982 = vrot.slane %v975, %v981
        %v984 = vunpack.c.l.s4 1966171168
        %v985 = vunpack.c.0.s8 %v984
        %v986 = vlaneseq
        %v987 = vshrl.u32 %v986, 7
        %v988 = vsub.s32 %v985, %v987
        %v989 = vrot.slane %v271, %v988
        %v991 = vunpack.c.l.s4 1966171168
        %v992 = vunpack.c.0.s8 %v991
        %v993 = vlaneseq
        %v994 = vshrl.u32 %v993, 7
        %v995 = vsub.s32 %v992, %v994
        %v996 = vrot.slane %v989, %v995
        %v997 = vunpack.c.l.b16 %v506
        %v998 = vunpack.c.l.b16 %v520
        %v999 = vunpack.c.l.b16 %v534
        %v1000 = vunpack.c.l.b16 %v548
        %v1001 = vunpack.c.l.b16 %v562
        %v1002 = vunpack.c.l.b16 %v576
        %v1003 = vunpack.c.l.b16 %v590
        %v1004 = vunpack.c.l.b16 %v604
        %v1005 = vunpack.c.l.b16 %v618
        %v1006 = vunpack.c.l.b16 %v632
        %v1007 = vunpack.c.l.b16 %v646
        %v1008 = vunpack.c.l.b16 %v660
        %v1009 = vunpack.c.l.b16 %v674
        %v1010 = vunpack.c.l.b16 %v688
        %v1011 = vunpack.c.l.b16 %v702
        %v1012 = vunpack.c.l.b16 %v716
        %v1013 = vunpack.c.l.b16 %v730
        %v1014 = vunpack.c.l.b16 %v744
        %v1015 = vunpack.c.l.b16 %v758
        %v1016 = vunpack.c.l.b16 %v772
        %v1017 = vunpack.c.l.b16 %v786
        %v1018 = vunpack.c.l.b16 %v800
        %v1019 = vunpack.c.l.b16 %v814
        %v1020 = vunpack.c.l.b16 %v828
        %v1021 = vunpack.c.l.b16 %v842
        %v1022 = vunpack.c.l.b16 %v856
        %v1023 = vunpack.c.l.b16 %v870
        %v1024 = vunpack.c.l.b16 %v884
        %v1025 = vunpack.c.l.b16 %v898
        %v1026 = vunpack.c.l.b16 %v912
        %v1027 = vunpack.c.l.b16 %v926
        %v1028 = vunpack.c.l.b16 %v940
        %v1029 = vunpack.c.l.b16 %v954
        %v1030 = vunpack.c.l.b16 %v968
        %v1031 = vunpack.c.l.b16 %v982
        %v1032 = vunpack.c.l.b16 %v996
        %v1033 = vrot.slane %v998, 7
        %vm1034 = vcmask 1041409
        %v1035 = vsel %vm1034, %v1033, %v997
        %v1036 = vrot.slane %v999, 6
        %vm1037 = vcmask 1042434
        %v1038 = vsel %vm1037, %v1036, %v1035
        %v1039 = vrot.slane %v1000, 5
        %vm1040 = vcmask 1043459
        %v1041 = vsel %vm1040, %v1039, %v1038
        %v1042 = vrot.slane %v1001, 4
        %vm1043 = vcmask 1044484
        %v1044 = vsel %vm1043, %v1042, %v1041
        %v1045 = vrot.slane %v1002, 3
        %vm1046 = vcmask 1045509
        %v1047 = vsel %vm1046, %v1045, %v1044
        %v1048 = vrot.slane %v1003, 2
        %vm1049 = vcmask 1046534
        %v1050 = vsel %vm1049, %v1048, %v1047
        %v1051 = vrot.slane %v1004, 1
        %vm1052 = vcmask 1047559
        %v1053 = vsel %vm1052, %v1051, %v1050
        %v1054 = vrot.slane %v1006, 7
        %v1055 = vsel %vm1034, %v1054, %v1005
        %v1056 = vrot.slane %v1007, 6
        %v1057 = vsel %vm1037, %v1056, %v1055
        %v1058 = vrot.slane %v1008, 5
        %v1059 = vsel %vm1040, %v1058, %v1057
        %v1060 = vrot.slane %v1009, 4
        %v1061 = vsel %vm1043, %v1060, %v1059
        %v1062 = vrot.slane %v1010, 3
        %v1063 = vsel %vm1046, %v1062, %v1061
        %v1064 = vrot.slane %v1011, 2
        %v1065 = vsel %vm1049, %v1064, %v1063
        %v1066 = vrot.slane %v1012, 1
        %v1067 = vsel %vm1052, %v1066, %v1065
        %v1068 = vrot.slane %v1014, 7
        %v1069 = vsel %vm1034, %v1068, %v1013
        %v1070 = vrot.slane %v1015, 6
        %v1071 = vsel %vm1037, %v1070, %v1069
        %v1072 = vrot.slane %v1016, 5
        %v1073 = vsel %vm1040, %v1072, %v1071
        %v1074 = vrot.slane %v1017, 4
        %v1075 = vsel %vm1043, %v1074, %v1073
        %v1076 = vrot.slane %v1018, 3
        %v1077 = vsel %vm1046, %v1076, %v1075
        %v1078 = vrot.slane %v1019, 2
        %v1079 = vsel %vm1049, %v1078, %v1077
        %v1080 = vrot.slane %v1020, 1
        %v1081 = vsel %vm1052, %v1080, %v1079
        %v1082 = vrot.slane %v1022, 7
        %v1083 = vsel %vm1034, %v1082, %v1021
        %v1084 = vrot.slane %v1023, 6
        %v1085 = vsel %vm1037, %v1084, %v1083
        %v1086 = vrot.slane %v1024, 5
        %v1087 = vsel %vm1040, %v1086, %v1085
        %v1088 = vrot.slane %v1025, 4
        %v1089 = vsel %vm1043, %v1088, %v1087
        %v1090 = vrot.slane %v1026, 3
        %v1091 = vsel %vm1046, %v1090, %v1089
        %v1092 = vrot.slane %v1027, 2
        %v1093 = vsel %vm1049, %v1092, %v1091
        %v1094 = vrot.slane %v1028, 1
        %v1095 = vsel %vm1052, %v1094, %v1093
        %v1096 = vrot.slane %v1030, 7
        %v1097 = vsel %vm1034, %v1096, %v1029
        %v1098 = vrot.slane %v1031, 6
        %v1099 = vsel %vm1037, %v1098, %v1097
        %v1100 = vrot.slane %v1032, 5
        %v1101 = vsel %vm1040, %v1100, %v1099
        %v1102 = vpack.c.b16 %v1067, %v1053
        %v1103 = vpack.c.b16 %v1095, %v1081
        %v1104 = vpack.c.b16 %v1101, %v1101
        %v1145 = vunpack.c.l.s4 1966171168
        %v1146 = vunpack.c.0.s8 %v1145
        %v1147 = vlaneseq
        %v1148 = vshrl.u32 %v1147, 7
        %v1149 = vsub.s32 %v1146, %v1148
        %v1150 = vrot.slane %v273, %v1149
        %v1152 = vunpack.c.l.s4 1966171168
        %v1153 = vunpack.c.0.s8 %v1152
        %v1154 = vlaneseq
        %v1155 = vshrl.u32 %v1154, 7
        %v1156 = vsub.s32 %v1153, %v1155
        %v1157 = vrot.slane %v1150, %v1156
        %v1159 = vunpack.c.l.s4 1966171168
        %v1160 = vunpack.c.0.s8 %v1159
        %v1161 = vlaneseq
        %v1162 = vshrl.u32 %v1161, 7
        %v1163 = vsub.s32 %v1160, %v1162
        %v1164 = vrot.slane %v274, %v1163
        %v1166 = vunpack.c.l.s4 1966171168
        %v1167 = vunpack.c.0.s8 %v1166
        %v1168 = vlaneseq
        %v1169 = vshrl.u32 %v1168, 7
        %v1170 = vsub.s32 %v1167, %v1169
        %v1171 = vrot.slane %v1164, %v1170
        %v1173 = vunpack.c.l.s4 1966171168
        %v1174 = vunpack.c.0.s8 %v1173
        %v1175 = vlaneseq
        %v1176 = vshrl.u32 %v1175, 7
        %v1177 = vsub.s32 %v1174, %v1176
        %v1178 = vrot.slane %v275, %v1177
        %v1180 = vunpack.c.l.s4 1966171168
        %v1181 = vunpack.c.0.s8 %v1180
        %v1182 = vlaneseq
        %v1183 = vshrl.u32 %v1182, 7
        %v1184 = vsub.s32 %v1181, %v1183
        %v1185 = vrot.slane %v1178, %v1184
        %v1187 = vunpack.c.l.s4 1966171168
        %v1188 = vunpack.c.0.s8 %v1187
        %v1189 = vlaneseq
        %v1190 = vshrl.u32 %v1189, 7
        %v1191 = vsub.s32 %v1188, %v1190
        %v1192 = vrot.slane %v276, %v1191
        %v1194 = vunpack.c.l.s4 1966171168
        %v1195 = vunpack.c.0.s8 %v1194
        %v1196 = vlaneseq
        %v1197 = vshrl.u32 %v1196, 7
        %v1198 = vsub.s32 %v1195, %v1197
        %v1199 = vrot.slane %v1192, %v1198
        %v1201 = vunpack.c.l.s4 1966171168
        %v1202 = vunpack.c.0.s8 %v1201
        %v1203 = vlaneseq
        %v1204 = vshrl.u32 %v1203, 7
        %v1205 = vsub.s32 %v1202, %v1204
        %v1206 = vrot.slane %v277, %v1205
        %v1208 = vunpack.c.l.s4 1966171168
        %v1209 = vunpack.c.0.s8 %v1208
        %v1210 = vlaneseq
        %v1211 = vshrl.u32 %v1210, 7
        %v1212 = vsub.s32 %v1209, %v1211
        %v1213 = vrot.slane %v1206, %v1212
        %v1215 = vunpack.c.l.s4 1966171168
        %v1216 = vunpack.c.0.s8 %v1215
        %v1217 = vlaneseq
        %v1218 = vshrl.u32 %v1217, 7
        %v1219 = vsub.s32 %v1216, %v1218
        %v1220 = vrot.slane %v278, %v1219
        %v1222 = vunpack.c.l.s4 1966171168
        %v1223 = vunpack.c.0.s8 %v1222
        %v1224 = vlaneseq
        %v1225 = vshrl.u32 %v1224, 7
        %v1226 = vsub.s32 %v1223, %v1225
        %v1227 = vrot.slane %v1220, %v1226
        %v1229 = vunpack.c.l.s4 1966171168
        %v1230 = vunpack.c.0.s8 %v1229
        %v1231 = vlaneseq
        %v1232 = vshrl.u32 %v1231, 7
        %v1233 = vsub.s32 %v1230, %v1232
        %v1234 = vrot.slane %v279, %v1233
        %v1236 = vunpack.c.l.s4 1966171168
        %v1237 = vunpack.c.0.s8 %v1236
        %v1238 = vlaneseq
        %v1239 = vshrl.u32 %v1238, 7
        %v1240 = vsub.s32 %v1237, %v1239
        %v1241 = vrot.slane %v1234, %v1240
        %v1243 = vunpack.c.l.s4 1966171168
        %v1244 = vunpack.c.0.s8 %v1243
        %v1245 = vlaneseq
        %v1246 = vshrl.u32 %v1245, 7
        %v1247 = vsub.s32 %v1244, %v1246
        %v1248 = vrot.slane %v280, %v1247
        %v1250 = vunpack.c.l.s4 1966171168
        %v1251 = vunpack.c.0.s8 %v1250
        %v1252 = vlaneseq
        %v1253 = vshrl.u32 %v1252, 7
        %v1254 = vsub.s32 %v1251, %v1253
        %v1255 = vrot.slane %v1248, %v1254
        %v1257 = vunpack.c.l.s4 1966171168
        %v1258 = vunpack.c.0.s8 %v1257
        %v1259 = vlaneseq
        %v1260 = vshrl.u32 %v1259, 7
        %v1261 = vsub.s32 %v1258, %v1260
        %v1262 = vrot.slane %v281, %v1261
        %v1264 = vunpack.c.l.s4 1966171168
        %v1265 = vunpack.c.0.s8 %v1264
        %v1266 = vlaneseq
        %v1267 = vshrl.u32 %v1266, 7
        %v1268 = vsub.s32 %v1265, %v1267
        %v1269 = vrot.slane %v1262, %v1268
        %v1271 = vunpack.c.l.s4 1966171168
        %v1272 = vunpack.c.0.s8 %v1271
        %v1273 = vlaneseq
        %v1274 = vshrl.u32 %v1273, 7
        %v1275 = vsub.s32 %v1272, %v1274
        %v1276 = vrot.slane %v282, %v1275
        %v1278 = vunpack.c.l.s4 1966171168
        %v1279 = vunpack.c.0.s8 %v1278
        %v1280 = vlaneseq
        %v1281 = vshrl.u32 %v1280, 7
        %v1282 = vsub.s32 %v1279, %v1281
        %v1283 = vrot.slane %v1276, %v1282
        %v1285 = vunpack.c.l.s4 1966171168
        %v1286 = vunpack.c.0.s8 %v1285
        %v1287 = vlaneseq
        %v1288 = vshrl.u32 %v1287, 7
        %v1289 = vsub.s32 %v1286, %v1288
        %v1290 = vrot.slane %v283, %v1289
        %v1292 = vunpack.c.l.s4 1966171168
        %v1293 = vunpack.c.0.s8 %v1292
        %v1294 = vlaneseq
        %v1295 = vshrl.u32 %v1294, 7
        %v1296 = vsub.s32 %v1293, %v1295
        %v1297 = vrot.slane %v1290, %v1296
        %v1299 = vunpack.c.l.s4 1966171168
        %v1300 = vunpack.c.0.s8 %v1299
        %v1301 = vlaneseq
        %v1302 = vshrl.u32 %v1301, 7
        %v1303 = vsub.s32 %v1300, %v1302
        %v1304 = vrot.slane %v284, %v1303
        %v1306 = vunpack.c.l.s4 1966171168
        %v1307 = vunpack.c.0.s8 %v1306
        %v1308 = vlaneseq
        %v1309 = vshrl.u32 %v1308, 7
        %v1310 = vsub.s32 %v1307, %v1309
        %v1311 = vrot.slane %v1304, %v1310
        %v1313 = vunpack.c.l.s4 1966171168
        %v1314 = vunpack.c.0.s8 %v1313
        %v1315 = vlaneseq
        %v1316 = vshrl.u32 %v1315, 7
        %v1317 = vsub.s32 %v1314, %v1316
        %v1318 = vrot.slane %v285, %v1317
        %v1320 = vunpack.c.l.s4 1966171168
        %v1321 = vunpack.c.0.s8 %v1320
        %v1322 = vlaneseq
        %v1323 = vshrl.u32 %v1322, 7
        %v1324 = vsub.s32 %v1321, %v1323
        %v1325 = vrot.slane %v1318, %v1324
        %v1327 = vunpack.c.l.s4 1966171168
        %v1328 = vunpack.c.0.s8 %v1327
        %v1329 = vlaneseq
        %v1330 = vshrl.u32 %v1329, 7
        %v1331 = vsub.s32 %v1328, %v1330
        %v1332 = vrot.slane %v286, %v1331
        %v1334 = vunpack.c.l.s4 1966171168
        %v1335 = vunpack.c.0.s8 %v1334
        %v1336 = vlaneseq
        %v1337 = vshrl.u32 %v1336, 7
        %v1338 = vsub.s32 %v1335, %v1337
        %v1339 = vrot.slane %v1332, %v1338
        %v1341 = vunpack.c.l.s4 1966171168
        %v1342 = vunpack.c.0.s8 %v1341
        %v1343 = vlaneseq
        %v1344 = vshrl.u32 %v1343, 7
        %v1345 = vsub.s32 %v1342, %v1344
        %v1346 = vrot.slane %v287, %v1345
        %v1348 = vunpack.c.l.s4 1966171168
        %v1349 = vunpack.c.0.s8 %v1348
        %v1350 = vlaneseq
        %v1351 = vshrl.u32 %v1350, 7
        %v1352 = vsub.s32 %v1349, %v1351
        %v1353 = vrot.slane %v1346, %v1352
        %v1355 = vunpack.c.l.s4 1966171168
        %v1356 = vunpack.c.0.s8 %v1355
        %v1357 = vlaneseq
        %v1358 = vshrl.u32 %v1357, 7
        %v1359 = vsub.s32 %v1356, %v1358
        %v1360 = vrot.slane %v288, %v1359
        %v1362 = vunpack.c.l.s4 1966171168
        %v1363 = vunpack.c.0.s8 %v1362
        %v1364 = vlaneseq
        %v1365 = vshrl.u32 %v1364, 7
        %v1366 = vsub.s32 %v1363, %v1365
        %v1367 = vrot.slane %v1360, %v1366
        %v1369 = vunpack.c.l.s4 1966171168
        %v1370 = vunpack.c.0.s8 %v1369
        %v1371 = vlaneseq
        %v1372 = vshrl.u32 %v1371, 7
        %v1373 = vsub.s32 %v1370, %v1372
        %v1374 = vrot.slane %v289, %v1373
        %v1376 = vunpack.c.l.s4 1966171168
        %v1377 = vunpack.c.0.s8 %v1376
        %v1378 = vlaneseq
        %v1379 = vshrl.u32 %v1378, 7
        %v1380 = vsub.s32 %v1377, %v1379
        %v1381 = vrot.slane %v1374, %v1380
        %v1383 = vunpack.c.l.s4 1966171168
        %v1384 = vunpack.c.0.s8 %v1383
        %v1385 = vlaneseq
        %v1386 = vshrl.u32 %v1385, 7
        %v1387 = vsub.s32 %v1384, %v1386
        %v1388 = vrot.slane %v290, %v1387
        %v1390 = vunpack.c.l.s4 1966171168
        %v1391 = vunpack.c.0.s8 %v1390
        %v1392 = vlaneseq
        %v1393 = vshrl.u32 %v1392, 7
        %v1394 = vsub.s32 %v1391, %v1393
        %v1395 = vrot.slane %v1388, %v1394
        %v1397 = vunpack.c.l.s4 1966171168
        %v1398 = vunpack.c.0.s8 %v1397
        %v1399 = vlaneseq
        %v1400 = vshrl.u32 %v1399, 7
        %v1401 = vsub.s32 %v1398, %v1400
        %v1402 = vrot.slane %v291, %v1401
        %v1404 = vunpack.c.l.s4 1966171168
        %v1405 = vunpack.c.0.s8 %v1404
        %v1406 = vlaneseq
        %v1407 = vshrl.u32 %v1406, 7
        %v1408 = vsub.s32 %v1405, %v1407
        %v1409 = vrot.slane %v1402, %v1408
        %v1411 = vunpack.c.l.s4 1966171168
        %v1412 = vunpack.c.0.s8 %v1411
        %v1413 = vlaneseq
        %v1414 = vshrl.u32 %v1413, 7
        %v1415 = vsub.s32 %v1412, %v1414
        %v1416 = vrot.slane %v292, %v1415
        %v1418 = vunpack.c.l.s4 1966171168
        %v1419 = vunpack.c.0.s8 %v1418
        %v1420 = vlaneseq
        %v1421 = vshrl.u32 %v1420, 7
        %v1422 = vsub.s32 %v1419, %v1421
        %v1423 = vrot.slane %v1416, %v1422
        %v1425 = vunpack.c.l.s4 1966171168
        %v1426 = vunpack.c.0.s8 %v1425
        %v1427 = vlaneseq
        %v1428 = vshrl.u32 %v1427, 7
        %v1429 = vsub.s32 %v1426, %v1428
        %v1430 = vrot.slane %v293, %v1429
        %v1432 = vunpack.c.l.s4 1966171168
        %v1433 = vunpack.c.0.s8 %v1432
        %v1434 = vlaneseq
        %v1435 = vshrl.u32 %v1434, 7
        %v1436 = vsub.s32 %v1433, %v1435
        %v1437 = vrot.slane %v1430, %v1436
        %v1439 = vunpack.c.l.s4 1966171168
        %v1440 = vunpack.c.0.s8 %v1439
        %v1441 = vlaneseq
        %v1442 = vshrl.u32 %v1441, 7
        %v1443 = vsub.s32 %v1440, %v1442
        %v1444 = vrot.slane %v294, %v1443
        %v1446 = vunpack.c.l.s4 1966171168
        %v1447 = vunpack.c.0.s8 %v1446
        %v1448 = vlaneseq
        %v1449 = vshrl.u32 %v1448, 7
        %v1450 = vsub.s32 %v1447, %v1449
        %v1451 = vrot.slane %v1444, %v1450
        %v1453 = vunpack.c.l.s4 1966171168
        %v1454 = vunpack.c.0.s8 %v1453
        %v1455 = vlaneseq
        %v1456 = vshrl.u32 %v1455, 7
        %v1457 = vsub.s32 %v1454, %v1456
        %v1458 = vrot.slane %v295, %v1457
        %v1460 = vunpack.c.l.s4 1966171168
        %v1461 = vunpack.c.0.s8 %v1460
        %v1462 = vlaneseq
        %v1463 = vshrl.u32 %v1462, 7
        %v1464 = vsub.s32 %v1461, %v1463
        %v1465 = vrot.slane %v1458, %v1464
        %v1467 = vunpack.c.l.s4 1966171168
        %v1468 = vunpack.c.0.s8 %v1467
        %v1469 = vlaneseq
        %v1470 = vshrl.u32 %v1469, 7
        %v1471 = vsub.s32 %v1468, %v1470
        %v1472 = vrot.slane %v296, %v1471
        %v1474 = vunpack.c.l.s4 1966171168
        %v1475 = vunpack.c.0.s8 %v1474
        %v1476 = vlaneseq
        %v1477 = vshrl.u32 %v1476, 7
        %v1478 = vsub.s32 %v1475, %v1477
        %v1479 = vrot.slane %v1472, %v1478
        %v1481 = vunpack.c.l.s4 1966171168
        %v1482 = vunpack.c.0.s8 %v1481
        %v1483 = vlaneseq
        %v1484 = vshrl.u32 %v1483, 7
        %v1485 = vsub.s32 %v1482, %v1484
        %v1486 = vrot.slane %v297, %v1485
        %v1488 = vunpack.c.l.s4 1966171168
        %v1489 = vunpack.c.0.s8 %v1488
        %v1490 = vlaneseq
        %v1491 = vshrl.u32 %v1490, 7
        %v1492 = vsub.s32 %v1489, %v1491
        %v1493 = vrot.slane %v1486, %v1492
        %v1495 = vunpack.c.l.s4 1966171168
        %v1496 = vunpack.c.0.s8 %v1495
        %v1497 = vlaneseq
        %v1498 = vshrl.u32 %v1497, 7
        %v1499 = vsub.s32 %v1496, %v1498
        %v1500 = vrot.slane %v298, %v1499
        %v1502 = vunpack.c.l.s4 1966171168
        %v1503 = vunpack.c.0.s8 %v1502
        %v1504 = vlaneseq
        %v1505 = vshrl.u32 %v1504, 7
        %v1506 = vsub.s32 %v1503, %v1505
        %v1507 = vrot.slane %v1500, %v1506
        %v1509 = vunpack.c.l.s4 1966171168
        %v1510 = vunpack.c.0.s8 %v1509
        %v1511 = vlaneseq
        %v1512 = vshrl.u32 %v1511, 7
        %v1513 = vsub.s32 %v1510, %v1512
        %v1514 = vrot.slane %v299, %v1513
        %v1516 = vunpack.c.l.s4 1966171168
        %v1517 = vunpack.c.0.s8 %v1516
        %v1518 = vlaneseq
        %v1519 = vshrl.u32 %v1518, 7
        %v1520 = vsub.s32 %v1517, %v1519
        %v1521 = vrot.slane %v1514, %v1520
        %v1523 = vunpack.c.l.s4 1966171168
        %v1524 = vunpack.c.0.s8 %v1523
        %v1525 = vlaneseq
        %v1526 = vshrl.u32 %v1525, 7
        %v1527 = vsub.s32 %v1524, %v1526
        %v1528 = vrot.slane %v300, %v1527
        %v1530 = vunpack.c.l.s4 1966171168
        %v1531 = vunpack.c.0.s8 %v1530
        %v1532 = vlaneseq
        %v1533 = vshrl.u32 %v1532, 7
        %v1534 = vsub.s32 %v1531, %v1533
        %v1535 = vrot.slane %v1528, %v1534
        %v1537 = vunpack.c.l.s4 1966171168
        %v1538 = vunpack.c.0.s8 %v1537
        %v1539 = vlaneseq
        %v1540 = vshrl.u32 %v1539, 7
        %v1541 = vsub.s32 %v1538, %v1540
        %v1542 = vrot.slane %v301, %v1541
        %v1544 = vunpack.c.l.s4 1966171168
        %v1545 = vunpack.c.0.s8 %v1544
        %v1546 = vlaneseq
        %v1547 = vshrl.u32 %v1546, 7
        %v1548 = vsub.s32 %v1545, %v1547
        %v1549 = vrot.slane %v1542, %v1548
        %v1551 = vunpack.c.l.s4 1966171168
        %v1552 = vunpack.c.0.s8 %v1551
        %v1553 = vlaneseq
        %v1554 = vshrl.u32 %v1553, 7
        %v1555 = vsub.s32 %v1552, %v1554
        %v1556 = vrot.slane %v302, %v1555
        %v1558 = vunpack.c.l.s4 1966171168
        %v1559 = vunpack.c.0.s8 %v1558
        %v1560 = vlaneseq
        %v1561 = vshrl.u32 %v1560, 7
        %v1562 = vsub.s32 %v1559, %v1561
        %v1563 = vrot.slane %v1556, %v1562
        %v1565 = vunpack.c.l.s4 1966171168
        %v1566 = vunpack.c.0.s8 %v1565
        %v1567 = vlaneseq
        %v1568 = vshrl.u32 %v1567, 7
        %v1569 = vsub.s32 %v1566, %v1568
        %v1570 = vrot.slane %v303, %v1569
        %v1572 = vunpack.c.l.s4 1966171168
        %v1573 = vunpack.c.0.s8 %v1572
        %v1574 = vlaneseq
        %v1575 = vshrl.u32 %v1574, 7
        %v1576 = vsub.s32 %v1573, %v1575
        %v1577 = vrot.slane %v1570, %v1576
        %v1579 = vunpack.c.l.s4 1966171168
        %v1580 = vunpack.c.0.s8 %v1579
        %v1581 = vlaneseq
        %v1582 = vshrl.u32 %v1581, 7
        %v1583 = vsub.s32 %v1580, %v1582
        %v1584 = vrot.slane %v304, %v1583
        %v1586 = vunpack.c.l.s4 1966171168
        %v1587 = vunpack.c.0.s8 %v1586
        %v1588 = vlaneseq
        %v1589 = vshrl.u32 %v1588, 7
        %v1590 = vsub.s32 %v1587, %v1589
        %v1591 = vrot.slane %v1584, %v1590
        %v1593 = vunpack.c.l.s4 1966171168
        %v1594 = vunpack.c.0.s8 %v1593
        %v1595 = vlaneseq
        %v1596 = vshrl.u32 %v1595, 7
        %v1597 = vsub.s32 %v1594, %v1596
        %v1598 = vrot.slane %v305, %v1597
        %v1600 = vunpack.c.l.s4 1966171168
        %v1601 = vunpack.c.0.s8 %v1600
        %v1602 = vlaneseq
        %v1603 = vshrl.u32 %v1602, 7
        %v1604 = vsub.s32 %v1601, %v1603
        %v1605 = vrot.slane %v1598, %v1604
        %v1607 = vunpack.c.l.s4 1966171168
        %v1608 = vunpack.c.0.s8 %v1607
        %v1609 = vlaneseq
        %v1610 = vshrl.u32 %v1609, 7
        %v1611 = vsub.s32 %v1608, %v1610
        %v1612 = vrot.slane %v306, %v1611
        %v1614 = vunpack.c.l.s4 1966171168
        %v1615 = vunpack.c.0.s8 %v1614
        %v1616 = vlaneseq
        %v1617 = vshrl.u32 %v1616, 7
        %v1618 = vsub.s32 %v1615, %v1617
        %v1619 = vrot.slane %v1612, %v1618
        %v1621 = vunpack.c.l.s4 1966171168
        %v1622 = vunpack.c.0.s8 %v1621
        %v1623 = vlaneseq
        %v1624 = vshrl.u32 %v1623, 7
        %v1625 = vsub.s32 %v1622, %v1624
        %v1626 = vrot.slane %v307, %v1625
        %v1628 = vunpack.c.l.s4 1966171168
        %v1629 = vunpack.c.0.s8 %v1628
        %v1630 = vlaneseq
        %v1631 = vshrl.u32 %v1630, 7
        %v1632 = vsub.s32 %v1629, %v1631
        %v1633 = vrot.slane %v1626, %v1632
        %v1635 = vunpack.c.l.s4 1966171168
        %v1636 = vunpack.c.0.s8 %v1635
        %v1637 = vlaneseq
        %v1638 = vshrl.u32 %v1637, 7
        %v1639 = vsub.s32 %v1636, %v1638
        %v1640 = vrot.slane %v308, %v1639
        %v1642 = vunpack.c.l.s4 1966171168
        %v1643 = vunpack.c.0.s8 %v1642
        %v1644 = vlaneseq
        %v1645 = vshrl.u32 %v1644, 7
        %v1646 = vsub.s32 %v1643, %v1645
        %v1647 = vrot.slane %v1640, %v1646
        %v1648 = vunpack.c.l.b16 %v1157
        %v1649 = vunpack.c.l.b16 %v1171
        %v1650 = vunpack.c.l.b16 %v1185
        %v1651 = vunpack.c.l.b16 %v1199
        %v1652 = vunpack.c.l.b16 %v1213
        %v1653 = vunpack.c.l.b16 %v1227
        %v1654 = vunpack.c.l.b16 %v1241
        %v1655 = vunpack.c.l.b16 %v1255
        %v1656 = vunpack.c.l.b16 %v1269
        %v1657 = vunpack.c.l.b16 %v1283
        %v1658 = vunpack.c.l.b16 %v1297
        %v1659 = vunpack.c.l.b16 %v1311
        %v1660 = vunpack.c.l.b16 %v1325
        %v1661 = vunpack.c.l.b16 %v1339
        %v1662 = vunpack.c.l.b16 %v1353
        %v1663 = vunpack.c.l.b16 %v1367
        %v1664 = vunpack.c.l.b16 %v1381
        %v1665 = vunpack.c.l.b16 %v1395
        %v1666 = vunpack.c.l.b16 %v1409
        %v1667 = vunpack.c.l.b16 %v1423
        %v1668 = vunpack.c.l.b16 %v1437
        %v1669 = vunpack.c.l.b16 %v1451
        %v1670 = vunpack.c.l.b16 %v1465
        %v1671 = vunpack.c.l.b16 %v1479
        %v1672 = vunpack.c.l.b16 %v1493
        %v1673 = vunpack.c.l.b16 %v1507
        %v1674 = vunpack.c.l.b16 %v1521
        %v1675 = vunpack.c.l.b16 %v1535
        %v1676 = vunpack.c.l.b16 %v1549
        %v1677 = vunpack.c.l.b16 %v1563
        %v1678 = vunpack.c.l.b16 %v1577
        %v1679 = vunpack.c.l.b16 %v1591
        %v1680 = vunpack.c.l.b16 %v1605
        %v1681 = vunpack.c.l.b16 %v1619
        %v1682 = vunpack.c.l.b16 %v1633
        %v1683 = vunpack.c.l.b16 %v1647
        %v1684 = vrot.slane %v1649, 7
        %v1685 = vsel %vm1034, %v1684, %v1648
        %v1686 = vrot.slane %v1650, 6
        %v1687 = vsel %vm1037, %v1686, %v1685
        %v1688 = vrot.slane %v1651, 5
        %v1689 = vsel %vm1040, %v1688, %v1687
        %v1690 = vrot.slane %v1652, 4
        %v1691 = vsel %vm1043, %v1690, %v1689
        %v1692 = vrot.slane %v1653, 3
        %v1693 = vsel %vm1046, %v1692, %v1691
        %v1694 = vrot.slane %v1654, 2
        %v1695 = vsel %vm1049, %v1694, %v1693
        %v1696 = vrot.slane %v1655, 1
        %v1697 = vsel %vm1052, %v1696, %v1695
        %v1698 = vrot.slane %v1657, 7
        %v1699 = vsel %vm1034, %v1698, %v1656
        %v1700 = vrot.slane %v1658, 6
        %v1701 = vsel %vm1037, %v1700, %v1699
        %v1702 = vrot.slane %v1659, 5
        %v1703 = vsel %vm1040, %v1702, %v1701
        %v1704 = vrot.slane %v1660, 4
        %v1705 = vsel %vm1043, %v1704, %v1703
        %v1706 = vrot.slane %v1661, 3
        %v1707 = vsel %vm1046, %v1706, %v1705
        %v1708 = vrot.slane %v1662, 2
        %v1709 = vsel %vm1049, %v1708, %v1707
        %v1710 = vrot.slane %v1663, 1
        %v1711 = vsel %vm1052, %v1710, %v1709
        %v1712 = vrot.slane %v1665, 7
        %v1713 = vsel %vm1034, %v1712, %v1664
        %v1714 = vrot.slane %v1666, 6
        %v1715 = vsel %vm1037, %v1714, %v1713
        %v1716 = vrot.slane %v1667, 5
        %v1717 = vsel %vm1040, %v1716, %v1715
        %v1718 = vrot.slane %v1668, 4
        %v1719 = vsel %vm1043, %v1718, %v1717
        %v1720 = vrot.slane %v1669, 3
        %v1721 = vsel %vm1046, %v1720, %v1719
        %v1722 = vrot.slane %v1670, 2
        %v1723 = vsel %vm1049, %v1722, %v1721
        %v1724 = vrot.slane %v1671, 1
        %v1725 = vsel %vm1052, %v1724, %v1723
        %v1726 = vrot.slane %v1673, 7
        %v1727 = vsel %vm1034, %v1726, %v1672
        %v1728 = vrot.slane %v1674, 6
        %v1729 = vsel %vm1037, %v1728, %v1727
        %v1730 = vrot.slane %v1675, 5
        %v1731 = vsel %vm1040, %v1730, %v1729
        %v1732 = vrot.slane %v1676, 4
        %v1733 = vsel %vm1043, %v1732, %v1731
        %v1734 = vrot.slane %v1677, 3
        %v1735 = vsel %vm1046, %v1734, %v1733
        %v1736 = vrot.slane %v1678, 2
        %v1737 = vsel %vm1049, %v1736, %v1735
        %v1738 = vrot.slane %v1679, 1
        %v1739 = vsel %vm1052, %v1738, %v1737
        %v1740 = vrot.slane %v1681, 7
        %v1741 = vsel %vm1034, %v1740, %v1680
        %v1742 = vrot.slane %v1682, 6
        %v1743 = vsel %vm1037, %v1742, %v1741
        %v1744 = vrot.slane %v1683, 5
        %v1745 = vsel %vm1040, %v1744, %v1743
        %v1746 = vpack.c.b16 %v1711, %v1697
        %v1747 = vpack.c.b16 %v1739, %v1725
        %v1748 = vpack.c.b16 %v1745, %v1745
        %v1789 = vunpack.c.l.s4 1966171168
        %v1790 = vunpack.c.0.s8 %v1789
        %v1791 = vlaneseq
        %v1792 = vshrl.u32 %v1791, 7
        %v1793 = vsub.s32 %v1790, %v1792
        %v1794 = vrot.slane %v310, %v1793
        %v1796 = vunpack.c.l.s4 1966171168
        %v1797 = vunpack.c.0.s8 %v1796
        %v1798 = vlaneseq
        %v1799 = vshrl.u32 %v1798, 7
        %v1800 = vsub.s32 %v1797, %v1799
        %v1801 = vrot.slane %v1794, %v1800
        %v1803 = vunpack.c.l.s4 1966171168
        %v1804 = vunpack.c.0.s8 %v1803
        %v1805 = vlaneseq
        %v1806 = vshrl.u32 %v1805, 7
        %v1807 = vsub.s32 %v1804, %v1806
        %v1808 = vrot.slane %v311, %v1807
        %v1810 = vunpack.c.l.s4 1966171168
        %v1811 = vunpack.c.0.s8 %v1810
        %v1812 = vlaneseq
        %v1813 = vshrl.u32 %v1812, 7
        %v1814 = vsub.s32 %v1811, %v1813
        %v1815 = vrot.slane %v1808, %v1814
        %v1817 = vunpack.c.l.s4 1966171168
        %v1818 = vunpack.c.0.s8 %v1817
        %v1819 = vlaneseq
        %v1820 = vshrl.u32 %v1819, 7
        %v1821 = vsub.s32 %v1818, %v1820
        %v1822 = vrot.slane %v312, %v1821
        %v1824 = vunpack.c.l.s4 1966171168
        %v1825 = vunpack.c.0.s8 %v1824
        %v1826 = vlaneseq
        %v1827 = vshrl.u32 %v1826, 7
        %v1828 = vsub.s32 %v1825, %v1827
        %v1829 = vrot.slane %v1822, %v1828
        %v1831 = vunpack.c.l.s4 1966171168
        %v1832 = vunpack.c.0.s8 %v1831
        %v1833 = vlaneseq
        %v1834 = vshrl.u32 %v1833, 7
        %v1835 = vsub.s32 %v1832, %v1834
        %v1836 = vrot.slane %v313, %v1835
        %v1838 = vunpack.c.l.s4 1966171168
        %v1839 = vunpack.c.0.s8 %v1838
        %v1840 = vlaneseq
        %v1841 = vshrl.u32 %v1840, 7
        %v1842 = vsub.s32 %v1839, %v1841
        %v1843 = vrot.slane %v1836, %v1842
        %v1845 = vunpack.c.l.s4 1966171168
        %v1846 = vunpack.c.0.s8 %v1845
        %v1847 = vlaneseq
        %v1848 = vshrl.u32 %v1847, 7
        %v1849 = vsub.s32 %v1846, %v1848
        %v1850 = vrot.slane %v314, %v1849
        %v1852 = vunpack.c.l.s4 1966171168
        %v1853 = vunpack.c.0.s8 %v1852
        %v1854 = vlaneseq
        %v1855 = vshrl.u32 %v1854, 7
        %v1856 = vsub.s32 %v1853, %v1855
        %v1857 = vrot.slane %v1850, %v1856
        %v1859 = vunpack.c.l.s4 1966171168
        %v1860 = vunpack.c.0.s8 %v1859
        %v1861 = vlaneseq
        %v1862 = vshrl.u32 %v1861, 7
        %v1863 = vsub.s32 %v1860, %v1862
        %v1864 = vrot.slane %v315, %v1863
        %v1866 = vunpack.c.l.s4 1966171168
        %v1867 = vunpack.c.0.s8 %v1866
        %v1868 = vlaneseq
        %v1869 = vshrl.u32 %v1868, 7
        %v1870 = vsub.s32 %v1867, %v1869
        %v1871 = vrot.slane %v1864, %v1870
        %v1873 = vunpack.c.l.s4 1966171168
        %v1874 = vunpack.c.0.s8 %v1873
        %v1875 = vlaneseq
        %v1876 = vshrl.u32 %v1875, 7
        %v1877 = vsub.s32 %v1874, %v1876
        %v1878 = vrot.slane %v316, %v1877
        %v1880 = vunpack.c.l.s4 1966171168
        %v1881 = vunpack.c.0.s8 %v1880
        %v1882 = vlaneseq
        %v1883 = vshrl.u32 %v1882, 7
        %v1884 = vsub.s32 %v1881, %v1883
        %v1885 = vrot.slane %v1878, %v1884
        %v1887 = vunpack.c.l.s4 1966171168
        %v1888 = vunpack.c.0.s8 %v1887
        %v1889 = vlaneseq
        %v1890 = vshrl.u32 %v1889, 7
        %v1891 = vsub.s32 %v1888, %v1890
        %v1892 = vrot.slane %v317, %v1891
        %v1894 = vunpack.c.l.s4 1966171168
        %v1895 = vunpack.c.0.s8 %v1894
        %v1896 = vlaneseq
        %v1897 = vshrl.u32 %v1896, 7
        %v1898 = vsub.s32 %v1895, %v1897
        %v1899 = vrot.slane %v1892, %v1898
        %v1901 = vunpack.c.l.s4 1966171168
        %v1902 = vunpack.c.0.s8 %v1901
        %v1903 = vlaneseq
        %v1904 = vshrl.u32 %v1903, 7
        %v1905 = vsub.s32 %v1902, %v1904
        %v1906 = vrot.slane %v318, %v1905
        %v1908 = vunpack.c.l.s4 1966171168
        %v1909 = vunpack.c.0.s8 %v1908
        %v1910 = vlaneseq
        %v1911 = vshrl.u32 %v1910, 7
        %v1912 = vsub.s32 %v1909, %v1911
        %v1913 = vrot.slane %v1906, %v1912
        %v1915 = vunpack.c.l.s4 1966171168
        %v1916 = vunpack.c.0.s8 %v1915
        %v1917 = vlaneseq
        %v1918 = vshrl.u32 %v1917, 7
        %v1919 = vsub.s32 %v1916, %v1918
        %v1920 = vrot.slane %v319, %v1919
        %v1922 = vunpack.c.l.s4 1966171168
        %v1923 = vunpack.c.0.s8 %v1922
        %v1924 = vlaneseq
        %v1925 = vshrl.u32 %v1924, 7
        %v1926 = vsub.s32 %v1923, %v1925
        %v1927 = vrot.slane %v1920, %v1926
        %v1929 = vunpack.c.l.s4 1966171168
        %v1930 = vunpack.c.0.s8 %v1929
        %v1931 = vlaneseq
        %v1932 = vshrl.u32 %v1931, 7
        %v1933 = vsub.s32 %v1930, %v1932
        %v1934 = vrot.slane %v320, %v1933
        %v1936 = vunpack.c.l.s4 1966171168
        %v1937 = vunpack.c.0.s8 %v1936
        %v1938 = vlaneseq
        %v1939 = vshrl.u32 %v1938, 7
        %v1940 = vsub.s32 %v1937, %v1939
        %v1941 = vrot.slane %v1934, %v1940
        %v1943 = vunpack.c.l.s4 1966171168
        %v1944 = vunpack.c.0.s8 %v1943
        %v1945 = vlaneseq
        %v1946 = vshrl.u32 %v1945, 7
        %v1947 = vsub.s32 %v1944, %v1946
        %v1948 = vrot.slane %v321, %v1947
        %v1950 = vunpack.c.l.s4 1966171168
        %v1951 = vunpack.c.0.s8 %v1950
        %v1952 = vlaneseq
        %v1953 = vshrl.u32 %v1952, 7
        %v1954 = vsub.s32 %v1951, %v1953
        %v1955 = vrot.slane %v1948, %v1954
        %v1957 = vunpack.c.l.s4 1966171168
        %v1958 = vunpack.c.0.s8 %v1957
        %v1959 = vlaneseq
        %v1960 = vshrl.u32 %v1959, 7
        %v1961 = vsub.s32 %v1958, %v1960
        %v1962 = vrot.slane %v322, %v1961
        %v1964 = vunpack.c.l.s4 1966171168
        %v1965 = vunpack.c.0.s8 %v1964
        %v1966 = vlaneseq
        %v1967 = vshrl.u32 %v1966, 7
        %v1968 = vsub.s32 %v1965, %v1967
        %v1969 = vrot.slane %v1962, %v1968
        %v1971 = vunpack.c.l.s4 1966171168
        %v1972 = vunpack.c.0.s8 %v1971
        %v1973 = vlaneseq
        %v1974 = vshrl.u32 %v1973, 7
        %v1975 = vsub.s32 %v1972, %v1974
        %v1976 = vrot.slane %v323, %v1975
        %v1978 = vunpack.c.l.s4 1966171168
        %v1979 = vunpack.c.0.s8 %v1978
        %v1980 = vlaneseq
        %v1981 = vshrl.u32 %v1980, 7
        %v1982 = vsub.s32 %v1979, %v1981
        %v1983 = vrot.slane %v1976, %v1982
        %v1985 = vunpack.c.l.s4 1966171168
        %v1986 = vunpack.c.0.s8 %v1985
        %v1987 = vlaneseq
        %v1988 = vshrl.u32 %v1987, 7
        %v1989 = vsub.s32 %v1986, %v1988
        %v1990 = vrot.slane %v324, %v1989
        %v1992 = vunpack.c.l.s4 1966171168
        %v1993 = vunpack.c.0.s8 %v1992
        %v1994 = vlaneseq
        %v1995 = vshrl.u32 %v1994, 7
        %v1996 = vsub.s32 %v1993, %v1995
        %v1997 = vrot.slane %v1990, %v1996
        %v1999 = vunpack.c.l.s4 1966171168
        %v2000 = vunpack.c.0.s8 %v1999
        %v2001 = vlaneseq
        %v2002 = vshrl.u32 %v2001, 7
        %v2003 = vsub.s32 %v2000, %v2002
        %v2004 = vrot.slane %v325, %v2003
        %v2006 = vunpack.c.l.s4 1966171168
        %v2007 = vunpack.c.0.s8 %v2006
        %v2008 = vlaneseq
        %v2009 = vshrl.u32 %v2008, 7
        %v2010 = vsub.s32 %v2007, %v2009
        %v2011 = vrot.slane %v2004, %v2010
        %v2013 = vunpack.c.l.s4 1966171168
        %v2014 = vunpack.c.0.s8 %v2013
        %v2015 = vlaneseq
        %v2016 = vshrl.u32 %v2015, 7
        %v2017 = vsub.s32 %v2014, %v2016
        %v2018 = vrot.slane %v326, %v2017
        %v2020 = vunpack.c.l.s4 1966171168
        %v2021 = vunpack.c.0.s8 %v2020
        %v2022 = vlaneseq
        %v2023 = vshrl.u32 %v2022, 7
        %v2024 = vsub.s32 %v2021, %v2023
        %v2025 = vrot.slane %v2018, %v2024
        %v2027 = vunpack.c.l.s4 1966171168
        %v2028 = vunpack.c.0.s8 %v2027
        %v2029 = vlaneseq
        %v2030 = vshrl.u32 %v2029, 7
        %v2031 = vsub.s32 %v2028, %v2030
        %v2032 = vrot.slane %v327, %v2031
        %v2034 = vunpack.c.l.s4 1966171168
        %v2035 = vunpack.c.0.s8 %v2034
        %v2036 = vlaneseq
        %v2037 = vshrl.u32 %v2036, 7
        %v2038 = vsub.s32 %v2035, %v2037
        %v2039 = vrot.slane %v2032, %v2038
        %v2041 = vunpack.c.l.s4 1966171168
        %v2042 = vunpack.c.0.s8 %v2041
        %v2043 = vlaneseq
        %v2044 = vshrl.u32 %v2043, 7
        %v2045 = vsub.s32 %v2042, %v2044
        %v2046 = vrot.slane %v328, %v2045
        %v2048 = vunpack.c.l.s4 1966171168
        %v2049 = vunpack.c.0.s8 %v2048
        %v2050 = vlaneseq
        %v2051 = vshrl.u32 %v2050, 7
        %v2052 = vsub.s32 %v2049, %v2051
        %v2053 = vrot.slane %v2046, %v2052
        %v2055 = vunpack.c.l.s4 1966171168
        %v2056 = vunpack.c.0.s8 %v2055
        %v2057 = vlaneseq
        %v2058 = vshrl.u32 %v2057, 7
        %v2059 = vsub.s32 %v2056, %v2058
        %v2060 = vrot.slane %v329, %v2059
        %v2062 = vunpack.c.l.s4 1966171168
        %v2063 = vunpack.c.0.s8 %v2062
        %v2064 = vlaneseq
        %v2065 = vshrl.u32 %v2064, 7
        %v2066 = vsub.s32 %v2063, %v2065
        %v2067 = vrot.slane %v2060, %v2066
        %v2069 = vunpack.c.l.s4 1966171168
        %v2070 = vunpack.c.0.s8 %v2069
        %v2071 = vlaneseq
        %v2072 = vshrl.u32 %v2071, 7
        %v2073 = vsub.s32 %v2070, %v2072
        %v2074 = vrot.slane %v330, %v2073
        %v2076 = vunpack.c.l.s4 1966171168
        %v2077 = vunpack.c.0.s8 %v2076
        %v2078 = vlaneseq
        %v2079 = vshrl.u32 %v2078, 7
        %v2080 = vsub.s32 %v2077, %v2079
        %v2081 = vrot.slane %v2074, %v2080
        %v2083 = vunpack.c.l.s4 1966171168
        %v2084 = vunpack.c.0.s8 %v2083
        %v2085 = vlaneseq
        %v2086 = vshrl.u32 %v2085, 7
        %v2087 = vsub.s32 %v2084, %v2086
        %v2088 = vrot.slane %v331, %v2087
        %v2090 = vunpack.c.l.s4 1966171168
        %v2091 = vunpack.c.0.s8 %v2090
        %v2092 = vlaneseq
        %v2093 = vshrl.u32 %v2092, 7
        %v2094 = vsub.s32 %v2091, %v2093
        %v2095 = vrot.slane %v2088, %v2094
        %v2097 = vunpack.c.l.s4 1966171168
        %v2098 = vunpack.c.0.s8 %v2097
        %v2099 = vlaneseq
        %v2100 = vshrl.u32 %v2099, 7
        %v2101 = vsub.s32 %v2098, %v2100
        %v2102 = vrot.slane %v332, %v2101
        %v2104 = vunpack.c.l.s4 1966171168
        %v2105 = vunpack.c.0.s8 %v2104
        %v2106 = vlaneseq
        %v2107 = vshrl.u32 %v2106, 7
        %v2108 = vsub.s32 %v2105, %v2107
        %v2109 = vrot.slane %v2102, %v2108
        %v2111 = vunpack.c.l.s4 1966171168
        %v2112 = vunpack.c.0.s8 %v2111
        %v2113 = vlaneseq
        %v2114 = vshrl.u32 %v2113, 7
        %v2115 = vsub.s32 %v2112, %v2114
        %v2116 = vrot.slane %v333, %v2115
        %v2118 = vunpack.c.l.s4 1966171168
        %v2119 = vunpack.c.0.s8 %v2118
        %v2120 = vlaneseq
        %v2121 = vshrl.u32 %v2120, 7
        %v2122 = vsub.s32 %v2119, %v2121
        %v2123 = vrot.slane %v2116, %v2122
        %v2125 = vunpack.c.l.s4 1966171168
        %v2126 = vunpack.c.0.s8 %v2125
        %v2127 = vlaneseq
        %v2128 = vshrl.u32 %v2127, 7
        %v2129 = vsub.s32 %v2126, %v2128
        %v2130 = vrot.slane %v334, %v2129
        %v2132 = vunpack.c.l.s4 1966171168
        %v2133 = vunpack.c.0.s8 %v2132
        %v2134 = vlaneseq
        %v2135 = vshrl.u32 %v2134, 7
        %v2136 = vsub.s32 %v2133, %v2135
        %v2137 = vrot.slane %v2130, %v2136
        %v2139 = vunpack.c.l.s4 1966171168
        %v2140 = vunpack.c.0.s8 %v2139
        %v2141 = vlaneseq
        %v2142 = vshrl.u32 %v2141, 7
        %v2143 = vsub.s32 %v2140, %v2142
        %v2144 = vrot.slane %v335, %v2143
        %v2146 = vunpack.c.l.s4 1966171168
        %v2147 = vunpack.c.0.s8 %v2146
        %v2148 = vlaneseq
        %v2149 = vshrl.u32 %v2148, 7
        %v2150 = vsub.s32 %v2147, %v2149
        %v2151 = vrot.slane %v2144, %v2150
        %v2153 = vunpack.c.l.s4 1966171168
        %v2154 = vunpack.c.0.s8 %v2153
        %v2155 = vlaneseq
        %v2156 = vshrl.u32 %v2155, 7
        %v2157 = vsub.s32 %v2154, %v2156
        %v2158 = vrot.slane %v336, %v2157
        %v2160 = vunpack.c.l.s4 1966171168
        %v2161 = vunpack.c.0.s8 %v2160
        %v2162 = vlaneseq
        %v2163 = vshrl.u32 %v2162, 7
        %v2164 = vsub.s32 %v2161, %v2163
        %v2165 = vrot.slane %v2158, %v2164
        %v2167 = vunpack.c.l.s4 1966171168
        %v2168 = vunpack.c.0.s8 %v2167
        %v2169 = vlaneseq
        %v2170 = vshrl.u32 %v2169, 7
        %v2171 = vsub.s32 %v2168, %v2170
        %v2172 = vrot.slane %v337, %v2171
        %v2174 = vunpack.c.l.s4 1966171168
        %v2175 = vunpack.c.0.s8 %v2174
        %v2176 = vlaneseq
        %v2177 = vshrl.u32 %v2176, 7
        %v2178 = vsub.s32 %v2175, %v2177
        %v2179 = vrot.slane %v2172, %v2178
        %v2181 = vunpack.c.l.s4 1966171168
        %v2182 = vunpack.c.0.s8 %v2181
        %v2183 = vlaneseq
        %v2184 = vshrl.u32 %v2183, 7
        %v2185 = vsub.s32 %v2182, %v2184
        %v2186 = vrot.slane %v338, %v2185
        %v2188 = vunpack.c.l.s4 1966171168
        %v2189 = vunpack.c.0.s8 %v2188
        %v2190 = vlaneseq
        %v2191 = vshrl.u32 %v2190, 7
        %v2192 = vsub.s32 %v2189, %v2191
        %v2193 = vrot.slane %v2186, %v2192
        %v2195 = vunpack.c.l.s4 1966171168
        %v2196 = vunpack.c.0.s8 %v2195
        %v2197 = vlaneseq
        %v2198 = vshrl.u32 %v2197, 7
        %v2199 = vsub.s32 %v2196, %v2198
        %v2200 = vrot.slane %v339, %v2199
        %v2202 = vunpack.c.l.s4 1966171168
        %v2203 = vunpack.c.0.s8 %v2202
        %v2204 = vlaneseq
        %v2205 = vshrl.u32 %v2204, 7
        %v2206 = vsub.s32 %v2203, %v2205
        %v2207 = vrot.slane %v2200, %v2206
        %v2209 = vunpack.c.l.s4 1966171168
        %v2210 = vunpack.c.0.s8 %v2209
        %v2211 = vlaneseq
        %v2212 = vshrl.u32 %v2211, 7
        %v2213 = vsub.s32 %v2210, %v2212
        %v2214 = vrot.slane %v340, %v2213
        %v2216 = vunpack.c.l.s4 1966171168
        %v2217 = vunpack.c.0.s8 %v2216
        %v2218 = vlaneseq
        %v2219 = vshrl.u32 %v2218, 7
        %v2220 = vsub.s32 %v2217, %v2219
        %v2221 = vrot.slane %v2214, %v2220
        %v2223 = vunpack.c.l.s4 1966171168
        %v2224 = vunpack.c.0.s8 %v2223
        %v2225 = vlaneseq
        %v2226 = vshrl.u32 %v2225, 7
        %v2227 = vsub.s32 %v2224, %v2226
        %v2228 = vrot.slane %v341, %v2227
        %v2230 = vunpack.c.l.s4 1966171168
        %v2231 = vunpack.c.0.s8 %v2230
        %v2232 = vlaneseq
        %v2233 = vshrl.u32 %v2232, 7
        %v2234 = vsub.s32 %v2231, %v2233
        %v2235 = vrot.slane %v2228, %v2234
        %v2237 = vunpack.c.l.s4 1966171168
        %v2238 = vunpack.c.0.s8 %v2237
        %v2239 = vlaneseq
        %v2240 = vshrl.u32 %v2239, 7
        %v2241 = vsub.s32 %v2238, %v2240
        %v2242 = vrot.slane %v342, %v2241
        %v2244 = vunpack.c.l.s4 1966171168
        %v2245 = vunpack.c.0.s8 %v2244
        %v2246 = vlaneseq
        %v2247 = vshrl.u32 %v2246, 7
        %v2248 = vsub.s32 %v2245, %v2247
        %v2249 = vrot.slane %v2242, %v2248
        %v2251 = vunpack.c.l.s4 1966171168
        %v2252 = vunpack.c.0.s8 %v2251
        %v2253 = vlaneseq
        %v2254 = vshrl.u32 %v2253, 7
        %v2255 = vsub.s32 %v2252, %v2254
        %v2256 = vrot.slane %v343, %v2255
        %v2258 = vunpack.c.l.s4 1966171168
        %v2259 = vunpack.c.0.s8 %v2258
        %v2260 = vlaneseq
        %v2261 = vshrl.u32 %v2260, 7
        %v2262 = vsub.s32 %v2259, %v2261
        %v2263 = vrot.slane %v2256, %v2262
        %v2265 = vunpack.c.l.s4 1966171168
        %v2266 = vunpack.c.0.s8 %v2265
        %v2267 = vlaneseq
        %v2268 = vshrl.u32 %v2267, 7
        %v2269 = vsub.s32 %v2266, %v2268
        %v2270 = vrot.slane %v344, %v2269
        %v2272 = vunpack.c.l.s4 1966171168
        %v2273 = vunpack.c.0.s8 %v2272
        %v2274 = vlaneseq
        %v2275 = vshrl.u32 %v2274, 7
        %v2276 = vsub.s32 %v2273, %v2275
        %v2277 = vrot.slane %v2270, %v2276
        %v2279 = vunpack.c.l.s4 1966171168
        %v2280 = vunpack.c.0.s8 %v2279
        %v2281 = vlaneseq
        %v2282 = vshrl.u32 %v2281, 7
        %v2283 = vsub.s32 %v2280, %v2282
        %v2284 = vrot.slane %v345, %v2283
        %v2286 = vunpack.c.l.s4 1966171168
        %v2287 = vunpack.c.0.s8 %v2286
        %v2288 = vlaneseq
        %v2289 = vshrl.u32 %v2288, 7
        %v2290 = vsub.s32 %v2287, %v2289
        %v2291 = vrot.slane %v2284, %v2290
        %v2292 = vunpack.c.l.b16 %v1801
        %v2293 = vunpack.c.l.b16 %v1815
        %v2294 = vunpack.c.l.b16 %v1829
        %v2295 = vunpack.c.l.b16 %v1843
        %v2296 = vunpack.c.l.b16 %v1857
        %v2297 = vunpack.c.l.b16 %v1871
        %v2298 = vunpack.c.l.b16 %v1885
        %v2299 = vunpack.c.l.b16 %v1899
        %v2300 = vunpack.c.l.b16 %v1913
        %v2301 = vunpack.c.l.b16 %v1927
        %v2302 = vunpack.c.l.b16 %v1941
        %v2303 = vunpack.c.l.b16 %v1955
        %v2304 = vunpack.c.l.b16 %v1969
        %v2305 = vunpack.c.l.b16 %v1983
        %v2306 = vunpack.c.l.b16 %v1997
        %v2307 = vunpack.c.l.b16 %v2011
        %v2308 = vunpack.c.l.b16 %v2025
        %v2309 = vunpack.c.l.b16 %v2039
        %v2310 = vunpack.c.l.b16 %v2053
        %v2311 = vunpack.c.l.b16 %v2067
        %v2312 = vunpack.c.l.b16 %v2081
        %v2313 = vunpack.c.l.b16 %v2095
        %v2314 = vunpack.c.l.b16 %v2109
        %v2315 = vunpack.c.l.b16 %v2123
        %v2316 = vunpack.c.l.b16 %v2137
        %v2317 = vunpack.c.l.b16 %v2151
        %v2318 = vunpack.c.l.b16 %v2165
        %v2319 = vunpack.c.l.b16 %v2179
        %v2320 = vunpack.c.l.b16 %v2193
        %v2321 = vunpack.c.l.b16 %v2207
        %v2322 = vunpack.c.l.b16 %v2221
        %v2323 = vunpack.c.l.b16 %v2235
        %v2324 = vunpack.c.l.b16 %v2249
        %v2325 = vunpack.c.l.b16 %v2263
        %v2326 = vunpack.c.l.b16 %v2277
        %v2327 = vunpack.c.l.b16 %v2291
        %v2328 = vrot.slane %v2293, 7
        %v2329 = vsel %vm1034, %v2328, %v2292
        %v2330 = vrot.slane %v2294, 6
        %v2331 = vsel %vm1037, %v2330, %v2329
        %v2332 = vrot.slane %v2295, 5
        %v2333 = vsel %vm1040, %v2332, %v2331
        %v2334 = vrot.slane %v2296, 4
        %v2335 = vsel %vm1043, %v2334, %v2333
        %v2336 = vrot.slane %v2297, 3
        %v2337 = vsel %vm1046, %v2336, %v2335
        %v2338 = vrot.slane %v2298, 2
        %v2339 = vsel %vm1049, %v2338, %v2337
        %v2340 = vrot.slane %v2299, 1
        %v2341 = vsel %vm1052, %v2340, %v2339
        %v2342 = vrot.slane %v2301, 7
        %v2343 = vsel %vm1034, %v2342, %v2300
        %v2344 = vrot.slane %v2302, 6
        %v2345 = vsel %vm1037, %v2344, %v2343
        %v2346 = vrot.slane %v2303, 5
        %v2347 = vsel %vm1040, %v2346, %v2345
        %v2348 = vrot.slane %v2304, 4
        %v2349 = vsel %vm1043, %v2348, %v2347
        %v2350 = vrot.slane %v2305, 3
        %v2351 = vsel %vm1046, %v2350, %v2349
        %v2352 = vrot.slane %v2306, 2
        %v2353 = vsel %vm1049, %v2352, %v2351
        %v2354 = vrot.slane %v2307, 1
        %v2355 = vsel %vm1052, %v2354, %v2353
        %v2356 = vrot.slane %v2309, 7
        %v2357 = vsel %vm1034, %v2356, %v2308
        %v2358 = vrot.slane %v2310, 6
        %v2359 = vsel %vm1037, %v2358, %v2357
        %v2360 = vrot.slane %v2311, 5
        %v2361 = vsel %vm1040, %v2360, %v2359
        %v2362 = vrot.slane %v2312, 4
        %v2363 = vsel %vm1043, %v2362, %v2361
        %v2364 = vrot.slane %v2313, 3
        %v2365 = vsel %vm1046, %v2364, %v2363
        %v2366 = vrot.slane %v2314, 2
        %v2367 = vsel %vm1049, %v2366, %v2365
        %v2368 = vrot.slane %v2315, 1
        %v2369 = vsel %vm1052, %v2368, %v2367
        %v2370 = vrot.slane %v2317, 7
        %v2371 = vsel %vm1034, %v2370, %v2316
        %v2372 = vrot.slane %v2318, 6
        %v2373 = vsel %vm1037, %v2372, %v2371
        %v2374 = vrot.slane %v2319, 5
        %v2375 = vsel %vm1040, %v2374, %v2373
        %v2376 = vrot.slane %v2320, 4
        %v2377 = vsel %vm1043, %v2376, %v2375
        %v2378 = vrot.slane %v2321, 3
        %v2379 = vsel %vm1046, %v2378, %v2377
        %v2380 = vrot.slane %v2322, 2
        %v2381 = vsel %vm1049, %v2380, %v2379
        %v2382 = vrot.slane %v2323, 1
        %v2383 = vsel %vm1052, %v2382, %v2381
        %v2384 = vrot.slane %v2325, 7
        %v2385 = vsel %vm1034, %v2384, %v2324
        %v2386 = vrot.slane %v2326, 6
        %v2387 = vsel %vm1037, %v2386, %v2385
        %v2388 = vrot.slane %v2327, 5
        %v2389 = vsel %vm1040, %v2388, %v2387
        %v2390 = vpack.c.b16 %v2355, %v2341
        %v2391 = vpack.c.b16 %v2383, %v2369
        %v2392 = vpack.c.b16 %v2389, %v2389
        %v2433 = vunpack.c.l.s4 1966171168
        %v2434 = vunpack.c.0.s8 %v2433
        %v2435 = vlaneseq
        %v2436 = vshrl.u32 %v2435, 7
        %v2437 = vsub.s32 %v2434, %v2436
        %v2438 = vrot.slane %v347, %v2437
        %v2440 = vunpack.c.l.s4 1966171168
        %v2441 = vunpack.c.0.s8 %v2440
        %v2442 = vlaneseq
        %v2443 = vshrl.u32 %v2442, 7
        %v2444 = vsub.s32 %v2441, %v2443
        %v2445 = vrot.slane %v2438, %v2444
        %v2447 = vunpack.c.l.s4 1966171168
        %v2448 = vunpack.c.0.s8 %v2447
        %v2449 = vlaneseq
        %v2450 = vshrl.u32 %v2449, 7
        %v2451 = vsub.s32 %v2448, %v2450
        %v2452 = vrot.slane %v348, %v2451
        %v2454 = vunpack.c.l.s4 1966171168
        %v2455 = vunpack.c.0.s8 %v2454
        %v2456 = vlaneseq
        %v2457 = vshrl.u32 %v2456, 7
        %v2458 = vsub.s32 %v2455, %v2457
        %v2459 = vrot.slane %v2452, %v2458
        %v2461 = vunpack.c.l.s4 1966171168
        %v2462 = vunpack.c.0.s8 %v2461
        %v2463 = vlaneseq
        %v2464 = vshrl.u32 %v2463, 7
        %v2465 = vsub.s32 %v2462, %v2464
        %v2466 = vrot.slane %v349, %v2465
        %v2468 = vunpack.c.l.s4 1966171168
        %v2469 = vunpack.c.0.s8 %v2468
        %v2470 = vlaneseq
        %v2471 = vshrl.u32 %v2470, 7
        %v2472 = vsub.s32 %v2469, %v2471
        %v2473 = vrot.slane %v2466, %v2472
        %v2475 = vunpack.c.l.s4 1966171168
        %v2476 = vunpack.c.0.s8 %v2475
        %v2477 = vlaneseq
        %v2478 = vshrl.u32 %v2477, 7
        %v2479 = vsub.s32 %v2476, %v2478
        %v2480 = vrot.slane %v350, %v2479
        %v2482 = vunpack.c.l.s4 1966171168
        %v2483 = vunpack.c.0.s8 %v2482
        %v2484 = vlaneseq
        %v2485 = vshrl.u32 %v2484, 7
        %v2486 = vsub.s32 %v2483, %v2485
        %v2487 = vrot.slane %v2480, %v2486
        %v2489 = vunpack.c.l.s4 1966171168
        %v2490 = vunpack.c.0.s8 %v2489
        %v2491 = vlaneseq
        %v2492 = vshrl.u32 %v2491, 7
        %v2493 = vsub.s32 %v2490, %v2492
        %v2494 = vrot.slane %v351, %v2493
        %v2496 = vunpack.c.l.s4 1966171168
        %v2497 = vunpack.c.0.s8 %v2496
        %v2498 = vlaneseq
        %v2499 = vshrl.u32 %v2498, 7
        %v2500 = vsub.s32 %v2497, %v2499
        %v2501 = vrot.slane %v2494, %v2500
        %v2503 = vunpack.c.l.s4 1966171168
        %v2504 = vunpack.c.0.s8 %v2503
        %v2505 = vlaneseq
        %v2506 = vshrl.u32 %v2505, 7
        %v2507 = vsub.s32 %v2504, %v2506
        %v2508 = vrot.slane %v352, %v2507
        %v2510 = vunpack.c.l.s4 1966171168
        %v2511 = vunpack.c.0.s8 %v2510
        %v2512 = vlaneseq
        %v2513 = vshrl.u32 %v2512, 7
        %v2514 = vsub.s32 %v2511, %v2513
        %v2515 = vrot.slane %v2508, %v2514
        %v2517 = vunpack.c.l.s4 1966171168
        %v2518 = vunpack.c.0.s8 %v2517
        %v2519 = vlaneseq
        %v2520 = vshrl.u32 %v2519, 7
        %v2521 = vsub.s32 %v2518, %v2520
        %v2522 = vrot.slane %v353, %v2521
        %v2524 = vunpack.c.l.s4 1966171168
        %v2525 = vunpack.c.0.s8 %v2524
        %v2526 = vlaneseq
        %v2527 = vshrl.u32 %v2526, 7
        %v2528 = vsub.s32 %v2525, %v2527
        %v2529 = vrot.slane %v2522, %v2528
        %v2531 = vunpack.c.l.s4 1966171168
        %v2532 = vunpack.c.0.s8 %v2531
        %v2533 = vlaneseq
        %v2534 = vshrl.u32 %v2533, 7
        %v2535 = vsub.s32 %v2532, %v2534
        %v2536 = vrot.slane %v354, %v2535
        %v2538 = vunpack.c.l.s4 1966171168
        %v2539 = vunpack.c.0.s8 %v2538
        %v2540 = vlaneseq
        %v2541 = vshrl.u32 %v2540, 7
        %v2542 = vsub.s32 %v2539, %v2541
        %v2543 = vrot.slane %v2536, %v2542
        %v2545 = vunpack.c.l.s4 1966171168
        %v2546 = vunpack.c.0.s8 %v2545
        %v2547 = vlaneseq
        %v2548 = vshrl.u32 %v2547, 7
        %v2549 = vsub.s32 %v2546, %v2548
        %v2550 = vrot.slane %v355, %v2549
        %v2552 = vunpack.c.l.s4 1966171168
        %v2553 = vunpack.c.0.s8 %v2552
        %v2554 = vlaneseq
        %v2555 = vshrl.u32 %v2554, 7
        %v2556 = vsub.s32 %v2553, %v2555
        %v2557 = vrot.slane %v2550, %v2556
        %v2559 = vunpack.c.l.s4 1966171168
        %v2560 = vunpack.c.0.s8 %v2559
        %v2561 = vlaneseq
        %v2562 = vshrl.u32 %v2561, 7
        %v2563 = vsub.s32 %v2560, %v2562
        %v2564 = vrot.slane %v356, %v2563
        %v2566 = vunpack.c.l.s4 1966171168
        %v2567 = vunpack.c.0.s8 %v2566
        %v2568 = vlaneseq
        %v2569 = vshrl.u32 %v2568, 7
        %v2570 = vsub.s32 %v2567, %v2569
        %v2571 = vrot.slane %v2564, %v2570
        %v2573 = vunpack.c.l.s4 1966171168
        %v2574 = vunpack.c.0.s8 %v2573
        %v2575 = vlaneseq
        %v2576 = vshrl.u32 %v2575, 7
        %v2577 = vsub.s32 %v2574, %v2576
        %v2578 = vrot.slane %v357, %v2577
        %v2580 = vunpack.c.l.s4 1966171168
        %v2581 = vunpack.c.0.s8 %v2580
        %v2582 = vlaneseq
        %v2583 = vshrl.u32 %v2582, 7
        %v2584 = vsub.s32 %v2581, %v2583
        %v2585 = vrot.slane %v2578, %v2584
        %v2587 = vunpack.c.l.s4 1966171168
        %v2588 = vunpack.c.0.s8 %v2587
        %v2589 = vlaneseq
        %v2590 = vshrl.u32 %v2589, 7
        %v2591 = vsub.s32 %v2588, %v2590
        %v2592 = vrot.slane %v358, %v2591
        %v2594 = vunpack.c.l.s4 1966171168
        %v2595 = vunpack.c.0.s8 %v2594
        %v2596 = vlaneseq
        %v2597 = vshrl.u32 %v2596, 7
        %v2598 = vsub.s32 %v2595, %v2597
        %v2599 = vrot.slane %v2592, %v2598
        %v2601 = vunpack.c.l.s4 1966171168
        %v2602 = vunpack.c.0.s8 %v2601
        %v2603 = vlaneseq
        %v2604 = vshrl.u32 %v2603, 7
        %v2605 = vsub.s32 %v2602, %v2604
        %v2606 = vrot.slane %v359, %v2605
        %v2608 = vunpack.c.l.s4 1966171168
        %v2609 = vunpack.c.0.s8 %v2608
        %v2610 = vlaneseq
        %v2611 = vshrl.u32 %v2610, 7
        %v2612 = vsub.s32 %v2609, %v2611
        %v2613 = vrot.slane %v2606, %v2612
        %v2615 = vunpack.c.l.s4 1966171168
        %v2616 = vunpack.c.0.s8 %v2615
        %v2617 = vlaneseq
        %v2618 = vshrl.u32 %v2617, 7
        %v2619 = vsub.s32 %v2616, %v2618
        %v2620 = vrot.slane %v360, %v2619
        %v2622 = vunpack.c.l.s4 1966171168
        %v2623 = vunpack.c.0.s8 %v2622
        %v2624 = vlaneseq
        %v2625 = vshrl.u32 %v2624, 7
        %v2626 = vsub.s32 %v2623, %v2625
        %v2627 = vrot.slane %v2620, %v2626
        %v2629 = vunpack.c.l.s4 1966171168
        %v2630 = vunpack.c.0.s8 %v2629
        %v2631 = vlaneseq
        %v2632 = vshrl.u32 %v2631, 7
        %v2633 = vsub.s32 %v2630, %v2632
        %v2634 = vrot.slane %v361, %v2633
        %v2636 = vunpack.c.l.s4 1966171168
        %v2637 = vunpack.c.0.s8 %v2636
        %v2638 = vlaneseq
        %v2639 = vshrl.u32 %v2638, 7
        %v2640 = vsub.s32 %v2637, %v2639
        %v2641 = vrot.slane %v2634, %v2640
        %v2643 = vunpack.c.l.s4 1966171168
        %v2644 = vunpack.c.0.s8 %v2643
        %v2645 = vlaneseq
        %v2646 = vshrl.u32 %v2645, 7
        %v2647 = vsub.s32 %v2644, %v2646
        %v2648 = vrot.slane %v362, %v2647
        %v2650 = vunpack.c.l.s4 1966171168
        %v2651 = vunpack.c.0.s8 %v2650
        %v2652 = vlaneseq
        %v2653 = vshrl.u32 %v2652, 7
        %v2654 = vsub.s32 %v2651, %v2653
        %v2655 = vrot.slane %v2648, %v2654
        %v2657 = vunpack.c.l.s4 1966171168
        %v2658 = vunpack.c.0.s8 %v2657
        %v2659 = vlaneseq
        %v2660 = vshrl.u32 %v2659, 7
        %v2661 = vsub.s32 %v2658, %v2660
        %v2662 = vrot.slane %v363, %v2661
        %v2664 = vunpack.c.l.s4 1966171168
        %v2665 = vunpack.c.0.s8 %v2664
        %v2666 = vlaneseq
        %v2667 = vshrl.u32 %v2666, 7
        %v2668 = vsub.s32 %v2665, %v2667
        %v2669 = vrot.slane %v2662, %v2668
        %v2671 = vunpack.c.l.s4 1966171168
        %v2672 = vunpack.c.0.s8 %v2671
        %v2673 = vlaneseq
        %v2674 = vshrl.u32 %v2673, 7
        %v2675 = vsub.s32 %v2672, %v2674
        %v2676 = vrot.slane %v364, %v2675
        %v2678 = vunpack.c.l.s4 1966171168
        %v2679 = vunpack.c.0.s8 %v2678
        %v2680 = vlaneseq
        %v2681 = vshrl.u32 %v2680, 7
        %v2682 = vsub.s32 %v2679, %v2681
        %v2683 = vrot.slane %v2676, %v2682
        %v2685 = vunpack.c.l.s4 1966171168
        %v2686 = vunpack.c.0.s8 %v2685
        %v2687 = vlaneseq
        %v2688 = vshrl.u32 %v2687, 7
        %v2689 = vsub.s32 %v2686, %v2688
        %v2690 = vrot.slane %v365, %v2689
        %v2692 = vunpack.c.l.s4 1966171168
        %v2693 = vunpack.c.0.s8 %v2692
        %v2694 = vlaneseq
        %v2695 = vshrl.u32 %v2694, 7
        %v2696 = vsub.s32 %v2693, %v2695
        %v2697 = vrot.slane %v2690, %v2696
        %v2699 = vunpack.c.l.s4 1966171168
        %v2700 = vunpack.c.0.s8 %v2699
        %v2701 = vlaneseq
        %v2702 = vshrl.u32 %v2701, 7
        %v2703 = vsub.s32 %v2700, %v2702
        %v2704 = vrot.slane %v366, %v2703
        %v2706 = vunpack.c.l.s4 1966171168
        %v2707 = vunpack.c.0.s8 %v2706
        %v2708 = vlaneseq
        %v2709 = vshrl.u32 %v2708, 7
        %v2710 = vsub.s32 %v2707, %v2709
        %v2711 = vrot.slane %v2704, %v2710
        %v2713 = vunpack.c.l.s4 1966171168
        %v2714 = vunpack.c.0.s8 %v2713
        %v2715 = vlaneseq
        %v2716 = vshrl.u32 %v2715, 7
        %v2717 = vsub.s32 %v2714, %v2716
        %v2718 = vrot.slane %v367, %v2717
        %v2720 = vunpack.c.l.s4 1966171168
        %v2721 = vunpack.c.0.s8 %v2720
        %v2722 = vlaneseq
        %v2723 = vshrl.u32 %v2722, 7
        %v2724 = vsub.s32 %v2721, %v2723
        %v2725 = vrot.slane %v2718, %v2724
        %v2727 = vunpack.c.l.s4 1966171168
        %v2728 = vunpack.c.0.s8 %v2727
        %v2729 = vlaneseq
        %v2730 = vshrl.u32 %v2729, 7
        %v2731 = vsub.s32 %v2728, %v2730
        %v2732 = vrot.slane %v368, %v2731
        %v2734 = vunpack.c.l.s4 1966171168
        %v2735 = vunpack.c.0.s8 %v2734
        %v2736 = vlaneseq
        %v2737 = vshrl.u32 %v2736, 7
        %v2738 = vsub.s32 %v2735, %v2737
        %v2739 = vrot.slane %v2732, %v2738
        %v2741 = vunpack.c.l.s4 1966171168
        %v2742 = vunpack.c.0.s8 %v2741
        %v2743 = vlaneseq
        %v2744 = vshrl.u32 %v2743, 7
        %v2745 = vsub.s32 %v2742, %v2744
        %v2746 = vrot.slane %v369, %v2745
        %v2748 = vunpack.c.l.s4 1966171168
        %v2749 = vunpack.c.0.s8 %v2748
        %v2750 = vlaneseq
        %v2751 = vshrl.u32 %v2750, 7
        %v2752 = vsub.s32 %v2749, %v2751
        %v2753 = vrot.slane %v2746, %v2752
        %v2755 = vunpack.c.l.s4 1966171168
        %v2756 = vunpack.c.0.s8 %v2755
        %v2757 = vlaneseq
        %v2758 = vshrl.u32 %v2757, 7
        %v2759 = vsub.s32 %v2756, %v2758
        %v2760 = vrot.slane %v370, %v2759
        %v2762 = vunpack.c.l.s4 1966171168
        %v2763 = vunpack.c.0.s8 %v2762
        %v2764 = vlaneseq
        %v2765 = vshrl.u32 %v2764, 7
        %v2766 = vsub.s32 %v2763, %v2765
        %v2767 = vrot.slane %v2760, %v2766
        %v2769 = vunpack.c.l.s4 1966171168
        %v2770 = vunpack.c.0.s8 %v2769
        %v2771 = vlaneseq
        %v2772 = vshrl.u32 %v2771, 7
        %v2773 = vsub.s32 %v2770, %v2772
        %v2774 = vrot.slane %v371, %v2773
        %v2776 = vunpack.c.l.s4 1966171168
        %v2777 = vunpack.c.0.s8 %v2776
        %v2778 = vlaneseq
        %v2779 = vshrl.u32 %v2778, 7
        %v2780 = vsub.s32 %v2777, %v2779
        %v2781 = vrot.slane %v2774, %v2780
        %v2783 = vunpack.c.l.s4 1966171168
        %v2784 = vunpack.c.0.s8 %v2783
        %v2785 = vlaneseq
        %v2786 = vshrl.u32 %v2785, 7
        %v2787 = vsub.s32 %v2784, %v2786
        %v2788 = vrot.slane %v372, %v2787
        %v2790 = vunpack.c.l.s4 1966171168
        %v2791 = vunpack.c.0.s8 %v2790
        %v2792 = vlaneseq
        %v2793 = vshrl.u32 %v2792, 7
        %v2794 = vsub.s32 %v2791, %v2793
        %v2795 = vrot.slane %v2788, %v2794
        %v2797 = vunpack.c.l.s4 1966171168
        %v2798 = vunpack.c.0.s8 %v2797
        %v2799 = vlaneseq
        %v2800 = vshrl.u32 %v2799, 7
        %v2801 = vsub.s32 %v2798, %v2800
        %v2802 = vrot.slane %v373, %v2801
        %v2804 = vunpack.c.l.s4 1966171168
        %v2805 = vunpack.c.0.s8 %v2804
        %v2806 = vlaneseq
        %v2807 = vshrl.u32 %v2806, 7
        %v2808 = vsub.s32 %v2805, %v2807
        %v2809 = vrot.slane %v2802, %v2808
        %v2811 = vunpack.c.l.s4 1966171168
        %v2812 = vunpack.c.0.s8 %v2811
        %v2813 = vlaneseq
        %v2814 = vshrl.u32 %v2813, 7
        %v2815 = vsub.s32 %v2812, %v2814
        %v2816 = vrot.slane %v374, %v2815
        %v2818 = vunpack.c.l.s4 1966171168
        %v2819 = vunpack.c.0.s8 %v2818
        %v2820 = vlaneseq
        %v2821 = vshrl.u32 %v2820, 7
        %v2822 = vsub.s32 %v2819, %v2821
        %v2823 = vrot.slane %v2816, %v2822
        %v2825 = vunpack.c.l.s4 1966171168
        %v2826 = vunpack.c.0.s8 %v2825
        %v2827 = vlaneseq
        %v2828 = vshrl.u32 %v2827, 7
        %v2829 = vsub.s32 %v2826, %v2828
        %v2830 = vrot.slane %v375, %v2829
        %v2832 = vunpack.c.l.s4 1966171168
        %v2833 = vunpack.c.0.s8 %v2832
        %v2834 = vlaneseq
        %v2835 = vshrl.u32 %v2834, 7
        %v2836 = vsub.s32 %v2833, %v2835
        %v2837 = vrot.slane %v2830, %v2836
        %v2839 = vunpack.c.l.s4 1966171168
        %v2840 = vunpack.c.0.s8 %v2839
        %v2841 = vlaneseq
        %v2842 = vshrl.u32 %v2841, 7
        %v2843 = vsub.s32 %v2840, %v2842
        %v2844 = vrot.slane %v376, %v2843
        %v2846 = vunpack.c.l.s4 1966171168
        %v2847 = vunpack.c.0.s8 %v2846
        %v2848 = vlaneseq
        %v2849 = vshrl.u32 %v2848, 7
        %v2850 = vsub.s32 %v2847, %v2849
        %v2851 = vrot.slane %v2844, %v2850
        %v2853 = vunpack.c.l.s4 1966171168
        %v2854 = vunpack.c.0.s8 %v2853
        %v2855 = vlaneseq
        %v2856 = vshrl.u32 %v2855, 7
        %v2857 = vsub.s32 %v2854, %v2856
        %v2858 = vrot.slane %v377, %v2857
        %v2860 = vunpack.c.l.s4 1966171168
        %v2861 = vunpack.c.0.s8 %v2860
        %v2862 = vlaneseq
        %v2863 = vshrl.u32 %v2862, 7
        %v2864 = vsub.s32 %v2861, %v2863
        %v2865 = vrot.slane %v2858, %v2864
        %v2867 = vunpack.c.l.s4 1966171168
        %v2868 = vunpack.c.0.s8 %v2867
        %v2869 = vlaneseq
        %v2870 = vshrl.u32 %v2869, 7
        %v2871 = vsub.s32 %v2868, %v2870
        %v2872 = vrot.slane %v378, %v2871
        %v2874 = vunpack.c.l.s4 1966171168
        %v2875 = vunpack.c.0.s8 %v2874
        %v2876 = vlaneseq
        %v2877 = vshrl.u32 %v2876, 7
        %v2878 = vsub.s32 %v2875, %v2877
        %v2879 = vrot.slane %v2872, %v2878
        %v2881 = vunpack.c.l.s4 1966171168
        %v2882 = vunpack.c.0.s8 %v2881
        %v2883 = vlaneseq
        %v2884 = vshrl.u32 %v2883, 7
        %v2885 = vsub.s32 %v2882, %v2884
        %v2886 = vrot.slane %v379, %v2885
        %v2888 = vunpack.c.l.s4 1966171168
        %v2889 = vunpack.c.0.s8 %v2888
        %v2890 = vlaneseq
        %v2891 = vshrl.u32 %v2890, 7
        %v2892 = vsub.s32 %v2889, %v2891
        %v2893 = vrot.slane %v2886, %v2892
        %v2895 = vunpack.c.l.s4 1966171168
        %v2896 = vunpack.c.0.s8 %v2895
        %v2897 = vlaneseq
        %v2898 = vshrl.u32 %v2897, 7
        %v2899 = vsub.s32 %v2896, %v2898
        %v2900 = vrot.slane %v380, %v2899
        %v2902 = vunpack.c.l.s4 1966171168
        %v2903 = vunpack.c.0.s8 %v2902
        %v2904 = vlaneseq
        %v2905 = vshrl.u32 %v2904, 7
        %v2906 = vsub.s32 %v2903, %v2905
        %v2907 = vrot.slane %v2900, %v2906
        %v2909 = vunpack.c.l.s4 1966171168
        %v2910 = vunpack.c.0.s8 %v2909
        %v2911 = vlaneseq
        %v2912 = vshrl.u32 %v2911, 7
        %v2913 = vsub.s32 %v2910, %v2912
        %v2914 = vrot.slane %v381, %v2913
        %v2916 = vunpack.c.l.s4 1966171168
        %v2917 = vunpack.c.0.s8 %v2916
        %v2918 = vlaneseq
        %v2919 = vshrl.u32 %v2918, 7
        %v2920 = vsub.s32 %v2917, %v2919
        %v2921 = vrot.slane %v2914, %v2920
        %v2923 = vunpack.c.l.s4 1966171168
        %v2924 = vunpack.c.0.s8 %v2923
        %v2925 = vlaneseq
        %v2926 = vshrl.u32 %v2925, 7
        %v2927 = vsub.s32 %v2924, %v2926
        %v2928 = vrot.slane %v382, %v2927
        %v2930 = vunpack.c.l.s4 1966171168
        %v2931 = vunpack.c.0.s8 %v2930
        %v2932 = vlaneseq
        %v2933 = vshrl.u32 %v2932, 7
        %v2934 = vsub.s32 %v2931, %v2933
        %v2935 = vrot.slane %v2928, %v2934
        %v2936 = vunpack.c.l.b16 %v2445
        %v2937 = vunpack.c.l.b16 %v2459
        %v2938 = vunpack.c.l.b16 %v2473
        %v2939 = vunpack.c.l.b16 %v2487
        %v2940 = vunpack.c.l.b16 %v2501
        %v2941 = vunpack.c.l.b16 %v2515
        %v2942 = vunpack.c.l.b16 %v2529
        %v2943 = vunpack.c.l.b16 %v2543
        %v2944 = vunpack.c.l.b16 %v2557
        %v2945 = vunpack.c.l.b16 %v2571
        %v2946 = vunpack.c.l.b16 %v2585
        %v2947 = vunpack.c.l.b16 %v2599
        %v2948 = vunpack.c.l.b16 %v2613
        %v2949 = vunpack.c.l.b16 %v2627
        %v2950 = vunpack.c.l.b16 %v2641
        %v2951 = vunpack.c.l.b16 %v2655
        %v2952 = vunpack.c.l.b16 %v2669
        %v2953 = vunpack.c.l.b16 %v2683
        %v2954 = vunpack.c.l.b16 %v2697
        %v2955 = vunpack.c.l.b16 %v2711
        %v2956 = vunpack.c.l.b16 %v2725
        %v2957 = vunpack.c.l.b16 %v2739
        %v2958 = vunpack.c.l.b16 %v2753
        %v2959 = vunpack.c.l.b16 %v2767
        %v2960 = vunpack.c.l.b16 %v2781
        %v2961 = vunpack.c.l.b16 %v2795
        %v2962 = vunpack.c.l.b16 %v2809
        %v2963 = vunpack.c.l.b16 %v2823
        %v2964 = vunpack.c.l.b16 %v2837
        %v2965 = vunpack.c.l.b16 %v2851
        %v2966 = vunpack.c.l.b16 %v2865
        %v2967 = vunpack.c.l.b16 %v2879
        %v2968 = vunpack.c.l.b16 %v2893
        %v2969 = vunpack.c.l.b16 %v2907
        %v2970 = vunpack.c.l.b16 %v2921
        %v2971 = vunpack.c.l.b16 %v2935
        %v2972 = vrot.slane %v2937, 7
        %v2973 = vsel %vm1034, %v2972, %v2936
        %v2974 = vrot.slane %v2938, 6
        %v2975 = vsel %vm1037, %v2974, %v2973
        %v2976 = vrot.slane %v2939, 5
        %v2977 = vsel %vm1040, %v2976, %v2975
        %v2978 = vrot.slane %v2940, 4
        %v2979 = vsel %vm1043, %v2978, %v2977
        %v2980 = vrot.slane %v2941, 3
        %v2981 = vsel %vm1046, %v2980, %v2979
        %v2982 = vrot.slane %v2942, 2
        %v2983 = vsel %vm1049, %v2982, %v2981
        %v2984 = vrot.slane %v2943, 1
        %v2985 = vsel %vm1052, %v2984, %v2983
        %v2986 = vrot.slane %v2945, 7
        %v2987 = vsel %vm1034, %v2986, %v2944
        %v2988 = vrot.slane %v2946, 6
        %v2989 = vsel %vm1037, %v2988, %v2987
        %v2990 = vrot.slane %v2947, 5
        %v2991 = vsel %vm1040, %v2990, %v2989
        %v2992 = vrot.slane %v2948, 4
        %v2993 = vsel %vm1043, %v2992, %v2991
        %v2994 = vrot.slane %v2949, 3
        %v2995 = vsel %vm1046, %v2994, %v2993
        %v2996 = vrot.slane %v2950, 2
        %v2997 = vsel %vm1049, %v2996, %v2995
        %v2998 = vrot.slane %v2951, 1
        %v2999 = vsel %vm1052, %v2998, %v2997
        %v3000 = vrot.slane %v2953, 7
        %v3001 = vsel %vm1034, %v3000, %v2952
        %v3002 = vrot.slane %v2954, 6
        %v3003 = vsel %vm1037, %v3002, %v3001
        %v3004 = vrot.slane %v2955, 5
        %v3005 = vsel %vm1040, %v3004, %v3003
        %v3006 = vrot.slane %v2956, 4
        %v3007 = vsel %vm1043, %v3006, %v3005
        %v3008 = vrot.slane %v2957, 3
        %v3009 = vsel %vm1046, %v3008, %v3007
        %v3010 = vrot.slane %v2958, 2
        %v3011 = vsel %vm1049, %v3010, %v3009
        %v3012 = vrot.slane %v2959, 1
        %v3013 = vsel %vm1052, %v3012, %v3011
        %v3014 = vrot.slane %v2961, 7
        %v3015 = vsel %vm1034, %v3014, %v2960
        %v3016 = vrot.slane %v2962, 6
        %v3017 = vsel %vm1037, %v3016, %v3015
        %v3018 = vrot.slane %v2963, 5
        %v3019 = vsel %vm1040, %v3018, %v3017
        %v3020 = vrot.slane %v2964, 4
        %v3021 = vsel %vm1043, %v3020, %v3019
        %v3022 = vrot.slane %v2965, 3
        %v3023 = vsel %vm1046, %v3022, %v3021
        %v3024 = vrot.slane %v2966, 2
        %v3025 = vsel %vm1049, %v3024, %v3023
        %v3026 = vrot.slane %v2967, 1
        %v3027 = vsel %vm1052, %v3026, %v3025
        %v3028 = vrot.slane %v2969, 7
        %v3029 = vsel %vm1034, %v3028, %v2968
        %v3030 = vrot.slane %v2970, 6
        %v3031 = vsel %vm1037, %v3030, %v3029
        %v3032 = vrot.slane %v2971, 5
        %v3033 = vsel %vm1040, %v3032, %v3031
        %v3034 = vpack.c.b16 %v2999, %v2985
        %v3035 = vpack.c.b16 %v3027, %v3013
        %v3036 = vpack.c.b16 %v3033, %v3033
        %v3077 = vunpack.c.l.s4 1966171168
        %v3078 = vunpack.c.0.s8 %v3077
        %v3079 = vlaneseq
        %v3080 = vshrl.u32 %v3079, 7
        %v3081 = vsub.s32 %v3078, %v3080
        %v3082 = vrot.slane %v384, %v3081
        %v3084 = vunpack.c.l.s4 1966171168
        %v3085 = vunpack.c.0.s8 %v3084
        %v3086 = vlaneseq
        %v3087 = vshrl.u32 %v3086, 7
        %v3088 = vsub.s32 %v3085, %v3087
        %v3089 = vrot.slane %v3082, %v3088
        %v3091 = vunpack.c.l.s4 1966171168
        %v3092 = vunpack.c.0.s8 %v3091
        %v3093 = vlaneseq
        %v3094 = vshrl.u32 %v3093, 7
        %v3095 = vsub.s32 %v3092, %v3094
        %v3096 = vrot.slane %v385, %v3095
        %v3098 = vunpack.c.l.s4 1966171168
        %v3099 = vunpack.c.0.s8 %v3098
        %v3100 = vlaneseq
        %v3101 = vshrl.u32 %v3100, 7
        %v3102 = vsub.s32 %v3099, %v3101
        %v3103 = vrot.slane %v3096, %v3102
        %v3105 = vunpack.c.l.s4 1966171168
        %v3106 = vunpack.c.0.s8 %v3105
        %v3107 = vlaneseq
        %v3108 = vshrl.u32 %v3107, 7
        %v3109 = vsub.s32 %v3106, %v3108
        %v3110 = vrot.slane %v386, %v3109
        %v3112 = vunpack.c.l.s4 1966171168
        %v3113 = vunpack.c.0.s8 %v3112
        %v3114 = vlaneseq
        %v3115 = vshrl.u32 %v3114, 7
        %v3116 = vsub.s32 %v3113, %v3115
        %v3117 = vrot.slane %v3110, %v3116
        %v3119 = vunpack.c.l.s4 1966171168
        %v3120 = vunpack.c.0.s8 %v3119
        %v3121 = vlaneseq
        %v3122 = vshrl.u32 %v3121, 7
        %v3123 = vsub.s32 %v3120, %v3122
        %v3124 = vrot.slane %v387, %v3123
        %v3126 = vunpack.c.l.s4 1966171168
        %v3127 = vunpack.c.0.s8 %v3126
        %v3128 = vlaneseq
        %v3129 = vshrl.u32 %v3128, 7
        %v3130 = vsub.s32 %v3127, %v3129
        %v3131 = vrot.slane %v3124, %v3130
        %v3133 = vunpack.c.l.s4 1966171168
        %v3134 = vunpack.c.0.s8 %v3133
        %v3135 = vlaneseq
        %v3136 = vshrl.u32 %v3135, 7
        %v3137 = vsub.s32 %v3134, %v3136
        %v3138 = vrot.slane %v388, %v3137
        %v3140 = vunpack.c.l.s4 1966171168
        %v3141 = vunpack.c.0.s8 %v3140
        %v3142 = vlaneseq
        %v3143 = vshrl.u32 %v3142, 7
        %v3144 = vsub.s32 %v3141, %v3143
        %v3145 = vrot.slane %v3138, %v3144
        %v3147 = vunpack.c.l.s4 1966171168
        %v3148 = vunpack.c.0.s8 %v3147
        %v3149 = vlaneseq
        %v3150 = vshrl.u32 %v3149, 7
        %v3151 = vsub.s32 %v3148, %v3150
        %v3152 = vrot.slane %v389, %v3151
        %v3154 = vunpack.c.l.s4 1966171168
        %v3155 = vunpack.c.0.s8 %v3154
        %v3156 = vlaneseq
        %v3157 = vshrl.u32 %v3156, 7
        %v3158 = vsub.s32 %v3155, %v3157
        %v3159 = vrot.slane %v3152, %v3158
        %v3161 = vunpack.c.l.s4 1966171168
        %v3162 = vunpack.c.0.s8 %v3161
        %v3163 = vlaneseq
        %v3164 = vshrl.u32 %v3163, 7
        %v3165 = vsub.s32 %v3162, %v3164
        %v3166 = vrot.slane %v390, %v3165
        %v3168 = vunpack.c.l.s4 1966171168
        %v3169 = vunpack.c.0.s8 %v3168
        %v3170 = vlaneseq
        %v3171 = vshrl.u32 %v3170, 7
        %v3172 = vsub.s32 %v3169, %v3171
        %v3173 = vrot.slane %v3166, %v3172
        %v3175 = vunpack.c.l.s4 1966171168
        %v3176 = vunpack.c.0.s8 %v3175
        %v3177 = vlaneseq
        %v3178 = vshrl.u32 %v3177, 7
        %v3179 = vsub.s32 %v3176, %v3178
        %v3180 = vrot.slane %v391, %v3179
        %v3182 = vunpack.c.l.s4 1966171168
        %v3183 = vunpack.c.0.s8 %v3182
        %v3184 = vlaneseq
        %v3185 = vshrl.u32 %v3184, 7
        %v3186 = vsub.s32 %v3183, %v3185
        %v3187 = vrot.slane %v3180, %v3186
        %v3189 = vunpack.c.l.s4 1966171168
        %v3190 = vunpack.c.0.s8 %v3189
        %v3191 = vlaneseq
        %v3192 = vshrl.u32 %v3191, 7
        %v3193 = vsub.s32 %v3190, %v3192
        %v3194 = vrot.slane %v392, %v3193
        %v3196 = vunpack.c.l.s4 1966171168
        %v3197 = vunpack.c.0.s8 %v3196
        %v3198 = vlaneseq
        %v3199 = vshrl.u32 %v3198, 7
        %v3200 = vsub.s32 %v3197, %v3199
        %v3201 = vrot.slane %v3194, %v3200
        %v3203 = vunpack.c.l.s4 1966171168
        %v3204 = vunpack.c.0.s8 %v3203
        %v3205 = vlaneseq
        %v3206 = vshrl.u32 %v3205, 7
        %v3207 = vsub.s32 %v3204, %v3206
        %v3208 = vrot.slane %v393, %v3207
        %v3210 = vunpack.c.l.s4 1966171168
        %v3211 = vunpack.c.0.s8 %v3210
        %v3212 = vlaneseq
        %v3213 = vshrl.u32 %v3212, 7
        %v3214 = vsub.s32 %v3211, %v3213
        %v3215 = vrot.slane %v3208, %v3214
        %v3217 = vunpack.c.l.s4 1966171168
        %v3218 = vunpack.c.0.s8 %v3217
        %v3219 = vlaneseq
        %v3220 = vshrl.u32 %v3219, 7
        %v3221 = vsub.s32 %v3218, %v3220
        %v3222 = vrot.slane %v394, %v3221
        %v3224 = vunpack.c.l.s4 1966171168
        %v3225 = vunpack.c.0.s8 %v3224
        %v3226 = vlaneseq
        %v3227 = vshrl.u32 %v3226, 7
        %v3228 = vsub.s32 %v3225, %v3227
        %v3229 = vrot.slane %v3222, %v3228
        %v3231 = vunpack.c.l.s4 1966171168
        %v3232 = vunpack.c.0.s8 %v3231
        %v3233 = vlaneseq
        %v3234 = vshrl.u32 %v3233, 7
        %v3235 = vsub.s32 %v3232, %v3234
        %v3236 = vrot.slane %v395, %v3235
        %v3238 = vunpack.c.l.s4 1966171168
        %v3239 = vunpack.c.0.s8 %v3238
        %v3240 = vlaneseq
        %v3241 = vshrl.u32 %v3240, 7
        %v3242 = vsub.s32 %v3239, %v3241
        %v3243 = vrot.slane %v3236, %v3242
        %v3245 = vunpack.c.l.s4 1966171168
        %v3246 = vunpack.c.0.s8 %v3245
        %v3247 = vlaneseq
        %v3248 = vshrl.u32 %v3247, 7
        %v3249 = vsub.s32 %v3246, %v3248
        %v3250 = vrot.slane %v396, %v3249
        %v3252 = vunpack.c.l.s4 1966171168
        %v3253 = vunpack.c.0.s8 %v3252
        %v3254 = vlaneseq
        %v3255 = vshrl.u32 %v3254, 7
        %v3256 = vsub.s32 %v3253, %v3255
        %v3257 = vrot.slane %v3250, %v3256
        %v3259 = vunpack.c.l.s4 1966171168
        %v3260 = vunpack.c.0.s8 %v3259
        %v3261 = vlaneseq
        %v3262 = vshrl.u32 %v3261, 7
        %v3263 = vsub.s32 %v3260, %v3262
        %v3264 = vrot.slane %v397, %v3263
        %v3266 = vunpack.c.l.s4 1966171168
        %v3267 = vunpack.c.0.s8 %v3266
        %v3268 = vlaneseq
        %v3269 = vshrl.u32 %v3268, 7
        %v3270 = vsub.s32 %v3267, %v3269
        %v3271 = vrot.slane %v3264, %v3270
        %v3273 = vunpack.c.l.s4 1966171168
        %v3274 = vunpack.c.0.s8 %v3273
        %v3275 = vlaneseq
        %v3276 = vshrl.u32 %v3275, 7
        %v3277 = vsub.s32 %v3274, %v3276
        %v3278 = vrot.slane %v398, %v3277
        %v3280 = vunpack.c.l.s4 1966171168
        %v3281 = vunpack.c.0.s8 %v3280
        %v3282 = vlaneseq
        %v3283 = vshrl.u32 %v3282, 7
        %v3284 = vsub.s32 %v3281, %v3283
        %v3285 = vrot.slane %v3278, %v3284
        %v3287 = vunpack.c.l.s4 1966171168
        %v3288 = vunpack.c.0.s8 %v3287
        %v3289 = vlaneseq
        %v3290 = vshrl.u32 %v3289, 7
        %v3291 = vsub.s32 %v3288, %v3290
        %v3292 = vrot.slane %v399, %v3291
        %v3294 = vunpack.c.l.s4 1966171168
        %v3295 = vunpack.c.0.s8 %v3294
        %v3296 = vlaneseq
        %v3297 = vshrl.u32 %v3296, 7
        %v3298 = vsub.s32 %v3295, %v3297
        %v3299 = vrot.slane %v3292, %v3298
        %v3301 = vunpack.c.l.s4 1966171168
        %v3302 = vunpack.c.0.s8 %v3301
        %v3303 = vlaneseq
        %v3304 = vshrl.u32 %v3303, 7
        %v3305 = vsub.s32 %v3302, %v3304
        %v3306 = vrot.slane %v400, %v3305
        %v3308 = vunpack.c.l.s4 1966171168
        %v3309 = vunpack.c.0.s8 %v3308
        %v3310 = vlaneseq
        %v3311 = vshrl.u32 %v3310, 7
        %v3312 = vsub.s32 %v3309, %v3311
        %v3313 = vrot.slane %v3306, %v3312
        %v3315 = vunpack.c.l.s4 1966171168
        %v3316 = vunpack.c.0.s8 %v3315
        %v3317 = vlaneseq
        %v3318 = vshrl.u32 %v3317, 7
        %v3319 = vsub.s32 %v3316, %v3318
        %v3320 = vrot.slane %v401, %v3319
        %v3322 = vunpack.c.l.s4 1966171168
        %v3323 = vunpack.c.0.s8 %v3322
        %v3324 = vlaneseq
        %v3325 = vshrl.u32 %v3324, 7
        %v3326 = vsub.s32 %v3323, %v3325
        %v3327 = vrot.slane %v3320, %v3326
        %v3329 = vunpack.c.l.s4 1966171168
        %v3330 = vunpack.c.0.s8 %v3329
        %v3331 = vlaneseq
        %v3332 = vshrl.u32 %v3331, 7
        %v3333 = vsub.s32 %v3330, %v3332
        %v3334 = vrot.slane %v402, %v3333
        %v3336 = vunpack.c.l.s4 1966171168
        %v3337 = vunpack.c.0.s8 %v3336
        %v3338 = vlaneseq
        %v3339 = vshrl.u32 %v3338, 7
        %v3340 = vsub.s32 %v3337, %v3339
        %v3341 = vrot.slane %v3334, %v3340
        %v3343 = vunpack.c.l.s4 1966171168
        %v3344 = vunpack.c.0.s8 %v3343
        %v3345 = vlaneseq
        %v3346 = vshrl.u32 %v3345, 7
        %v3347 = vsub.s32 %v3344, %v3346
        %v3348 = vrot.slane %v403, %v3347
        %v3350 = vunpack.c.l.s4 1966171168
        %v3351 = vunpack.c.0.s8 %v3350
        %v3352 = vlaneseq
        %v3353 = vshrl.u32 %v3352, 7
        %v3354 = vsub.s32 %v3351, %v3353
        %v3355 = vrot.slane %v3348, %v3354
        %v3357 = vunpack.c.l.s4 1966171168
        %v3358 = vunpack.c.0.s8 %v3357
        %v3359 = vlaneseq
        %v3360 = vshrl.u32 %v3359, 7
        %v3361 = vsub.s32 %v3358, %v3360
        %v3362 = vrot.slane %v404, %v3361
        %v3364 = vunpack.c.l.s4 1966171168
        %v3365 = vunpack.c.0.s8 %v3364
        %v3366 = vlaneseq
        %v3367 = vshrl.u32 %v3366, 7
        %v3368 = vsub.s32 %v3365, %v3367
        %v3369 = vrot.slane %v3362, %v3368
        %v3371 = vunpack.c.l.s4 1966171168
        %v3372 = vunpack.c.0.s8 %v3371
        %v3373 = vlaneseq
        %v3374 = vshrl.u32 %v3373, 7
        %v3375 = vsub.s32 %v3372, %v3374
        %v3376 = vrot.slane %v405, %v3375
        %v3378 = vunpack.c.l.s4 1966171168
        %v3379 = vunpack.c.0.s8 %v3378
        %v3380 = vlaneseq
        %v3381 = vshrl.u32 %v3380, 7
        %v3382 = vsub.s32 %v3379, %v3381
        %v3383 = vrot.slane %v3376, %v3382
        %v3385 = vunpack.c.l.s4 1966171168
        %v3386 = vunpack.c.0.s8 %v3385
        %v3387 = vlaneseq
        %v3388 = vshrl.u32 %v3387, 7
        %v3389 = vsub.s32 %v3386, %v3388
        %v3390 = vrot.slane %v406, %v3389
        %v3392 = vunpack.c.l.s4 1966171168
        %v3393 = vunpack.c.0.s8 %v3392
        %v3394 = vlaneseq
        %v3395 = vshrl.u32 %v3394, 7
        %v3396 = vsub.s32 %v3393, %v3395
        %v3397 = vrot.slane %v3390, %v3396
        %v3399 = vunpack.c.l.s4 1966171168
        %v3400 = vunpack.c.0.s8 %v3399
        %v3401 = vlaneseq
        %v3402 = vshrl.u32 %v3401, 7
        %v3403 = vsub.s32 %v3400, %v3402
        %v3404 = vrot.slane %v407, %v3403
        %v3406 = vunpack.c.l.s4 1966171168
        %v3407 = vunpack.c.0.s8 %v3406
        %v3408 = vlaneseq
        %v3409 = vshrl.u32 %v3408, 7
        %v3410 = vsub.s32 %v3407, %v3409
        %v3411 = vrot.slane %v3404, %v3410
        %v3413 = vunpack.c.l.s4 1966171168
        %v3414 = vunpack.c.0.s8 %v3413
        %v3415 = vlaneseq
        %v3416 = vshrl.u32 %v3415, 7
        %v3417 = vsub.s32 %v3414, %v3416
        %v3418 = vrot.slane %v408, %v3417
        %v3420 = vunpack.c.l.s4 1966171168
        %v3421 = vunpack.c.0.s8 %v3420
        %v3422 = vlaneseq
        %v3423 = vshrl.u32 %v3422, 7
        %v3424 = vsub.s32 %v3421, %v3423
        %v3425 = vrot.slane %v3418, %v3424
        %v3427 = vunpack.c.l.s4 1966171168
        %v3428 = vunpack.c.0.s8 %v3427
        %v3429 = vlaneseq
        %v3430 = vshrl.u32 %v3429, 7
        %v3431 = vsub.s32 %v3428, %v3430
        %v3432 = vrot.slane %v409, %v3431
        %v3434 = vunpack.c.l.s4 1966171168
        %v3435 = vunpack.c.0.s8 %v3434
        %v3436 = vlaneseq
        %v3437 = vshrl.u32 %v3436, 7
        %v3438 = vsub.s32 %v3435, %v3437
        %v3439 = vrot.slane %v3432, %v3438
        %v3441 = vunpack.c.l.s4 1966171168
        %v3442 = vunpack.c.0.s8 %v3441
        %v3443 = vlaneseq
        %v3444 = vshrl.u32 %v3443, 7
        %v3445 = vsub.s32 %v3442, %v3444
        %v3446 = vrot.slane %v410, %v3445
        %v3448 = vunpack.c.l.s4 1966171168
        %v3449 = vunpack.c.0.s8 %v3448
        %v3450 = vlaneseq
        %v3451 = vshrl.u32 %v3450, 7
        %v3452 = vsub.s32 %v3449, %v3451
        %v3453 = vrot.slane %v3446, %v3452
        %v3455 = vunpack.c.l.s4 1966171168
        %v3456 = vunpack.c.0.s8 %v3455
        %v3457 = vlaneseq
        %v3458 = vshrl.u32 %v3457, 7
        %v3459 = vsub.s32 %v3456, %v3458
        %v3460 = vrot.slane %v411, %v3459
        %v3462 = vunpack.c.l.s4 1966171168
        %v3463 = vunpack.c.0.s8 %v3462
        %v3464 = vlaneseq
        %v3465 = vshrl.u32 %v3464, 7
        %v3466 = vsub.s32 %v3463, %v3465
        %v3467 = vrot.slane %v3460, %v3466
        %v3469 = vunpack.c.l.s4 1966171168
        %v3470 = vunpack.c.0.s8 %v3469
        %v3471 = vlaneseq
        %v3472 = vshrl.u32 %v3471, 7
        %v3473 = vsub.s32 %v3470, %v3472
        %v3474 = vrot.slane %v412, %v3473
        %v3476 = vunpack.c.l.s4 1966171168
        %v3477 = vunpack.c.0.s8 %v3476
        %v3478 = vlaneseq
        %v3479 = vshrl.u32 %v3478, 7
        %v3480 = vsub.s32 %v3477, %v3479
        %v3481 = vrot.slane %v3474, %v3480
        %v3483 = vunpack.c.l.s4 1966171168
        %v3484 = vunpack.c.0.s8 %v3483
        %v3485 = vlaneseq
        %v3486 = vshrl.u32 %v3485, 7
        %v3487 = vsub.s32 %v3484, %v3486
        %v3488 = vrot.slane %v413, %v3487
        %v3490 = vunpack.c.l.s4 1966171168
        %v3491 = vunpack.c.0.s8 %v3490
        %v3492 = vlaneseq
        %v3493 = vshrl.u32 %v3492, 7
        %v3494 = vsub.s32 %v3491, %v3493
        %v3495 = vrot.slane %v3488, %v3494
        %v3497 = vunpack.c.l.s4 1966171168
        %v3498 = vunpack.c.0.s8 %v3497
        %v3499 = vlaneseq
        %v3500 = vshrl.u32 %v3499, 7
        %v3501 = vsub.s32 %v3498, %v3500
        %v3502 = vrot.slane %v414, %v3501
        %v3504 = vunpack.c.l.s4 1966171168
        %v3505 = vunpack.c.0.s8 %v3504
        %v3506 = vlaneseq
        %v3507 = vshrl.u32 %v3506, 7
        %v3508 = vsub.s32 %v3505, %v3507
        %v3509 = vrot.slane %v3502, %v3508
        %v3511 = vunpack.c.l.s4 1966171168
        %v3512 = vunpack.c.0.s8 %v3511
        %v3513 = vlaneseq
        %v3514 = vshrl.u32 %v3513, 7
        %v3515 = vsub.s32 %v3512, %v3514
        %v3516 = vrot.slane %v415, %v3515
        %v3518 = vunpack.c.l.s4 1966171168
        %v3519 = vunpack.c.0.s8 %v3518
        %v3520 = vlaneseq
        %v3521 = vshrl.u32 %v3520, 7
        %v3522 = vsub.s32 %v3519, %v3521
        %v3523 = vrot.slane %v3516, %v3522
        %v3525 = vunpack.c.l.s4 1966171168
        %v3526 = vunpack.c.0.s8 %v3525
        %v3527 = vlaneseq
        %v3528 = vshrl.u32 %v3527, 7
        %v3529 = vsub.s32 %v3526, %v3528
        %v3530 = vrot.slane %v416, %v3529
        %v3532 = vunpack.c.l.s4 1966171168
        %v3533 = vunpack.c.0.s8 %v3532
        %v3534 = vlaneseq
        %v3535 = vshrl.u32 %v3534, 7
        %v3536 = vsub.s32 %v3533, %v3535
        %v3537 = vrot.slane %v3530, %v3536
        %v3539 = vunpack.c.l.s4 1966171168
        %v3540 = vunpack.c.0.s8 %v3539
        %v3541 = vlaneseq
        %v3542 = vshrl.u32 %v3541, 7
        %v3543 = vsub.s32 %v3540, %v3542
        %v3544 = vrot.slane %v417, %v3543
        %v3546 = vunpack.c.l.s4 1966171168
        %v3547 = vunpack.c.0.s8 %v3546
        %v3548 = vlaneseq
        %v3549 = vshrl.u32 %v3548, 7
        %v3550 = vsub.s32 %v3547, %v3549
        %v3551 = vrot.slane %v3544, %v3550
        %v3553 = vunpack.c.l.s4 1966171168
        %v3554 = vunpack.c.0.s8 %v3553
        %v3555 = vlaneseq
        %v3556 = vshrl.u32 %v3555, 7
        %v3557 = vsub.s32 %v3554, %v3556
        %v3558 = vrot.slane %v418, %v3557
        %v3560 = vunpack.c.l.s4 1966171168
        %v3561 = vunpack.c.0.s8 %v3560
        %v3562 = vlaneseq
        %v3563 = vshrl.u32 %v3562, 7
        %v3564 = vsub.s32 %v3561, %v3563
        %v3565 = vrot.slane %v3558, %v3564
        %v3567 = vunpack.c.l.s4 1966171168
        %v3568 = vunpack.c.0.s8 %v3567
        %v3569 = vlaneseq
        %v3570 = vshrl.u32 %v3569, 7
        %v3571 = vsub.s32 %v3568, %v3570
        %v3572 = vrot.slane %v419, %v3571
        %v3574 = vunpack.c.l.s4 1966171168
        %v3575 = vunpack.c.0.s8 %v3574
        %v3576 = vlaneseq
        %v3577 = vshrl.u32 %v3576, 7
        %v3578 = vsub.s32 %v3575, %v3577
        %v3579 = vrot.slane %v3572, %v3578
        %v3580 = vunpack.c.l.b16 %v3089
        %v3581 = vunpack.c.l.b16 %v3103
        %v3582 = vunpack.c.l.b16 %v3117
        %v3583 = vunpack.c.l.b16 %v3131
        %v3584 = vunpack.c.l.b16 %v3145
        %v3585 = vunpack.c.l.b16 %v3159
        %v3586 = vunpack.c.l.b16 %v3173
        %v3587 = vunpack.c.l.b16 %v3187
        %v3588 = vunpack.c.l.b16 %v3201
        %v3589 = vunpack.c.l.b16 %v3215
        %v3590 = vunpack.c.l.b16 %v3229
        %v3591 = vunpack.c.l.b16 %v3243
        %v3592 = vunpack.c.l.b16 %v3257
        %v3593 = vunpack.c.l.b16 %v3271
        %v3594 = vunpack.c.l.b16 %v3285
        %v3595 = vunpack.c.l.b16 %v3299
        %v3596 = vunpack.c.l.b16 %v3313
        %v3597 = vunpack.c.l.b16 %v3327
        %v3598 = vunpack.c.l.b16 %v3341
        %v3599 = vunpack.c.l.b16 %v3355
        %v3600 = vunpack.c.l.b16 %v3369
        %v3601 = vunpack.c.l.b16 %v3383
        %v3602 = vunpack.c.l.b16 %v3397
        %v3603 = vunpack.c.l.b16 %v3411
        %v3604 = vunpack.c.l.b16 %v3425
        %v3605 = vunpack.c.l.b16 %v3439
        %v3606 = vunpack.c.l.b16 %v3453
        %v3607 = vunpack.c.l.b16 %v3467
        %v3608 = vunpack.c.l.b16 %v3481
        %v3609 = vunpack.c.l.b16 %v3495
        %v3610 = vunpack.c.l.b16 %v3509
        %v3611 = vunpack.c.l.b16 %v3523
        %v3612 = vunpack.c.l.b16 %v3537
        %v3613 = vunpack.c.l.b16 %v3551
        %v3614 = vunpack.c.l.b16 %v3565
        %v3615 = vunpack.c.l.b16 %v3579
        %v3616 = vrot.slane %v3581, 7
        %v3617 = vsel %vm1034, %v3616, %v3580
        %v3618 = vrot.slane %v3582, 6
        %v3619 = vsel %vm1037, %v3618, %v3617
        %v3620 = vrot.slane %v3583, 5
        %v3621 = vsel %vm1040, %v3620, %v3619
        %v3622 = vrot.slane %v3584, 4
        %v3623 = vsel %vm1043, %v3622, %v3621
        %v3624 = vrot.slane %v3585, 3
        %v3625 = vsel %vm1046, %v3624, %v3623
        %v3626 = vrot.slane %v3586, 2
        %v3627 = vsel %vm1049, %v3626, %v3625
        %v3628 = vrot.slane %v3587, 1
        %v3629 = vsel %vm1052, %v3628, %v3627
        %v3630 = vrot.slane %v3589, 7
        %v3631 = vsel %vm1034, %v3630, %v3588
        %v3632 = vrot.slane %v3590, 6
        %v3633 = vsel %vm1037, %v3632, %v3631
        %v3634 = vrot.slane %v3591, 5
        %v3635 = vsel %vm1040, %v3634, %v3633
        %v3636 = vrot.slane %v3592, 4
        %v3637 = vsel %vm1043, %v3636, %v3635
        %v3638 = vrot.slane %v3593, 3
        %v3639 = vsel %vm1046, %v3638, %v3637
        %v3640 = vrot.slane %v3594, 2
        %v3641 = vsel %vm1049, %v3640, %v3639
        %v3642 = vrot.slane %v3595, 1
        %v3643 = vsel %vm1052, %v3642, %v3641
        %v3644 = vrot.slane %v3597, 7
        %v3645 = vsel %vm1034, %v3644, %v3596
        %v3646 = vrot.slane %v3598, 6
        %v3647 = vsel %vm1037, %v3646, %v3645
        %v3648 = vrot.slane %v3599, 5
        %v3649 = vsel %vm1040, %v3648, %v3647
        %v3650 = vrot.slane %v3600, 4
        %v3651 = vsel %vm1043, %v3650, %v3649
        %v3652 = vrot.slane %v3601, 3
        %v3653 = vsel %vm1046, %v3652, %v3651
        %v3654 = vrot.slane %v3602, 2
        %v3655 = vsel %vm1049, %v3654, %v3653
        %v3656 = vrot.slane %v3603, 1
        %v3657 = vsel %vm1052, %v3656, %v3655
        %v3658 = vrot.slane %v3605, 7
        %v3659 = vsel %vm1034, %v3658, %v3604
        %v3660 = vrot.slane %v3606, 6
        %v3661 = vsel %vm1037, %v3660, %v3659
        %v3662 = vrot.slane %v3607, 5
        %v3663 = vsel %vm1040, %v3662, %v3661
        %v3664 = vrot.slane %v3608, 4
        %v3665 = vsel %vm1043, %v3664, %v3663
        %v3666 = vrot.slane %v3609, 3
        %v3667 = vsel %vm1046, %v3666, %v3665
        %v3668 = vrot.slane %v3610, 2
        %v3669 = vsel %vm1049, %v3668, %v3667
        %v3670 = vrot.slane %v3611, 1
        %v3671 = vsel %vm1052, %v3670, %v3669
        %v3672 = vrot.slane %v3613, 7
        %v3673 = vsel %vm1034, %v3672, %v3612
        %v3674 = vrot.slane %v3614, 6
        %v3675 = vsel %vm1037, %v3674, %v3673
        %v3676 = vrot.slane %v3615, 5
        %v3677 = vsel %vm1040, %v3676, %v3675
        %v3678 = vpack.c.b16 %v3643, %v3629
        %v3679 = vpack.c.b16 %v3671, %v3657
        %v3680 = vpack.c.b16 %v3677, %v3677
        %v3721 = vunpack.c.l.s4 1966171168
        %v3722 = vunpack.c.0.s8 %v3721
        %v3723 = vlaneseq
        %v3724 = vshrl.u32 %v3723, 7
        %v3725 = vsub.s32 %v3722, %v3724
        %v3726 = vrot.slane %v421, %v3725
        %v3728 = vunpack.c.l.s4 1966171168
        %v3729 = vunpack.c.0.s8 %v3728
        %v3730 = vlaneseq
        %v3731 = vshrl.u32 %v3730, 7
        %v3732 = vsub.s32 %v3729, %v3731
        %v3733 = vrot.slane %v3726, %v3732
        %v3735 = vunpack.c.l.s4 1966171168
        %v3736 = vunpack.c.0.s8 %v3735
        %v3737 = vlaneseq
        %v3738 = vshrl.u32 %v3737, 7
        %v3739 = vsub.s32 %v3736, %v3738
        %v3740 = vrot.slane %v422, %v3739
        %v3742 = vunpack.c.l.s4 1966171168
        %v3743 = vunpack.c.0.s8 %v3742
        %v3744 = vlaneseq
        %v3745 = vshrl.u32 %v3744, 7
        %v3746 = vsub.s32 %v3743, %v3745
        %v3747 = vrot.slane %v3740, %v3746
        %v3749 = vunpack.c.l.s4 1966171168
        %v3750 = vunpack.c.0.s8 %v3749
        %v3751 = vlaneseq
        %v3752 = vshrl.u32 %v3751, 7
        %v3753 = vsub.s32 %v3750, %v3752
        %v3754 = vrot.slane %v423, %v3753
        %v3756 = vunpack.c.l.s4 1966171168
        %v3757 = vunpack.c.0.s8 %v3756
        %v3758 = vlaneseq
        %v3759 = vshrl.u32 %v3758, 7
        %v3760 = vsub.s32 %v3757, %v3759
        %v3761 = vrot.slane %v3754, %v3760
        %v3763 = vunpack.c.l.s4 1966171168
        %v3764 = vunpack.c.0.s8 %v3763
        %v3765 = vlaneseq
        %v3766 = vshrl.u32 %v3765, 7
        %v3767 = vsub.s32 %v3764, %v3766
        %v3768 = vrot.slane %v424, %v3767
        %v3770 = vunpack.c.l.s4 1966171168
        %v3771 = vunpack.c.0.s8 %v3770
        %v3772 = vlaneseq
        %v3773 = vshrl.u32 %v3772, 7
        %v3774 = vsub.s32 %v3771, %v3773
        %v3775 = vrot.slane %v3768, %v3774
        %v3777 = vunpack.c.l.s4 1966171168
        %v3778 = vunpack.c.0.s8 %v3777
        %v3779 = vlaneseq
        %v3780 = vshrl.u32 %v3779, 7
        %v3781 = vsub.s32 %v3778, %v3780
        %v3782 = vrot.slane %v425, %v3781
        %v3784 = vunpack.c.l.s4 1966171168
        %v3785 = vunpack.c.0.s8 %v3784
        %v3786 = vlaneseq
        %v3787 = vshrl.u32 %v3786, 7
        %v3788 = vsub.s32 %v3785, %v3787
        %v3789 = vrot.slane %v3782, %v3788
        %v3791 = vunpack.c.l.s4 1966171168
        %v3792 = vunpack.c.0.s8 %v3791
        %v3793 = vlaneseq
        %v3794 = vshrl.u32 %v3793, 7
        %v3795 = vsub.s32 %v3792, %v3794
        %v3796 = vrot.slane %v426, %v3795
        %v3798 = vunpack.c.l.s4 1966171168
        %v3799 = vunpack.c.0.s8 %v3798
        %v3800 = vlaneseq
        %v3801 = vshrl.u32 %v3800, 7
        %v3802 = vsub.s32 %v3799, %v3801
        %v3803 = vrot.slane %v3796, %v3802
        %v3805 = vunpack.c.l.s4 1966171168
        %v3806 = vunpack.c.0.s8 %v3805
        %v3807 = vlaneseq
        %v3808 = vshrl.u32 %v3807, 7
        %v3809 = vsub.s32 %v3806, %v3808
        %v3810 = vrot.slane %v427, %v3809
        %v3812 = vunpack.c.l.s4 1966171168
        %v3813 = vunpack.c.0.s8 %v3812
        %v3814 = vlaneseq
        %v3815 = vshrl.u32 %v3814, 7
        %v3816 = vsub.s32 %v3813, %v3815
        %v3817 = vrot.slane %v3810, %v3816
        %v3819 = vunpack.c.l.s4 1966171168
        %v3820 = vunpack.c.0.s8 %v3819
        %v3821 = vlaneseq
        %v3822 = vshrl.u32 %v3821, 7
        %v3823 = vsub.s32 %v3820, %v3822
        %v3824 = vrot.slane %v428, %v3823
        %v3826 = vunpack.c.l.s4 1966171168
        %v3827 = vunpack.c.0.s8 %v3826
        %v3828 = vlaneseq
        %v3829 = vshrl.u32 %v3828, 7
        %v3830 = vsub.s32 %v3827, %v3829
        %v3831 = vrot.slane %v3824, %v3830
        %v3833 = vunpack.c.l.s4 1966171168
        %v3834 = vunpack.c.0.s8 %v3833
        %v3835 = vlaneseq
        %v3836 = vshrl.u32 %v3835, 7
        %v3837 = vsub.s32 %v3834, %v3836
        %v3838 = vrot.slane %v429, %v3837
        %v3840 = vunpack.c.l.s4 1966171168
        %v3841 = vunpack.c.0.s8 %v3840
        %v3842 = vlaneseq
        %v3843 = vshrl.u32 %v3842, 7
        %v3844 = vsub.s32 %v3841, %v3843
        %v3845 = vrot.slane %v3838, %v3844
        %v3847 = vunpack.c.l.s4 1966171168
        %v3848 = vunpack.c.0.s8 %v3847
        %v3849 = vlaneseq
        %v3850 = vshrl.u32 %v3849, 7
        %v3851 = vsub.s32 %v3848, %v3850
        %v3852 = vrot.slane %v430, %v3851
        %v3854 = vunpack.c.l.s4 1966171168
        %v3855 = vunpack.c.0.s8 %v3854
        %v3856 = vlaneseq
        %v3857 = vshrl.u32 %v3856, 7
        %v3858 = vsub.s32 %v3855, %v3857
        %v3859 = vrot.slane %v3852, %v3858
        %v3861 = vunpack.c.l.s4 1966171168
        %v3862 = vunpack.c.0.s8 %v3861
        %v3863 = vlaneseq
        %v3864 = vshrl.u32 %v3863, 7
        %v3865 = vsub.s32 %v3862, %v3864
        %v3866 = vrot.slane %v431, %v3865
        %v3868 = vunpack.c.l.s4 1966171168
        %v3869 = vunpack.c.0.s8 %v3868
        %v3870 = vlaneseq
        %v3871 = vshrl.u32 %v3870, 7
        %v3872 = vsub.s32 %v3869, %v3871
        %v3873 = vrot.slane %v3866, %v3872
        %v3875 = vunpack.c.l.s4 1966171168
        %v3876 = vunpack.c.0.s8 %v3875
        %v3877 = vlaneseq
        %v3878 = vshrl.u32 %v3877, 7
        %v3879 = vsub.s32 %v3876, %v3878
        %v3880 = vrot.slane %v432, %v3879
        %v3882 = vunpack.c.l.s4 1966171168
        %v3883 = vunpack.c.0.s8 %v3882
        %v3884 = vlaneseq
        %v3885 = vshrl.u32 %v3884, 7
        %v3886 = vsub.s32 %v3883, %v3885
        %v3887 = vrot.slane %v3880, %v3886
        %v3889 = vunpack.c.l.s4 1966171168
        %v3890 = vunpack.c.0.s8 %v3889
        %v3891 = vlaneseq
        %v3892 = vshrl.u32 %v3891, 7
        %v3893 = vsub.s32 %v3890, %v3892
        %v3894 = vrot.slane %v433, %v3893
        %v3896 = vunpack.c.l.s4 1966171168
        %v3897 = vunpack.c.0.s8 %v3896
        %v3898 = vlaneseq
        %v3899 = vshrl.u32 %v3898, 7
        %v3900 = vsub.s32 %v3897, %v3899
        %v3901 = vrot.slane %v3894, %v3900
        %v3903 = vunpack.c.l.s4 1966171168
        %v3904 = vunpack.c.0.s8 %v3903
        %v3905 = vlaneseq
        %v3906 = vshrl.u32 %v3905, 7
        %v3907 = vsub.s32 %v3904, %v3906
        %v3908 = vrot.slane %v434, %v3907
        %v3910 = vunpack.c.l.s4 1966171168
        %v3911 = vunpack.c.0.s8 %v3910
        %v3912 = vlaneseq
        %v3913 = vshrl.u32 %v3912, 7
        %v3914 = vsub.s32 %v3911, %v3913
        %v3915 = vrot.slane %v3908, %v3914
        %v3917 = vunpack.c.l.s4 1966171168
        %v3918 = vunpack.c.0.s8 %v3917
        %v3919 = vlaneseq
        %v3920 = vshrl.u32 %v3919, 7
        %v3921 = vsub.s32 %v3918, %v3920
        %v3922 = vrot.slane %v435, %v3921
        %v3924 = vunpack.c.l.s4 1966171168
        %v3925 = vunpack.c.0.s8 %v3924
        %v3926 = vlaneseq
        %v3927 = vshrl.u32 %v3926, 7
        %v3928 = vsub.s32 %v3925, %v3927
        %v3929 = vrot.slane %v3922, %v3928
        %v3931 = vunpack.c.l.s4 1966171168
        %v3932 = vunpack.c.0.s8 %v3931
        %v3933 = vlaneseq
        %v3934 = vshrl.u32 %v3933, 7
        %v3935 = vsub.s32 %v3932, %v3934
        %v3936 = vrot.slane %v436, %v3935
        %v3938 = vunpack.c.l.s4 1966171168
        %v3939 = vunpack.c.0.s8 %v3938
        %v3940 = vlaneseq
        %v3941 = vshrl.u32 %v3940, 7
        %v3942 = vsub.s32 %v3939, %v3941
        %v3943 = vrot.slane %v3936, %v3942
        %v3945 = vunpack.c.l.s4 1966171168
        %v3946 = vunpack.c.0.s8 %v3945
        %v3947 = vlaneseq
        %v3948 = vshrl.u32 %v3947, 7
        %v3949 = vsub.s32 %v3946, %v3948
        %v3950 = vrot.slane %v437, %v3949
        %v3952 = vunpack.c.l.s4 1966171168
        %v3953 = vunpack.c.0.s8 %v3952
        %v3954 = vlaneseq
        %v3955 = vshrl.u32 %v3954, 7
        %v3956 = vsub.s32 %v3953, %v3955
        %v3957 = vrot.slane %v3950, %v3956
        %v3959 = vunpack.c.l.s4 1966171168
        %v3960 = vunpack.c.0.s8 %v3959
        %v3961 = vlaneseq
        %v3962 = vshrl.u32 %v3961, 7
        %v3963 = vsub.s32 %v3960, %v3962
        %v3964 = vrot.slane %v438, %v3963
        %v3966 = vunpack.c.l.s4 1966171168
        %v3967 = vunpack.c.0.s8 %v3966
        %v3968 = vlaneseq
        %v3969 = vshrl.u32 %v3968, 7
        %v3970 = vsub.s32 %v3967, %v3969
        %v3971 = vrot.slane %v3964, %v3970
        %v3973 = vunpack.c.l.s4 1966171168
        %v3974 = vunpack.c.0.s8 %v3973
        %v3975 = vlaneseq
        %v3976 = vshrl.u32 %v3975, 7
        %v3977 = vsub.s32 %v3974, %v3976
        %v3978 = vrot.slane %v439, %v3977
        %v3980 = vunpack.c.l.s4 1966171168
        %v3981 = vunpack.c.0.s8 %v3980
        %v3982 = vlaneseq
        %v3983 = vshrl.u32 %v3982, 7
        %v3984 = vsub.s32 %v3981, %v3983
        %v3985 = vrot.slane %v3978, %v3984
        %v3987 = vunpack.c.l.s4 1966171168
        %v3988 = vunpack.c.0.s8 %v3987
        %v3989 = vlaneseq
        %v3990 = vshrl.u32 %v3989, 7
        %v3991 = vsub.s32 %v3988, %v3990
        %v3992 = vrot.slane %v440, %v3991
        %v3994 = vunpack.c.l.s4 1966171168
        %v3995 = vunpack.c.0.s8 %v3994
        %v3996 = vlaneseq
        %v3997 = vshrl.u32 %v3996, 7
        %v3998 = vsub.s32 %v3995, %v3997
        %v3999 = vrot.slane %v3992, %v3998
        %v4001 = vunpack.c.l.s4 1966171168
        %v4002 = vunpack.c.0.s8 %v4001
        %v4003 = vlaneseq
        %v4004 = vshrl.u32 %v4003, 7
        %v4005 = vsub.s32 %v4002, %v4004
        %v4006 = vrot.slane %v441, %v4005
        %v4008 = vunpack.c.l.s4 1966171168
        %v4009 = vunpack.c.0.s8 %v4008
        %v4010 = vlaneseq
        %v4011 = vshrl.u32 %v4010, 7
        %v4012 = vsub.s32 %v4009, %v4011
        %v4013 = vrot.slane %v4006, %v4012
        %v4015 = vunpack.c.l.s4 1966171168
        %v4016 = vunpack.c.0.s8 %v4015
        %v4017 = vlaneseq
        %v4018 = vshrl.u32 %v4017, 7
        %v4019 = vsub.s32 %v4016, %v4018
        %v4020 = vrot.slane %v442, %v4019
        %v4022 = vunpack.c.l.s4 1966171168
        %v4023 = vunpack.c.0.s8 %v4022
        %v4024 = vlaneseq
        %v4025 = vshrl.u32 %v4024, 7
        %v4026 = vsub.s32 %v4023, %v4025
        %v4027 = vrot.slane %v4020, %v4026
        %v4029 = vunpack.c.l.s4 1966171168
        %v4030 = vunpack.c.0.s8 %v4029
        %v4031 = vlaneseq
        %v4032 = vshrl.u32 %v4031, 7
        %v4033 = vsub.s32 %v4030, %v4032
        %v4034 = vrot.slane %v443, %v4033
        %v4036 = vunpack.c.l.s4 1966171168
        %v4037 = vunpack.c.0.s8 %v4036
        %v4038 = vlaneseq
        %v4039 = vshrl.u32 %v4038, 7
        %v4040 = vsub.s32 %v4037, %v4039
        %v4041 = vrot.slane %v4034, %v4040
        %v4043 = vunpack.c.l.s4 1966171168
        %v4044 = vunpack.c.0.s8 %v4043
        %v4045 = vlaneseq
        %v4046 = vshrl.u32 %v4045, 7
        %v4047 = vsub.s32 %v4044, %v4046
        %v4048 = vrot.slane %v444, %v4047
        %v4050 = vunpack.c.l.s4 1966171168
        %v4051 = vunpack.c.0.s8 %v4050
        %v4052 = vlaneseq
        %v4053 = vshrl.u32 %v4052, 7
        %v4054 = vsub.s32 %v4051, %v4053
        %v4055 = vrot.slane %v4048, %v4054
        %v4057 = vunpack.c.l.s4 1966171168
        %v4058 = vunpack.c.0.s8 %v4057
        %v4059 = vlaneseq
        %v4060 = vshrl.u32 %v4059, 7
        %v4061 = vsub.s32 %v4058, %v4060
        %v4062 = vrot.slane %v445, %v4061
        %v4064 = vunpack.c.l.s4 1966171168
        %v4065 = vunpack.c.0.s8 %v4064
        %v4066 = vlaneseq
        %v4067 = vshrl.u32 %v4066, 7
        %v4068 = vsub.s32 %v4065, %v4067
        %v4069 = vrot.slane %v4062, %v4068
        %v4071 = vunpack.c.l.s4 1966171168
        %v4072 = vunpack.c.0.s8 %v4071
        %v4073 = vlaneseq
        %v4074 = vshrl.u32 %v4073, 7
        %v4075 = vsub.s32 %v4072, %v4074
        %v4076 = vrot.slane %v446, %v4075
        %v4078 = vunpack.c.l.s4 1966171168
        %v4079 = vunpack.c.0.s8 %v4078
        %v4080 = vlaneseq
        %v4081 = vshrl.u32 %v4080, 7
        %v4082 = vsub.s32 %v4079, %v4081
        %v4083 = vrot.slane %v4076, %v4082
        %v4085 = vunpack.c.l.s4 1966171168
        %v4086 = vunpack.c.0.s8 %v4085
        %v4087 = vlaneseq
        %v4088 = vshrl.u32 %v4087, 7
        %v4089 = vsub.s32 %v4086, %v4088
        %v4090 = vrot.slane %v447, %v4089
        %v4092 = vunpack.c.l.s4 1966171168
        %v4093 = vunpack.c.0.s8 %v4092
        %v4094 = vlaneseq
        %v4095 = vshrl.u32 %v4094, 7
        %v4096 = vsub.s32 %v4093, %v4095
        %v4097 = vrot.slane %v4090, %v4096
        %v4099 = vunpack.c.l.s4 1966171168
        %v4100 = vunpack.c.0.s8 %v4099
        %v4101 = vlaneseq
        %v4102 = vshrl.u32 %v4101, 7
        %v4103 = vsub.s32 %v4100, %v4102
        %v4104 = vrot.slane %v448, %v4103
        %v4106 = vunpack.c.l.s4 1966171168
        %v4107 = vunpack.c.0.s8 %v4106
        %v4108 = vlaneseq
        %v4109 = vshrl.u32 %v4108, 7
        %v4110 = vsub.s32 %v4107, %v4109
        %v4111 = vrot.slane %v4104, %v4110
        %v4113 = vunpack.c.l.s4 1966171168
        %v4114 = vunpack.c.0.s8 %v4113
        %v4115 = vlaneseq
        %v4116 = vshrl.u32 %v4115, 7
        %v4117 = vsub.s32 %v4114, %v4116
        %v4118 = vrot.slane %v449, %v4117
        %v4120 = vunpack.c.l.s4 1966171168
        %v4121 = vunpack.c.0.s8 %v4120
        %v4122 = vlaneseq
        %v4123 = vshrl.u32 %v4122, 7
        %v4124 = vsub.s32 %v4121, %v4123
        %v4125 = vrot.slane %v4118, %v4124
        %v4127 = vunpack.c.l.s4 1966171168
        %v4128 = vunpack.c.0.s8 %v4127
        %v4129 = vlaneseq
        %v4130 = vshrl.u32 %v4129, 7
        %v4131 = vsub.s32 %v4128, %v4130
        %v4132 = vrot.slane %v450, %v4131
        %v4134 = vunpack.c.l.s4 1966171168
        %v4135 = vunpack.c.0.s8 %v4134
        %v4136 = vlaneseq
        %v4137 = vshrl.u32 %v4136, 7
        %v4138 = vsub.s32 %v4135, %v4137
        %v4139 = vrot.slane %v4132, %v4138
        %v4141 = vunpack.c.l.s4 1966171168
        %v4142 = vunpack.c.0.s8 %v4141
        %v4143 = vlaneseq
        %v4144 = vshrl.u32 %v4143, 7
        %v4145 = vsub.s32 %v4142, %v4144
        %v4146 = vrot.slane %v451, %v4145
        %v4148 = vunpack.c.l.s4 1966171168
        %v4149 = vunpack.c.0.s8 %v4148
        %v4150 = vlaneseq
        %v4151 = vshrl.u32 %v4150, 7
        %v4152 = vsub.s32 %v4149, %v4151
        %v4153 = vrot.slane %v4146, %v4152
        %v4155 = vunpack.c.l.s4 1966171168
        %v4156 = vunpack.c.0.s8 %v4155
        %v4157 = vlaneseq
        %v4158 = vshrl.u32 %v4157, 7
        %v4159 = vsub.s32 %v4156, %v4158
        %v4160 = vrot.slane %v452, %v4159
        %v4162 = vunpack.c.l.s4 1966171168
        %v4163 = vunpack.c.0.s8 %v4162
        %v4164 = vlaneseq
        %v4165 = vshrl.u32 %v4164, 7
        %v4166 = vsub.s32 %v4163, %v4165
        %v4167 = vrot.slane %v4160, %v4166
        %v4169 = vunpack.c.l.s4 1966171168
        %v4170 = vunpack.c.0.s8 %v4169
        %v4171 = vlaneseq
        %v4172 = vshrl.u32 %v4171, 7
        %v4173 = vsub.s32 %v4170, %v4172
        %v4174 = vrot.slane %v453, %v4173
        %v4176 = vunpack.c.l.s4 1966171168
        %v4177 = vunpack.c.0.s8 %v4176
        %v4178 = vlaneseq
        %v4179 = vshrl.u32 %v4178, 7
        %v4180 = vsub.s32 %v4177, %v4179
        %v4181 = vrot.slane %v4174, %v4180
        %v4183 = vunpack.c.l.s4 1966171168
        %v4184 = vunpack.c.0.s8 %v4183
        %v4185 = vlaneseq
        %v4186 = vshrl.u32 %v4185, 7
        %v4187 = vsub.s32 %v4184, %v4186
        %v4188 = vrot.slane %v454, %v4187
        %v4190 = vunpack.c.l.s4 1966171168
        %v4191 = vunpack.c.0.s8 %v4190
        %v4192 = vlaneseq
        %v4193 = vshrl.u32 %v4192, 7
        %v4194 = vsub.s32 %v4191, %v4193
        %v4195 = vrot.slane %v4188, %v4194
        %v4197 = vunpack.c.l.s4 1966171168
        %v4198 = vunpack.c.0.s8 %v4197
        %v4199 = vlaneseq
        %v4200 = vshrl.u32 %v4199, 7
        %v4201 = vsub.s32 %v4198, %v4200
        %v4202 = vrot.slane %v455, %v4201
        %v4204 = vunpack.c.l.s4 1966171168
        %v4205 = vunpack.c.0.s8 %v4204
        %v4206 = vlaneseq
        %v4207 = vshrl.u32 %v4206, 7
        %v4208 = vsub.s32 %v4205, %v4207
        %v4209 = vrot.slane %v4202, %v4208
        %v4211 = vunpack.c.l.s4 1966171168
        %v4212 = vunpack.c.0.s8 %v4211
        %v4213 = vlaneseq
        %v4214 = vshrl.u32 %v4213, 7
        %v4215 = vsub.s32 %v4212, %v4214
        %v4216 = vrot.slane %v456, %v4215
        %v4218 = vunpack.c.l.s4 1966171168
        %v4219 = vunpack.c.0.s8 %v4218
        %v4220 = vlaneseq
        %v4221 = vshrl.u32 %v4220, 7
        %v4222 = vsub.s32 %v4219, %v4221
        %v4223 = vrot.slane %v4216, %v4222
        %v4224 = vunpack.c.l.b16 %v3733
        %v4225 = vunpack.c.l.b16 %v3747
        %v4226 = vunpack.c.l.b16 %v3761
        %v4227 = vunpack.c.l.b16 %v3775
        %v4228 = vunpack.c.l.b16 %v3789
        %v4229 = vunpack.c.l.b16 %v3803
        %v4230 = vunpack.c.l.b16 %v3817
        %v4231 = vunpack.c.l.b16 %v3831
        %v4232 = vunpack.c.l.b16 %v3845
        %v4233 = vunpack.c.l.b16 %v3859
        %v4234 = vunpack.c.l.b16 %v3873
        %v4235 = vunpack.c.l.b16 %v3887
        %v4236 = vunpack.c.l.b16 %v3901
        %v4237 = vunpack.c.l.b16 %v3915
        %v4238 = vunpack.c.l.b16 %v3929
        %v4239 = vunpack.c.l.b16 %v3943
        %v4240 = vunpack.c.l.b16 %v3957
        %v4241 = vunpack.c.l.b16 %v3971
        %v4242 = vunpack.c.l.b16 %v3985
        %v4243 = vunpack.c.l.b16 %v3999
        %v4244 = vunpack.c.l.b16 %v4013
        %v4245 = vunpack.c.l.b16 %v4027
        %v4246 = vunpack.c.l.b16 %v4041
        %v4247 = vunpack.c.l.b16 %v4055
        %v4248 = vunpack.c.l.b16 %v4069
        %v4249 = vunpack.c.l.b16 %v4083
        %v4250 = vunpack.c.l.b16 %v4097
        %v4251 = vunpack.c.l.b16 %v4111
        %v4252 = vunpack.c.l.b16 %v4125
        %v4253 = vunpack.c.l.b16 %v4139
        %v4254 = vunpack.c.l.b16 %v4153
        %v4255 = vunpack.c.l.b16 %v4167
        %v4256 = vunpack.c.l.b16 %v4181
        %v4257 = vunpack.c.l.b16 %v4195
        %v4258 = vunpack.c.l.b16 %v4209
        %v4259 = vunpack.c.l.b16 %v4223
        %v4260 = vrot.slane %v4225, 7
        %v4261 = vsel %vm1034, %v4260, %v4224
        %v4262 = vrot.slane %v4226, 6
        %v4263 = vsel %vm1037, %v4262, %v4261
        %v4264 = vrot.slane %v4227, 5
        %v4265 = vsel %vm1040, %v4264, %v4263
        %v4266 = vrot.slane %v4228, 4
        %v4267 = vsel %vm1043, %v4266, %v4265
        %v4268 = vrot.slane %v4229, 3
        %v4269 = vsel %vm1046, %v4268, %v4267
        %v4270 = vrot.slane %v4230, 2
        %v4271 = vsel %vm1049, %v4270, %v4269
        %v4272 = vrot.slane %v4231, 1
        %v4273 = vsel %vm1052, %v4272, %v4271
        %v4274 = vrot.slane %v4233, 7
        %v4275 = vsel %vm1034, %v4274, %v4232
        %v4276 = vrot.slane %v4234, 6
        %v4277 = vsel %vm1037, %v4276, %v4275
        %v4278 = vrot.slane %v4235, 5
        %v4279 = vsel %vm1040, %v4278, %v4277
        %v4280 = vrot.slane %v4236, 4
        %v4281 = vsel %vm1043, %v4280, %v4279
        %v4282 = vrot.slane %v4237, 3
        %v4283 = vsel %vm1046, %v4282, %v4281
        %v4284 = vrot.slane %v4238, 2
        %v4285 = vsel %vm1049, %v4284, %v4283
        %v4286 = vrot.slane %v4239, 1
        %v4287 = vsel %vm1052, %v4286, %v4285
        %v4288 = vrot.slane %v4241, 7
        %v4289 = vsel %vm1034, %v4288, %v4240
        %v4290 = vrot.slane %v4242, 6
        %v4291 = vsel %vm1037, %v4290, %v4289
        %v4292 = vrot.slane %v4243, 5
        %v4293 = vsel %vm1040, %v4292, %v4291
        %v4294 = vrot.slane %v4244, 4
        %v4295 = vsel %vm1043, %v4294, %v4293
        %v4296 = vrot.slane %v4245, 3
        %v4297 = vsel %vm1046, %v4296, %v4295
        %v4298 = vrot.slane %v4246, 2
        %v4299 = vsel %vm1049, %v4298, %v4297
        %v4300 = vrot.slane %v4247, 1
        %v4301 = vsel %vm1052, %v4300, %v4299
        %v4302 = vrot.slane %v4249, 7
        %v4303 = vsel %vm1034, %v4302, %v4248
        %v4304 = vrot.slane %v4250, 6
        %v4305 = vsel %vm1037, %v4304, %v4303
        %v4306 = vrot.slane %v4251, 5
        %v4307 = vsel %vm1040, %v4306, %v4305
        %v4308 = vrot.slane %v4252, 4
        %v4309 = vsel %vm1043, %v4308, %v4307
        %v4310 = vrot.slane %v4253, 3
        %v4311 = vsel %vm1046, %v4310, %v4309
        %v4312 = vrot.slane %v4254, 2
        %v4313 = vsel %vm1049, %v4312, %v4311
        %v4314 = vrot.slane %v4255, 1
        %v4315 = vsel %vm1052, %v4314, %v4313
        %v4316 = vrot.slane %v4257, 7
        %v4317 = vsel %vm1034, %v4316, %v4256
        %v4318 = vrot.slane %v4258, 6
        %v4319 = vsel %vm1037, %v4318, %v4317
        %v4320 = vrot.slane %v4259, 5
        %v4321 = vsel %vm1040, %v4320, %v4319
        %v4322 = vpack.c.b16 %v4287, %v4273
        %v4323 = vpack.c.b16 %v4315, %v4301
        %v4324 = vpack.c.b16 %v4321, %v4321
        %v4328 = vld [vmem:[%s1] sm:$0xf]
        %v4329 = vld [vmem:[%s1 + $0x4] sm:$0xf]
        %v4330 = vld [vmem:[%s1 + $0x8] sm:$0xf]
        %v4331 = vld [vmem:[%s1 + $0xc] sm:$0xf]
        %v4332 = vld [vmem:[%s1 + $0x10] sm:$0xf]
        %v4333 = vld [vmem:[%s1 + $0x14] sm:$0xf]
        %v4334 = vld [vmem:[%s1 + $0x18] sm:$0xf]
        %v4335 = vld [vmem:[%s1 + $0x1c] sm:$0xf]
        %v4336 = vld [vmem:[%s1 + $0x20] sm:$0xf]
        %v4337 = vld [vmem:[%s1 + $0x24] sm:$0xf]
        %v4338 = vld [vmem:[%s1 + $0x28] sm:$0xf]
        %v4339 = vld [vmem:[%s1 + $0x2c] sm:$0xf]
        %v4340 = vld [vmem:[%s1 + $0x30] sm:$0xf]
        %v4341 = vld [vmem:[%s1 + $0x34] sm:$0xf]
        %v4342 = vld [vmem:[%s1 + $0x38] sm:$0xf]
        %v4343 = vld [vmem:[%s1 + $0x3c] sm:$0xf]
        %v4344 = vld [vmem:[%s1 + $0x40] sm:$0xf]
        %v4345 = vld [vmem:[%s1 + $0x44] sm:$0xf]
        %v4346 = vld [vmem:[%s1 + $0x48] sm:$0xf]
        %v4347 = vld [vmem:[%s1 + $0x4c] sm:$0xf]
        %v4348 = vld [vmem:[%s1 + $0x50] sm:$0xf]
        %v4349 = vld [vmem:[%s1 + $0x54] sm:$0xf]
        %v4350 = vld [vmem:[%s1 + $0x58] sm:$0xf]
        %v4351 = vld [vmem:[%s1 + $0x5c] sm:$0xf]
        %v4352 = vld [vmem:[%s1 + $0x60] sm:$0xf]
        %v4353 = vld [vmem:[%s1 + $0x64] sm:$0xf]
        %v4354 = vld [vmem:[%s1 + $0x68] sm:$0xf]
        %v4355 = vld [vmem:[%s1 + $0x6c] sm:$0xf]
        %v4356 = vld [vmem:[%s1 + $0x70] sm:$0xf]
        %v4357 = vld [vmem:[%s1 + $0x74] sm:$0xf]
        %v4358 = vld [vmem:[%s1 + $0x78] sm:$0xf]
        %v4359 = vld [vmem:[%s1 + $0x7c] sm:$0xf]
        %v4360 = vld [vmem:[%s1 + $0x80] sm:$0xf]
        %v4361 = vld [vmem:[%s1 + $0x84] sm:$0xf]
        %v4362 = vld [vmem:[%s1 + $0x88] sm:$0xf]
        %v4363 = vld [vmem:[%s1 + $0x8c] sm:$0xf]
        %v4364 = vld [vmem:[%s1 + $0x90] sm:$0xf]
        %v4365 = vld [vmem:[%s1 + $0x94] sm:$0xf]
        %v4366 = vld [vmem:[%s1 + $0x98] sm:$0xf]
        %v4367 = vld [vmem:[%s1 + $0x9c] sm:$0xf]
        %v4368 = vld [vmem:[%s1 + $0xa0] sm:$0xf]
        %v4369 = vld [vmem:[%s1 + $0xa4] sm:$0xf]
        %v4370 = vld [vmem:[%s1 + $0xa8] sm:$0xf]
        %v4371 = vld [vmem:[%s1 + $0xac] sm:$0xf]
        %v4372 = vld [vmem:[%s1 + $0xb0] sm:$0xf]
        %v4373 = vld [vmem:[%s1 + $0xb4] sm:$0xf]
        %v4374 = vld [vmem:[%s1 + $0xb8] sm:$0xf]
        %v4375 = vld [vmem:[%s1 + $0xbc] sm:$0xf]
        %v4376 = vld [vmem:[%s1 + $0xc0] sm:$0xf]
        %v4377 = vld [vmem:[%s1 + $0xc4] sm:$0xf]
        %v4378 = vld [vmem:[%s1 + $0xc8] sm:$0xf]
        %v4379 = vld [vmem:[%s1 + $0xcc] sm:$0xf]
        %v4380 = vld [vmem:[%s1 + $0xd0] sm:$0xf]
        %v4381 = vld [vmem:[%s1 + $0xd4] sm:$0xf]
        %v4382 = vld [vmem:[%s1 + $0xd8] sm:$0xf]
        %v4383 = vld [vmem:[%s1 + $0xdc] sm:$0xf]
        %v4384 = vld [vmem:[%s1 + $0xe0] sm:$0xf]
        %v4385 = vld [vmem:[%s1 + $0xe4] sm:$0xf]
        %v4386 = vld [vmem:[%s1 + $0xe8] sm:$0xf]
        %v4387 = vld [vmem:[%s1 + $0xec] sm:$0xf]
        %v4388 = vld [vmem:[%s1 + $0xf0] sm:$0xf]
        %v4389 = vld [vmem:[%s1 + $0xf4] sm:$0xf]
        %v4390 = vld [vmem:[%s1 + $0xf8] sm:$0xf]
        %v4391 = vld [vmem:[%s1 + $0xfc] sm:$0xf]
        %v4392 = vld [vmem:[%s1 + $0x100] sm:$0xf]
        %v4393 = vld [vmem:[%s1 + $0x104] sm:$0xf]
        %v4394 = vld [vmem:[%s1 + $0x108] sm:$0xf]
        %v4395 = vld [vmem:[%s1 + $0x10c] sm:$0xf]
        %v4396 = vld [vmem:[%s1 + $0x110] sm:$0xf]
        %v4397 = vld [vmem:[%s1 + $0x114] sm:$0xf]
        %v4398 = vld [vmem:[%s1 + $0x118] sm:$0xf]
        %v4399 = vld [vmem:[%s1 + $0x11c] sm:$0xf]
        %v4400 = vld [vmem:[%s1 + $0x120] sm:$0xf]
        %v4401 = vld [vmem:[%s1 + $0x124] sm:$0xf]
        %v4402 = vld [vmem:[%s1 + $0x128] sm:$0xf]
        %v4403 = vld [vmem:[%s1 + $0x12c] sm:$0xf]
        %v4404 = vld [vmem:[%s1 + $0x130] sm:$0xf]
        %v4405 = vld [vmem:[%s1 + $0x134] sm:$0xf]
        %v4406 = vld [vmem:[%s1 + $0x138] sm:$0xf]
        %v4407 = vld [vmem:[%s1 + $0x13c] sm:$0xf]
        %v4408 = vld [vmem:[%s1 + $0x140] sm:$0xf]
        %v4409 = vld [vmem:[%s1 + $0x144] sm:$0xf]
        %v4410 = vld [vmem:[%s1 + $0x148] sm:$0xf]
        %v4411 = vld [vmem:[%s1 + $0x14c] sm:$0xf]
        %v4412 = vld [vmem:[%s1 + $0x150] sm:$0xf]
        %v4413 = vld [vmem:[%s1 + $0x154] sm:$0xf]
        %v4414 = vld [vmem:[%s1 + $0x158] sm:$0xf]
        %v4415 = vld [vmem:[%s1 + $0x15c] sm:$0xf]
        %v4416 = vld [vmem:[%s1 + $0x160] sm:$0xf]
        %v4417 = vld [vmem:[%s1 + $0x164] sm:$0xf]
        %v4418 = vld [vmem:[%s1 + $0x168] sm:$0xf]
        %v4419 = vld [vmem:[%s1 + $0x16c] sm:$0xf]
        %v4420 = vld [vmem:[%s1 + $0x170] sm:$0xf]
        %v4421 = vld [vmem:[%s1 + $0x174] sm:$0xf]
        %v4422 = vld [vmem:[%s1 + $0x178] sm:$0xf]
        %v4423 = vld [vmem:[%s1 + $0x17c] sm:$0xf]
        %v4424 = vld [vmem:[%s2] sm:$0x1]
        %v4426 = vlaneseq
        %v4427 = vshrl.u32 %v4426, 7
        %v4428 = vsub.s32 0, %v4427
        %v4429 = vrot.slane %v4424, %v4428
        %v4527 = vunpack.c.l.b16 %v4328
        %v4528 = vunpack.c.l.b16 %v4329
        %v4529 = vunpack.c.l.b16 %v4330
        %v4530 = vunpack.c.l.b16 %v4331
        %v4531 = vunpack.c.l.b16 %v4332
        %v4532 = vunpack.c.l.b16 %v4333
        %v4533 = vunpack.c.l.b16 %v4334
        %v4534 = vunpack.c.l.b16 %v4335
        %v4535 = vunpack.c.l.b16 %v4336
        %v4536 = vunpack.c.l.b16 %v4337
        %v4537 = vunpack.c.l.b16 %v4338
        %v4538 = vunpack.c.l.b16 %v4339
        %v4539 = vunpack.c.l.b16 %v4340
        %v4540 = vunpack.c.l.b16 %v4341
        %v4541 = vunpack.c.l.b16 %v4342
        %v4542 = vunpack.c.l.b16 %v4343
        %v4543 = vunpack.c.l.b16 %v4344
        %v4544 = vunpack.c.l.b16 %v4345
        %v4545 = vunpack.c.l.b16 %v4346
        %v4546 = vunpack.c.l.b16 %v4347
        %v4547 = vunpack.c.l.b16 %v4348
        %v4548 = vunpack.c.l.b16 %v4349
        %v4549 = vunpack.c.l.b16 %v4350
        %v4550 = vunpack.c.l.b16 %v4351
        %v4551 = vunpack.c.l.b16 %v4352
        %v4552 = vunpack.c.l.b16 %v4353
        %v4553 = vunpack.c.l.b16 %v4354
        %v4554 = vunpack.c.l.b16 %v4355
        %v4555 = vunpack.c.l.b16 %v4356
        %v4556 = vunpack.c.l.b16 %v4357
        %v4557 = vunpack.c.l.b16 %v4358
        %v4558 = vunpack.c.l.b16 %v4359
        %v4559 = vunpack.c.l.b16 %v4360
        %v4560 = vunpack.c.l.b16 %v4361
        %v4561 = vunpack.c.l.b16 %v4362
        %v4562 = vunpack.c.l.b16 %v4363
        %v4563 = vunpack.c.l.b16 %v4364
        %v4564 = vunpack.c.l.b16 %v4365
        %v4565 = vunpack.c.l.b16 %v4366
        %v4566 = vunpack.c.l.b16 %v4367
        %v4567 = vunpack.c.l.b16 %v4368
        %v4568 = vunpack.c.l.b16 %v4369
        %v4569 = vunpack.c.l.b16 %v4370
        %v4570 = vunpack.c.l.b16 %v4371
        %v4571 = vunpack.c.l.b16 %v4372
        %v4572 = vunpack.c.l.b16 %v4373
        %v4573 = vunpack.c.l.b16 %v4374
        %v4574 = vunpack.c.l.b16 %v4375
        %v4575 = vunpack.c.l.b16 %v4376
        %v4576 = vunpack.c.l.b16 %v4377
        %v4577 = vunpack.c.l.b16 %v4378
        %v4578 = vunpack.c.l.b16 %v4379
        %v4579 = vunpack.c.l.b16 %v4380
        %v4580 = vunpack.c.l.b16 %v4381
        %v4581 = vunpack.c.l.b16 %v4382
        %v4582 = vunpack.c.l.b16 %v4383
        %v4583 = vunpack.c.l.b16 %v4384
        %v4584 = vunpack.c.l.b16 %v4385
        %v4585 = vunpack.c.l.b16 %v4386
        %v4586 = vunpack.c.l.b16 %v4387
        %v4587 = vunpack.c.l.b16 %v4388
        %v4588 = vunpack.c.l.b16 %v4389
        %v4589 = vunpack.c.l.b16 %v4390
        %v4590 = vunpack.c.l.b16 %v4391
        %v4591 = vunpack.c.l.b16 %v4392
        %v4592 = vunpack.c.l.b16 %v4393
        %v4593 = vunpack.c.l.b16 %v4394
        %v4594 = vunpack.c.l.b16 %v4395
        %v4595 = vunpack.c.l.b16 %v4396
        %v4596 = vunpack.c.l.b16 %v4397
        %v4597 = vunpack.c.l.b16 %v4398
        %v4598 = vunpack.c.l.b16 %v4399
        %v4599 = vunpack.c.l.b16 %v4400
        %v4600 = vunpack.c.l.b16 %v4401
        %v4601 = vunpack.c.l.b16 %v4402
        %v4602 = vunpack.c.l.b16 %v4403
        %v4603 = vunpack.c.l.b16 %v4404
        %v4604 = vunpack.c.l.b16 %v4405
        %v4605 = vunpack.c.l.b16 %v4406
        %v4606 = vunpack.c.l.b16 %v4407
        %v4607 = vunpack.c.l.b16 %v4408
        %v4608 = vunpack.c.l.b16 %v4409
        %v4609 = vunpack.c.l.b16 %v4410
        %v4610 = vunpack.c.l.b16 %v4411
        %v4611 = vunpack.c.l.b16 %v4412
        %v4612 = vunpack.c.l.b16 %v4413
        %v4613 = vunpack.c.l.b16 %v4414
        %v4614 = vunpack.c.l.b16 %v4415
        %v4615 = vunpack.c.l.b16 %v4416
        %v4616 = vunpack.c.l.b16 %v4417
        %v4617 = vunpack.c.l.b16 %v4418
        %v4618 = vunpack.c.l.b16 %v4419
        %v4619 = vunpack.c.l.b16 %v4420
        %v4620 = vunpack.c.l.b16 %v4421
        %v4621 = vunpack.c.l.b16 %v4422
        %v4622 = vunpack.c.l.b16 %v4423
        %v4623 = vpack.c.b16 %v4528, %v4527
        %v4624 = vpack.c.b16 %v4530, %v4529
        %v4625 = vpack.c.b16 %v4532, %v4531
        %v4626 = vpack.c.b16 %v4534, %v4533
        %v4627 = vpack.c.b16 %v4536, %v4535
        %v4628 = vpack.c.b16 %v4538, %v4537
        %v4629 = vpack.c.b16 %v4540, %v4539
        %v4630 = vpack.c.b16 %v4542, %v4541
        %v4631 = vpack.c.b16 %v4544, %v4543
        %v4632 = vpack.c.b16 %v4546, %v4545
        %v4633 = vpack.c.b16 %v4548, %v4547
        %v4634 = vpack.c.b16 %v4550, %v4549
        %v4635 = vpack.c.b16 %v4552, %v4551
        %v4636 = vpack.c.b16 %v4554, %v4553
        %v4637 = vpack.c.b16 %v4556, %v4555
        %v4638 = vpack.c.b16 %v4558, %v4557
        %v4639 = vpack.c.b16 %v4560, %v4559
        %v4640 = vpack.c.b16 %v4562, %v4561
        %v4641 = vpack.c.b16 %v4564, %v4563
        %v4642 = vpack.c.b16 %v4566, %v4565
        %v4643 = vpack.c.b16 %v4568, %v4567
        %v4644 = vpack.c.b16 %v4570, %v4569
        %v4645 = vpack.c.b16 %v4572, %v4571
        %v4646 = vpack.c.b16 %v4574, %v4573
        %v4647 = vpack.c.b16 %v4576, %v4575
        %v4648 = vpack.c.b16 %v4578, %v4577
        %v4649 = vpack.c.b16 %v4580, %v4579
        %v4650 = vpack.c.b16 %v4582, %v4581
        %v4651 = vpack.c.b16 %v4584, %v4583
        %v4652 = vpack.c.b16 %v4586, %v4585
        %v4653 = vpack.c.b16 %v4588, %v4587
        %v4654 = vpack.c.b16 %v4590, %v4589
        %v4655 = vpack.c.b16 %v4592, %v4591
        %v4656 = vpack.c.b16 %v4594, %v4593
        %v4657 = vpack.c.b16 %v4596, %v4595
        %v4658 = vpack.c.b16 %v4598, %v4597
        %v4659 = vpack.c.b16 %v4600, %v4599
        %v4660 = vpack.c.b16 %v4602, %v4601
        %v4661 = vpack.c.b16 %v4604, %v4603
        %v4662 = vpack.c.b16 %v4606, %v4605
        %v4663 = vpack.c.b16 %v4608, %v4607
        %v4664 = vpack.c.b16 %v4610, %v4609
        %v4665 = vpack.c.b16 %v4612, %v4611
        %v4666 = vpack.c.b16 %v4614, %v4613
        %v4667 = vpack.c.b16 %v4616, %v4615
        %v4668 = vpack.c.b16 %v4618, %v4617
        %v4669 = vpack.c.b16 %v4620, %v4619
        %v4670 = vpack.c.b16 %v4622, %v4621
        %4719 = vmatprep.subr.bf16.mxu0 0
        %4720 = vmatpush1.bf16.msra.mxu0 %v4623
        %4721 = vmatprep.subr.bf16.mxu0 0
        %4722 = vmatpush1.bf16.msra.mxu0 %v4624
        %4723 = vmatprep.subr.bf16.mxu0 0
        %4724 = vmatpush1.bf16.msra.mxu0 %v4625
        %4725 = vmatprep.subr.bf16.mxu0 0
        %4726 = vmatpush1.bf16.msra.mxu0 %v4626
        %4727 = vmatprep.subr.bf16.mxu0 0
        %4728 = vmatpush1.bf16.msra.mxu0 %v4627
        %4729 = vmatprep.subr.bf16.mxu0 0
        %4730 = vmatpush1.bf16.msra.mxu0 %v4628
        %4731 = vmatprep.subr.bf16.mxu0 0
        %4732 = vmatpush1.bf16.msra.mxu0 %v4629
        %4733 = vmatprep.subr.bf16.mxu0 0
        %4734 = vmatpush1.bf16.msra.mxu0 %v4630
        %4735 = vmatprep.subr.bf16.mxu0 0
        %4736 = vmatpush1.bf16.msra.mxu0 %v4631
        %4737 = vmatprep.subr.bf16.mxu0 0
        %4738 = vmatpush1.bf16.msra.mxu0 %v4632
        %4739 = vmatprep.subr.bf16.mxu0 0
        %4740 = vmatpush1.bf16.msra.mxu0 %v4633
        %4741 = vmatprep.subr.bf16.mxu0 0
        %4742 = vmatpush1.bf16.msra.mxu0 %v4634
        %4743 = vmatprep.subr.bf16.mxu0 0
        %4744 = vmatpush1.bf16.msra.mxu0 %v4635
        %4745 = vmatprep.subr.bf16.mxu0 0
        %4746 = vmatpush1.bf16.msra.mxu0 %v4636
        %4747 = vmatprep.subr.bf16.mxu0 0
        %4748 = vmatpush1.bf16.msra.mxu0 %v4637
        %4749 = vmatprep.subr.bf16.mxu0 0
        %4750 = vmatpush1.bf16.msra.mxu0 %v4638
        %4751 = vmatprep.mubr.bf16.mxu0 %v1746
        %4752 = vmatmul.mubr.bf16.gmra.mrb[0].mxu0 %v1102
        %v4753 = vpop.f32.mrb[0].mxu0
        %v4754 = vadd.f32 %v4429, %v4753
        %v4755 = vpop.f32.mrb[0].mxu0
        %v4756 = vpop.f32.mrb[0].mxu0
        %v4757 = vadd.f32 %v4429, %v4756
        %v4758 = vpop.f32.mrb[0].mxu0
        %4759 = vmatprep.mubr.bf16.mxu0 %v1747
        %4760 = vmatmul.mubr.bf16.gmra.mrb[0].mxu0 %v1103
        %v4761 = vpop.f32.mrb[0].mxu0
        %v4762 = vadd.f32 %v4429, %v4761
        %v4763 = vpop.f32.mrb[0].mxu0
        %v4764 = vpop.f32.mrb[0].mxu0
        %v4765 = vadd.f32 %v4429, %v4764
        %v4766 = vpop.f32.mrb[0].mxu0
        %4767 = vmatprep.mubr.bf16.mxu0 %v1748
        %4768 = vmatmul.mubr.bf16.gmra.mrb[0].mxu0 %v1104
        %v4769 = vpop.f32.mrb[0].mxu0
        %v4770 = vadd.f32 %v4429, %v4769
        %v4771 = vpop.f32.mrb[0].mxu0
        %v4772 = vpop.f32.mrb[0].mxu0
        %v4773 = vpop.f32.mrb[0].mxu0
        %4774 = vdwg.mxu0
        %4775 = vmatprep.subr.bf16.mxu0 0
        %4776 = vmatpush1.bf16.msra.mxu0 %v4639
        %4777 = vmatprep.subr.bf16.mxu0 0
        %4778 = vmatpush1.bf16.msra.mxu0 %v4640
        %4779 = vmatprep.subr.bf16.mxu0 0
        %4780 = vmatpush1.bf16.msra.mxu0 %v4641
        %4781 = vmatprep.subr.bf16.mxu0 0
        %4782 = vmatpush1.bf16.msra.mxu0 %v4642
        %4783 = vmatprep.subr.bf16.mxu0 0
        %4784 = vmatpush1.bf16.msra.mxu0 %v4643
        %4785 = vmatprep.subr.bf16.mxu0 0
        %4786 = vmatpush1.bf16.msra.mxu0 %v4644
        %4787 = vmatprep.subr.bf16.mxu0 0
        %4788 = vmatpush1.bf16.msra.mxu0 %v4645
        %4789 = vmatprep.subr.bf16.mxu0 0
        %4790 = vmatpush1.bf16.msra.mxu0 %v4646
        %4791 = vmatprep.subr.bf16.mxu0 0
        %4792 = vmatpush1.bf16.msra.mxu0 %v4647
        %4793 = vmatprep.subr.bf16.mxu0 0
        %4794 = vmatpush1.bf16.msra.mxu0 %v4648
        %4795 = vmatprep.subr.bf16.mxu0 0
        %4796 = vmatpush1.bf16.msra.mxu0 %v4649
        %4797 = vmatprep.subr.bf16.mxu0 0
        %4798 = vmatpush1.bf16.msra.mxu0 %v4650
        %4799 = vmatprep.subr.bf16.mxu0 0
        %4800 = vmatpush1.bf16.msra.mxu0 %v4651
        %4801 = vmatprep.subr.bf16.mxu0 0
        %4802 = vmatpush1.bf16.msra.mxu0 %v4652
        %4803 = vmatprep.subr.bf16.mxu0 0
        %4804 = vmatpush1.bf16.msra.mxu0 %v4653
        %4805 = vmatprep.subr.bf16.mxu0 0
        %4806 = vmatpush1.bf16.msra.mxu0 %v4654
        %4807 = vmatprep.mubr.bf16.mxu0 %v3034
        %4808 = vmatmul.mubr.bf16.gmra.mrb[0].mxu0 %v2390
        %v4809 = vpop.f32.mrb[0].mxu0
        %v4810 = vadd.f32 %v4754, %v4809
        %v4811 = vpop.f32.mrb[0].mxu0
        %v4812 = vpop.f32.mrb[0].mxu0
        %v4813 = vadd.f32 %v4757, %v4812
        %v4814 = vpop.f32.mrb[0].mxu0
        %4815 = vmatprep.mubr.bf16.mxu0 %v3035
        %4816 = vmatmul.mubr.bf16.gmra.mrb[0].mxu0 %v2391
        %v4817 = vpop.f32.mrb[0].mxu0
        %v4818 = vadd.f32 %v4762, %v4817
        %v4819 = vpop.f32.mrb[0].mxu0
        %v4820 = vpop.f32.mrb[0].mxu0
        %v4821 = vadd.f32 %v4765, %v4820
        %v4822 = vpop.f32.mrb[0].mxu0
        %4823 = vmatprep.mubr.bf16.mxu0 %v3036
        %4824 = vmatmul.mubr.bf16.gmra.mrb[0].mxu0 %v2392
        %v4825 = vpop.f32.mrb[0].mxu0
        %v4826 = vadd.f32 %v4770, %v4825
        %v4827 = vpop.f32.mrb[0].mxu0
        %v4828 = vpop.f32.mrb[0].mxu0
        %v4829 = vpop.f32.mrb[0].mxu0
        %4830 = vdwg.mxu0
        %4831 = vmatprep.subr.bf16.mxu0 0
        %4832 = vmatpush1.bf16.msra.mxu0 %v4655
        %4833 = vmatprep.subr.bf16.mxu0 0
        %4834 = vmatpush1.bf16.msra.mxu0 %v4656
        %4835 = vmatprep.subr.bf16.mxu0 0
        %4836 = vmatpush1.bf16.msra.mxu0 %v4657
        %4837 = vmatprep.subr.bf16.mxu0 0
        %4838 = vmatpush1.bf16.msra.mxu0 %v4658
        %4839 = vmatprep.subr.bf16.mxu0 0
        %4840 = vmatpush1.bf16.msra.mxu0 %v4659
        %4841 = vmatprep.subr.bf16.mxu0 0
        %4842 = vmatpush1.bf16.msra.mxu0 %v4660
        %4843 = vmatprep.subr.bf16.mxu0 0
        %4844 = vmatpush1.bf16.msra.mxu0 %v4661
        %4845 = vmatprep.subr.bf16.mxu0 0
        %4846 = vmatpush1.bf16.msra.mxu0 %v4662
        %4847 = vmatprep.subr.bf16.mxu0 0
        %4848 = vmatpush1.bf16.msra.mxu0 %v4663
        %4849 = vmatprep.subr.bf16.mxu0 0
        %4850 = vmatpush1.bf16.msra.mxu0 %v4664
        %4851 = vmatprep.subr.bf16.mxu0 0
        %4852 = vmatpush1.bf16.msra.mxu0 %v4665
        %4853 = vmatprep.subr.bf16.mxu0 0
        %4854 = vmatpush1.bf16.msra.mxu0 %v4666
        %4855 = vmatprep.subr.bf16.mxu0 0
        %4856 = vmatpush1.bf16.msra.mxu0 %v4667
        %4857 = vmatprep.subr.bf16.mxu0 0
        %4858 = vmatpush1.bf16.msra.mxu0 %v4668
        %4859 = vmatprep.subr.bf16.mxu0 0
        %4860 = vmatpush1.bf16.msra.mxu0 %v4669
        %4861 = vmatprep.subr.bf16.mxu0 0
        %4862 = vmatpush1.bf16.msra.mxu0 %v4670
        %4863 = vmatprep.mubr.bf16.mxu0 %v4322
        %4864 = vmatmul.mubr.bf16.gmra.mrb[0].mxu0 %v3678
        %v4865 = vpop.f32.mrb[0].mxu0
        %v4866 = vadd.f32 %v4810, %v4865
        %v4867 = vpop.f32.mrb[0].mxu0
        %v4868 = vpop.f32.mrb[0].mxu0
        %v4869 = vadd.f32 %v4813, %v4868
        %v4870 = vpop.f32.mrb[0].mxu0
        %4871 = vmatprep.mubr.bf16.mxu0 %v4323
        %4872 = vmatmul.mubr.bf16.gmra.mrb[0].mxu0 %v3679
        %v4873 = vpop.f32.mrb[0].mxu0
        %v4874 = vadd.f32 %v4818, %v4873
        %v4875 = vpop.f32.mrb[0].mxu0
        %v4876 = vpop.f32.mrb[0].mxu0
        %v4877 = vadd.f32 %v4821, %v4876
        %v4878 = vpop.f32.mrb[0].mxu0
        %4879 = vmatprep.mubr.bf16.mxu0 %v4324
        %4880 = vmatmul.mubr.bf16.gmra.mrb[0].mxu0 %v3680
        %v4881 = vpop.f32.mrb[0].mxu0
        %v4882 = vadd.f32 %v4826, %v4881
        %v4883 = vpop.f32.mrb[0].mxu0
        %v4884 = vpop.f32.mrb[0].mxu0
        %v4885 = vpop.f32.mrb[0].mxu0
        %4886 = vdwg.mxu0
        %vm4887 = vcmp.ge.f32.partialorder %v4866, 0.0
        %vm4888 = vcmp.ge.f32.partialorder %v4869, 0.0
        %vm4889 = vcmp.ge.f32.partialorder %v4874, 0.0
        %vm4890 = vcmp.ge.f32.partialorder %v4877, 0.0
        %vm4891 = vcmp.ge.f32.partialorder %v4882, 0.0
        %v4892 = vmul.f32 %v4866, 0.01
        %v4893 = vmul.f32 %v4869, 0.01
        %v4894 = vmul.f32 %v4874, 0.01
        %v4895 = vmul.f32 %v4877, 0.01
        %v4896 = vmul.f32 %v4882, 0.01
        %v4897 = vsel %vm4887, %v4866, %v4892
        %v4898 = vsel %vm4888, %v4869, %v4893
        %v4899 = vsel %vm4889, %v4874, %v4894
        %v4900 = vsel %vm4890, %v4877, %v4895
        %v4901 = vsel %vm4891, %v4882, %v4896
        %v4902 = vpack.c.bf16 %v4898, %v4897
        %v4903 = vpack.c.bf16 %v4900, %v4899
        %v4904 = vpack.c.bf16 %v4901, %v4901
        %v4905 = vld [vmem:[%s309] sm:$0x1]
        %v4906 = vld [vmem:[%s309 + $0x1] sm:$0x1]
        %v4907 = vld [vmem:[%s309 + $0x2] sm:$0x1]
        %v4908 = vld [vmem:[%s309 + $0x3] sm:$0x1]
        %v4909 = vld [vmem:[%s309 + $0x4] sm:$0x1]
        %v4910 = vld [vmem:[%s309 + $0x5] sm:$0x1]
        %v4911 = vld [vmem:[%s309 + $0x6] sm:$0x1]
        %v4912 = vld [vmem:[%s309 + $0x7] sm:$0x1]
        %v4913 = vld [vmem:[%s309 + $0x8] sm:$0x1]
        %v4914 = vld [vmem:[%s309 + $0x9] sm:$0x1]
        %v4915 = vld [vmem:[%s309 + $0xa] sm:$0x1]
        %v4916 = vld [vmem:[%s309 + $0xb] sm:$0x1]
        %v4917 = vld [vmem:[%s309 + $0xc] sm:$0x1]
        %v4918 = vld [vmem:[%s309 + $0xd] sm:$0x1]
        %v4919 = vld [vmem:[%s309 + $0xe] sm:$0x1]
        %v4920 = vld [vmem:[%s309 + $0xf] sm:$0x1]
        %v4921 = vld [vmem:[%s309 + $0x10] sm:$0x1]
        %v4922 = vld [vmem:[%s309 + $0x11] sm:$0x1]
        %v4923 = vld [vmem:[%s309 + $0x12] sm:$0x1]
        %v4924 = vld [vmem:[%s309 + $0x13] sm:$0x1]
        %v4925 = vld [vmem:[%s309 + $0x14] sm:$0x1]
        %v4926 = vld [vmem:[%s309 + $0x15] sm:$0x1]
        %v4927 = vld [vmem:[%s309 + $0x16] sm:$0x1]
        %v4928 = vld [vmem:[%s309 + $0x17] sm:$0x1]
        %v4929 = vld [vmem:[%s309 + $0x18] sm:$0x1]
        %v4930 = vld [vmem:[%s309 + $0x19] sm:$0x1]
        %v4931 = vld [vmem:[%s309 + $0x1a] sm:$0x1]
        %v4932 = vld [vmem:[%s309 + $0x1b] sm:$0x1]
        %v4933 = vld [vmem:[%s309 + $0x1c] sm:$0x1]
        %v4934 = vld [vmem:[%s309 + $0x1d] sm:$0x1]
        %v4935 = vld [vmem:[%s309 + $0x1e] sm:$0x1]
        %v4936 = vld [vmem:[%s309 + $0x1f] sm:$0x1]
        %v4937 = vld [vmem:[%s309 + $0x20] sm:$0x1]
        %v4938 = vld [vmem:[%s309 + $0x21] sm:$0x1]
        %v4939 = vld [vmem:[%s309 + $0x22] sm:$0x1]
        %v4940 = vld [vmem:[%s346] sm:$0x1]
        %v4941 = vld [vmem:[%s346 + $0x1] sm:$0x1]
        %v4942 = vld [vmem:[%s346 + $0x2] sm:$0x1]
        %v4943 = vld [vmem:[%s346 + $0x3] sm:$0x1]
        %v4944 = vld [vmem:[%s346 + $0x4] sm:$0x1]
        %v4945 = vld [vmem:[%s346 + $0x5] sm:$0x1]
        %v4946 = vld [vmem:[%s346 + $0x6] sm:$0x1]
        %v4947 = vld [vmem:[%s346 + $0x7] sm:$0x1]
        %v4948 = vld [vmem:[%s346 + $0x8] sm:$0x1]
        %v4949 = vld [vmem:[%s346 + $0x9] sm:$0x1]
        %v4950 = vld [vmem:[%s346 + $0xa] sm:$0x1]
        %v4951 = vld [vmem:[%s346 + $0xb] sm:$0x1]
        %v4952 = vld [vmem:[%s346 + $0xc] sm:$0x1]
        %v4953 = vld [vmem:[%s346 + $0xd] sm:$0x1]
        %v4954 = vld [vmem:[%s346 + $0xe] sm:$0x1]
        %v4955 = vld [vmem:[%s346 + $0xf] sm:$0x1]
        %v4956 = vld [vmem:[%s346 + $0x10] sm:$0x1]
        %v4957 = vld [vmem:[%s346 + $0x11] sm:$0x1]
        %v4958 = vld [vmem:[%s346 + $0x12] sm:$0x1]
        %v4959 = vld [vmem:[%s346 + $0x13] sm:$0x1]
        %v4960 = vld [vmem:[%s346 + $0x14] sm:$0x1]
        %v4961 = vld [vmem:[%s346 + $0x15] sm:$0x1]
        %v4962 = vld [vmem:[%s346 + $0x16] sm:$0x1]
        %v4963 = vld [vmem:[%s346 + $0x17] sm:$0x1]
        %v4964 = vld [vmem:[%s346 + $0x18] sm:$0x1]
        %v4965 = vld [vmem:[%s346 + $0x19] sm:$0x1]
        %v4966 = vld [vmem:[%s346 + $0x1a] sm:$0x1]
        %v4967 = vld [vmem:[%s346 + $0x1b] sm:$0x1]
        %v4968 = vld [vmem:[%s346 + $0x1c] sm:$0x1]
        %v4969 = vld [vmem:[%s346 + $0x1d] sm:$0x1]
        %v4970 = vld [vmem:[%s346 + $0x1e] sm:$0x1]
        %v4971 = vld [vmem:[%s346 + $0x1f] sm:$0x1]
        %v4972 = vld [vmem:[%s346 + $0x20] sm:$0x1]
        %v4973 = vld [vmem:[%s346 + $0x21] sm:$0x1]
        %v4974 = vld [vmem:[%s346 + $0x22] sm:$0x1]
        %v4975 = vld [vmem:[%s383] sm:$0x1]
        %v4976 = vld [vmem:[%s383 + $0x1] sm:$0x1]
        %v4977 = vld [vmem:[%s383 + $0x2] sm:$0x1]
        %v4978 = vld [vmem:[%s383 + $0x3] sm:$0x1]
        %v4979 = vld [vmem:[%s383 + $0x4] sm:$0x1]
        %v4980 = vld [vmem:[%s383 + $0x5] sm:$0x1]
        %v4981 = vld [vmem:[%s383 + $0x6] sm:$0x1]
        %v4982 = vld [vmem:[%s383 + $0x7] sm:$0x1]
        %v4983 = vld [vmem:[%s383 + $0x8] sm:$0x1]
        %v4984 = vld [vmem:[%s383 + $0x9] sm:$0x1]
        %v4985 = vld [vmem:[%s383 + $0xa] sm:$0x1]
        %v4986 = vld [vmem:[%s383 + $0xb] sm:$0x1]
        %v4987 = vld [vmem:[%s383 + $0xc] sm:$0x1]
        %v4988 = vld [vmem:[%s383 + $0xd] sm:$0x1]
        %v4989 = vld [vmem:[%s383 + $0xe] sm:$0x1]
        %v4990 = vld [vmem:[%s383 + $0xf] sm:$0x1]
        %v4991 = vld [vmem:[%s383 + $0x10] sm:$0x1]
        %v4992 = vld [vmem:[%s383 + $0x11] sm:$0x1]
        %v4993 = vld [vmem:[%s383 + $0x12] sm:$0x1]
        %v4994 = vld [vmem:[%s383 + $0x13] sm:$0x1]
        %v4995 = vld [vmem:[%s383 + $0x14] sm:$0x1]
        %v4996 = vld [vmem:[%s383 + $0x15] sm:$0x1]
        %v4997 = vld [vmem:[%s383 + $0x16] sm:$0x1]
        %v4998 = vld [vmem:[%s383 + $0x17] sm:$0x1]
        %v4999 = vld [vmem:[%s383 + $0x18] sm:$0x1]
        %v5000 = vld [vmem:[%s383 + $0x19] sm:$0x1]
        %v5001 = vld [vmem:[%s383 + $0x1a] sm:$0x1]
        %v5002 = vld [vmem:[%s383 + $0x1b] sm:$0x1]
        %v5003 = vld [vmem:[%s383 + $0x1c] sm:$0x1]
        %v5004 = vld [vmem:[%s383 + $0x1d] sm:$0x1]
        %v5005 = vld [vmem:[%s383 + $0x1e] sm:$0x1]
        %v5006 = vld [vmem:[%s383 + $0x1f] sm:$0x1]
        %v5007 = vld [vmem:[%s383 + $0x20] sm:$0x1]
        %v5008 = vld [vmem:[%s383 + $0x21] sm:$0x1]
        %v5009 = vld [vmem:[%s383 + $0x22] sm:$0x1]
        %v5010 = vld [vmem:[%s420] sm:$0x1]
        %v5011 = vld [vmem:[%s420 + $0x1] sm:$0x1]
        %v5012 = vld [vmem:[%s420 + $0x2] sm:$0x1]
        %v5013 = vld [vmem:[%s420 + $0x3] sm:$0x1]
        %v5014 = vld [vmem:[%s420 + $0x4] sm:$0x1]
        %v5015 = vld [vmem:[%s420 + $0x5] sm:$0x1]
        %v5016 = vld [vmem:[%s420 + $0x6] sm:$0x1]
        %v5017 = vld [vmem:[%s420 + $0x7] sm:$0x1]
        %v5018 = vld [vmem:[%s420 + $0x8] sm:$0x1]
        %v5019 = vld [vmem:[%s420 + $0x9] sm:$0x1]
        %v5020 = vld [vmem:[%s420 + $0xa] sm:$0x1]
        %v5021 = vld [vmem:[%s420 + $0xb] sm:$0x1]
        %v5022 = vld [vmem:[%s420 + $0xc] sm:$0x1]
        %v5023 = vld [vmem:[%s420 + $0xd] sm:$0x1]
        %v5024 = vld [vmem:[%s420 + $0xe] sm:$0x1]
        %v5025 = vld [vmem:[%s420 + $0xf] sm:$0x1]
        %v5026 = vld [vmem:[%s420 + $0x10] sm:$0x1]
        %v5027 = vld [vmem:[%s420 + $0x11] sm:$0x1]
        %v5028 = vld [vmem:[%s420 + $0x12] sm:$0x1]
        %v5029 = vld [vmem:[%s420 + $0x13] sm:$0x1]
        %v5030 = vld [vmem:[%s420 + $0x14] sm:$0x1]
        %v5031 = vld [vmem:[%s420 + $0x15] sm:$0x1]
        %v5032 = vld [vmem:[%s420 + $0x16] sm:$0x1]
        %v5033 = vld [vmem:[%s420 + $0x17] sm:$0x1]
        %v5034 = vld [vmem:[%s420 + $0x18] sm:$0x1]
        %v5035 = vld [vmem:[%s420 + $0x19] sm:$0x1]
        %v5036 = vld [vmem:[%s420 + $0x1a] sm:$0x1]
        %v5037 = vld [vmem:[%s420 + $0x1b] sm:$0x1]
        %v5038 = vld [vmem:[%s420 + $0x1c] sm:$0x1]
        %v5039 = vld [vmem:[%s420 + $0x1d] sm:$0x1]
        %v5040 = vld [vmem:[%s420 + $0x1e] sm:$0x1]
        %v5041 = vld [vmem:[%s420 + $0x1f] sm:$0x1]
        %v5042 = vld [vmem:[%s420 + $0x20] sm:$0x1]
        %v5043 = vld [vmem:[%s420 + $0x21] sm:$0x1]
        %v5044 = vld [vmem:[%s420 + $0x22] sm:$0x1]
        %s5045 = scalar_lea.vmem %s234, 75
        %v5046 = vld [vmem:[%s5045] sm:$0x1]
        %v5047 = vld [vmem:[%s5045 + $0x1] sm:$0x1]
        %v5048 = vld [vmem:[%s5045 + $0x2] sm:$0x1]
        %v5049 = vld [vmem:[%s5045 + $0x3] sm:$0x1]
        %v5050 = vld [vmem:[%s5045 + $0x4] sm:$0x1]
        %v5051 = vld [vmem:[%s5045 + $0x5] sm:$0x1]
        %v5052 = vld [vmem:[%s5045 + $0x6] sm:$0x1]
        %v5053 = vld [vmem:[%s5045 + $0x7] sm:$0x1]
        %v5054 = vld [vmem:[%s5045 + $0x8] sm:$0x1]
        %v5055 = vld [vmem:[%s5045 + $0x9] sm:$0x1]
        %v5056 = vld [vmem:[%s5045 + $0xa] sm:$0x1]
        %v5057 = vld [vmem:[%s5045 + $0xb] sm:$0x1]
        %v5058 = vld [vmem:[%s5045 + $0xc] sm:$0x1]
        %v5059 = vld [vmem:[%s5045 + $0xd] sm:$0x1]
        %v5060 = vld [vmem:[%s5045 + $0xe] sm:$0x1]
        %v5061 = vld [vmem:[%s5045 + $0xf] sm:$0x1]
        %v5062 = vld [vmem:[%s5045 + $0x10] sm:$0x1]
        %v5063 = vld [vmem:[%s5045 + $0x11] sm:$0x1]
        %v5064 = vld [vmem:[%s5045 + $0x12] sm:$0x1]
        %v5065 = vld [vmem:[%s5045 + $0x13] sm:$0x1]
        %v5066 = vld [vmem:[%s5045 + $0x14] sm:$0x1]
        %v5067 = vld [vmem:[%s5045 + $0x15] sm:$0x1]
        %v5068 = vld [vmem:[%s5045 + $0x16] sm:$0x1]
        %v5069 = vld [vmem:[%s5045 + $0x17] sm:$0x1]
        %v5070 = vld [vmem:[%s5045 + $0x18] sm:$0x1]
        %v5071 = vld [vmem:[%s5045 + $0x19] sm:$0x1]
        %v5072 = vld [vmem:[%s5045 + $0x1a] sm:$0x1]
        %v5073 = vld [vmem:[%s5045 + $0x1b] sm:$0x1]
        %v5074 = vld [vmem:[%s5045 + $0x1c] sm:$0x1]
        %v5075 = vld [vmem:[%s5045 + $0x1d] sm:$0x1]
        %v5076 = vld [vmem:[%s5045 + $0x1e] sm:$0x1]
        %v5077 = vld [vmem:[%s5045 + $0x1f] sm:$0x1]
        %v5078 = vld [vmem:[%s5045 + $0x20] sm:$0x1]
        %v5079 = vld [vmem:[%s5045 + $0x21] sm:$0x1]
        %v5080 = vld [vmem:[%s5045 + $0x22] sm:$0x1]
        %s5081 = scalar_lea.vmem %s234, 112
        %v5082 = vld [vmem:[%s5081] sm:$0x1]
        %v5083 = vld [vmem:[%s5081 + $0x1] sm:$0x1]
        %v5084 = vld [vmem:[%s5081 + $0x2] sm:$0x1]
        %v5085 = vld [vmem:[%s5081 + $0x3] sm:$0x1]
        %v5086 = vld [vmem:[%s5081 + $0x4] sm:$0x1]
        %v5087 = vld [vmem:[%s5081 + $0x5] sm:$0x1]
        %v5088 = vld [vmem:[%s5081 + $0x6] sm:$0x1]
        %v5089 = vld [vmem:[%s5081 + $0x7] sm:$0x1]
        %v5090 = vld [vmem:[%s5081 + $0x8] sm:$0x1]
        %v5091 = vld [vmem:[%s5081 + $0x9] sm:$0x1]
        %v5092 = vld [vmem:[%s5081 + $0xa] sm:$0x1]
        %v5093 = vld [vmem:[%s5081 + $0xb] sm:$0x1]
        %v5094 = vld [vmem:[%s5081 + $0xc] sm:$0x1]
        %v5095 = vld [vmem:[%s5081 + $0xd] sm:$0x1]
        %v5096 = vld [vmem:[%s5081 + $0xe] sm:$0x1]
        %v5097 = vld [vmem:[%s5081 + $0xf] sm:$0x1]
        %v5098 = vld [vmem:[%s5081 + $0x10] sm:$0x1]
        %v5099 = vld [vmem:[%s5081 + $0x11] sm:$0x1]
        %v5100 = vld [vmem:[%s5081 + $0x12] sm:$0x1]
        %v5101 = vld [vmem:[%s5081 + $0x13] sm:$0x1]
        %v5102 = vld [vmem:[%s5081 + $0x14] sm:$0x1]
        %v5103 = vld [vmem:[%s5081 + $0x15] sm:$0x1]
        %v5104 = vld [vmem:[%s5081 + $0x16] sm:$0x1]
        %v5105 = vld [vmem:[%s5081 + $0x17] sm:$0x1]
        %v5106 = vld [vmem:[%s5081 + $0x18] sm:$0x1]
        %v5107 = vld [vmem:[%s5081 + $0x19] sm:$0x1]
        %v5108 = vld [vmem:[%s5081 + $0x1a] sm:$0x1]
        %v5109 = vld [vmem:[%s5081 + $0x1b] sm:$0x1]
        %v5110 = vld [vmem:[%s5081 + $0x1c] sm:$0x1]
        %v5111 = vld [vmem:[%s5081 + $0x1d] sm:$0x1]
        %v5112 = vld [vmem:[%s5081 + $0x1e] sm:$0x1]
        %v5113 = vld [vmem:[%s5081 + $0x1f] sm:$0x1]
        %v5114 = vld [vmem:[%s5081 + $0x20] sm:$0x1]
        %v5115 = vld [vmem:[%s5081 + $0x21] sm:$0x1]
        %v5116 = vld [vmem:[%s5081 + $0x22] sm:$0x1]
        %v5153 = vunpack.c.l.s4 1966171168
        %v5154 = vunpack.c.0.s8 %v5153
        %v5155 = vlaneseq
        %v5156 = vshrl.u32 %v5155, 7
        %v5157 = vsub.s32 %v5154, %v5156
        %v5158 = vrot.slane %v4905, %v5157
        %v5160 = vunpack.c.l.s4 1966171168
        %v5161 = vunpack.c.0.s8 %v5160
        %v5162 = vlaneseq
        %v5163 = vshrl.u32 %v5162, 7
        %v5164 = vsub.s32 %v5161, %v5163
        %v5165 = vrot.slane %v5158, %v5164
        %v5167 = vunpack.c.l.s4 1966171168
        %v5168 = vunpack.c.0.s8 %v5167
        %v5169 = vlaneseq
        %v5170 = vshrl.u32 %v5169, 7
        %v5171 = vsub.s32 %v5168, %v5170
        %v5172 = vrot.slane %v4906, %v5171
        %v5174 = vunpack.c.l.s4 1966171168
        %v5175 = vunpack.c.0.s8 %v5174
        %v5176 = vlaneseq
        %v5177 = vshrl.u32 %v5176, 7
        %v5178 = vsub.s32 %v5175, %v5177
        %v5179 = vrot.slane %v5172, %v5178
        %v5181 = vunpack.c.l.s4 1966171168
        %v5182 = vunpack.c.0.s8 %v5181
        %v5183 = vlaneseq
        %v5184 = vshrl.u32 %v5183, 7
        %v5185 = vsub.s32 %v5182, %v5184
        %v5186 = vrot.slane %v4907, %v5185
        %v5188 = vunpack.c.l.s4 1966171168
        %v5189 = vunpack.c.0.s8 %v5188
        %v5190 = vlaneseq
        %v5191 = vshrl.u32 %v5190, 7
        %v5192 = vsub.s32 %v5189, %v5191
        %v5193 = vrot.slane %v5186, %v5192
        %v5195 = vunpack.c.l.s4 1966171168
        %v5196 = vunpack.c.0.s8 %v5195
        %v5197 = vlaneseq
        %v5198 = vshrl.u32 %v5197, 7
        %v5199 = vsub.s32 %v5196, %v5198
        %v5200 = vrot.slane %v4908, %v5199
        %v5202 = vunpack.c.l.s4 1966171168
        %v5203 = vunpack.c.0.s8 %v5202
        %v5204 = vlaneseq
        %v5205 = vshrl.u32 %v5204, 7
        %v5206 = vsub.s32 %v5203, %v5205
        %v5207 = vrot.slane %v5200, %v5206
        %v5209 = vunpack.c.l.s4 1966171168
        %v5210 = vunpack.c.0.s8 %v5209
        %v5211 = vlaneseq
        %v5212 = vshrl.u32 %v5211, 7
        %v5213 = vsub.s32 %v5210, %v5212
        %v5214 = vrot.slane %v4909, %v5213
        %v5216 = vunpack.c.l.s4 1966171168
        %v5217 = vunpack.c.0.s8 %v5216
        %v5218 = vlaneseq
        %v5219 = vshrl.u32 %v5218, 7
        %v5220 = vsub.s32 %v5217, %v5219
        %v5221 = vrot.slane %v5214, %v5220
        %v5223 = vunpack.c.l.s4 1966171168
        %v5224 = vunpack.c.0.s8 %v5223
        %v5225 = vlaneseq
        %v5226 = vshrl.u32 %v5225, 7
        %v5227 = vsub.s32 %v5224, %v5226
        %v5228 = vrot.slane %v4910, %v5227
        %v5230 = vunpack.c.l.s4 1966171168
        %v5231 = vunpack.c.0.s8 %v5230
        %v5232 = vlaneseq
        %v5233 = vshrl.u32 %v5232, 7
        %v5234 = vsub.s32 %v5231, %v5233
        %v5235 = vrot.slane %v5228, %v5234
        %v5237 = vunpack.c.l.s4 1966171168
        %v5238 = vunpack.c.0.s8 %v5237
        %v5239 = vlaneseq
        %v5240 = vshrl.u32 %v5239, 7
        %v5241 = vsub.s32 %v5238, %v5240
        %v5242 = vrot.slane %v4911, %v5241
        %v5244 = vunpack.c.l.s4 1966171168
        %v5245 = vunpack.c.0.s8 %v5244
        %v5246 = vlaneseq
        %v5247 = vshrl.u32 %v5246, 7
        %v5248 = vsub.s32 %v5245, %v5247
        %v5249 = vrot.slane %v5242, %v5248
        %v5251 = vunpack.c.l.s4 1966171168
        %v5252 = vunpack.c.0.s8 %v5251
        %v5253 = vlaneseq
        %v5254 = vshrl.u32 %v5253, 7
        %v5255 = vsub.s32 %v5252, %v5254
        %v5256 = vrot.slane %v4912, %v5255
        %v5258 = vunpack.c.l.s4 1966171168
        %v5259 = vunpack.c.0.s8 %v5258
        %v5260 = vlaneseq
        %v5261 = vshrl.u32 %v5260, 7
        %v5262 = vsub.s32 %v5259, %v5261
        %v5263 = vrot.slane %v5256, %v5262
        %v5265 = vunpack.c.l.s4 1966171168
        %v5266 = vunpack.c.0.s8 %v5265
        %v5267 = vlaneseq
        %v5268 = vshrl.u32 %v5267, 7
        %v5269 = vsub.s32 %v5266, %v5268
        %v5270 = vrot.slane %v4913, %v5269
        %v5272 = vunpack.c.l.s4 1966171168
        %v5273 = vunpack.c.0.s8 %v5272
        %v5274 = vlaneseq
        %v5275 = vshrl.u32 %v5274, 7
        %v5276 = vsub.s32 %v5273, %v5275
        %v5277 = vrot.slane %v5270, %v5276
        %v5279 = vunpack.c.l.s4 1966171168
        %v5280 = vunpack.c.0.s8 %v5279
        %v5281 = vlaneseq
        %v5282 = vshrl.u32 %v5281, 7
        %v5283 = vsub.s32 %v5280, %v5282
        %v5284 = vrot.slane %v4914, %v5283
        %v5286 = vunpack.c.l.s4 1966171168
        %v5287 = vunpack.c.0.s8 %v5286
        %v5288 = vlaneseq
        %v5289 = vshrl.u32 %v5288, 7
        %v5290 = vsub.s32 %v5287, %v5289
        %v5291 = vrot.slane %v5284, %v5290
        %v5293 = vunpack.c.l.s4 1966171168
        %v5294 = vunpack.c.0.s8 %v5293
        %v5295 = vlaneseq
        %v5296 = vshrl.u32 %v5295, 7
        %v5297 = vsub.s32 %v5294, %v5296
        %v5298 = vrot.slane %v4915, %v5297
        %v5300 = vunpack.c.l.s4 1966171168
        %v5301 = vunpack.c.0.s8 %v5300
        %v5302 = vlaneseq
        %v5303 = vshrl.u32 %v5302, 7
        %v5304 = vsub.s32 %v5301, %v5303
        %v5305 = vrot.slane %v5298, %v5304
        %v5307 = vunpack.c.l.s4 1966171168
        %v5308 = vunpack.c.0.s8 %v5307
        %v5309 = vlaneseq
        %v5310 = vshrl.u32 %v5309, 7
        %v5311 = vsub.s32 %v5308, %v5310
        %v5312 = vrot.slane %v4916, %v5311
        %v5314 = vunpack.c.l.s4 1966171168
        %v5315 = vunpack.c.0.s8 %v5314
        %v5316 = vlaneseq
        %v5317 = vshrl.u32 %v5316, 7
        %v5318 = vsub.s32 %v5315, %v5317
        %v5319 = vrot.slane %v5312, %v5318
        %v5321 = vunpack.c.l.s4 1966171168
        %v5322 = vunpack.c.0.s8 %v5321
        %v5323 = vlaneseq
        %v5324 = vshrl.u32 %v5323, 7
        %v5325 = vsub.s32 %v5322, %v5324
        %v5326 = vrot.slane %v4917, %v5325
        %v5328 = vunpack.c.l.s4 1966171168
        %v5329 = vunpack.c.0.s8 %v5328
        %v5330 = vlaneseq
        %v5331 = vshrl.u32 %v5330, 7
        %v5332 = vsub.s32 %v5329, %v5331
        %v5333 = vrot.slane %v5326, %v5332
        %v5335 = vunpack.c.l.s4 1966171168
        %v5336 = vunpack.c.0.s8 %v5335
        %v5337 = vlaneseq
        %v5338 = vshrl.u32 %v5337, 7
        %v5339 = vsub.s32 %v5336, %v5338
        %v5340 = vrot.slane %v4918, %v5339
        %v5342 = vunpack.c.l.s4 1966171168
        %v5343 = vunpack.c.0.s8 %v5342
        %v5344 = vlaneseq
        %v5345 = vshrl.u32 %v5344, 7
        %v5346 = vsub.s32 %v5343, %v5345
        %v5347 = vrot.slane %v5340, %v5346
        %v5349 = vunpack.c.l.s4 1966171168
        %v5350 = vunpack.c.0.s8 %v5349
        %v5351 = vlaneseq
        %v5352 = vshrl.u32 %v5351, 7
        %v5353 = vsub.s32 %v5350, %v5352
        %v5354 = vrot.slane %v4919, %v5353
        %v5356 = vunpack.c.l.s4 1966171168
        %v5357 = vunpack.c.0.s8 %v5356
        %v5358 = vlaneseq
        %v5359 = vshrl.u32 %v5358, 7
        %v5360 = vsub.s32 %v5357, %v5359
        %v5361 = vrot.slane %v5354, %v5360
        %v5363 = vunpack.c.l.s4 1966171168
        %v5364 = vunpack.c.0.s8 %v5363
        %v5365 = vlaneseq
        %v5366 = vshrl.u32 %v5365, 7
        %v5367 = vsub.s32 %v5364, %v5366
        %v5368 = vrot.slane %v4920, %v5367
        %v5370 = vunpack.c.l.s4 1966171168
        %v5371 = vunpack.c.0.s8 %v5370
        %v5372 = vlaneseq
        %v5373 = vshrl.u32 %v5372, 7
        %v5374 = vsub.s32 %v5371, %v5373
        %v5375 = vrot.slane %v5368, %v5374
        %v5377 = vunpack.c.l.s4 1966171168
        %v5378 = vunpack.c.0.s8 %v5377
        %v5379 = vlaneseq
        %v5380 = vshrl.u32 %v5379, 7
        %v5381 = vsub.s32 %v5378, %v5380
        %v5382 = vrot.slane %v4921, %v5381
        %v5384 = vunpack.c.l.s4 1966171168
        %v5385 = vunpack.c.0.s8 %v5384
        %v5386 = vlaneseq
        %v5387 = vshrl.u32 %v5386, 7
        %v5388 = vsub.s32 %v5385, %v5387
        %v5389 = vrot.slane %v5382, %v5388
        %v5391 = vunpack.c.l.s4 1966171168
        %v5392 = vunpack.c.0.s8 %v5391
        %v5393 = vlaneseq
        %v5394 = vshrl.u32 %v5393, 7
        %v5395 = vsub.s32 %v5392, %v5394
        %v5396 = vrot.slane %v4922, %v5395
        %v5398 = vunpack.c.l.s4 1966171168
        %v5399 = vunpack.c.0.s8 %v5398
        %v5400 = vlaneseq
        %v5401 = vshrl.u32 %v5400, 7
        %v5402 = vsub.s32 %v5399, %v5401
        %v5403 = vrot.slane %v5396, %v5402
        %v5405 = vunpack.c.l.s4 1966171168
        %v5406 = vunpack.c.0.s8 %v5405
        %v5407 = vlaneseq
        %v5408 = vshrl.u32 %v5407, 7
        %v5409 = vsub.s32 %v5406, %v5408
        %v5410 = vrot.slane %v4923, %v5409
        %v5412 = vunpack.c.l.s4 1966171168
        %v5413 = vunpack.c.0.s8 %v5412
        %v5414 = vlaneseq
        %v5415 = vshrl.u32 %v5414, 7
        %v5416 = vsub.s32 %v5413, %v5415
        %v5417 = vrot.slane %v5410, %v5416
        %v5419 = vunpack.c.l.s4 1966171168
        %v5420 = vunpack.c.0.s8 %v5419
        %v5421 = vlaneseq
        %v5422 = vshrl.u32 %v5421, 7
        %v5423 = vsub.s32 %v5420, %v5422
        %v5424 = vrot.slane %v4924, %v5423
        %v5426 = vunpack.c.l.s4 1966171168
        %v5427 = vunpack.c.0.s8 %v5426
        %v5428 = vlaneseq
        %v5429 = vshrl.u32 %v5428, 7
        %v5430 = vsub.s32 %v5427, %v5429
        %v5431 = vrot.slane %v5424, %v5430
        %v5433 = vunpack.c.l.s4 1966171168
        %v5434 = vunpack.c.0.s8 %v5433
        %v5435 = vlaneseq
        %v5436 = vshrl.u32 %v5435, 7
        %v5437 = vsub.s32 %v5434, %v5436
        %v5438 = vrot.slane %v4925, %v5437
        %v5440 = vunpack.c.l.s4 1966171168
        %v5441 = vunpack.c.0.s8 %v5440
        %v5442 = vlaneseq
        %v5443 = vshrl.u32 %v5442, 7
        %v5444 = vsub.s32 %v5441, %v5443
        %v5445 = vrot.slane %v5438, %v5444
        %v5447 = vunpack.c.l.s4 1966171168
        %v5448 = vunpack.c.0.s8 %v5447
        %v5449 = vlaneseq
        %v5450 = vshrl.u32 %v5449, 7
        %v5451 = vsub.s32 %v5448, %v5450
        %v5452 = vrot.slane %v4926, %v5451
        %v5454 = vunpack.c.l.s4 1966171168
        %v5455 = vunpack.c.0.s8 %v5454
        %v5456 = vlaneseq
        %v5457 = vshrl.u32 %v5456, 7
        %v5458 = vsub.s32 %v5455, %v5457
        %v5459 = vrot.slane %v5452, %v5458
        %v5461 = vunpack.c.l.s4 1966171168
        %v5462 = vunpack.c.0.s8 %v5461
        %v5463 = vlaneseq
        %v5464 = vshrl.u32 %v5463, 7
        %v5465 = vsub.s32 %v5462, %v5464
        %v5466 = vrot.slane %v4927, %v5465
        %v5468 = vunpack.c.l.s4 1966171168
        %v5469 = vunpack.c.0.s8 %v5468
        %v5470 = vlaneseq
        %v5471 = vshrl.u32 %v5470, 7
        %v5472 = vsub.s32 %v5469, %v5471
        %v5473 = vrot.slane %v5466, %v5472
        %v5475 = vunpack.c.l.s4 1966171168
        %v5476 = vunpack.c.0.s8 %v5475
        %v5477 = vlaneseq
        %v5478 = vshrl.u32 %v5477, 7
        %v5479 = vsub.s32 %v5476, %v5478
        %v5480 = vrot.slane %v4928, %v5479
        %v5482 = vunpack.c.l.s4 1966171168
        %v5483 = vunpack.c.0.s8 %v5482
        %v5484 = vlaneseq
        %v5485 = vshrl.u32 %v5484, 7
        %v5486 = vsub.s32 %v5483, %v5485
        %v5487 = vrot.slane %v5480, %v5486
        %v5489 = vunpack.c.l.s4 1966171168
        %v5490 = vunpack.c.0.s8 %v5489
        %v5491 = vlaneseq
        %v5492 = vshrl.u32 %v5491, 7
        %v5493 = vsub.s32 %v5490, %v5492
        %v5494 = vrot.slane %v4929, %v5493
        %v5496 = vunpack.c.l.s4 1966171168
        %v5497 = vunpack.c.0.s8 %v5496
        %v5498 = vlaneseq
        %v5499 = vshrl.u32 %v5498, 7
        %v5500 = vsub.s32 %v5497, %v5499
        %v5501 = vrot.slane %v5494, %v5500
        %v5503 = vunpack.c.l.s4 1966171168
        %v5504 = vunpack.c.0.s8 %v5503
        %v5505 = vlaneseq
        %v5506 = vshrl.u32 %v5505, 7
        %v5507 = vsub.s32 %v5504, %v5506
        %v5508 = vrot.slane %v4930, %v5507
        %v5510 = vunpack.c.l.s4 1966171168
        %v5511 = vunpack.c.0.s8 %v5510
        %v5512 = vlaneseq
        %v5513 = vshrl.u32 %v5512, 7
        %v5514 = vsub.s32 %v5511, %v5513
        %v5515 = vrot.slane %v5508, %v5514
        %v5517 = vunpack.c.l.s4 1966171168
        %v5518 = vunpack.c.0.s8 %v5517
        %v5519 = vlaneseq
        %v5520 = vshrl.u32 %v5519, 7
        %v5521 = vsub.s32 %v5518, %v5520
        %v5522 = vrot.slane %v4931, %v5521
        %v5524 = vunpack.c.l.s4 1966171168
        %v5525 = vunpack.c.0.s8 %v5524
        %v5526 = vlaneseq
        %v5527 = vshrl.u32 %v5526, 7
        %v5528 = vsub.s32 %v5525, %v5527
        %v5529 = vrot.slane %v5522, %v5528
        %v5531 = vunpack.c.l.s4 1966171168
        %v5532 = vunpack.c.0.s8 %v5531
        %v5533 = vlaneseq
        %v5534 = vshrl.u32 %v5533, 7
        %v5535 = vsub.s32 %v5532, %v5534
        %v5536 = vrot.slane %v4932, %v5535
        %v5538 = vunpack.c.l.s4 1966171168
        %v5539 = vunpack.c.0.s8 %v5538
        %v5540 = vlaneseq
        %v5541 = vshrl.u32 %v5540, 7
        %v5542 = vsub.s32 %v5539, %v5541
        %v5543 = vrot.slane %v5536, %v5542
        %v5545 = vunpack.c.l.s4 1966171168
        %v5546 = vunpack.c.0.s8 %v5545
        %v5547 = vlaneseq
        %v5548 = vshrl.u32 %v5547, 7
        %v5549 = vsub.s32 %v5546, %v5548
        %v5550 = vrot.slane %v4933, %v5549
        %v5552 = vunpack.c.l.s4 1966171168
        %v5553 = vunpack.c.0.s8 %v5552
        %v5554 = vlaneseq
        %v5555 = vshrl.u32 %v5554, 7
        %v5556 = vsub.s32 %v5553, %v5555
        %v5557 = vrot.slane %v5550, %v5556
        %v5559 = vunpack.c.l.s4 1966171168
        %v5560 = vunpack.c.0.s8 %v5559
        %v5561 = vlaneseq
        %v5562 = vshrl.u32 %v5561, 7
        %v5563 = vsub.s32 %v5560, %v5562
        %v5564 = vrot.slane %v4934, %v5563
        %v5566 = vunpack.c.l.s4 1966171168
        %v5567 = vunpack.c.0.s8 %v5566
        %v5568 = vlaneseq
        %v5569 = vshrl.u32 %v5568, 7
        %v5570 = vsub.s32 %v5567, %v5569
        %v5571 = vrot.slane %v5564, %v5570
        %v5573 = vunpack.c.l.s4 1966171168
        %v5574 = vunpack.c.0.s8 %v5573
        %v5575 = vlaneseq
        %v5576 = vshrl.u32 %v5575, 7
        %v5577 = vsub.s32 %v5574, %v5576
        %v5578 = vrot.slane %v4935, %v5577
        %v5580 = vunpack.c.l.s4 1966171168
        %v5581 = vunpack.c.0.s8 %v5580
        %v5582 = vlaneseq
        %v5583 = vshrl.u32 %v5582, 7
        %v5584 = vsub.s32 %v5581, %v5583
        %v5585 = vrot.slane %v5578, %v5584
        %v5587 = vunpack.c.l.s4 1966171168
        %v5588 = vunpack.c.0.s8 %v5587
        %v5589 = vlaneseq
        %v5590 = vshrl.u32 %v5589, 7
        %v5591 = vsub.s32 %v5588, %v5590
        %v5592 = vrot.slane %v4936, %v5591
        %v5594 = vunpack.c.l.s4 1966171168
        %v5595 = vunpack.c.0.s8 %v5594
        %v5596 = vlaneseq
        %v5597 = vshrl.u32 %v5596, 7
        %v5598 = vsub.s32 %v5595, %v5597
        %v5599 = vrot.slane %v5592, %v5598
        %v5601 = vunpack.c.l.s4 1966171168
        %v5602 = vunpack.c.0.s8 %v5601
        %v5603 = vlaneseq
        %v5604 = vshrl.u32 %v5603, 7
        %v5605 = vsub.s32 %v5602, %v5604
        %v5606 = vrot.slane %v4937, %v5605
        %v5608 = vunpack.c.l.s4 1966171168
        %v5609 = vunpack.c.0.s8 %v5608
        %v5610 = vlaneseq
        %v5611 = vshrl.u32 %v5610, 7
        %v5612 = vsub.s32 %v5609, %v5611
        %v5613 = vrot.slane %v5606, %v5612
        %v5615 = vunpack.c.l.s4 1966171168
        %v5616 = vunpack.c.0.s8 %v5615
        %v5617 = vlaneseq
        %v5618 = vshrl.u32 %v5617, 7
        %v5619 = vsub.s32 %v5616, %v5618
        %v5620 = vrot.slane %v4938, %v5619
        %v5622 = vunpack.c.l.s4 1966171168
        %v5623 = vunpack.c.0.s8 %v5622
        %v5624 = vlaneseq
        %v5625 = vshrl.u32 %v5624, 7
        %v5626 = vsub.s32 %v5623, %v5625
        %v5627 = vrot.slane %v5620, %v5626
        %v5629 = vunpack.c.l.s4 1966171168
        %v5630 = vunpack.c.0.s8 %v5629
        %v5631 = vlaneseq
        %v5632 = vshrl.u32 %v5631, 7
        %v5633 = vsub.s32 %v5630, %v5632
        %v5634 = vrot.slane %v4939, %v5633
        %v5636 = vunpack.c.l.s4 1966171168
        %v5637 = vunpack.c.0.s8 %v5636
        %v5638 = vlaneseq
        %v5639 = vshrl.u32 %v5638, 7
        %v5640 = vsub.s32 %v5637, %v5639
        %v5641 = vrot.slane %v5634, %v5640
        %v5642 = vunpack.c.l.b16 %v5165
        %v5643 = vunpack.c.l.b16 %v5179
        %v5644 = vunpack.c.l.b16 %v5193
        %v5645 = vunpack.c.l.b16 %v5207
        %v5646 = vunpack.c.l.b16 %v5221
        %v5647 = vunpack.c.l.b16 %v5235
        %v5648 = vunpack.c.l.b16 %v5249
        %v5649 = vunpack.c.l.b16 %v5263
        %v5650 = vunpack.c.l.b16 %v5277
        %v5651 = vunpack.c.l.b16 %v5291
        %v5652 = vunpack.c.l.b16 %v5305
        %v5653 = vunpack.c.l.b16 %v5319
        %v5654 = vunpack.c.l.b16 %v5333
        %v5655 = vunpack.c.l.b16 %v5347
        %v5656 = vunpack.c.l.b16 %v5361
        %v5657 = vunpack.c.l.b16 %v5375
        %v5658 = vunpack.c.l.b16 %v5389
        %v5659 = vunpack.c.l.b16 %v5403
        %v5660 = vunpack.c.l.b16 %v5417
        %v5661 = vunpack.c.l.b16 %v5431
        %v5662 = vunpack.c.l.b16 %v5445
        %v5663 = vunpack.c.l.b16 %v5459
        %v5664 = vunpack.c.l.b16 %v5473
        %v5665 = vunpack.c.l.b16 %v5487
        %v5666 = vunpack.c.l.b16 %v5501
        %v5667 = vunpack.c.l.b16 %v5515
        %v5668 = vunpack.c.l.b16 %v5529
        %v5669 = vunpack.c.l.b16 %v5543
        %v5670 = vunpack.c.l.b16 %v5557
        %v5671 = vunpack.c.l.b16 %v5571
        %v5672 = vunpack.c.l.b16 %v5585
        %v5673 = vunpack.c.l.b16 %v5599
        %v5674 = vunpack.c.l.b16 %v5613
        %v5675 = vunpack.c.l.b16 %v5627
        %v5676 = vunpack.c.l.b16 %v5641
        %v5677 = vrot.slane %v5643, 7
        %v5678 = vsel %vm1034, %v5677, %v5642
        %v5679 = vrot.slane %v5644, 6
        %v5680 = vsel %vm1037, %v5679, %v5678
        %v5681 = vrot.slane %v5645, 5
        %v5682 = vsel %vm1040, %v5681, %v5680
        %v5683 = vrot.slane %v5646, 4
        %v5684 = vsel %vm1043, %v5683, %v5682
        %v5685 = vrot.slane %v5647, 3
        %v5686 = vsel %vm1046, %v5685, %v5684
        %v5687 = vrot.slane %v5648, 2
        %v5688 = vsel %vm1049, %v5687, %v5686
        %v5689 = vrot.slane %v5649, 1
        %v5690 = vsel %vm1052, %v5689, %v5688
        %v5691 = vrot.slane %v5651, 7
        %v5692 = vsel %vm1034, %v5691, %v5650
        %v5693 = vrot.slane %v5652, 6
        %v5694 = vsel %vm1037, %v5693, %v5692
        %v5695 = vrot.slane %v5653, 5
        %v5696 = vsel %vm1040, %v5695, %v5694
        %v5697 = vrot.slane %v5654, 4
        %v5698 = vsel %vm1043, %v5697, %v5696
        %v5699 = vrot.slane %v5655, 3
        %v5700 = vsel %vm1046, %v5699, %v5698
        %v5701 = vrot.slane %v5656, 2
        %v5702 = vsel %vm1049, %v5701, %v5700
        %v5703 = vrot.slane %v5657, 1
        %v5704 = vsel %vm1052, %v5703, %v5702
        %v5705 = vrot.slane %v5659, 7
        %v5706 = vsel %vm1034, %v5705, %v5658
        %v5707 = vrot.slane %v5660, 6
        %v5708 = vsel %vm1037, %v5707, %v5706
        %v5709 = vrot.slane %v5661, 5
        %v5710 = vsel %vm1040, %v5709, %v5708
        %v5711 = vrot.slane %v5662, 4
        %v5712 = vsel %vm1043, %v5711, %v5710
        %v5713 = vrot.slane %v5663, 3
        %v5714 = vsel %vm1046, %v5713, %v5712
        %v5715 = vrot.slane %v5664, 2
        %v5716 = vsel %vm1049, %v5715, %v5714
        %v5717 = vrot.slane %v5665, 1
        %v5718 = vsel %vm1052, %v5717, %v5716
        %v5719 = vrot.slane %v5667, 7
        %v5720 = vsel %vm1034, %v5719, %v5666
        %v5721 = vrot.slane %v5668, 6
        %v5722 = vsel %vm1037, %v5721, %v5720
        %v5723 = vrot.slane %v5669, 5
        %v5724 = vsel %vm1040, %v5723, %v5722
        %v5725 = vrot.slane %v5670, 4
        %v5726 = vsel %vm1043, %v5725, %v5724
        %v5727 = vrot.slane %v5671, 3
        %v5728 = vsel %vm1046, %v5727, %v5726
        %v5729 = vrot.slane %v5672, 2
        %v5730 = vsel %vm1049, %v5729, %v5728
        %v5731 = vrot.slane %v5673, 1
        %v5732 = vsel %vm1052, %v5731, %v5730
        %v5733 = vrot.slane %v5675, 7
        %v5734 = vsel %vm1034, %v5733, %v5674
        %v5735 = vrot.slane %v5676, 6
        %v5736 = vsel %vm1037, %v5735, %v5734
        %v5737 = vpack.c.b16 %v5704, %v5690
        %v5738 = vpack.c.b16 %v5732, %v5718
        %v5739 = vpack.c.b16 %v5736, %v5736
        %v5779 = vunpack.c.l.s4 1966171168
        %v5780 = vunpack.c.0.s8 %v5779
        %v5781 = vlaneseq
        %v5782 = vshrl.u32 %v5781, 7
        %v5783 = vsub.s32 %v5780, %v5782
        %v5784 = vrot.slane %v4940, %v5783
        %v5786 = vunpack.c.l.s4 1966171168
        %v5787 = vunpack.c.0.s8 %v5786
        %v5788 = vlaneseq
        %v5789 = vshrl.u32 %v5788, 7
        %v5790 = vsub.s32 %v5787, %v5789
        %v5791 = vrot.slane %v5784, %v5790
        %v5793 = vunpack.c.l.s4 1966171168
        %v5794 = vunpack.c.0.s8 %v5793
        %v5795 = vlaneseq
        %v5796 = vshrl.u32 %v5795, 7
        %v5797 = vsub.s32 %v5794, %v5796
        %v5798 = vrot.slane %v4941, %v5797
        %v5800 = vunpack.c.l.s4 1966171168
        %v5801 = vunpack.c.0.s8 %v5800
        %v5802 = vlaneseq
        %v5803 = vshrl.u32 %v5802, 7
        %v5804 = vsub.s32 %v5801, %v5803
        %v5805 = vrot.slane %v5798, %v5804
        %v5807 = vunpack.c.l.s4 1966171168
        %v5808 = vunpack.c.0.s8 %v5807
        %v5809 = vlaneseq
        %v5810 = vshrl.u32 %v5809, 7
        %v5811 = vsub.s32 %v5808, %v5810
        %v5812 = vrot.slane %v4942, %v5811
        %v5814 = vunpack.c.l.s4 1966171168
        %v5815 = vunpack.c.0.s8 %v5814
        %v5816 = vlaneseq
        %v5817 = vshrl.u32 %v5816, 7
        %v5818 = vsub.s32 %v5815, %v5817
        %v5819 = vrot.slane %v5812, %v5818
        %v5821 = vunpack.c.l.s4 1966171168
        %v5822 = vunpack.c.0.s8 %v5821
        %v5823 = vlaneseq
        %v5824 = vshrl.u32 %v5823, 7
        %v5825 = vsub.s32 %v5822, %v5824
        %v5826 = vrot.slane %v4943, %v5825
        %v5828 = vunpack.c.l.s4 1966171168
        %v5829 = vunpack.c.0.s8 %v5828
        %v5830 = vlaneseq
        %v5831 = vshrl.u32 %v5830, 7
        %v5832 = vsub.s32 %v5829, %v5831
        %v5833 = vrot.slane %v5826, %v5832
        %v5835 = vunpack.c.l.s4 1966171168
        %v5836 = vunpack.c.0.s8 %v5835
        %v5837 = vlaneseq
        %v5838 = vshrl.u32 %v5837, 7
        %v5839 = vsub.s32 %v5836, %v5838
        %v5840 = vrot.slane %v4944, %v5839
        %v5842 = vunpack.c.l.s4 1966171168
        %v5843 = vunpack.c.0.s8 %v5842
        %v5844 = vlaneseq
        %v5845 = vshrl.u32 %v5844, 7
        %v5846 = vsub.s32 %v5843, %v5845
        %v5847 = vrot.slane %v5840, %v5846
        %v5849 = vunpack.c.l.s4 1966171168
        %v5850 = vunpack.c.0.s8 %v5849
        %v5851 = vlaneseq
        %v5852 = vshrl.u32 %v5851, 7
        %v5853 = vsub.s32 %v5850, %v5852
        %v5854 = vrot.slane %v4945, %v5853
        %v5856 = vunpack.c.l.s4 1966171168
        %v5857 = vunpack.c.0.s8 %v5856
        %v5858 = vlaneseq
        %v5859 = vshrl.u32 %v5858, 7
        %v5860 = vsub.s32 %v5857, %v5859
        %v5861 = vrot.slane %v5854, %v5860
        %v5863 = vunpack.c.l.s4 1966171168
        %v5864 = vunpack.c.0.s8 %v5863
        %v5865 = vlaneseq
        %v5866 = vshrl.u32 %v5865, 7
        %v5867 = vsub.s32 %v5864, %v5866
        %v5868 = vrot.slane %v4946, %v5867
        %v5870 = vunpack.c.l.s4 1966171168
        %v5871 = vunpack.c.0.s8 %v5870
        %v5872 = vlaneseq
        %v5873 = vshrl.u32 %v5872, 7
        %v5874 = vsub.s32 %v5871, %v5873
        %v5875 = vrot.slane %v5868, %v5874
        %v5877 = vunpack.c.l.s4 1966171168
        %v5878 = vunpack.c.0.s8 %v5877
        %v5879 = vlaneseq
        %v5880 = vshrl.u32 %v5879, 7
        %v5881 = vsub.s32 %v5878, %v5880
        %v5882 = vrot.slane %v4947, %v5881
        %v5884 = vunpack.c.l.s4 1966171168
        %v5885 = vunpack.c.0.s8 %v5884
        %v5886 = vlaneseq
        %v5887 = vshrl.u32 %v5886, 7
        %v5888 = vsub.s32 %v5885, %v5887
        %v5889 = vrot.slane %v5882, %v5888
        %v5891 = vunpack.c.l.s4 1966171168
        %v5892 = vunpack.c.0.s8 %v5891
        %v5893 = vlaneseq
        %v5894 = vshrl.u32 %v5893, 7
        %v5895 = vsub.s32 %v5892, %v5894
        %v5896 = vrot.slane %v4948, %v5895
        %v5898 = vunpack.c.l.s4 1966171168
        %v5899 = vunpack.c.0.s8 %v5898
        %v5900 = vlaneseq
        %v5901 = vshrl.u32 %v5900, 7
        %v5902 = vsub.s32 %v5899, %v5901
        %v5903 = vrot.slane %v5896, %v5902
        %v5905 = vunpack.c.l.s4 1966171168
        %v5906 = vunpack.c.0.s8 %v5905
        %v5907 = vlaneseq
        %v5908 = vshrl.u32 %v5907, 7
        %v5909 = vsub.s32 %v5906, %v5908
        %v5910 = vrot.slane %v4949, %v5909
        %v5912 = vunpack.c.l.s4 1966171168
        %v5913 = vunpack.c.0.s8 %v5912
        %v5914 = vlaneseq
        %v5915 = vshrl.u32 %v5914, 7
        %v5916 = vsub.s32 %v5913, %v5915
        %v5917 = vrot.slane %v5910, %v5916
        %v5919 = vunpack.c.l.s4 1966171168
        %v5920 = vunpack.c.0.s8 %v5919
        %v5921 = vlaneseq
        %v5922 = vshrl.u32 %v5921, 7
        %v5923 = vsub.s32 %v5920, %v5922
        %v5924 = vrot.slane %v4950, %v5923
        %v5926 = vunpack.c.l.s4 1966171168
        %v5927 = vunpack.c.0.s8 %v5926
        %v5928 = vlaneseq
        %v5929 = vshrl.u32 %v5928, 7
        %v5930 = vsub.s32 %v5927, %v5929
        %v5931 = vrot.slane %v5924, %v5930
        %v5933 = vunpack.c.l.s4 1966171168
        %v5934 = vunpack.c.0.s8 %v5933
        %v5935 = vlaneseq
        %v5936 = vshrl.u32 %v5935, 7
        %v5937 = vsub.s32 %v5934, %v5936
        %v5938 = vrot.slane %v4951, %v5937
        %v5940 = vunpack.c.l.s4 1966171168
        %v5941 = vunpack.c.0.s8 %v5940
        %v5942 = vlaneseq
        %v5943 = vshrl.u32 %v5942, 7
        %v5944 = vsub.s32 %v5941, %v5943
        %v5945 = vrot.slane %v5938, %v5944
        %v5947 = vunpack.c.l.s4 1966171168
        %v5948 = vunpack.c.0.s8 %v5947
        %v5949 = vlaneseq
        %v5950 = vshrl.u32 %v5949, 7
        %v5951 = vsub.s32 %v5948, %v5950
        %v5952 = vrot.slane %v4952, %v5951
        %v5954 = vunpack.c.l.s4 1966171168
        %v5955 = vunpack.c.0.s8 %v5954
        %v5956 = vlaneseq
        %v5957 = vshrl.u32 %v5956, 7
        %v5958 = vsub.s32 %v5955, %v5957
        %v5959 = vrot.slane %v5952, %v5958
        %v5961 = vunpack.c.l.s4 1966171168
        %v5962 = vunpack.c.0.s8 %v5961
        %v5963 = vlaneseq
        %v5964 = vshrl.u32 %v5963, 7
        %v5965 = vsub.s32 %v5962, %v5964
        %v5966 = vrot.slane %v4953, %v5965
        %v5968 = vunpack.c.l.s4 1966171168
        %v5969 = vunpack.c.0.s8 %v5968
        %v5970 = vlaneseq
        %v5971 = vshrl.u32 %v5970, 7
        %v5972 = vsub.s32 %v5969, %v5971
        %v5973 = vrot.slane %v5966, %v5972
        %v5975 = vunpack.c.l.s4 1966171168
        %v5976 = vunpack.c.0.s8 %v5975
        %v5977 = vlaneseq
        %v5978 = vshrl.u32 %v5977, 7
        %v5979 = vsub.s32 %v5976, %v5978
        %v5980 = vrot.slane %v4954, %v5979
        %v5982 = vunpack.c.l.s4 1966171168
        %v5983 = vunpack.c.0.s8 %v5982
        %v5984 = vlaneseq
        %v5985 = vshrl.u32 %v5984, 7
        %v5986 = vsub.s32 %v5983, %v5985
        %v5987 = vrot.slane %v5980, %v5986
        %v5989 = vunpack.c.l.s4 1966171168
        %v5990 = vunpack.c.0.s8 %v5989
        %v5991 = vlaneseq
        %v5992 = vshrl.u32 %v5991, 7
        %v5993 = vsub.s32 %v5990, %v5992
        %v5994 = vrot.slane %v4955, %v5993
        %v5996 = vunpack.c.l.s4 1966171168
        %v5997 = vunpack.c.0.s8 %v5996
        %v5998 = vlaneseq
        %v5999 = vshrl.u32 %v5998, 7
        %v6000 = vsub.s32 %v5997, %v5999
        %v6001 = vrot.slane %v5994, %v6000
        %v6003 = vunpack.c.l.s4 1966171168
        %v6004 = vunpack.c.0.s8 %v6003
        %v6005 = vlaneseq
        %v6006 = vshrl.u32 %v6005, 7
        %v6007 = vsub.s32 %v6004, %v6006
        %v6008 = vrot.slane %v4956, %v6007
        %v6010 = vunpack.c.l.s4 1966171168
        %v6011 = vunpack.c.0.s8 %v6010
        %v6012 = vlaneseq
        %v6013 = vshrl.u32 %v6012, 7
        %v6014 = vsub.s32 %v6011, %v6013
        %v6015 = vrot.slane %v6008, %v6014
        %v6017 = vunpack.c.l.s4 1966171168
        %v6018 = vunpack.c.0.s8 %v6017
        %v6019 = vlaneseq
        %v6020 = vshrl.u32 %v6019, 7
        %v6021 = vsub.s32 %v6018, %v6020
        %v6022 = vrot.slane %v4957, %v6021
        %v6024 = vunpack.c.l.s4 1966171168
        %v6025 = vunpack.c.0.s8 %v6024
        %v6026 = vlaneseq
        %v6027 = vshrl.u32 %v6026, 7
        %v6028 = vsub.s32 %v6025, %v6027
        %v6029 = vrot.slane %v6022, %v6028
        %v6031 = vunpack.c.l.s4 1966171168
        %v6032 = vunpack.c.0.s8 %v6031
        %v6033 = vlaneseq
        %v6034 = vshrl.u32 %v6033, 7
        %v6035 = vsub.s32 %v6032, %v6034
        %v6036 = vrot.slane %v4958, %v6035
        %v6038 = vunpack.c.l.s4 1966171168
        %v6039 = vunpack.c.0.s8 %v6038
        %v6040 = vlaneseq
        %v6041 = vshrl.u32 %v6040, 7
        %v6042 = vsub.s32 %v6039, %v6041
        %v6043 = vrot.slane %v6036, %v6042
        %v6045 = vunpack.c.l.s4 1966171168
        %v6046 = vunpack.c.0.s8 %v6045
        %v6047 = vlaneseq
        %v6048 = vshrl.u32 %v6047, 7
        %v6049 = vsub.s32 %v6046, %v6048
        %v6050 = vrot.slane %v4959, %v6049
        %v6052 = vunpack.c.l.s4 1966171168
        %v6053 = vunpack.c.0.s8 %v6052
        %v6054 = vlaneseq
        %v6055 = vshrl.u32 %v6054, 7
        %v6056 = vsub.s32 %v6053, %v6055
        %v6057 = vrot.slane %v6050, %v6056
        %v6059 = vunpack.c.l.s4 1966171168
        %v6060 = vunpack.c.0.s8 %v6059
        %v6061 = vlaneseq
        %v6062 = vshrl.u32 %v6061, 7
        %v6063 = vsub.s32 %v6060, %v6062
        %v6064 = vrot.slane %v4960, %v6063
        %v6066 = vunpack.c.l.s4 1966171168
        %v6067 = vunpack.c.0.s8 %v6066
        %v6068 = vlaneseq
        %v6069 = vshrl.u32 %v6068, 7
        %v6070 = vsub.s32 %v6067, %v6069
        %v6071 = vrot.slane %v6064, %v6070
        %v6073 = vunpack.c.l.s4 1966171168
        %v6074 = vunpack.c.0.s8 %v6073
        %v6075 = vlaneseq
        %v6076 = vshrl.u32 %v6075, 7
        %v6077 = vsub.s32 %v6074, %v6076
        %v6078 = vrot.slane %v4961, %v6077
        %v6080 = vunpack.c.l.s4 1966171168
        %v6081 = vunpack.c.0.s8 %v6080
        %v6082 = vlaneseq
        %v6083 = vshrl.u32 %v6082, 7
        %v6084 = vsub.s32 %v6081, %v6083
        %v6085 = vrot.slane %v6078, %v6084
        %v6087 = vunpack.c.l.s4 1966171168
        %v6088 = vunpack.c.0.s8 %v6087
        %v6089 = vlaneseq
        %v6090 = vshrl.u32 %v6089, 7
        %v6091 = vsub.s32 %v6088, %v6090
        %v6092 = vrot.slane %v4962, %v6091
        %v6094 = vunpack.c.l.s4 1966171168
        %v6095 = vunpack.c.0.s8 %v6094
        %v6096 = vlaneseq
        %v6097 = vshrl.u32 %v6096, 7
        %v6098 = vsub.s32 %v6095, %v6097
        %v6099 = vrot.slane %v6092, %v6098
        %v6101 = vunpack.c.l.s4 1966171168
        %v6102 = vunpack.c.0.s8 %v6101
        %v6103 = vlaneseq
        %v6104 = vshrl.u32 %v6103, 7
        %v6105 = vsub.s32 %v6102, %v6104
        %v6106 = vrot.slane %v4963, %v6105
        %v6108 = vunpack.c.l.s4 1966171168
        %v6109 = vunpack.c.0.s8 %v6108
        %v6110 = vlaneseq
        %v6111 = vshrl.u32 %v6110, 7
        %v6112 = vsub.s32 %v6109, %v6111
        %v6113 = vrot.slane %v6106, %v6112
        %v6115 = vunpack.c.l.s4 1966171168
        %v6116 = vunpack.c.0.s8 %v6115
        %v6117 = vlaneseq
        %v6118 = vshrl.u32 %v6117, 7
        %v6119 = vsub.s32 %v6116, %v6118
        %v6120 = vrot.slane %v4964, %v6119
        %v6122 = vunpack.c.l.s4 1966171168
        %v6123 = vunpack.c.0.s8 %v6122
        %v6124 = vlaneseq
        %v6125 = vshrl.u32 %v6124, 7
        %v6126 = vsub.s32 %v6123, %v6125
        %v6127 = vrot.slane %v6120, %v6126
        %v6129 = vunpack.c.l.s4 1966171168
        %v6130 = vunpack.c.0.s8 %v6129
        %v6131 = vlaneseq
        %v6132 = vshrl.u32 %v6131, 7
        %v6133 = vsub.s32 %v6130, %v6132
        %v6134 = vrot.slane %v4965, %v6133
        %v6136 = vunpack.c.l.s4 1966171168
        %v6137 = vunpack.c.0.s8 %v6136
        %v6138 = vlaneseq
        %v6139 = vshrl.u32 %v6138, 7
        %v6140 = vsub.s32 %v6137, %v6139
        %v6141 = vrot.slane %v6134, %v6140
        %v6143 = vunpack.c.l.s4 1966171168
        %v6144 = vunpack.c.0.s8 %v6143
        %v6145 = vlaneseq
        %v6146 = vshrl.u32 %v6145, 7
        %v6147 = vsub.s32 %v6144, %v6146
        %v6148 = vrot.slane %v4966, %v6147
        %v6150 = vunpack.c.l.s4 1966171168
        %v6151 = vunpack.c.0.s8 %v6150
        %v6152 = vlaneseq
        %v6153 = vshrl.u32 %v6152, 7
        %v6154 = vsub.s32 %v6151, %v6153
        %v6155 = vrot.slane %v6148, %v6154
        %v6157 = vunpack.c.l.s4 1966171168
        %v6158 = vunpack.c.0.s8 %v6157
        %v6159 = vlaneseq
        %v6160 = vshrl.u32 %v6159, 7
        %v6161 = vsub.s32 %v6158, %v6160
        %v6162 = vrot.slane %v4967, %v6161
        %v6164 = vunpack.c.l.s4 1966171168
        %v6165 = vunpack.c.0.s8 %v6164
        %v6166 = vlaneseq
        %v6167 = vshrl.u32 %v6166, 7
        %v6168 = vsub.s32 %v6165, %v6167
        %v6169 = vrot.slane %v6162, %v6168
        %v6171 = vunpack.c.l.s4 1966171168
        %v6172 = vunpack.c.0.s8 %v6171
        %v6173 = vlaneseq
        %v6174 = vshrl.u32 %v6173, 7
        %v6175 = vsub.s32 %v6172, %v6174
        %v6176 = vrot.slane %v4968, %v6175
        %v6178 = vunpack.c.l.s4 1966171168
        %v6179 = vunpack.c.0.s8 %v6178
        %v6180 = vlaneseq
        %v6181 = vshrl.u32 %v6180, 7
        %v6182 = vsub.s32 %v6179, %v6181
        %v6183 = vrot.slane %v6176, %v6182
        %v6185 = vunpack.c.l.s4 1966171168
        %v6186 = vunpack.c.0.s8 %v6185
        %v6187 = vlaneseq
        %v6188 = vshrl.u32 %v6187, 7
        %v6189 = vsub.s32 %v6186, %v6188
        %v6190 = vrot.slane %v4969, %v6189
        %v6192 = vunpack.c.l.s4 1966171168
        %v6193 = vunpack.c.0.s8 %v6192
        %v6194 = vlaneseq
        %v6195 = vshrl.u32 %v6194, 7
        %v6196 = vsub.s32 %v6193, %v6195
        %v6197 = vrot.slane %v6190, %v6196
        %v6199 = vunpack.c.l.s4 1966171168
        %v6200 = vunpack.c.0.s8 %v6199
        %v6201 = vlaneseq
        %v6202 = vshrl.u32 %v6201, 7
        %v6203 = vsub.s32 %v6200, %v6202
        %v6204 = vrot.slane %v4970, %v6203
        %v6206 = vunpack.c.l.s4 1966171168
        %v6207 = vunpack.c.0.s8 %v6206
        %v6208 = vlaneseq
        %v6209 = vshrl.u32 %v6208, 7
        %v6210 = vsub.s32 %v6207, %v6209
        %v6211 = vrot.slane %v6204, %v6210
        %v6213 = vunpack.c.l.s4 1966171168
        %v6214 = vunpack.c.0.s8 %v6213
        %v6215 = vlaneseq
        %v6216 = vshrl.u32 %v6215, 7
        %v6217 = vsub.s32 %v6214, %v6216
        %v6218 = vrot.slane %v4971, %v6217
        %v6220 = vunpack.c.l.s4 1966171168
        %v6221 = vunpack.c.0.s8 %v6220
        %v6222 = vlaneseq
        %v6223 = vshrl.u32 %v6222, 7
        %v6224 = vsub.s32 %v6221, %v6223
        %v6225 = vrot.slane %v6218, %v6224
        %v6227 = vunpack.c.l.s4 1966171168
        %v6228 = vunpack.c.0.s8 %v6227
        %v6229 = vlaneseq
        %v6230 = vshrl.u32 %v6229, 7
        %v6231 = vsub.s32 %v6228, %v6230
        %v6232 = vrot.slane %v4972, %v6231
        %v6234 = vunpack.c.l.s4 1966171168
        %v6235 = vunpack.c.0.s8 %v6234
        %v6236 = vlaneseq
        %v6237 = vshrl.u32 %v6236, 7
        %v6238 = vsub.s32 %v6235, %v6237
        %v6239 = vrot.slane %v6232, %v6238
        %v6241 = vunpack.c.l.s4 1966171168
        %v6242 = vunpack.c.0.s8 %v6241
        %v6243 = vlaneseq
        %v6244 = vshrl.u32 %v6243, 7
        %v6245 = vsub.s32 %v6242, %v6244
        %v6246 = vrot.slane %v4973, %v6245
        %v6248 = vunpack.c.l.s4 1966171168
        %v6249 = vunpack.c.0.s8 %v6248
        %v6250 = vlaneseq
        %v6251 = vshrl.u32 %v6250, 7
        %v6252 = vsub.s32 %v6249, %v6251
        %v6253 = vrot.slane %v6246, %v6252
        %v6255 = vunpack.c.l.s4 1966171168
        %v6256 = vunpack.c.0.s8 %v6255
        %v6257 = vlaneseq
        %v6258 = vshrl.u32 %v6257, 7
        %v6259 = vsub.s32 %v6256, %v6258
        %v6260 = vrot.slane %v4974, %v6259
        %v6262 = vunpack.c.l.s4 1966171168
        %v6263 = vunpack.c.0.s8 %v6262
        %v6264 = vlaneseq
        %v6265 = vshrl.u32 %v6264, 7
        %v6266 = vsub.s32 %v6263, %v6265
        %v6267 = vrot.slane %v6260, %v6266
        %v6268 = vunpack.c.l.b16 %v5791
        %v6269 = vunpack.c.l.b16 %v5805
        %v6270 = vunpack.c.l.b16 %v5819
        %v6271 = vunpack.c.l.b16 %v5833
        %v6272 = vunpack.c.l.b16 %v5847
        %v6273 = vunpack.c.l.b16 %v5861
        %v6274 = vunpack.c.l.b16 %v5875
        %v6275 = vunpack.c.l.b16 %v5889
        %v6276 = vunpack.c.l.b16 %v5903
        %v6277 = vunpack.c.l.b16 %v5917
        %v6278 = vunpack.c.l.b16 %v5931
        %v6279 = vunpack.c.l.b16 %v5945
        %v6280 = vunpack.c.l.b16 %v5959
        %v6281 = vunpack.c.l.b16 %v5973
        %v6282 = vunpack.c.l.b16 %v5987
        %v6283 = vunpack.c.l.b16 %v6001
        %v6284 = vunpack.c.l.b16 %v6015
        %v6285 = vunpack.c.l.b16 %v6029
        %v6286 = vunpack.c.l.b16 %v6043
        %v6287 = vunpack.c.l.b16 %v6057
        %v6288 = vunpack.c.l.b16 %v6071
        %v6289 = vunpack.c.l.b16 %v6085
        %v6290 = vunpack.c.l.b16 %v6099
        %v6291 = vunpack.c.l.b16 %v6113
        %v6292 = vunpack.c.l.b16 %v6127
        %v6293 = vunpack.c.l.b16 %v6141
        %v6294 = vunpack.c.l.b16 %v6155
        %v6295 = vunpack.c.l.b16 %v6169
        %v6296 = vunpack.c.l.b16 %v6183
        %v6297 = vunpack.c.l.b16 %v6197
        %v6298 = vunpack.c.l.b16 %v6211
        %v6299 = vunpack.c.l.b16 %v6225
        %v6300 = vunpack.c.l.b16 %v6239
        %v6301 = vunpack.c.l.b16 %v6253
        %v6302 = vunpack.c.l.b16 %v6267
        %v6303 = vrot.slane %v6269, 7
        %v6304 = vsel %vm1034, %v6303, %v6268
        %v6305 = vrot.slane %v6270, 6
        %v6306 = vsel %vm1037, %v6305, %v6304
        %v6307 = vrot.slane %v6271, 5
        %v6308 = vsel %vm1040, %v6307, %v6306
        %v6309 = vrot.slane %v6272, 4
        %v6310 = vsel %vm1043, %v6309, %v6308
        %v6311 = vrot.slane %v6273, 3
        %v6312 = vsel %vm1046, %v6311, %v6310
        %v6313 = vrot.slane %v6274, 2
        %v6314 = vsel %vm1049, %v6313, %v6312
        %v6315 = vrot.slane %v6275, 1
        %v6316 = vsel %vm1052, %v6315, %v6314
        %v6317 = vrot.slane %v6277, 7
        %v6318 = vsel %vm1034, %v6317, %v6276
        %v6319 = vrot.slane %v6278, 6
        %v6320 = vsel %vm1037, %v6319, %v6318
        %v6321 = vrot.slane %v6279, 5
        %v6322 = vsel %vm1040, %v6321, %v6320
        %v6323 = vrot.slane %v6280, 4
        %v6324 = vsel %vm1043, %v6323, %v6322
        %v6325 = vrot.slane %v6281, 3
        %v6326 = vsel %vm1046, %v6325, %v6324
        %v6327 = vrot.slane %v6282, 2
        %v6328 = vsel %vm1049, %v6327, %v6326
        %v6329 = vrot.slane %v6283, 1
        %v6330 = vsel %vm1052, %v6329, %v6328
        %v6331 = vrot.slane %v6285, 7
        %v6332 = vsel %vm1034, %v6331, %v6284
        %v6333 = vrot.slane %v6286, 6
        %v6334 = vsel %vm1037, %v6333, %v6332
        %v6335 = vrot.slane %v6287, 5
        %v6336 = vsel %vm1040, %v6335, %v6334
        %v6337 = vrot.slane %v6288, 4
        %v6338 = vsel %vm1043, %v6337, %v6336
        %v6339 = vrot.slane %v6289, 3
        %v6340 = vsel %vm1046, %v6339, %v6338
        %v6341 = vrot.slane %v6290, 2
        %v6342 = vsel %vm1049, %v6341, %v6340
        %v6343 = vrot.slane %v6291, 1
        %v6344 = vsel %vm1052, %v6343, %v6342
        %v6345 = vrot.slane %v6293, 7
        %v6346 = vsel %vm1034, %v6345, %v6292
        %v6347 = vrot.slane %v6294, 6
        %v6348 = vsel %vm1037, %v6347, %v6346
        %v6349 = vrot.slane %v6295, 5
        %v6350 = vsel %vm1040, %v6349, %v6348
        %v6351 = vrot.slane %v6296, 4
        %v6352 = vsel %vm1043, %v6351, %v6350
        %v6353 = vrot.slane %v6297, 3
        %v6354 = vsel %vm1046, %v6353, %v6352
        %v6355 = vrot.slane %v6298, 2
        %v6356 = vsel %vm1049, %v6355, %v6354
        %v6357 = vrot.slane %v6299, 1
        %v6358 = vsel %vm1052, %v6357, %v6356
        %v6359 = vrot.slane %v6301, 7
        %v6360 = vsel %vm1034, %v6359, %v6300
        %v6361 = vrot.slane %v6302, 6
        %v6362 = vsel %vm1037, %v6361, %v6360
        %v6363 = vpack.c.b16 %v6330, %v6316
        %v6364 = vpack.c.b16 %v6358, %v6344
        %v6365 = vpack.c.b16 %v6362, %v6362
        %v6405 = vunpack.c.l.s4 1966171168
        %v6406 = vunpack.c.0.s8 %v6405
        %v6407 = vlaneseq
        %v6408 = vshrl.u32 %v6407, 7
        %v6409 = vsub.s32 %v6406, %v6408
        %v6410 = vrot.slane %v4975, %v6409
        %v6412 = vunpack.c.l.s4 1966171168
        %v6413 = vunpack.c.0.s8 %v6412
        %v6414 = vlaneseq
        %v6415 = vshrl.u32 %v6414, 7
        %v6416 = vsub.s32 %v6413, %v6415
        %v6417 = vrot.slane %v6410, %v6416
        %v6419 = vunpack.c.l.s4 1966171168
        %v6420 = vunpack.c.0.s8 %v6419
        %v6421 = vlaneseq
        %v6422 = vshrl.u32 %v6421, 7
        %v6423 = vsub.s32 %v6420, %v6422
        %v6424 = vrot.slane %v4976, %v6423
        %v6426 = vunpack.c.l.s4 1966171168
        %v6427 = vunpack.c.0.s8 %v6426
        %v6428 = vlaneseq
        %v6429 = vshrl.u32 %v6428, 7
        %v6430 = vsub.s32 %v6427, %v6429
        %v6431 = vrot.slane %v6424, %v6430
        %v6433 = vunpack.c.l.s4 1966171168
        %v6434 = vunpack.c.0.s8 %v6433
        %v6435 = vlaneseq
        %v6436 = vshrl.u32 %v6435, 7
        %v6437 = vsub.s32 %v6434, %v6436
        %v6438 = vrot.slane %v4977, %v6437
        %v6440 = vunpack.c.l.s4 1966171168
        %v6441 = vunpack.c.0.s8 %v6440
        %v6442 = vlaneseq
        %v6443 = vshrl.u32 %v6442, 7
        %v6444 = vsub.s32 %v6441, %v6443
        %v6445 = vrot.slane %v6438, %v6444
        %v6447 = vunpack.c.l.s4 1966171168
        %v6448 = vunpack.c.0.s8 %v6447
        %v6449 = vlaneseq
        %v6450 = vshrl.u32 %v6449, 7
        %v6451 = vsub.s32 %v6448, %v6450
        %v6452 = vrot.slane %v4978, %v6451
        %v6454 = vunpack.c.l.s4 1966171168
        %v6455 = vunpack.c.0.s8 %v6454
        %v6456 = vlaneseq
        %v6457 = vshrl.u32 %v6456, 7
        %v6458 = vsub.s32 %v6455, %v6457
        %v6459 = vrot.slane %v6452, %v6458
        %v6461 = vunpack.c.l.s4 1966171168
        %v6462 = vunpack.c.0.s8 %v6461
        %v6463 = vlaneseq
        %v6464 = vshrl.u32 %v6463, 7
        %v6465 = vsub.s32 %v6462, %v6464
        %v6466 = vrot.slane %v4979, %v6465
        %v6468 = vunpack.c.l.s4 1966171168
        %v6469 = vunpack.c.0.s8 %v6468
        %v6470 = vlaneseq
        %v6471 = vshrl.u32 %v6470, 7
        %v6472 = vsub.s32 %v6469, %v6471
        %v6473 = vrot.slane %v6466, %v6472
        %v6475 = vunpack.c.l.s4 1966171168
        %v6476 = vunpack.c.0.s8 %v6475
        %v6477 = vlaneseq
        %v6478 = vshrl.u32 %v6477, 7
        %v6479 = vsub.s32 %v6476, %v6478
        %v6480 = vrot.slane %v4980, %v6479
        %v6482 = vunpack.c.l.s4 1966171168
        %v6483 = vunpack.c.0.s8 %v6482
        %v6484 = vlaneseq
        %v6485 = vshrl.u32 %v6484, 7
        %v6486 = vsub.s32 %v6483, %v6485
        %v6487 = vrot.slane %v6480, %v6486
        %v6489 = vunpack.c.l.s4 1966171168
        %v6490 = vunpack.c.0.s8 %v6489
        %v6491 = vlaneseq
        %v6492 = vshrl.u32 %v6491, 7
        %v6493 = vsub.s32 %v6490, %v6492
        %v6494 = vrot.slane %v4981, %v6493
        %v6496 = vunpack.c.l.s4 1966171168
        %v6497 = vunpack.c.0.s8 %v6496
        %v6498 = vlaneseq
        %v6499 = vshrl.u32 %v6498, 7
        %v6500 = vsub.s32 %v6497, %v6499
        %v6501 = vrot.slane %v6494, %v6500
        %v6503 = vunpack.c.l.s4 1966171168
        %v6504 = vunpack.c.0.s8 %v6503
        %v6505 = vlaneseq
        %v6506 = vshrl.u32 %v6505, 7
        %v6507 = vsub.s32 %v6504, %v6506
        %v6508 = vrot.slane %v4982, %v6507
        %v6510 = vunpack.c.l.s4 1966171168
        %v6511 = vunpack.c.0.s8 %v6510
        %v6512 = vlaneseq
        %v6513 = vshrl.u32 %v6512, 7
        %v6514 = vsub.s32 %v6511, %v6513
        %v6515 = vrot.slane %v6508, %v6514
        %v6517 = vunpack.c.l.s4 1966171168
        %v6518 = vunpack.c.0.s8 %v6517
        %v6519 = vlaneseq
        %v6520 = vshrl.u32 %v6519, 7
        %v6521 = vsub.s32 %v6518, %v6520
        %v6522 = vrot.slane %v4983, %v6521
        %v6524 = vunpack.c.l.s4 1966171168
        %v6525 = vunpack.c.0.s8 %v6524
        %v6526 = vlaneseq
        %v6527 = vshrl.u32 %v6526, 7
        %v6528 = vsub.s32 %v6525, %v6527
        %v6529 = vrot.slane %v6522, %v6528
        %v6531 = vunpack.c.l.s4 1966171168
        %v6532 = vunpack.c.0.s8 %v6531
        %v6533 = vlaneseq
        %v6534 = vshrl.u32 %v6533, 7
        %v6535 = vsub.s32 %v6532, %v6534
        %v6536 = vrot.slane %v4984, %v6535
        %v6538 = vunpack.c.l.s4 1966171168
        %v6539 = vunpack.c.0.s8 %v6538
        %v6540 = vlaneseq
        %v6541 = vshrl.u32 %v6540, 7
        %v6542 = vsub.s32 %v6539, %v6541
        %v6543 = vrot.slane %v6536, %v6542
        %v6545 = vunpack.c.l.s4 1966171168
        %v6546 = vunpack.c.0.s8 %v6545
        %v6547 = vlaneseq
        %v6548 = vshrl.u32 %v6547, 7
        %v6549 = vsub.s32 %v6546, %v6548
        %v6550 = vrot.slane %v4985, %v6549
        %v6552 = vunpack.c.l.s4 1966171168
        %v6553 = vunpack.c.0.s8 %v6552
        %v6554 = vlaneseq
        %v6555 = vshrl.u32 %v6554, 7
        %v6556 = vsub.s32 %v6553, %v6555
        %v6557 = vrot.slane %v6550, %v6556
        %v6559 = vunpack.c.l.s4 1966171168
        %v6560 = vunpack.c.0.s8 %v6559
        %v6561 = vlaneseq
        %v6562 = vshrl.u32 %v6561, 7
        %v6563 = vsub.s32 %v6560, %v6562
        %v6564 = vrot.slane %v4986, %v6563
        %v6566 = vunpack.c.l.s4 1966171168
        %v6567 = vunpack.c.0.s8 %v6566
        %v6568 = vlaneseq
        %v6569 = vshrl.u32 %v6568, 7
        %v6570 = vsub.s32 %v6567, %v6569
        %v6571 = vrot.slane %v6564, %v6570
        %v6573 = vunpack.c.l.s4 1966171168
        %v6574 = vunpack.c.0.s8 %v6573
        %v6575 = vlaneseq
        %v6576 = vshrl.u32 %v6575, 7
        %v6577 = vsub.s32 %v6574, %v6576
        %v6578 = vrot.slane %v4987, %v6577
        %v6580 = vunpack.c.l.s4 1966171168
        %v6581 = vunpack.c.0.s8 %v6580
        %v6582 = vlaneseq
        %v6583 = vshrl.u32 %v6582, 7
        %v6584 = vsub.s32 %v6581, %v6583
        %v6585 = vrot.slane %v6578, %v6584
        %v6587 = vunpack.c.l.s4 1966171168
        %v6588 = vunpack.c.0.s8 %v6587
        %v6589 = vlaneseq
        %v6590 = vshrl.u32 %v6589, 7
        %v6591 = vsub.s32 %v6588, %v6590
        %v6592 = vrot.slane %v4988, %v6591
        %v6594 = vunpack.c.l.s4 1966171168
        %v6595 = vunpack.c.0.s8 %v6594
        %v6596 = vlaneseq
        %v6597 = vshrl.u32 %v6596, 7
        %v6598 = vsub.s32 %v6595, %v6597
        %v6599 = vrot.slane %v6592, %v6598
        %v6601 = vunpack.c.l.s4 1966171168
        %v6602 = vunpack.c.0.s8 %v6601
        %v6603 = vlaneseq
        %v6604 = vshrl.u32 %v6603, 7
        %v6605 = vsub.s32 %v6602, %v6604
        %v6606 = vrot.slane %v4989, %v6605
        %v6608 = vunpack.c.l.s4 1966171168
        %v6609 = vunpack.c.0.s8 %v6608
        %v6610 = vlaneseq
        %v6611 = vshrl.u32 %v6610, 7
        %v6612 = vsub.s32 %v6609, %v6611
        %v6613 = vrot.slane %v6606, %v6612
        %v6615 = vunpack.c.l.s4 1966171168
        %v6616 = vunpack.c.0.s8 %v6615
        %v6617 = vlaneseq
        %v6618 = vshrl.u32 %v6617, 7
        %v6619 = vsub.s32 %v6616, %v6618
        %v6620 = vrot.slane %v4990, %v6619
        %v6622 = vunpack.c.l.s4 1966171168
        %v6623 = vunpack.c.0.s8 %v6622
        %v6624 = vlaneseq
        %v6625 = vshrl.u32 %v6624, 7
        %v6626 = vsub.s32 %v6623, %v6625
        %v6627 = vrot.slane %v6620, %v6626
        %v6629 = vunpack.c.l.s4 1966171168
        %v6630 = vunpack.c.0.s8 %v6629
        %v6631 = vlaneseq
        %v6632 = vshrl.u32 %v6631, 7
        %v6633 = vsub.s32 %v6630, %v6632
        %v6634 = vrot.slane %v4991, %v6633
        %v6636 = vunpack.c.l.s4 1966171168
        %v6637 = vunpack.c.0.s8 %v6636
        %v6638 = vlaneseq
        %v6639 = vshrl.u32 %v6638, 7
        %v6640 = vsub.s32 %v6637, %v6639
        %v6641 = vrot.slane %v6634, %v6640
        %v6643 = vunpack.c.l.s4 1966171168
        %v6644 = vunpack.c.0.s8 %v6643
        %v6645 = vlaneseq
        %v6646 = vshrl.u32 %v6645, 7
        %v6647 = vsub.s32 %v6644, %v6646
        %v6648 = vrot.slane %v4992, %v6647
        %v6650 = vunpack.c.l.s4 1966171168
        %v6651 = vunpack.c.0.s8 %v6650
        %v6652 = vlaneseq
        %v6653 = vshrl.u32 %v6652, 7
        %v6654 = vsub.s32 %v6651, %v6653
        %v6655 = vrot.slane %v6648, %v6654
        %v6657 = vunpack.c.l.s4 1966171168
        %v6658 = vunpack.c.0.s8 %v6657
        %v6659 = vlaneseq
        %v6660 = vshrl.u32 %v6659, 7
        %v6661 = vsub.s32 %v6658, %v6660
        %v6662 = vrot.slane %v4993, %v6661
        %v6664 = vunpack.c.l.s4 1966171168
        %v6665 = vunpack.c.0.s8 %v6664
        %v6666 = vlaneseq
        %v6667 = vshrl.u32 %v6666, 7
        %v6668 = vsub.s32 %v6665, %v6667
        %v6669 = vrot.slane %v6662, %v6668
        %v6671 = vunpack.c.l.s4 1966171168
        %v6672 = vunpack.c.0.s8 %v6671
        %v6673 = vlaneseq
        %v6674 = vshrl.u32 %v6673, 7
        %v6675 = vsub.s32 %v6672, %v6674
        %v6676 = vrot.slane %v4994, %v6675
        %v6678 = vunpack.c.l.s4 1966171168
        %v6679 = vunpack.c.0.s8 %v6678
        %v6680 = vlaneseq
        %v6681 = vshrl.u32 %v6680, 7
        %v6682 = vsub.s32 %v6679, %v6681
        %v6683 = vrot.slane %v6676, %v6682
        %v6685 = vunpack.c.l.s4 1966171168
        %v6686 = vunpack.c.0.s8 %v6685
        %v6687 = vlaneseq
        %v6688 = vshrl.u32 %v6687, 7
        %v6689 = vsub.s32 %v6686, %v6688
        %v6690 = vrot.slane %v4995, %v6689
        %v6692 = vunpack.c.l.s4 1966171168
        %v6693 = vunpack.c.0.s8 %v6692
        %v6694 = vlaneseq
        %v6695 = vshrl.u32 %v6694, 7
        %v6696 = vsub.s32 %v6693, %v6695
        %v6697 = vrot.slane %v6690, %v6696
        %v6699 = vunpack.c.l.s4 1966171168
        %v6700 = vunpack.c.0.s8 %v6699
        %v6701 = vlaneseq
        %v6702 = vshrl.u32 %v6701, 7
        %v6703 = vsub.s32 %v6700, %v6702
        %v6704 = vrot.slane %v4996, %v6703
        %v6706 = vunpack.c.l.s4 1966171168
        %v6707 = vunpack.c.0.s8 %v6706
        %v6708 = vlaneseq
        %v6709 = vshrl.u32 %v6708, 7
        %v6710 = vsub.s32 %v6707, %v6709
        %v6711 = vrot.slane %v6704, %v6710
        %v6713 = vunpack.c.l.s4 1966171168
        %v6714 = vunpack.c.0.s8 %v6713
        %v6715 = vlaneseq
        %v6716 = vshrl.u32 %v6715, 7
        %v6717 = vsub.s32 %v6714, %v6716
        %v6718 = vrot.slane %v4997, %v6717
        %v6720 = vunpack.c.l.s4 1966171168
        %v6721 = vunpack.c.0.s8 %v6720
        %v6722 = vlaneseq
        %v6723 = vshrl.u32 %v6722, 7
        %v6724 = vsub.s32 %v6721, %v6723
        %v6725 = vrot.slane %v6718, %v6724
        %v6727 = vunpack.c.l.s4 1966171168
        %v6728 = vunpack.c.0.s8 %v6727
        %v6729 = vlaneseq
        %v6730 = vshrl.u32 %v6729, 7
        %v6731 = vsub.s32 %v6728, %v6730
        %v6732 = vrot.slane %v4998, %v6731
        %v6734 = vunpack.c.l.s4 1966171168
        %v6735 = vunpack.c.0.s8 %v6734
        %v6736 = vlaneseq
        %v6737 = vshrl.u32 %v6736, 7
        %v6738 = vsub.s32 %v6735, %v6737
        %v6739 = vrot.slane %v6732, %v6738
        %v6741 = vunpack.c.l.s4 1966171168
        %v6742 = vunpack.c.0.s8 %v6741
        %v6743 = vlaneseq
        %v6744 = vshrl.u32 %v6743, 7
        %v6745 = vsub.s32 %v6742, %v6744
        %v6746 = vrot.slane %v4999, %v6745
        %v6748 = vunpack.c.l.s4 1966171168
        %v6749 = vunpack.c.0.s8 %v6748
        %v6750 = vlaneseq
        %v6751 = vshrl.u32 %v6750, 7
        %v6752 = vsub.s32 %v6749, %v6751
        %v6753 = vrot.slane %v6746, %v6752
        %v6755 = vunpack.c.l.s4 1966171168
        %v6756 = vunpack.c.0.s8 %v6755
        %v6757 = vlaneseq
        %v6758 = vshrl.u32 %v6757, 7
        %v6759 = vsub.s32 %v6756, %v6758
        %v6760 = vrot.slane %v5000, %v6759
        %v6762 = vunpack.c.l.s4 1966171168
        %v6763 = vunpack.c.0.s8 %v6762
        %v6764 = vlaneseq
        %v6765 = vshrl.u32 %v6764, 7
        %v6766 = vsub.s32 %v6763, %v6765
        %v6767 = vrot.slane %v6760, %v6766
        %v6769 = vunpack.c.l.s4 1966171168
        %v6770 = vunpack.c.0.s8 %v6769
        %v6771 = vlaneseq
        %v6772 = vshrl.u32 %v6771, 7
        %v6773 = vsub.s32 %v6770, %v6772
        %v6774 = vrot.slane %v5001, %v6773
        %v6776 = vunpack.c.l.s4 1966171168
        %v6777 = vunpack.c.0.s8 %v6776
        %v6778 = vlaneseq
        %v6779 = vshrl.u32 %v6778, 7
        %v6780 = vsub.s32 %v6777, %v6779
        %v6781 = vrot.slane %v6774, %v6780
        %v6783 = vunpack.c.l.s4 1966171168
        %v6784 = vunpack.c.0.s8 %v6783
        %v6785 = vlaneseq
        %v6786 = vshrl.u32 %v6785, 7
        %v6787 = vsub.s32 %v6784, %v6786
        %v6788 = vrot.slane %v5002, %v6787
        %v6790 = vunpack.c.l.s4 1966171168
        %v6791 = vunpack.c.0.s8 %v6790
        %v6792 = vlaneseq
        %v6793 = vshrl.u32 %v6792, 7
        %v6794 = vsub.s32 %v6791, %v6793
        %v6795 = vrot.slane %v6788, %v6794
        %v6797 = vunpack.c.l.s4 1966171168
        %v6798 = vunpack.c.0.s8 %v6797
        %v6799 = vlaneseq
        %v6800 = vshrl.u32 %v6799, 7
        %v6801 = vsub.s32 %v6798, %v6800
        %v6802 = vrot.slane %v5003, %v6801
        %v6804 = vunpack.c.l.s4 1966171168
        %v6805 = vunpack.c.0.s8 %v6804
        %v6806 = vlaneseq
        %v6807 = vshrl.u32 %v6806, 7
        %v6808 = vsub.s32 %v6805, %v6807
        %v6809 = vrot.slane %v6802, %v6808
        %v6811 = vunpack.c.l.s4 1966171168
        %v6812 = vunpack.c.0.s8 %v6811
        %v6813 = vlaneseq
        %v6814 = vshrl.u32 %v6813, 7
        %v6815 = vsub.s32 %v6812, %v6814
        %v6816 = vrot.slane %v5004, %v6815
        %v6818 = vunpack.c.l.s4 1966171168
        %v6819 = vunpack.c.0.s8 %v6818
        %v6820 = vlaneseq
        %v6821 = vshrl.u32 %v6820, 7
        %v6822 = vsub.s32 %v6819, %v6821
        %v6823 = vrot.slane %v6816, %v6822
        %v6825 = vunpack.c.l.s4 1966171168
        %v6826 = vunpack.c.0.s8 %v6825
        %v6827 = vlaneseq
        %v6828 = vshrl.u32 %v6827, 7
        %v6829 = vsub.s32 %v6826, %v6828
        %v6830 = vrot.slane %v5005, %v6829
        %v6832 = vunpack.c.l.s4 1966171168
        %v6833 = vunpack.c.0.s8 %v6832
        %v6834 = vlaneseq
        %v6835 = vshrl.u32 %v6834, 7
        %v6836 = vsub.s32 %v6833, %v6835
        %v6837 = vrot.slane %v6830, %v6836
        %v6839 = vunpack.c.l.s4 1966171168
        %v6840 = vunpack.c.0.s8 %v6839
        %v6841 = vlaneseq
        %v6842 = vshrl.u32 %v6841, 7
        %v6843 = vsub.s32 %v6840, %v6842
        %v6844 = vrot.slane %v5006, %v6843
        %v6846 = vunpack.c.l.s4 1966171168
        %v6847 = vunpack.c.0.s8 %v6846
        %v6848 = vlaneseq
        %v6849 = vshrl.u32 %v6848, 7
        %v6850 = vsub.s32 %v6847, %v6849
        %v6851 = vrot.slane %v6844, %v6850
        %v6853 = vunpack.c.l.s4 1966171168
        %v6854 = vunpack.c.0.s8 %v6853
        %v6855 = vlaneseq
        %v6856 = vshrl.u32 %v6855, 7
        %v6857 = vsub.s32 %v6854, %v6856
        %v6858 = vrot.slane %v5007, %v6857
        %v6860 = vunpack.c.l.s4 1966171168
        %v6861 = vunpack.c.0.s8 %v6860
        %v6862 = vlaneseq
        %v6863 = vshrl.u32 %v6862, 7
        %v6864 = vsub.s32 %v6861, %v6863
        %v6865 = vrot.slane %v6858, %v6864
        %v6867 = vunpack.c.l.s4 1966171168
        %v6868 = vunpack.c.0.s8 %v6867
        %v6869 = vlaneseq
        %v6870 = vshrl.u32 %v6869, 7
        %v6871 = vsub.s32 %v6868, %v6870
        %v6872 = vrot.slane %v5008, %v6871
        %v6874 = vunpack.c.l.s4 1966171168
        %v6875 = vunpack.c.0.s8 %v6874
        %v6876 = vlaneseq
        %v6877 = vshrl.u32 %v6876, 7
        %v6878 = vsub.s32 %v6875, %v6877
        %v6879 = vrot.slane %v6872, %v6878
        %v6881 = vunpack.c.l.s4 1966171168
        %v6882 = vunpack.c.0.s8 %v6881
        %v6883 = vlaneseq
        %v6884 = vshrl.u32 %v6883, 7
        %v6885 = vsub.s32 %v6882, %v6884
        %v6886 = vrot.slane %v5009, %v6885
        %v6888 = vunpack.c.l.s4 1966171168
        %v6889 = vunpack.c.0.s8 %v6888
        %v6890 = vlaneseq
        %v6891 = vshrl.u32 %v6890, 7
        %v6892 = vsub.s32 %v6889, %v6891
        %v6893 = vrot.slane %v6886, %v6892
        %v6894 = vunpack.c.l.b16 %v6417
        %v6895 = vunpack.c.l.b16 %v6431
        %v6896 = vunpack.c.l.b16 %v6445
        %v6897 = vunpack.c.l.b16 %v6459
        %v6898 = vunpack.c.l.b16 %v6473
        %v6899 = vunpack.c.l.b16 %v6487
        %v6900 = vunpack.c.l.b16 %v6501
        %v6901 = vunpack.c.l.b16 %v6515
        %v6902 = vunpack.c.l.b16 %v6529
        %v6903 = vunpack.c.l.b16 %v6543
        %v6904 = vunpack.c.l.b16 %v6557
        %v6905 = vunpack.c.l.b16 %v6571
        %v6906 = vunpack.c.l.b16 %v6585
        %v6907 = vunpack.c.l.b16 %v6599
        %v6908 = vunpack.c.l.b16 %v6613
        %v6909 = vunpack.c.l.b16 %v6627
        %v6910 = vunpack.c.l.b16 %v6641
        %v6911 = vunpack.c.l.b16 %v6655
        %v6912 = vunpack.c.l.b16 %v6669
        %v6913 = vunpack.c.l.b16 %v6683
        %v6914 = vunpack.c.l.b16 %v6697
        %v6915 = vunpack.c.l.b16 %v6711
        %v6916 = vunpack.c.l.b16 %v6725
        %v6917 = vunpack.c.l.b16 %v6739
        %v6918 = vunpack.c.l.b16 %v6753
        %v6919 = vunpack.c.l.b16 %v6767
        %v6920 = vunpack.c.l.b16 %v6781
        %v6921 = vunpack.c.l.b16 %v6795
        %v6922 = vunpack.c.l.b16 %v6809
        %v6923 = vunpack.c.l.b16 %v6823
        %v6924 = vunpack.c.l.b16 %v6837
        %v6925 = vunpack.c.l.b16 %v6851
        %v6926 = vunpack.c.l.b16 %v6865
        %v6927 = vunpack.c.l.b16 %v6879
        %v6928 = vunpack.c.l.b16 %v6893
        %v6929 = vrot.slane %v6895, 7
        %v6930 = vsel %vm1034, %v6929, %v6894
        %v6931 = vrot.slane %v6896, 6
        %v6932 = vsel %vm1037, %v6931, %v6930
        %v6933 = vrot.slane %v6897, 5
        %v6934 = vsel %vm1040, %v6933, %v6932
        %v6935 = vrot.slane %v6898, 4
        %v6936 = vsel %vm1043, %v6935, %v6934
        %v6937 = vrot.slane %v6899, 3
        %v6938 = vsel %vm1046, %v6937, %v6936
        %v6939 = vrot.slane %v6900, 2
        %v6940 = vsel %vm1049, %v6939, %v6938
        %v6941 = vrot.slane %v6901, 1
        %v6942 = vsel %vm1052, %v6941, %v6940
        %v6943 = vrot.slane %v6903, 7
        %v6944 = vsel %vm1034, %v6943, %v6902
        %v6945 = vrot.slane %v6904, 6
        %v6946 = vsel %vm1037, %v6945, %v6944
        %v6947 = vrot.slane %v6905, 5
        %v6948 = vsel %vm1040, %v6947, %v6946
        %v6949 = vrot.slane %v6906, 4
        %v6950 = vsel %vm1043, %v6949, %v6948
        %v6951 = vrot.slane %v6907, 3
        %v6952 = vsel %vm1046, %v6951, %v6950
        %v6953 = vrot.slane %v6908, 2
        %v6954 = vsel %vm1049, %v6953, %v6952
        %v6955 = vrot.slane %v6909, 1
        %v6956 = vsel %vm1052, %v6955, %v6954
        %v6957 = vrot.slane %v6911, 7
        %v6958 = vsel %vm1034, %v6957, %v6910
        %v6959 = vrot.slane %v6912, 6
        %v6960 = vsel %vm1037, %v6959, %v6958
        %v6961 = vrot.slane %v6913, 5
        %v6962 = vsel %vm1040, %v6961, %v6960
        %v6963 = vrot.slane %v6914, 4
        %v6964 = vsel %vm1043, %v6963, %v6962
        %v6965 = vrot.slane %v6915, 3
        %v6966 = vsel %vm1046, %v6965, %v6964
        %v6967 = vrot.slane %v6916, 2
        %v6968 = vsel %vm1049, %v6967, %v6966
        %v6969 = vrot.slane %v6917, 1
        %v6970 = vsel %vm1052, %v6969, %v6968
        %v6971 = vrot.slane %v6919, 7
        %v6972 = vsel %vm1034, %v6971, %v6918
        %v6973 = vrot.slane %v6920, 6
        %v6974 = vsel %vm1037, %v6973, %v6972
        %v6975 = vrot.slane %v6921, 5
        %v6976 = vsel %vm1040, %v6975, %v6974
        %v6977 = vrot.slane %v6922, 4
        %v6978 = vsel %vm1043, %v6977, %v6976
        %v6979 = vrot.slane %v6923, 3
        %v6980 = vsel %vm1046, %v6979, %v6978
        %v6981 = vrot.slane %v6924, 2
        %v6982 = vsel %vm1049, %v6981, %v6980
        %v6983 = vrot.slane %v6925, 1
        %v6984 = vsel %vm1052, %v6983, %v6982
        %v6985 = vrot.slane %v6927, 7
        %v6986 = vsel %vm1034, %v6985, %v6926
        %v6987 = vrot.slane %v6928, 6
        %v6988 = vsel %vm1037, %v6987, %v6986
        %v6989 = vpack.c.b16 %v6956, %v6942
        %v6990 = vpack.c.b16 %v6984, %v6970
        %v6991 = vpack.c.b16 %v6988, %v6988
        %v7031 = vunpack.c.l.s4 1966171168
        %v7032 = vunpack.c.0.s8 %v7031
        %v7033 = vlaneseq
        %v7034 = vshrl.u32 %v7033, 7
        %v7035 = vsub.s32 %v7032, %v7034
        %v7036 = vrot.slane %v5010, %v7035
        %v7038 = vunpack.c.l.s4 1966171168
        %v7039 = vunpack.c.0.s8 %v7038
        %v7040 = vlaneseq
        %v7041 = vshrl.u32 %v7040, 7
        %v7042 = vsub.s32 %v7039, %v7041
        %v7043 = vrot.slane %v7036, %v7042
        %v7045 = vunpack.c.l.s4 1966171168
        %v7046 = vunpack.c.0.s8 %v7045
        %v7047 = vlaneseq
        %v7048 = vshrl.u32 %v7047, 7
        %v7049 = vsub.s32 %v7046, %v7048
        %v7050 = vrot.slane %v5011, %v7049
        %v7052 = vunpack.c.l.s4 1966171168
        %v7053 = vunpack.c.0.s8 %v7052
        %v7054 = vlaneseq
        %v7055 = vshrl.u32 %v7054, 7
        %v7056 = vsub.s32 %v7053, %v7055
        %v7057 = vrot.slane %v7050, %v7056
        %v7059 = vunpack.c.l.s4 1966171168
        %v7060 = vunpack.c.0.s8 %v7059
        %v7061 = vlaneseq
        %v7062 = vshrl.u32 %v7061, 7
        %v7063 = vsub.s32 %v7060, %v7062
        %v7064 = vrot.slane %v5012, %v7063
        %v7066 = vunpack.c.l.s4 1966171168
        %v7067 = vunpack.c.0.s8 %v7066
        %v7068 = vlaneseq
        %v7069 = vshrl.u32 %v7068, 7
        %v7070 = vsub.s32 %v7067, %v7069
        %v7071 = vrot.slane %v7064, %v7070
        %v7073 = vunpack.c.l.s4 1966171168
        %v7074 = vunpack.c.0.s8 %v7073
        %v7075 = vlaneseq
        %v7076 = vshrl.u32 %v7075, 7
        %v7077 = vsub.s32 %v7074, %v7076
        %v7078 = vrot.slane %v5013, %v7077
        %v7080 = vunpack.c.l.s4 1966171168
        %v7081 = vunpack.c.0.s8 %v7080
        %v7082 = vlaneseq
        %v7083 = vshrl.u32 %v7082, 7
        %v7084 = vsub.s32 %v7081, %v7083
        %v7085 = vrot.slane %v7078, %v7084
        %v7087 = vunpack.c.l.s4 1966171168
        %v7088 = vunpack.c.0.s8 %v7087
        %v7089 = vlaneseq
        %v7090 = vshrl.u32 %v7089, 7
        %v7091 = vsub.s32 %v7088, %v7090
        %v7092 = vrot.slane %v5014, %v7091
        %v7094 = vunpack.c.l.s4 1966171168
        %v7095 = vunpack.c.0.s8 %v7094
        %v7096 = vlaneseq
        %v7097 = vshrl.u32 %v7096, 7
        %v7098 = vsub.s32 %v7095, %v7097
        %v7099 = vrot.slane %v7092, %v7098
        %v7101 = vunpack.c.l.s4 1966171168
        %v7102 = vunpack.c.0.s8 %v7101
        %v7103 = vlaneseq
        %v7104 = vshrl.u32 %v7103, 7
        %v7105 = vsub.s32 %v7102, %v7104
        %v7106 = vrot.slane %v5015, %v7105
        %v7108 = vunpack.c.l.s4 1966171168
        %v7109 = vunpack.c.0.s8 %v7108
        %v7110 = vlaneseq
        %v7111 = vshrl.u32 %v7110, 7
        %v7112 = vsub.s32 %v7109, %v7111
        %v7113 = vrot.slane %v7106, %v7112
        %v7115 = vunpack.c.l.s4 1966171168
        %v7116 = vunpack.c.0.s8 %v7115
        %v7117 = vlaneseq
        %v7118 = vshrl.u32 %v7117, 7
        %v7119 = vsub.s32 %v7116, %v7118
        %v7120 = vrot.slane %v5016, %v7119
        %v7122 = vunpack.c.l.s4 1966171168
        %v7123 = vunpack.c.0.s8 %v7122
        %v7124 = vlaneseq
        %v7125 = vshrl.u32 %v7124, 7
        %v7126 = vsub.s32 %v7123, %v7125
        %v7127 = vrot.slane %v7120, %v7126
        %v7129 = vunpack.c.l.s4 1966171168
        %v7130 = vunpack.c.0.s8 %v7129
        %v7131 = vlaneseq
        %v7132 = vshrl.u32 %v7131, 7
        %v7133 = vsub.s32 %v7130, %v7132
        %v7134 = vrot.slane %v5017, %v7133
        %v7136 = vunpack.c.l.s4 1966171168
        %v7137 = vunpack.c.0.s8 %v7136
        %v7138 = vlaneseq
        %v7139 = vshrl.u32 %v7138, 7
        %v7140 = vsub.s32 %v7137, %v7139
        %v7141 = vrot.slane %v7134, %v7140
        %v7143 = vunpack.c.l.s4 1966171168
        %v7144 = vunpack.c.0.s8 %v7143
        %v7145 = vlaneseq
        %v7146 = vshrl.u32 %v7145, 7
        %v7147 = vsub.s32 %v7144, %v7146
        %v7148 = vrot.slane %v5018, %v7147
        %v7150 = vunpack.c.l.s4 1966171168
        %v7151 = vunpack.c.0.s8 %v7150
        %v7152 = vlaneseq
        %v7153 = vshrl.u32 %v7152, 7
        %v7154 = vsub.s32 %v7151, %v7153
        %v7155 = vrot.slane %v7148, %v7154
        %v7157 = vunpack.c.l.s4 1966171168
        %v7158 = vunpack.c.0.s8 %v7157
        %v7159 = vlaneseq
        %v7160 = vshrl.u32 %v7159, 7
        %v7161 = vsub.s32 %v7158, %v7160
        %v7162 = vrot.slane %v5019, %v7161
        %v7164 = vunpack.c.l.s4 1966171168
        %v7165 = vunpack.c.0.s8 %v7164
        %v7166 = vlaneseq
        %v7167 = vshrl.u32 %v7166, 7
        %v7168 = vsub.s32 %v7165, %v7167
        %v7169 = vrot.slane %v7162, %v7168
        %v7171 = vunpack.c.l.s4 1966171168
        %v7172 = vunpack.c.0.s8 %v7171
        %v7173 = vlaneseq
        %v7174 = vshrl.u32 %v7173, 7
        %v7175 = vsub.s32 %v7172, %v7174
        %v7176 = vrot.slane %v5020, %v7175
        %v7178 = vunpack.c.l.s4 1966171168
        %v7179 = vunpack.c.0.s8 %v7178
        %v7180 = vlaneseq
        %v7181 = vshrl.u32 %v7180, 7
        %v7182 = vsub.s32 %v7179, %v7181
        %v7183 = vrot.slane %v7176, %v7182
        %v7185 = vunpack.c.l.s4 1966171168
        %v7186 = vunpack.c.0.s8 %v7185
        %v7187 = vlaneseq
        %v7188 = vshrl.u32 %v7187, 7
        %v7189 = vsub.s32 %v7186, %v7188
        %v7190 = vrot.slane %v5021, %v7189
        %v7192 = vunpack.c.l.s4 1966171168
        %v7193 = vunpack.c.0.s8 %v7192
        %v7194 = vlaneseq
        %v7195 = vshrl.u32 %v7194, 7
        %v7196 = vsub.s32 %v7193, %v7195
        %v7197 = vrot.slane %v7190, %v7196
        %v7199 = vunpack.c.l.s4 1966171168
        %v7200 = vunpack.c.0.s8 %v7199
        %v7201 = vlaneseq
        %v7202 = vshrl.u32 %v7201, 7
        %v7203 = vsub.s32 %v7200, %v7202
        %v7204 = vrot.slane %v5022, %v7203
        %v7206 = vunpack.c.l.s4 1966171168
        %v7207 = vunpack.c.0.s8 %v7206
        %v7208 = vlaneseq
        %v7209 = vshrl.u32 %v7208, 7
        %v7210 = vsub.s32 %v7207, %v7209
        %v7211 = vrot.slane %v7204, %v7210
        %v7213 = vunpack.c.l.s4 1966171168
        %v7214 = vunpack.c.0.s8 %v7213
        %v7215 = vlaneseq
        %v7216 = vshrl.u32 %v7215, 7
        %v7217 = vsub.s32 %v7214, %v7216
        %v7218 = vrot.slane %v5023, %v7217
        %v7220 = vunpack.c.l.s4 1966171168
        %v7221 = vunpack.c.0.s8 %v7220
        %v7222 = vlaneseq
        %v7223 = vshrl.u32 %v7222, 7
        %v7224 = vsub.s32 %v7221, %v7223
        %v7225 = vrot.slane %v7218, %v7224
        %v7227 = vunpack.c.l.s4 1966171168
        %v7228 = vunpack.c.0.s8 %v7227
        %v7229 = vlaneseq
        %v7230 = vshrl.u32 %v7229, 7
        %v7231 = vsub.s32 %v7228, %v7230
        %v7232 = vrot.slane %v5024, %v7231
        %v7234 = vunpack.c.l.s4 1966171168
        %v7235 = vunpack.c.0.s8 %v7234
        %v7236 = vlaneseq
        %v7237 = vshrl.u32 %v7236, 7
        %v7238 = vsub.s32 %v7235, %v7237
        %v7239 = vrot.slane %v7232, %v7238
        %v7241 = vunpack.c.l.s4 1966171168
        %v7242 = vunpack.c.0.s8 %v7241
        %v7243 = vlaneseq
        %v7244 = vshrl.u32 %v7243, 7
        %v7245 = vsub.s32 %v7242, %v7244
        %v7246 = vrot.slane %v5025, %v7245
        %v7248 = vunpack.c.l.s4 1966171168
        %v7249 = vunpack.c.0.s8 %v7248
        %v7250 = vlaneseq
        %v7251 = vshrl.u32 %v7250, 7
        %v7252 = vsub.s32 %v7249, %v7251
        %v7253 = vrot.slane %v7246, %v7252
        %v7255 = vunpack.c.l.s4 1966171168
        %v7256 = vunpack.c.0.s8 %v7255
        %v7257 = vlaneseq
        %v7258 = vshrl.u32 %v7257, 7
        %v7259 = vsub.s32 %v7256, %v7258
        %v7260 = vrot.slane %v5026, %v7259
        %v7262 = vunpack.c.l.s4 1966171168
        %v7263 = vunpack.c.0.s8 %v7262
        %v7264 = vlaneseq
        %v7265 = vshrl.u32 %v7264, 7
        %v7266 = vsub.s32 %v7263, %v7265
        %v7267 = vrot.slane %v7260, %v7266
        %v7269 = vunpack.c.l.s4 1966171168
        %v7270 = vunpack.c.0.s8 %v7269
        %v7271 = vlaneseq
        %v7272 = vshrl.u32 %v7271, 7
        %v7273 = vsub.s32 %v7270, %v7272
        %v7274 = vrot.slane %v5027, %v7273
        %v7276 = vunpack.c.l.s4 1966171168
        %v7277 = vunpack.c.0.s8 %v7276
        %v7278 = vlaneseq
        %v7279 = vshrl.u32 %v7278, 7
        %v7280 = vsub.s32 %v7277, %v7279
        %v7281 = vrot.slane %v7274, %v7280
        %v7283 = vunpack.c.l.s4 1966171168
        %v7284 = vunpack.c.0.s8 %v7283
        %v7285 = vlaneseq
        %v7286 = vshrl.u32 %v7285, 7
        %v7287 = vsub.s32 %v7284, %v7286
        %v7288 = vrot.slane %v5028, %v7287
        %v7290 = vunpack.c.l.s4 1966171168
        %v7291 = vunpack.c.0.s8 %v7290
        %v7292 = vlaneseq
        %v7293 = vshrl.u32 %v7292, 7
        %v7294 = vsub.s32 %v7291, %v7293
        %v7295 = vrot.slane %v7288, %v7294
        %v7297 = vunpack.c.l.s4 1966171168
        %v7298 = vunpack.c.0.s8 %v7297
        %v7299 = vlaneseq
        %v7300 = vshrl.u32 %v7299, 7
        %v7301 = vsub.s32 %v7298, %v7300
        %v7302 = vrot.slane %v5029, %v7301
        %v7304 = vunpack.c.l.s4 1966171168
        %v7305 = vunpack.c.0.s8 %v7304
        %v7306 = vlaneseq
        %v7307 = vshrl.u32 %v7306, 7
        %v7308 = vsub.s32 %v7305, %v7307
        %v7309 = vrot.slane %v7302, %v7308
        %v7311 = vunpack.c.l.s4 1966171168
        %v7312 = vunpack.c.0.s8 %v7311
        %v7313 = vlaneseq
        %v7314 = vshrl.u32 %v7313, 7
        %v7315 = vsub.s32 %v7312, %v7314
        %v7316 = vrot.slane %v5030, %v7315
        %v7318 = vunpack.c.l.s4 1966171168
        %v7319 = vunpack.c.0.s8 %v7318
        %v7320 = vlaneseq
        %v7321 = vshrl.u32 %v7320, 7
        %v7322 = vsub.s32 %v7319, %v7321
        %v7323 = vrot.slane %v7316, %v7322
        %v7325 = vunpack.c.l.s4 1966171168
        %v7326 = vunpack.c.0.s8 %v7325
        %v7327 = vlaneseq
        %v7328 = vshrl.u32 %v7327, 7
        %v7329 = vsub.s32 %v7326, %v7328
        %v7330 = vrot.slane %v5031, %v7329
        %v7332 = vunpack.c.l.s4 1966171168
        %v7333 = vunpack.c.0.s8 %v7332
        %v7334 = vlaneseq
        %v7335 = vshrl.u32 %v7334, 7
        %v7336 = vsub.s32 %v7333, %v7335
        %v7337 = vrot.slane %v7330, %v7336
        %v7339 = vunpack.c.l.s4 1966171168
        %v7340 = vunpack.c.0.s8 %v7339
        %v7341 = vlaneseq
        %v7342 = vshrl.u32 %v7341, 7
        %v7343 = vsub.s32 %v7340, %v7342
        %v7344 = vrot.slane %v5032, %v7343
        %v7346 = vunpack.c.l.s4 1966171168
        %v7347 = vunpack.c.0.s8 %v7346
        %v7348 = vlaneseq
        %v7349 = vshrl.u32 %v7348, 7
        %v7350 = vsub.s32 %v7347, %v7349
        %v7351 = vrot.slane %v7344, %v7350
        %v7353 = vunpack.c.l.s4 1966171168
        %v7354 = vunpack.c.0.s8 %v7353
        %v7355 = vlaneseq
        %v7356 = vshrl.u32 %v7355, 7
        %v7357 = vsub.s32 %v7354, %v7356
        %v7358 = vrot.slane %v5033, %v7357
        %v7360 = vunpack.c.l.s4 1966171168
        %v7361 = vunpack.c.0.s8 %v7360
        %v7362 = vlaneseq
        %v7363 = vshrl.u32 %v7362, 7
        %v7364 = vsub.s32 %v7361, %v7363
        %v7365 = vrot.slane %v7358, %v7364
        %v7367 = vunpack.c.l.s4 1966171168
        %v7368 = vunpack.c.0.s8 %v7367
        %v7369 = vlaneseq
        %v7370 = vshrl.u32 %v7369, 7
        %v7371 = vsub.s32 %v7368, %v7370
        %v7372 = vrot.slane %v5034, %v7371
        %v7374 = vunpack.c.l.s4 1966171168
        %v7375 = vunpack.c.0.s8 %v7374
        %v7376 = vlaneseq
        %v7377 = vshrl.u32 %v7376, 7
        %v7378 = vsub.s32 %v7375, %v7377
        %v7379 = vrot.slane %v7372, %v7378
        %v7381 = vunpack.c.l.s4 1966171168
        %v7382 = vunpack.c.0.s8 %v7381
        %v7383 = vlaneseq
        %v7384 = vshrl.u32 %v7383, 7
        %v7385 = vsub.s32 %v7382, %v7384
        %v7386 = vrot.slane %v5035, %v7385
        %v7388 = vunpack.c.l.s4 1966171168
        %v7389 = vunpack.c.0.s8 %v7388
        %v7390 = vlaneseq
        %v7391 = vshrl.u32 %v7390, 7
        %v7392 = vsub.s32 %v7389, %v7391
        %v7393 = vrot.slane %v7386, %v7392
        %v7395 = vunpack.c.l.s4 1966171168
        %v7396 = vunpack.c.0.s8 %v7395
        %v7397 = vlaneseq
        %v7398 = vshrl.u32 %v7397, 7
        %v7399 = vsub.s32 %v7396, %v7398
        %v7400 = vrot.slane %v5036, %v7399
        %v7402 = vunpack.c.l.s4 1966171168
        %v7403 = vunpack.c.0.s8 %v7402
        %v7404 = vlaneseq
        %v7405 = vshrl.u32 %v7404, 7
        %v7406 = vsub.s32 %v7403, %v7405
        %v7407 = vrot.slane %v7400, %v7406
        %v7409 = vunpack.c.l.s4 1966171168
        %v7410 = vunpack.c.0.s8 %v7409
        %v7411 = vlaneseq
        %v7412 = vshrl.u32 %v7411, 7
        %v7413 = vsub.s32 %v7410, %v7412
        %v7414 = vrot.slane %v5037, %v7413
        %v7416 = vunpack.c.l.s4 1966171168
        %v7417 = vunpack.c.0.s8 %v7416
        %v7418 = vlaneseq
        %v7419 = vshrl.u32 %v7418, 7
        %v7420 = vsub.s32 %v7417, %v7419
        %v7421 = vrot.slane %v7414, %v7420
        %v7423 = vunpack.c.l.s4 1966171168
        %v7424 = vunpack.c.0.s8 %v7423
        %v7425 = vlaneseq
        %v7426 = vshrl.u32 %v7425, 7
        %v7427 = vsub.s32 %v7424, %v7426
        %v7428 = vrot.slane %v5038, %v7427
        %v7430 = vunpack.c.l.s4 1966171168
        %v7431 = vunpack.c.0.s8 %v7430
        %v7432 = vlaneseq
        %v7433 = vshrl.u32 %v7432, 7
        %v7434 = vsub.s32 %v7431, %v7433
        %v7435 = vrot.slane %v7428, %v7434
        %v7437 = vunpack.c.l.s4 1966171168
        %v7438 = vunpack.c.0.s8 %v7437
        %v7439 = vlaneseq
        %v7440 = vshrl.u32 %v7439, 7
        %v7441 = vsub.s32 %v7438, %v7440
        %v7442 = vrot.slane %v5039, %v7441
        %v7444 = vunpack.c.l.s4 1966171168
        %v7445 = vunpack.c.0.s8 %v7444
        %v7446 = vlaneseq
        %v7447 = vshrl.u32 %v7446, 7
        %v7448 = vsub.s32 %v7445, %v7447
        %v7449 = vrot.slane %v7442, %v7448
        %v7451 = vunpack.c.l.s4 1966171168
        %v7452 = vunpack.c.0.s8 %v7451
        %v7453 = vlaneseq
        %v7454 = vshrl.u32 %v7453, 7
        %v7455 = vsub.s32 %v7452, %v7454
        %v7456 = vrot.slane %v5040, %v7455
        %v7458 = vunpack.c.l.s4 1966171168
        %v7459 = vunpack.c.0.s8 %v7458
        %v7460 = vlaneseq
        %v7461 = vshrl.u32 %v7460, 7
        %v7462 = vsub.s32 %v7459, %v7461
        %v7463 = vrot.slane %v7456, %v7462
        %v7465 = vunpack.c.l.s4 1966171168
        %v7466 = vunpack.c.0.s8 %v7465
        %v7467 = vlaneseq
        %v7468 = vshrl.u32 %v7467, 7
        %v7469 = vsub.s32 %v7466, %v7468
        %v7470 = vrot.slane %v5041, %v7469
        %v7472 = vunpack.c.l.s4 1966171168
        %v7473 = vunpack.c.0.s8 %v7472
        %v7474 = vlaneseq
        %v7475 = vshrl.u32 %v7474, 7
        %v7476 = vsub.s32 %v7473, %v7475
        %v7477 = vrot.slane %v7470, %v7476
        %v7479 = vunpack.c.l.s4 1966171168
        %v7480 = vunpack.c.0.s8 %v7479
        %v7481 = vlaneseq
        %v7482 = vshrl.u32 %v7481, 7
        %v7483 = vsub.s32 %v7480, %v7482
        %v7484 = vrot.slane %v5042, %v7483
        %v7486 = vunpack.c.l.s4 1966171168
        %v7487 = vunpack.c.0.s8 %v7486
        %v7488 = vlaneseq
        %v7489 = vshrl.u32 %v7488, 7
        %v7490 = vsub.s32 %v7487, %v7489
        %v7491 = vrot.slane %v7484, %v7490
        %v7493 = vunpack.c.l.s4 1966171168
        %v7494 = vunpack.c.0.s8 %v7493
        %v7495 = vlaneseq
        %v7496 = vshrl.u32 %v7495, 7
        %v7497 = vsub.s32 %v7494, %v7496
        %v7498 = vrot.slane %v5043, %v7497
        %v7500 = vunpack.c.l.s4 1966171168
        %v7501 = vunpack.c.0.s8 %v7500
        %v7502 = vlaneseq
        %v7503 = vshrl.u32 %v7502, 7
        %v7504 = vsub.s32 %v7501, %v7503
        %v7505 = vrot.slane %v7498, %v7504
        %v7507 = vunpack.c.l.s4 1966171168
        %v7508 = vunpack.c.0.s8 %v7507
        %v7509 = vlaneseq
        %v7510 = vshrl.u32 %v7509, 7
        %v7511 = vsub.s32 %v7508, %v7510
        %v7512 = vrot.slane %v5044, %v7511
        %v7514 = vunpack.c.l.s4 1966171168
        %v7515 = vunpack.c.0.s8 %v7514
        %v7516 = vlaneseq
        %v7517 = vshrl.u32 %v7516, 7
        %v7518 = vsub.s32 %v7515, %v7517
        %v7519 = vrot.slane %v7512, %v7518
        %v7520 = vunpack.c.l.b16 %v7043
        %v7521 = vunpack.c.l.b16 %v7057
        %v7522 = vunpack.c.l.b16 %v7071
        %v7523 = vunpack.c.l.b16 %v7085
        %v7524 = vunpack.c.l.b16 %v7099
        %v7525 = vunpack.c.l.b16 %v7113
        %v7526 = vunpack.c.l.b16 %v7127
        %v7527 = vunpack.c.l.b16 %v7141
        %v7528 = vunpack.c.l.b16 %v7155
        %v7529 = vunpack.c.l.b16 %v7169
        %v7530 = vunpack.c.l.b16 %v7183
        %v7531 = vunpack.c.l.b16 %v7197
        %v7532 = vunpack.c.l.b16 %v7211
        %v7533 = vunpack.c.l.b16 %v7225
        %v7534 = vunpack.c.l.b16 %v7239
        %v7535 = vunpack.c.l.b16 %v7253
        %v7536 = vunpack.c.l.b16 %v7267
        %v7537 = vunpack.c.l.b16 %v7281
        %v7538 = vunpack.c.l.b16 %v7295
        %v7539 = vunpack.c.l.b16 %v7309
        %v7540 = vunpack.c.l.b16 %v7323
        %v7541 = vunpack.c.l.b16 %v7337
        %v7542 = vunpack.c.l.b16 %v7351
        %v7543 = vunpack.c.l.b16 %v7365
        %v7544 = vunpack.c.l.b16 %v7379
        %v7545 = vunpack.c.l.b16 %v7393
        %v7546 = vunpack.c.l.b16 %v7407
        %v7547 = vunpack.c.l.b16 %v7421
        %v7548 = vunpack.c.l.b16 %v7435
        %v7549 = vunpack.c.l.b16 %v7449
        %v7550 = vunpack.c.l.b16 %v7463
        %v7551 = vunpack.c.l.b16 %v7477
        %v7552 = vunpack.c.l.b16 %v7491
        %v7553 = vunpack.c.l.b16 %v7505
        %v7554 = vunpack.c.l.b16 %v7519
        %v7555 = vrot.slane %v7521, 7
        %v7556 = vsel %vm1034, %v7555, %v7520
        %v7557 = vrot.slane %v7522, 6
        %v7558 = vsel %vm1037, %v7557, %v7556
        %v7559 = vrot.slane %v7523, 5
        %v7560 = vsel %vm1040, %v7559, %v7558
        %v7561 = vrot.slane %v7524, 4
        %v7562 = vsel %vm1043, %v7561, %v7560
        %v7563 = vrot.slane %v7525, 3
        %v7564 = vsel %vm1046, %v7563, %v7562
        %v7565 = vrot.slane %v7526, 2
        %v7566 = vsel %vm1049, %v7565, %v7564
        %v7567 = vrot.slane %v7527, 1
        %v7568 = vsel %vm1052, %v7567, %v7566
        %v7569 = vrot.slane %v7529, 7
        %v7570 = vsel %vm1034, %v7569, %v7528
        %v7571 = vrot.slane %v7530, 6
        %v7572 = vsel %vm1037, %v7571, %v7570
        %v7573 = vrot.slane %v7531, 5
        %v7574 = vsel %vm1040, %v7573, %v7572
        %v7575 = vrot.slane %v7532, 4
        %v7576 = vsel %vm1043, %v7575, %v7574
        %v7577 = vrot.slane %v7533, 3
        %v7578 = vsel %vm1046, %v7577, %v7576
        %v7579 = vrot.slane %v7534, 2
        %v7580 = vsel %vm1049, %v7579, %v7578
        %v7581 = vrot.slane %v7535, 1
        %v7582 = vsel %vm1052, %v7581, %v7580
        %v7583 = vrot.slane %v7537, 7
        %v7584 = vsel %vm1034, %v7583, %v7536
        %v7585 = vrot.slane %v7538, 6
        %v7586 = vsel %vm1037, %v7585, %v7584
        %v7587 = vrot.slane %v7539, 5
        %v7588 = vsel %vm1040, %v7587, %v7586
        %v7589 = vrot.slane %v7540, 4
        %v7590 = vsel %vm1043, %v7589, %v7588
        %v7591 = vrot.slane %v7541, 3
        %v7592 = vsel %vm1046, %v7591, %v7590
        %v7593 = vrot.slane %v7542, 2
        %v7594 = vsel %vm1049, %v7593, %v7592
        %v7595 = vrot.slane %v7543, 1
        %v7596 = vsel %vm1052, %v7595, %v7594
        %v7597 = vrot.slane %v7545, 7
        %v7598 = vsel %vm1034, %v7597, %v7544
        %v7599 = vrot.slane %v7546, 6
        %v7600 = vsel %vm1037, %v7599, %v7598
        %v7601 = vrot.slane %v7547, 5
        %v7602 = vsel %vm1040, %v7601, %v7600
        %v7603 = vrot.slane %v7548, 4
        %v7604 = vsel %vm1043, %v7603, %v7602
        %v7605 = vrot.slane %v7549, 3
        %v7606 = vsel %vm1046, %v7605, %v7604
        %v7607 = vrot.slane %v7550, 2
        %v7608 = vsel %vm1049, %v7607, %v7606
        %v7609 = vrot.slane %v7551, 1
        %v7610 = vsel %vm1052, %v7609, %v7608
        %v7611 = vrot.slane %v7553, 7
        %v7612 = vsel %vm1034, %v7611, %v7552
        %v7613 = vrot.slane %v7554, 6
        %v7614 = vsel %vm1037, %v7613, %v7612
        %v7615 = vpack.c.b16 %v7582, %v7568
        %v7616 = vpack.c.b16 %v7610, %v7596
        %v7617 = vpack.c.b16 %v7614, %v7614
        %v7657 = vunpack.c.l.s4 1966171168
        %v7658 = vunpack.c.0.s8 %v7657
        %v7659 = vlaneseq
        %v7660 = vshrl.u32 %v7659, 7
        %v7661 = vsub.s32 %v7658, %v7660
        %v7662 = vrot.slane %v5046, %v7661
        %v7664 = vunpack.c.l.s4 1966171168
        %v7665 = vunpack.c.0.s8 %v7664
        %v7666 = vlaneseq
        %v7667 = vshrl.u32 %v7666, 7
        %v7668 = vsub.s32 %v7665, %v7667
        %v7669 = vrot.slane %v7662, %v7668
        %v7671 = vunpack.c.l.s4 1966171168
        %v7672 = vunpack.c.0.s8 %v7671
        %v7673 = vlaneseq
        %v7674 = vshrl.u32 %v7673, 7
        %v7675 = vsub.s32 %v7672, %v7674
        %v7676 = vrot.slane %v5047, %v7675
        %v7678 = vunpack.c.l.s4 1966171168
        %v7679 = vunpack.c.0.s8 %v7678
        %v7680 = vlaneseq
        %v7681 = vshrl.u32 %v7680, 7
        %v7682 = vsub.s32 %v7679, %v7681
        %v7683 = vrot.slane %v7676, %v7682
        %v7685 = vunpack.c.l.s4 1966171168
        %v7686 = vunpack.c.0.s8 %v7685
        %v7687 = vlaneseq
        %v7688 = vshrl.u32 %v7687, 7
        %v7689 = vsub.s32 %v7686, %v7688
        %v7690 = vrot.slane %v5048, %v7689
        %v7692 = vunpack.c.l.s4 1966171168
        %v7693 = vunpack.c.0.s8 %v7692
        %v7694 = vlaneseq
        %v7695 = vshrl.u32 %v7694, 7
        %v7696 = vsub.s32 %v7693, %v7695
        %v7697 = vrot.slane %v7690, %v7696
        %v7699 = vunpack.c.l.s4 1966171168
        %v7700 = vunpack.c.0.s8 %v7699
        %v7701 = vlaneseq
        %v7702 = vshrl.u32 %v7701, 7
        %v7703 = vsub.s32 %v7700, %v7702
        %v7704 = vrot.slane %v5049, %v7703
        %v7706 = vunpack.c.l.s4 1966171168
        %v7707 = vunpack.c.0.s8 %v7706
        %v7708 = vlaneseq
        %v7709 = vshrl.u32 %v7708, 7
        %v7710 = vsub.s32 %v7707, %v7709
        %v7711 = vrot.slane %v7704, %v7710
        %v7713 = vunpack.c.l.s4 1966171168
        %v7714 = vunpack.c.0.s8 %v7713
        %v7715 = vlaneseq
        %v7716 = vshrl.u32 %v7715, 7
        %v7717 = vsub.s32 %v7714, %v7716
        %v7718 = vrot.slane %v5050, %v7717
        %v7720 = vunpack.c.l.s4 1966171168
        %v7721 = vunpack.c.0.s8 %v7720
        %v7722 = vlaneseq
        %v7723 = vshrl.u32 %v7722, 7
        %v7724 = vsub.s32 %v7721, %v7723
        %v7725 = vrot.slane %v7718, %v7724
        %v7727 = vunpack.c.l.s4 1966171168
        %v7728 = vunpack.c.0.s8 %v7727
        %v7729 = vlaneseq
        %v7730 = vshrl.u32 %v7729, 7
        %v7731 = vsub.s32 %v7728, %v7730
        %v7732 = vrot.slane %v5051, %v7731
        %v7734 = vunpack.c.l.s4 1966171168
        %v7735 = vunpack.c.0.s8 %v7734
        %v7736 = vlaneseq
        %v7737 = vshrl.u32 %v7736, 7
        %v7738 = vsub.s32 %v7735, %v7737
        %v7739 = vrot.slane %v7732, %v7738
        %v7741 = vunpack.c.l.s4 1966171168
        %v7742 = vunpack.c.0.s8 %v7741
        %v7743 = vlaneseq
        %v7744 = vshrl.u32 %v7743, 7
        %v7745 = vsub.s32 %v7742, %v7744
        %v7746 = vrot.slane %v5052, %v7745
        %v7748 = vunpack.c.l.s4 1966171168
        %v7749 = vunpack.c.0.s8 %v7748
        %v7750 = vlaneseq
        %v7751 = vshrl.u32 %v7750, 7
        %v7752 = vsub.s32 %v7749, %v7751
        %v7753 = vrot.slane %v7746, %v7752
        %v7755 = vunpack.c.l.s4 1966171168
        %v7756 = vunpack.c.0.s8 %v7755
        %v7757 = vlaneseq
        %v7758 = vshrl.u32 %v7757, 7
        %v7759 = vsub.s32 %v7756, %v7758
        %v7760 = vrot.slane %v5053, %v7759
        %v7762 = vunpack.c.l.s4 1966171168
        %v7763 = vunpack.c.0.s8 %v7762
        %v7764 = vlaneseq
        %v7765 = vshrl.u32 %v7764, 7
        %v7766 = vsub.s32 %v7763, %v7765
        %v7767 = vrot.slane %v7760, %v7766
        %v7769 = vunpack.c.l.s4 1966171168
        %v7770 = vunpack.c.0.s8 %v7769
        %v7771 = vlaneseq
        %v7772 = vshrl.u32 %v7771, 7
        %v7773 = vsub.s32 %v7770, %v7772
        %v7774 = vrot.slane %v5054, %v7773
        %v7776 = vunpack.c.l.s4 1966171168
        %v7777 = vunpack.c.0.s8 %v7776
        %v7778 = vlaneseq
        %v7779 = vshrl.u32 %v7778, 7
        %v7780 = vsub.s32 %v7777, %v7779
        %v7781 = vrot.slane %v7774, %v7780
        %v7783 = vunpack.c.l.s4 1966171168
        %v7784 = vunpack.c.0.s8 %v7783
        %v7785 = vlaneseq
        %v7786 = vshrl.u32 %v7785, 7
        %v7787 = vsub.s32 %v7784, %v7786
        %v7788 = vrot.slane %v5055, %v7787
        %v7790 = vunpack.c.l.s4 1966171168
        %v7791 = vunpack.c.0.s8 %v7790
        %v7792 = vlaneseq
        %v7793 = vshrl.u32 %v7792, 7
        %v7794 = vsub.s32 %v7791, %v7793
        %v7795 = vrot.slane %v7788, %v7794
        %v7797 = vunpack.c.l.s4 1966171168
        %v7798 = vunpack.c.0.s8 %v7797
        %v7799 = vlaneseq
        %v7800 = vshrl.u32 %v7799, 7
        %v7801 = vsub.s32 %v7798, %v7800
        %v7802 = vrot.slane %v5056, %v7801
        %v7804 = vunpack.c.l.s4 1966171168
        %v7805 = vunpack.c.0.s8 %v7804
        %v7806 = vlaneseq
        %v7807 = vshrl.u32 %v7806, 7
        %v7808 = vsub.s32 %v7805, %v7807
        %v7809 = vrot.slane %v7802, %v7808
        %v7811 = vunpack.c.l.s4 1966171168
        %v7812 = vunpack.c.0.s8 %v7811
        %v7813 = vlaneseq
        %v7814 = vshrl.u32 %v7813, 7
        %v7815 = vsub.s32 %v7812, %v7814
        %v7816 = vrot.slane %v5057, %v7815
        %v7818 = vunpack.c.l.s4 1966171168
        %v7819 = vunpack.c.0.s8 %v7818
        %v7820 = vlaneseq
        %v7821 = vshrl.u32 %v7820, 7
        %v7822 = vsub.s32 %v7819, %v7821
        %v7823 = vrot.slane %v7816, %v7822
        %v7825 = vunpack.c.l.s4 1966171168
        %v7826 = vunpack.c.0.s8 %v7825
        %v7827 = vlaneseq
        %v7828 = vshrl.u32 %v7827, 7
        %v7829 = vsub.s32 %v7826, %v7828
        %v7830 = vrot.slane %v5058, %v7829
        %v7832 = vunpack.c.l.s4 1966171168
        %v7833 = vunpack.c.0.s8 %v7832
        %v7834 = vlaneseq
        %v7835 = vshrl.u32 %v7834, 7
        %v7836 = vsub.s32 %v7833, %v7835
        %v7837 = vrot.slane %v7830, %v7836
        %v7839 = vunpack.c.l.s4 1966171168
        %v7840 = vunpack.c.0.s8 %v7839
        %v7841 = vlaneseq
        %v7842 = vshrl.u32 %v7841, 7
        %v7843 = vsub.s32 %v7840, %v7842
        %v7844 = vrot.slane %v5059, %v7843
        %v7846 = vunpack.c.l.s4 1966171168
        %v7847 = vunpack.c.0.s8 %v7846
        %v7848 = vlaneseq
        %v7849 = vshrl.u32 %v7848, 7
        %v7850 = vsub.s32 %v7847, %v7849
        %v7851 = vrot.slane %v7844, %v7850
        %v7853 = vunpack.c.l.s4 1966171168
        %v7854 = vunpack.c.0.s8 %v7853
        %v7855 = vlaneseq
        %v7856 = vshrl.u32 %v7855, 7
        %v7857 = vsub.s32 %v7854, %v7856
        %v7858 = vrot.slane %v5060, %v7857
        %v7860 = vunpack.c.l.s4 1966171168
        %v7861 = vunpack.c.0.s8 %v7860
        %v7862 = vlaneseq
        %v7863 = vshrl.u32 %v7862, 7
        %v7864 = vsub.s32 %v7861, %v7863
        %v7865 = vrot.slane %v7858, %v7864
        %v7867 = vunpack.c.l.s4 1966171168
        %v7868 = vunpack.c.0.s8 %v7867
        %v7869 = vlaneseq
        %v7870 = vshrl.u32 %v7869, 7
        %v7871 = vsub.s32 %v7868, %v7870
        %v7872 = vrot.slane %v5061, %v7871
        %v7874 = vunpack.c.l.s4 1966171168
        %v7875 = vunpack.c.0.s8 %v7874
        %v7876 = vlaneseq
        %v7877 = vshrl.u32 %v7876, 7
        %v7878 = vsub.s32 %v7875, %v7877
        %v7879 = vrot.slane %v7872, %v7878
        %v7881 = vunpack.c.l.s4 1966171168
        %v7882 = vunpack.c.0.s8 %v7881
        %v7883 = vlaneseq
        %v7884 = vshrl.u32 %v7883, 7
        %v7885 = vsub.s32 %v7882, %v7884
        %v7886 = vrot.slane %v5062, %v7885
        %v7888 = vunpack.c.l.s4 1966171168
        %v7889 = vunpack.c.0.s8 %v7888
        %v7890 = vlaneseq
        %v7891 = vshrl.u32 %v7890, 7
        %v7892 = vsub.s32 %v7889, %v7891
        %v7893 = vrot.slane %v7886, %v7892
        %v7895 = vunpack.c.l.s4 1966171168
        %v7896 = vunpack.c.0.s8 %v7895
        %v7897 = vlaneseq
        %v7898 = vshrl.u32 %v7897, 7
        %v7899 = vsub.s32 %v7896, %v7898
        %v7900 = vrot.slane %v5063, %v7899
        %v7902 = vunpack.c.l.s4 1966171168
        %v7903 = vunpack.c.0.s8 %v7902
        %v7904 = vlaneseq
        %v7905 = vshrl.u32 %v7904, 7
        %v7906 = vsub.s32 %v7903, %v7905
        %v7907 = vrot.slane %v7900, %v7906
        %v7909 = vunpack.c.l.s4 1966171168
        %v7910 = vunpack.c.0.s8 %v7909
        %v7911 = vlaneseq
        %v7912 = vshrl.u32 %v7911, 7
        %v7913 = vsub.s32 %v7910, %v7912
        %v7914 = vrot.slane %v5064, %v7913
        %v7916 = vunpack.c.l.s4 1966171168
        %v7917 = vunpack.c.0.s8 %v7916
        %v7918 = vlaneseq
        %v7919 = vshrl.u32 %v7918, 7
        %v7920 = vsub.s32 %v7917, %v7919
        %v7921 = vrot.slane %v7914, %v7920
        %v7923 = vunpack.c.l.s4 1966171168
        %v7924 = vunpack.c.0.s8 %v7923
        %v7925 = vlaneseq
        %v7926 = vshrl.u32 %v7925, 7
        %v7927 = vsub.s32 %v7924, %v7926
        %v7928 = vrot.slane %v5065, %v7927
        %v7930 = vunpack.c.l.s4 1966171168
        %v7931 = vunpack.c.0.s8 %v7930
        %v7932 = vlaneseq
        %v7933 = vshrl.u32 %v7932, 7
        %v7934 = vsub.s32 %v7931, %v7933
        %v7935 = vrot.slane %v7928, %v7934
        %v7937 = vunpack.c.l.s4 1966171168
        %v7938 = vunpack.c.0.s8 %v7937
        %v7939 = vlaneseq
        %v7940 = vshrl.u32 %v7939, 7
        %v7941 = vsub.s32 %v7938, %v7940
        %v7942 = vrot.slane %v5066, %v7941
        %v7944 = vunpack.c.l.s4 1966171168
        %v7945 = vunpack.c.0.s8 %v7944
        %v7946 = vlaneseq
        %v7947 = vshrl.u32 %v7946, 7
        %v7948 = vsub.s32 %v7945, %v7947
        %v7949 = vrot.slane %v7942, %v7948
        %v7951 = vunpack.c.l.s4 1966171168
        %v7952 = vunpack.c.0.s8 %v7951
        %v7953 = vlaneseq
        %v7954 = vshrl.u32 %v7953, 7
        %v7955 = vsub.s32 %v7952, %v7954
        %v7956 = vrot.slane %v5067, %v7955
        %v7958 = vunpack.c.l.s4 1966171168
        %v7959 = vunpack.c.0.s8 %v7958
        %v7960 = vlaneseq
        %v7961 = vshrl.u32 %v7960, 7
        %v7962 = vsub.s32 %v7959, %v7961
        %v7963 = vrot.slane %v7956, %v7962
        %v7965 = vunpack.c.l.s4 1966171168
        %v7966 = vunpack.c.0.s8 %v7965
        %v7967 = vlaneseq
        %v7968 = vshrl.u32 %v7967, 7
        %v7969 = vsub.s32 %v7966, %v7968
        %v7970 = vrot.slane %v5068, %v7969
        %v7972 = vunpack.c.l.s4 1966171168
        %v7973 = vunpack.c.0.s8 %v7972
        %v7974 = vlaneseq
        %v7975 = vshrl.u32 %v7974, 7
        %v7976 = vsub.s32 %v7973, %v7975
        %v7977 = vrot.slane %v7970, %v7976
        %v7979 = vunpack.c.l.s4 1966171168
        %v7980 = vunpack.c.0.s8 %v7979
        %v7981 = vlaneseq
        %v7982 = vshrl.u32 %v7981, 7
        %v7983 = vsub.s32 %v7980, %v7982
        %v7984 = vrot.slane %v5069, %v7983
        %v7986 = vunpack.c.l.s4 1966171168
        %v7987 = vunpack.c.0.s8 %v7986
        %v7988 = vlaneseq
        %v7989 = vshrl.u32 %v7988, 7
        %v7990 = vsub.s32 %v7987, %v7989
        %v7991 = vrot.slane %v7984, %v7990
        %v7993 = vunpack.c.l.s4 1966171168
        %v7994 = vunpack.c.0.s8 %v7993
        %v7995 = vlaneseq
        %v7996 = vshrl.u32 %v7995, 7
        %v7997 = vsub.s32 %v7994, %v7996
        %v7998 = vrot.slane %v5070, %v7997
        %v8000 = vunpack.c.l.s4 1966171168
        %v8001 = vunpack.c.0.s8 %v8000
        %v8002 = vlaneseq
        %v8003 = vshrl.u32 %v8002, 7
        %v8004 = vsub.s32 %v8001, %v8003
        %v8005 = vrot.slane %v7998, %v8004
        %v8007 = vunpack.c.l.s4 1966171168
        %v8008 = vunpack.c.0.s8 %v8007
        %v8009 = vlaneseq
        %v8010 = vshrl.u32 %v8009, 7
        %v8011 = vsub.s32 %v8008, %v8010
        %v8012 = vrot.slane %v5071, %v8011
        %v8014 = vunpack.c.l.s4 1966171168
        %v8015 = vunpack.c.0.s8 %v8014
        %v8016 = vlaneseq
        %v8017 = vshrl.u32 %v8016, 7
        %v8018 = vsub.s32 %v8015, %v8017
        %v8019 = vrot.slane %v8012, %v8018
        %v8021 = vunpack.c.l.s4 1966171168
        %v8022 = vunpack.c.0.s8 %v8021
        %v8023 = vlaneseq
        %v8024 = vshrl.u32 %v8023, 7
        %v8025 = vsub.s32 %v8022, %v8024
        %v8026 = vrot.slane %v5072, %v8025
        %v8028 = vunpack.c.l.s4 1966171168
        %v8029 = vunpack.c.0.s8 %v8028
        %v8030 = vlaneseq
        %v8031 = vshrl.u32 %v8030, 7
        %v8032 = vsub.s32 %v8029, %v8031
        %v8033 = vrot.slane %v8026, %v8032
        %v8035 = vunpack.c.l.s4 1966171168
        %v8036 = vunpack.c.0.s8 %v8035
        %v8037 = vlaneseq
        %v8038 = vshrl.u32 %v8037, 7
        %v8039 = vsub.s32 %v8036, %v8038
        %v8040 = vrot.slane %v5073, %v8039
        %v8042 = vunpack.c.l.s4 1966171168
        %v8043 = vunpack.c.0.s8 %v8042
        %v8044 = vlaneseq
        %v8045 = vshrl.u32 %v8044, 7
        %v8046 = vsub.s32 %v8043, %v8045
        %v8047 = vrot.slane %v8040, %v8046
        %v8049 = vunpack.c.l.s4 1966171168
        %v8050 = vunpack.c.0.s8 %v8049
        %v8051 = vlaneseq
        %v8052 = vshrl.u32 %v8051, 7
        %v8053 = vsub.s32 %v8050, %v8052
        %v8054 = vrot.slane %v5074, %v8053
        %v8056 = vunpack.c.l.s4 1966171168
        %v8057 = vunpack.c.0.s8 %v8056
        %v8058 = vlaneseq
        %v8059 = vshrl.u32 %v8058, 7
        %v8060 = vsub.s32 %v8057, %v8059
        %v8061 = vrot.slane %v8054, %v8060
        %v8063 = vunpack.c.l.s4 1966171168
        %v8064 = vunpack.c.0.s8 %v8063
        %v8065 = vlaneseq
        %v8066 = vshrl.u32 %v8065, 7
        %v8067 = vsub.s32 %v8064, %v8066
        %v8068 = vrot.slane %v5075, %v8067
        %v8070 = vunpack.c.l.s4 1966171168
        %v8071 = vunpack.c.0.s8 %v8070
        %v8072 = vlaneseq
        %v8073 = vshrl.u32 %v8072, 7
        %v8074 = vsub.s32 %v8071, %v8073
        %v8075 = vrot.slane %v8068, %v8074
        %v8077 = vunpack.c.l.s4 1966171168
        %v8078 = vunpack.c.0.s8 %v8077
        %v8079 = vlaneseq
        %v8080 = vshrl.u32 %v8079, 7
        %v8081 = vsub.s32 %v8078, %v8080
        %v8082 = vrot.slane %v5076, %v8081
        %v8084 = vunpack.c.l.s4 1966171168
        %v8085 = vunpack.c.0.s8 %v8084
        %v8086 = vlaneseq
        %v8087 = vshrl.u32 %v8086, 7
        %v8088 = vsub.s32 %v8085, %v8087
        %v8089 = vrot.slane %v8082, %v8088
        %v8091 = vunpack.c.l.s4 1966171168
        %v8092 = vunpack.c.0.s8 %v8091
        %v8093 = vlaneseq
        %v8094 = vshrl.u32 %v8093, 7
        %v8095 = vsub.s32 %v8092, %v8094
        %v8096 = vrot.slane %v5077, %v8095
        %v8098 = vunpack.c.l.s4 1966171168
        %v8099 = vunpack.c.0.s8 %v8098
        %v8100 = vlaneseq
        %v8101 = vshrl.u32 %v8100, 7
        %v8102 = vsub.s32 %v8099, %v8101
        %v8103 = vrot.slane %v8096, %v8102
        %v8105 = vunpack.c.l.s4 1966171168
        %v8106 = vunpack.c.0.s8 %v8105
        %v8107 = vlaneseq
        %v8108 = vshrl.u32 %v8107, 7
        %v8109 = vsub.s32 %v8106, %v8108
        %v8110 = vrot.slane %v5078, %v8109
        %v8112 = vunpack.c.l.s4 1966171168
        %v8113 = vunpack.c.0.s8 %v8112
        %v8114 = vlaneseq
        %v8115 = vshrl.u32 %v8114, 7
        %v8116 = vsub.s32 %v8113, %v8115
        %v8117 = vrot.slane %v8110, %v8116
        %v8119 = vunpack.c.l.s4 1966171168
        %v8120 = vunpack.c.0.s8 %v8119
        %v8121 = vlaneseq
        %v8122 = vshrl.u32 %v8121, 7
        %v8123 = vsub.s32 %v8120, %v8122
        %v8124 = vrot.slane %v5079, %v8123
        %v8126 = vunpack.c.l.s4 1966171168
        %v8127 = vunpack.c.0.s8 %v8126
        %v8128 = vlaneseq
        %v8129 = vshrl.u32 %v8128, 7
        %v8130 = vsub.s32 %v8127, %v8129
        %v8131 = vrot.slane %v8124, %v8130
        %v8133 = vunpack.c.l.s4 1966171168
        %v8134 = vunpack.c.0.s8 %v8133
        %v8135 = vlaneseq
        %v8136 = vshrl.u32 %v8135, 7
        %v8137 = vsub.s32 %v8134, %v8136
        %v8138 = vrot.slane %v5080, %v8137
        %v8140 = vunpack.c.l.s4 1966171168
        %v8141 = vunpack.c.0.s8 %v8140
        %v8142 = vlaneseq
        %v8143 = vshrl.u32 %v8142, 7
        %v8144 = vsub.s32 %v8141, %v8143
        %v8145 = vrot.slane %v8138, %v8144
        %v8146 = vunpack.c.l.b16 %v7669
        %v8147 = vunpack.c.l.b16 %v7683
        %v8148 = vunpack.c.l.b16 %v7697
        %v8149 = vunpack.c.l.b16 %v7711
        %v8150 = vunpack.c.l.b16 %v7725
        %v8151 = vunpack.c.l.b16 %v7739
        %v8152 = vunpack.c.l.b16 %v7753
        %v8153 = vunpack.c.l.b16 %v7767
        %v8154 = vunpack.c.l.b16 %v7781
        %v8155 = vunpack.c.l.b16 %v7795
        %v8156 = vunpack.c.l.b16 %v7809
        %v8157 = vunpack.c.l.b16 %v7823
        %v8158 = vunpack.c.l.b16 %v7837
        %v8159 = vunpack.c.l.b16 %v7851
        %v8160 = vunpack.c.l.b16 %v7865
        %v8161 = vunpack.c.l.b16 %v7879
        %v8162 = vunpack.c.l.b16 %v7893
        %v8163 = vunpack.c.l.b16 %v7907
        %v8164 = vunpack.c.l.b16 %v7921
        %v8165 = vunpack.c.l.b16 %v7935
        %v8166 = vunpack.c.l.b16 %v7949
        %v8167 = vunpack.c.l.b16 %v7963
        %v8168 = vunpack.c.l.b16 %v7977
        %v8169 = vunpack.c.l.b16 %v7991
        %v8170 = vunpack.c.l.b16 %v8005
        %v8171 = vunpack.c.l.b16 %v8019
        %v8172 = vunpack.c.l.b16 %v8033
        %v8173 = vunpack.c.l.b16 %v8047
        %v8174 = vunpack.c.l.b16 %v8061
        %v8175 = vunpack.c.l.b16 %v8075
        %v8176 = vunpack.c.l.b16 %v8089
        %v8177 = vunpack.c.l.b16 %v8103
        %v8178 = vunpack.c.l.b16 %v8117
        %v8179 = vunpack.c.l.b16 %v8131
        %v8180 = vunpack.c.l.b16 %v8145
        %v8181 = vrot.slane %v8147, 7
        %v8182 = vsel %vm1034, %v8181, %v8146
        %v8183 = vrot.slane %v8148, 6
        %v8184 = vsel %vm1037, %v8183, %v8182
        %v8185 = vrot.slane %v8149, 5
        %v8186 = vsel %vm1040, %v8185, %v8184
        %v8187 = vrot.slane %v8150, 4
        %v8188 = vsel %vm1043, %v8187, %v8186
        %v8189 = vrot.slane %v8151, 3
        %v8190 = vsel %vm1046, %v8189, %v8188
        %v8191 = vrot.slane %v8152, 2
        %v8192 = vsel %vm1049, %v8191, %v8190
        %v8193 = vrot.slane %v8153, 1
        %v8194 = vsel %vm1052, %v8193, %v8192
        %v8195 = vrot.slane %v8155, 7
        %v8196 = vsel %vm1034, %v8195, %v8154
        %v8197 = vrot.slane %v8156, 6
        %v8198 = vsel %vm1037, %v8197, %v8196
        %v8199 = vrot.slane %v8157, 5
        %v8200 = vsel %vm1040, %v8199, %v8198
        %v8201 = vrot.slane %v8158, 4
        %v8202 = vsel %vm1043, %v8201, %v8200
        %v8203 = vrot.slane %v8159, 3
        %v8204 = vsel %vm1046, %v8203, %v8202
        %v8205 = vrot.slane %v8160, 2
        %v8206 = vsel %vm1049, %v8205, %v8204
        %v8207 = vrot.slane %v8161, 1
        %v8208 = vsel %vm1052, %v8207, %v8206
        %v8209 = vrot.slane %v8163, 7
        %v8210 = vsel %vm1034, %v8209, %v8162
        %v8211 = vrot.slane %v8164, 6
        %v8212 = vsel %vm1037, %v8211, %v8210
        %v8213 = vrot.slane %v8165, 5
        %v8214 = vsel %vm1040, %v8213, %v8212
        %v8215 = vrot.slane %v8166, 4
        %v8216 = vsel %vm1043, %v8215, %v8214
        %v8217 = vrot.slane %v8167, 3
        %v8218 = vsel %vm1046, %v8217, %v8216
        %v8219 = vrot.slane %v8168, 2
        %v8220 = vsel %vm1049, %v8219, %v8218
        %v8221 = vrot.slane %v8169, 1
        %v8222 = vsel %vm1052, %v8221, %v8220
        %v8223 = vrot.slane %v8171, 7
        %v8224 = vsel %vm1034, %v8223, %v8170
        %v8225 = vrot.slane %v8172, 6
        %v8226 = vsel %vm1037, %v8225, %v8224
        %v8227 = vrot.slane %v8173, 5
        %v8228 = vsel %vm1040, %v8227, %v8226
        %v8229 = vrot.slane %v8174, 4
        %v8230 = vsel %vm1043, %v8229, %v8228
        %v8231 = vrot.slane %v8175, 3
        %v8232 = vsel %vm1046, %v8231, %v8230
        %v8233 = vrot.slane %v8176, 2
        %v8234 = vsel %vm1049, %v8233, %v8232
        %v8235 = vrot.slane %v8177, 1
        %v8236 = vsel %vm1052, %v8235, %v8234
        %v8237 = vrot.slane %v8179, 7
        %v8238 = vsel %vm1034, %v8237, %v8178
        %v8239 = vrot.slane %v8180, 6
        %v8240 = vsel %vm1037, %v8239, %v8238
        %v8241 = vpack.c.b16 %v8208, %v8194
        %v8242 = vpack.c.b16 %v8236, %v8222
        %v8243 = vpack.c.b16 %v8240, %v8240
        %v8283 = vunpack.c.l.s4 1966171168
        %v8284 = vunpack.c.0.s8 %v8283
        %v8285 = vlaneseq
        %v8286 = vshrl.u32 %v8285, 7
        %v8287 = vsub.s32 %v8284, %v8286
        %v8288 = vrot.slane %v5082, %v8287
        %v8290 = vunpack.c.l.s4 1966171168
        %v8291 = vunpack.c.0.s8 %v8290
        %v8292 = vlaneseq
        %v8293 = vshrl.u32 %v8292, 7
        %v8294 = vsub.s32 %v8291, %v8293
        %v8295 = vrot.slane %v8288, %v8294
        %v8297 = vunpack.c.l.s4 1966171168
        %v8298 = vunpack.c.0.s8 %v8297
        %v8299 = vlaneseq
        %v8300 = vshrl.u32 %v8299, 7
        %v8301 = vsub.s32 %v8298, %v8300
        %v8302 = vrot.slane %v5083, %v8301
        %v8304 = vunpack.c.l.s4 1966171168
        %v8305 = vunpack.c.0.s8 %v8304
        %v8306 = vlaneseq
        %v8307 = vshrl.u32 %v8306, 7
        %v8308 = vsub.s32 %v8305, %v8307
        %v8309 = vrot.slane %v8302, %v8308
        %v8311 = vunpack.c.l.s4 1966171168
        %v8312 = vunpack.c.0.s8 %v8311
        %v8313 = vlaneseq
        %v8314 = vshrl.u32 %v8313, 7
        %v8315 = vsub.s32 %v8312, %v8314
        %v8316 = vrot.slane %v5084, %v8315
        %v8318 = vunpack.c.l.s4 1966171168
        %v8319 = vunpack.c.0.s8 %v8318
        %v8320 = vlaneseq
        %v8321 = vshrl.u32 %v8320, 7
        %v8322 = vsub.s32 %v8319, %v8321
        %v8323 = vrot.slane %v8316, %v8322
        %v8325 = vunpack.c.l.s4 1966171168
        %v8326 = vunpack.c.0.s8 %v8325
        %v8327 = vlaneseq
        %v8328 = vshrl.u32 %v8327, 7
        %v8329 = vsub.s32 %v8326, %v8328
        %v8330 = vrot.slane %v5085, %v8329
        %v8332 = vunpack.c.l.s4 1966171168
        %v8333 = vunpack.c.0.s8 %v8332
        %v8334 = vlaneseq
        %v8335 = vshrl.u32 %v8334, 7
        %v8336 = vsub.s32 %v8333, %v8335
        %v8337 = vrot.slane %v8330, %v8336
        %v8339 = vunpack.c.l.s4 1966171168
        %v8340 = vunpack.c.0.s8 %v8339
        %v8341 = vlaneseq
        %v8342 = vshrl.u32 %v8341, 7
        %v8343 = vsub.s32 %v8340, %v8342
        %v8344 = vrot.slane %v5086, %v8343
        %v8346 = vunpack.c.l.s4 1966171168
        %v8347 = vunpack.c.0.s8 %v8346
        %v8348 = vlaneseq
        %v8349 = vshrl.u32 %v8348, 7
        %v8350 = vsub.s32 %v8347, %v8349
        %v8351 = vrot.slane %v8344, %v8350
        %v8353 = vunpack.c.l.s4 1966171168
        %v8354 = vunpack.c.0.s8 %v8353
        %v8355 = vlaneseq
        %v8356 = vshrl.u32 %v8355, 7
        %v8357 = vsub.s32 %v8354, %v8356
        %v8358 = vrot.slane %v5087, %v8357
        %v8360 = vunpack.c.l.s4 1966171168
        %v8361 = vunpack.c.0.s8 %v8360
        %v8362 = vlaneseq
        %v8363 = vshrl.u32 %v8362, 7
        %v8364 = vsub.s32 %v8361, %v8363
        %v8365 = vrot.slane %v8358, %v8364
        %v8367 = vunpack.c.l.s4 1966171168
        %v8368 = vunpack.c.0.s8 %v8367
        %v8369 = vlaneseq
        %v8370 = vshrl.u32 %v8369, 7
        %v8371 = vsub.s32 %v8368, %v8370
        %v8372 = vrot.slane %v5088, %v8371
        %v8374 = vunpack.c.l.s4 1966171168
        %v8375 = vunpack.c.0.s8 %v8374
        %v8376 = vlaneseq
        %v8377 = vshrl.u32 %v8376, 7
        %v8378 = vsub.s32 %v8375, %v8377
        %v8379 = vrot.slane %v8372, %v8378
        %v8381 = vunpack.c.l.s4 1966171168
        %v8382 = vunpack.c.0.s8 %v8381
        %v8383 = vlaneseq
        %v8384 = vshrl.u32 %v8383, 7
        %v8385 = vsub.s32 %v8382, %v8384
        %v8386 = vrot.slane %v5089, %v8385
        %v8388 = vunpack.c.l.s4 1966171168
        %v8389 = vunpack.c.0.s8 %v8388
        %v8390 = vlaneseq
        %v8391 = vshrl.u32 %v8390, 7
        %v8392 = vsub.s32 %v8389, %v8391
        %v8393 = vrot.slane %v8386, %v8392
        %v8395 = vunpack.c.l.s4 1966171168
        %v8396 = vunpack.c.0.s8 %v8395
        %v8397 = vlaneseq
        %v8398 = vshrl.u32 %v8397, 7
        %v8399 = vsub.s32 %v8396, %v8398
        %v8400 = vrot.slane %v5090, %v8399
        %v8402 = vunpack.c.l.s4 1966171168
        %v8403 = vunpack.c.0.s8 %v8402
        %v8404 = vlaneseq
        %v8405 = vshrl.u32 %v8404, 7
        %v8406 = vsub.s32 %v8403, %v8405
        %v8407 = vrot.slane %v8400, %v8406
        %v8409 = vunpack.c.l.s4 1966171168
        %v8410 = vunpack.c.0.s8 %v8409
        %v8411 = vlaneseq
        %v8412 = vshrl.u32 %v8411, 7
        %v8413 = vsub.s32 %v8410, %v8412
        %v8414 = vrot.slane %v5091, %v8413
        %v8416 = vunpack.c.l.s4 1966171168
        %v8417 = vunpack.c.0.s8 %v8416
        %v8418 = vlaneseq
        %v8419 = vshrl.u32 %v8418, 7
        %v8420 = vsub.s32 %v8417, %v8419
        %v8421 = vrot.slane %v8414, %v8420
        %v8423 = vunpack.c.l.s4 1966171168
        %v8424 = vunpack.c.0.s8 %v8423
        %v8425 = vlaneseq
        %v8426 = vshrl.u32 %v8425, 7
        %v8427 = vsub.s32 %v8424, %v8426
        %v8428 = vrot.slane %v5092, %v8427
        %v8430 = vunpack.c.l.s4 1966171168
        %v8431 = vunpack.c.0.s8 %v8430
        %v8432 = vlaneseq
        %v8433 = vshrl.u32 %v8432, 7
        %v8434 = vsub.s32 %v8431, %v8433
        %v8435 = vrot.slane %v8428, %v8434
        %v8437 = vunpack.c.l.s4 1966171168
        %v8438 = vunpack.c.0.s8 %v8437
        %v8439 = vlaneseq
        %v8440 = vshrl.u32 %v8439, 7
        %v8441 = vsub.s32 %v8438, %v8440
        %v8442 = vrot.slane %v5093, %v8441
        %v8444 = vunpack.c.l.s4 1966171168
        %v8445 = vunpack.c.0.s8 %v8444
        %v8446 = vlaneseq
        %v8447 = vshrl.u32 %v8446, 7
        %v8448 = vsub.s32 %v8445, %v8447
        %v8449 = vrot.slane %v8442, %v8448
        %v8451 = vunpack.c.l.s4 1966171168
        %v8452 = vunpack.c.0.s8 %v8451
        %v8453 = vlaneseq
        %v8454 = vshrl.u32 %v8453, 7
        %v8455 = vsub.s32 %v8452, %v8454
        %v8456 = vrot.slane %v5094, %v8455
        %v8458 = vunpack.c.l.s4 1966171168
        %v8459 = vunpack.c.0.s8 %v8458
        %v8460 = vlaneseq
        %v8461 = vshrl.u32 %v8460, 7
        %v8462 = vsub.s32 %v8459, %v8461
        %v8463 = vrot.slane %v8456, %v8462
        %v8465 = vunpack.c.l.s4 1966171168
        %v8466 = vunpack.c.0.s8 %v8465
        %v8467 = vlaneseq
        %v8468 = vshrl.u32 %v8467, 7
        %v8469 = vsub.s32 %v8466, %v8468
        %v8470 = vrot.slane %v5095, %v8469
        %v8472 = vunpack.c.l.s4 1966171168
        %v8473 = vunpack.c.0.s8 %v8472
        %v8474 = vlaneseq
        %v8475 = vshrl.u32 %v8474, 7
        %v8476 = vsub.s32 %v8473, %v8475
        %v8477 = vrot.slane %v8470, %v8476
        %v8479 = vunpack.c.l.s4 1966171168
        %v8480 = vunpack.c.0.s8 %v8479
        %v8481 = vlaneseq
        %v8482 = vshrl.u32 %v8481, 7
        %v8483 = vsub.s32 %v8480, %v8482
        %v8484 = vrot.slane %v5096, %v8483
        %v8486 = vunpack.c.l.s4 1966171168
        %v8487 = vunpack.c.0.s8 %v8486
        %v8488 = vlaneseq
        %v8489 = vshrl.u32 %v8488, 7
        %v8490 = vsub.s32 %v8487, %v8489
        %v8491 = vrot.slane %v8484, %v8490
        %v8493 = vunpack.c.l.s4 1966171168
        %v8494 = vunpack.c.0.s8 %v8493
        %v8495 = vlaneseq
        %v8496 = vshrl.u32 %v8495, 7
        %v8497 = vsub.s32 %v8494, %v8496
        %v8498 = vrot.slane %v5097, %v8497
        %v8500 = vunpack.c.l.s4 1966171168
        %v8501 = vunpack.c.0.s8 %v8500
        %v8502 = vlaneseq
        %v8503 = vshrl.u32 %v8502, 7
        %v8504 = vsub.s32 %v8501, %v8503
        %v8505 = vrot.slane %v8498, %v8504
        %v8507 = vunpack.c.l.s4 1966171168
        %v8508 = vunpack.c.0.s8 %v8507
        %v8509 = vlaneseq
        %v8510 = vshrl.u32 %v8509, 7
        %v8511 = vsub.s32 %v8508, %v8510
        %v8512 = vrot.slane %v5098, %v8511
        %v8514 = vunpack.c.l.s4 1966171168
        %v8515 = vunpack.c.0.s8 %v8514
        %v8516 = vlaneseq
        %v8517 = vshrl.u32 %v8516, 7
        %v8518 = vsub.s32 %v8515, %v8517
        %v8519 = vrot.slane %v8512, %v8518
        %v8521 = vunpack.c.l.s4 1966171168
        %v8522 = vunpack.c.0.s8 %v8521
        %v8523 = vlaneseq
        %v8524 = vshrl.u32 %v8523, 7
        %v8525 = vsub.s32 %v8522, %v8524
        %v8526 = vrot.slane %v5099, %v8525
        %v8528 = vunpack.c.l.s4 1966171168
        %v8529 = vunpack.c.0.s8 %v8528
        %v8530 = vlaneseq
        %v8531 = vshrl.u32 %v8530, 7
        %v8532 = vsub.s32 %v8529, %v8531
        %v8533 = vrot.slane %v8526, %v8532
        %v8535 = vunpack.c.l.s4 1966171168
        %v8536 = vunpack.c.0.s8 %v8535
        %v8537 = vlaneseq
        %v8538 = vshrl.u32 %v8537, 7
        %v8539 = vsub.s32 %v8536, %v8538
        %v8540 = vrot.slane %v5100, %v8539
        %v8542 = vunpack.c.l.s4 1966171168
        %v8543 = vunpack.c.0.s8 %v8542
        %v8544 = vlaneseq
        %v8545 = vshrl.u32 %v8544, 7
        %v8546 = vsub.s32 %v8543, %v8545
        %v8547 = vrot.slane %v8540, %v8546
        %v8549 = vunpack.c.l.s4 1966171168
        %v8550 = vunpack.c.0.s8 %v8549
        %v8551 = vlaneseq
        %v8552 = vshrl.u32 %v8551, 7
        %v8553 = vsub.s32 %v8550, %v8552
        %v8554 = vrot.slane %v5101, %v8553
        %v8556 = vunpack.c.l.s4 1966171168
        %v8557 = vunpack.c.0.s8 %v8556
        %v8558 = vlaneseq
        %v8559 = vshrl.u32 %v8558, 7
        %v8560 = vsub.s32 %v8557, %v8559
        %v8561 = vrot.slane %v8554, %v8560
        %v8563 = vunpack.c.l.s4 1966171168
        %v8564 = vunpack.c.0.s8 %v8563
        %v8565 = vlaneseq
        %v8566 = vshrl.u32 %v8565, 7
        %v8567 = vsub.s32 %v8564, %v8566
        %v8568 = vrot.slane %v5102, %v8567
        %v8570 = vunpack.c.l.s4 1966171168
        %v8571 = vunpack.c.0.s8 %v8570
        %v8572 = vlaneseq
        %v8573 = vshrl.u32 %v8572, 7
        %v8574 = vsub.s32 %v8571, %v8573
        %v8575 = vrot.slane %v8568, %v8574
        %v8577 = vunpack.c.l.s4 1966171168
        %v8578 = vunpack.c.0.s8 %v8577
        %v8579 = vlaneseq
        %v8580 = vshrl.u32 %v8579, 7
        %v8581 = vsub.s32 %v8578, %v8580
        %v8582 = vrot.slane %v5103, %v8581
        %v8584 = vunpack.c.l.s4 1966171168
        %v8585 = vunpack.c.0.s8 %v8584
        %v8586 = vlaneseq
        %v8587 = vshrl.u32 %v8586, 7
        %v8588 = vsub.s32 %v8585, %v8587
        %v8589 = vrot.slane %v8582, %v8588
        %v8591 = vunpack.c.l.s4 1966171168
        %v8592 = vunpack.c.0.s8 %v8591
        %v8593 = vlaneseq
        %v8594 = vshrl.u32 %v8593, 7
        %v8595 = vsub.s32 %v8592, %v8594
        %v8596 = vrot.slane %v5104, %v8595
        %v8598 = vunpack.c.l.s4 1966171168
        %v8599 = vunpack.c.0.s8 %v8598
        %v8600 = vlaneseq
        %v8601 = vshrl.u32 %v8600, 7
        %v8602 = vsub.s32 %v8599, %v8601
        %v8603 = vrot.slane %v8596, %v8602
        %v8605 = vunpack.c.l.s4 1966171168
        %v8606 = vunpack.c.0.s8 %v8605
        %v8607 = vlaneseq
        %v8608 = vshrl.u32 %v8607, 7
        %v8609 = vsub.s32 %v8606, %v8608
        %v8610 = vrot.slane %v5105, %v8609
        %v8612 = vunpack.c.l.s4 1966171168
        %v8613 = vunpack.c.0.s8 %v8612
        %v8614 = vlaneseq
        %v8615 = vshrl.u32 %v8614, 7
        %v8616 = vsub.s32 %v8613, %v8615
        %v8617 = vrot.slane %v8610, %v8616
        %v8619 = vunpack.c.l.s4 1966171168
        %v8620 = vunpack.c.0.s8 %v8619
        %v8621 = vlaneseq
        %v8622 = vshrl.u32 %v8621, 7
        %v8623 = vsub.s32 %v8620, %v8622
        %v8624 = vrot.slane %v5106, %v8623
        %v8626 = vunpack.c.l.s4 1966171168
        %v8627 = vunpack.c.0.s8 %v8626
        %v8628 = vlaneseq
        %v8629 = vshrl.u32 %v8628, 7
        %v8630 = vsub.s32 %v8627, %v8629
        %v8631 = vrot.slane %v8624, %v8630
        %v8633 = vunpack.c.l.s4 1966171168
        %v8634 = vunpack.c.0.s8 %v8633
        %v8635 = vlaneseq
        %v8636 = vshrl.u32 %v8635, 7
        %v8637 = vsub.s32 %v8634, %v8636
        %v8638 = vrot.slane %v5107, %v8637
        %v8640 = vunpack.c.l.s4 1966171168
        %v8641 = vunpack.c.0.s8 %v8640
        %v8642 = vlaneseq
        %v8643 = vshrl.u32 %v8642, 7
        %v8644 = vsub.s32 %v8641, %v8643
        %v8645 = vrot.slane %v8638, %v8644
        %v8647 = vunpack.c.l.s4 1966171168
        %v8648 = vunpack.c.0.s8 %v8647
        %v8649 = vlaneseq
        %v8650 = vshrl.u32 %v8649, 7
        %v8651 = vsub.s32 %v8648, %v8650
        %v8652 = vrot.slane %v5108, %v8651
        %v8654 = vunpack.c.l.s4 1966171168
        %v8655 = vunpack.c.0.s8 %v8654
        %v8656 = vlaneseq
        %v8657 = vshrl.u32 %v8656, 7
        %v8658 = vsub.s32 %v8655, %v8657
        %v8659 = vrot.slane %v8652, %v8658
        %v8661 = vunpack.c.l.s4 1966171168
        %v8662 = vunpack.c.0.s8 %v8661
        %v8663 = vlaneseq
        %v8664 = vshrl.u32 %v8663, 7
        %v8665 = vsub.s32 %v8662, %v8664
        %v8666 = vrot.slane %v5109, %v8665
        %v8668 = vunpack.c.l.s4 1966171168
        %v8669 = vunpack.c.0.s8 %v8668
        %v8670 = vlaneseq
        %v8671 = vshrl.u32 %v8670, 7
        %v8672 = vsub.s32 %v8669, %v8671
        %v8673 = vrot.slane %v8666, %v8672
        %v8675 = vunpack.c.l.s4 1966171168
        %v8676 = vunpack.c.0.s8 %v8675
        %v8677 = vlaneseq
        %v8678 = vshrl.u32 %v8677, 7
        %v8679 = vsub.s32 %v8676, %v8678
        %v8680 = vrot.slane %v5110, %v8679
        %v8682 = vunpack.c.l.s4 1966171168
        %v8683 = vunpack.c.0.s8 %v8682
        %v8684 = vlaneseq
        %v8685 = vshrl.u32 %v8684, 7
        %v8686 = vsub.s32 %v8683, %v8685
        %v8687 = vrot.slane %v8680, %v8686
        %v8689 = vunpack.c.l.s4 1966171168
        %v8690 = vunpack.c.0.s8 %v8689
        %v8691 = vlaneseq
        %v8692 = vshrl.u32 %v8691, 7
        %v8693 = vsub.s32 %v8690, %v8692
        %v8694 = vrot.slane %v5111, %v8693
        %v8696 = vunpack.c.l.s4 1966171168
        %v8697 = vunpack.c.0.s8 %v8696
        %v8698 = vlaneseq
        %v8699 = vshrl.u32 %v8698, 7
        %v8700 = vsub.s32 %v8697, %v8699
        %v8701 = vrot.slane %v8694, %v8700
        %v8703 = vunpack.c.l.s4 1966171168
        %v8704 = vunpack.c.0.s8 %v8703
        %v8705 = vlaneseq
        %v8706 = vshrl.u32 %v8705, 7
        %v8707 = vsub.s32 %v8704, %v8706
        %v8708 = vrot.slane %v5112, %v8707
        %v8710 = vunpack.c.l.s4 1966171168
        %v8711 = vunpack.c.0.s8 %v8710
        %v8712 = vlaneseq
        %v8713 = vshrl.u32 %v8712, 7
        %v8714 = vsub.s32 %v8711, %v8713
        %v8715 = vrot.slane %v8708, %v8714
        %v8717 = vunpack.c.l.s4 1966171168
        %v8718 = vunpack.c.0.s8 %v8717
        %v8719 = vlaneseq
        %v8720 = vshrl.u32 %v8719, 7
        %v8721 = vsub.s32 %v8718, %v8720
        %v8722 = vrot.slane %v5113, %v8721
        %v8724 = vunpack.c.l.s4 1966171168
        %v8725 = vunpack.c.0.s8 %v8724
        %v8726 = vlaneseq
        %v8727 = vshrl.u32 %v8726, 7
        %v8728 = vsub.s32 %v8725, %v8727
        %v8729 = vrot.slane %v8722, %v8728
        %v8731 = vunpack.c.l.s4 1966171168
        %v8732 = vunpack.c.0.s8 %v8731
        %v8733 = vlaneseq
        %v8734 = vshrl.u32 %v8733, 7
        %v8735 = vsub.s32 %v8732, %v8734
        %v8736 = vrot.slane %v5114, %v8735
        %v8738 = vunpack.c.l.s4 1966171168
        %v8739 = vunpack.c.0.s8 %v8738
        %v8740 = vlaneseq
        %v8741 = vshrl.u32 %v8740, 7
        %v8742 = vsub.s32 %v8739, %v8741
        %v8743 = vrot.slane %v8736, %v8742
        %v8745 = vunpack.c.l.s4 1966171168
        %v8746 = vunpack.c.0.s8 %v8745
        %v8747 = vlaneseq
        %v8748 = vshrl.u32 %v8747, 7
        %v8749 = vsub.s32 %v8746, %v8748
        %v8750 = vrot.slane %v5115, %v8749
        %v8752 = vunpack.c.l.s4 1966171168
        %v8753 = vunpack.c.0.s8 %v8752
        %v8754 = vlaneseq
        %v8755 = vshrl.u32 %v8754, 7
        %v8756 = vsub.s32 %v8753, %v8755
        %v8757 = vrot.slane %v8750, %v8756
        %v8759 = vunpack.c.l.s4 1966171168
        %v8760 = vunpack.c.0.s8 %v8759
        %v8761 = vlaneseq
        %v8762 = vshrl.u32 %v8761, 7
        %v8763 = vsub.s32 %v8760, %v8762
        %v8764 = vrot.slane %v5116, %v8763
        %v8766 = vunpack.c.l.s4 1966171168
        %v8767 = vunpack.c.0.s8 %v8766
        %v8768 = vlaneseq
        %v8769 = vshrl.u32 %v8768, 7
        %v8770 = vsub.s32 %v8767, %v8769
        %v8771 = vrot.slane %v8764, %v8770
        %v8772 = vunpack.c.l.b16 %v8295
        %v8773 = vunpack.c.l.b16 %v8309
        %v8774 = vunpack.c.l.b16 %v8323
        %v8775 = vunpack.c.l.b16 %v8337
        %v8776 = vunpack.c.l.b16 %v8351
        %v8777 = vunpack.c.l.b16 %v8365
        %v8778 = vunpack.c.l.b16 %v8379
        %v8779 = vunpack.c.l.b16 %v8393
        %v8780 = vunpack.c.l.b16 %v8407
        %v8781 = vunpack.c.l.b16 %v8421
        %v8782 = vunpack.c.l.b16 %v8435
        %v8783 = vunpack.c.l.b16 %v8449
        %v8784 = vunpack.c.l.b16 %v8463
        %v8785 = vunpack.c.l.b16 %v8477
        %v8786 = vunpack.c.l.b16 %v8491
        %v8787 = vunpack.c.l.b16 %v8505
        %v8788 = vunpack.c.l.b16 %v8519
        %v8789 = vunpack.c.l.b16 %v8533
        %v8790 = vunpack.c.l.b16 %v8547
        %v8791 = vunpack.c.l.b16 %v8561
        %v8792 = vunpack.c.l.b16 %v8575
        %v8793 = vunpack.c.l.b16 %v8589
        %v8794 = vunpack.c.l.b16 %v8603
        %v8795 = vunpack.c.l.b16 %v8617
        %v8796 = vunpack.c.l.b16 %v8631
        %v8797 = vunpack.c.l.b16 %v8645
        %v8798 = vunpack.c.l.b16 %v8659
        %v8799 = vunpack.c.l.b16 %v8673
        %v8800 = vunpack.c.l.b16 %v8687
        %v8801 = vunpack.c.l.b16 %v8701
        %v8802 = vunpack.c.l.b16 %v8715
        %v8803 = vunpack.c.l.b16 %v8729
        %v8804 = vunpack.c.l.b16 %v8743
        %v8805 = vunpack.c.l.b16 %v8757
        %v8806 = vunpack.c.l.b16 %v8771
        %v8807 = vrot.slane %v8773, 7
        %v8808 = vsel %vm1034, %v8807, %v8772
        %v8809 = vrot.slane %v8774, 6
        %v8810 = vsel %vm1037, %v8809, %v8808
        %v8811 = vrot.slane %v8775, 5
        %v8812 = vsel %vm1040, %v8811, %v8810
        %v8813 = vrot.slane %v8776, 4
        %v8814 = vsel %vm1043, %v8813, %v8812
        %v8815 = vrot.slane %v8777, 3
        %v8816 = vsel %vm1046, %v8815, %v8814
        %v8817 = vrot.slane %v8778, 2
        %v8818 = vsel %vm1049, %v8817, %v8816
        %v8819 = vrot.slane %v8779, 1
        %v8820 = vsel %vm1052, %v8819, %v8818
        %v8821 = vrot.slane %v8781, 7
        %v8822 = vsel %vm1034, %v8821, %v8780
        %v8823 = vrot.slane %v8782, 6
        %v8824 = vsel %vm1037, %v8823, %v8822
        %v8825 = vrot.slane %v8783, 5
        %v8826 = vsel %vm1040, %v8825, %v8824
        %v8827 = vrot.slane %v8784, 4
        %v8828 = vsel %vm1043, %v8827, %v8826
        %v8829 = vrot.slane %v8785, 3
        %v8830 = vsel %vm1046, %v8829, %v8828
        %v8831 = vrot.slane %v8786, 2
        %v8832 = vsel %vm1049, %v8831, %v8830
        %v8833 = vrot.slane %v8787, 1
        %v8834 = vsel %vm1052, %v8833, %v8832
        %v8835 = vrot.slane %v8789, 7
        %v8836 = vsel %vm1034, %v8835, %v8788
        %v8837 = vrot.slane %v8790, 6
        %v8838 = vsel %vm1037, %v8837, %v8836
        %v8839 = vrot.slane %v8791, 5
        %v8840 = vsel %vm1040, %v8839, %v8838
        %v8841 = vrot.slane %v8792, 4
        %v8842 = vsel %vm1043, %v8841, %v8840
        %v8843 = vrot.slane %v8793, 3
        %v8844 = vsel %vm1046, %v8843, %v8842
        %v8845 = vrot.slane %v8794, 2
        %v8846 = vsel %vm1049, %v8845, %v8844
        %v8847 = vrot.slane %v8795, 1
        %v8848 = vsel %vm1052, %v8847, %v8846
        %v8849 = vrot.slane %v8797, 7
        %v8850 = vsel %vm1034, %v8849, %v8796
        %v8851 = vrot.slane %v8798, 6
        %v8852 = vsel %vm1037, %v8851, %v8850
        %v8853 = vrot.slane %v8799, 5
        %v8854 = vsel %vm1040, %v8853, %v8852
        %v8855 = vrot.slane %v8800, 4
        %v8856 = vsel %vm1043, %v8855, %v8854
        %v8857 = vrot.slane %v8801, 3
        %v8858 = vsel %vm1046, %v8857, %v8856
        %v8859 = vrot.slane %v8802, 2
        %v8860 = vsel %vm1049, %v8859, %v8858
        %v8861 = vrot.slane %v8803, 1
        %v8862 = vsel %vm1052, %v8861, %v8860
        %v8863 = vrot.slane %v8805, 7
        %v8864 = vsel %vm1034, %v8863, %v8804
        %v8865 = vrot.slane %v8806, 6
        %v8866 = vsel %vm1037, %v8865, %v8864
        %v8867 = vpack.c.b16 %v8834, %v8820
        %v8868 = vpack.c.b16 %v8862, %v8848
        %v8869 = vpack.c.b16 %v8866, %v8866
        %8873 = vmatprep.subr.bf16.mxu0 0
        %8874 = vmatpush1.bf16.msra.mxu0 %v4623
        %8875 = vmatprep.subr.bf16.mxu0 0
        %8876 = vmatpush1.bf16.msra.mxu0 %v4624
        %8877 = vmatprep.subr.bf16.mxu0 0
        %8878 = vmatpush1.bf16.msra.mxu0 %v4625
        %8879 = vmatprep.subr.bf16.mxu0 0
        %8880 = vmatpush1.bf16.msra.mxu0 %v4626
        %8881 = vmatprep.subr.bf16.mxu0 0
        %8882 = vmatpush1.bf16.msra.mxu0 %v4627
        %8883 = vmatprep.subr.bf16.mxu0 0
        %8884 = vmatpush1.bf16.msra.mxu0 %v4628
        %8885 = vmatprep.subr.bf16.mxu0 0
        %8886 = vmatpush1.bf16.msra.mxu0 %v4629
        %8887 = vmatprep.subr.bf16.mxu0 0
        %8888 = vmatpush1.bf16.msra.mxu0 %v4630
        %8889 = vmatprep.subr.bf16.mxu0 0
        %8890 = vmatpush1.bf16.msra.mxu0 %v4631
        %8891 = vmatprep.subr.bf16.mxu0 0
        %8892 = vmatpush1.bf16.msra.mxu0 %v4632
        %8893 = vmatprep.subr.bf16.mxu0 0
        %8894 = vmatpush1.bf16.msra.mxu0 %v4633
        %8895 = vmatprep.subr.bf16.mxu0 0
        %8896 = vmatpush1.bf16.msra.mxu0 %v4634
        %8897 = vmatprep.subr.bf16.mxu0 0
        %8898 = vmatpush1.bf16.msra.mxu0 %v4635
        %8899 = vmatprep.subr.bf16.mxu0 0
        %8900 = vmatpush1.bf16.msra.mxu0 %v4636
        %8901 = vmatprep.subr.bf16.mxu0 0
        %8902 = vmatpush1.bf16.msra.mxu0 %v4637
        %8903 = vmatprep.subr.bf16.mxu0 0
        %8904 = vmatpush1.bf16.msra.mxu0 %v4638
        %8905 = vmatprep.mubr.bf16.mxu0 %v6363
        %8906 = vmatmul.mubr.bf16.gmra.mrb[0].mxu0 %v5737
        %v8907 = vpop.f32.mrb[0].mxu0
        %v8908 = vadd.f32 %v4429, %v8907
        %v8909 = vpop.f32.mrb[0].mxu0
        %v8910 = vpop.f32.mrb[0].mxu0
        %v8911 = vadd.f32 %v4429, %v8910
        %v8912 = vpop.f32.mrb[0].mxu0
        %8913 = vmatprep.mubr.bf16.mxu0 %v6364
        %8914 = vmatmul.mubr.bf16.gmra.mrb[0].mxu0 %v5738
        %v8915 = vpop.f32.mrb[0].mxu0
        %v8916 = vadd.f32 %v4429, %v8915
        %v8917 = vpop.f32.mrb[0].mxu0
        %v8918 = vpop.f32.mrb[0].mxu0
        %v8919 = vadd.f32 %v4429, %v8918
        %v8920 = vpop.f32.mrb[0].mxu0
        %8921 = vmatprep.mubr.bf16.mxu0 %v6365
        %8922 = vmatmul.mubr.bf16.gmra.mrb[0].mxu0 %v5739
        %v8923 = vpop.f32.mrb[0].mxu0
        %v8924 = vadd.f32 %v4429, %v8923
        %v8925 = vpop.f32.mrb[0].mxu0
        %v8926 = vpop.f32.mrb[0].mxu0
        %v8927 = vpop.f32.mrb[0].mxu0
        %8928 = vdwg.mxu0
        %8929 = vmatprep.subr.bf16.mxu0 0
        %8930 = vmatpush1.bf16.msra.mxu0 %v4639
        %8931 = vmatprep.subr.bf16.mxu0 0
        %8932 = vmatpush1.bf16.msra.mxu0 %v4640
        %8933 = vmatprep.subr.bf16.mxu0 0
        %8934 = vmatpush1.bf16.msra.mxu0 %v4641
        %8935 = vmatprep.subr.bf16.mxu0 0
        %8936 = vmatpush1.bf16.msra.mxu0 %v4642
        %8937 = vmatprep.subr.bf16.mxu0 0
        %8938 = vmatpush1.bf16.msra.mxu0 %v4643
        %8939 = vmatprep.subr.bf16.mxu0 0
        %8940 = vmatpush1.bf16.msra.mxu0 %v4644
        %8941 = vmatprep.subr.bf16.mxu0 0
        %8942 = vmatpush1.bf16.msra.mxu0 %v4645
        %8943 = vmatprep.subr.bf16.mxu0 0
        %8944 = vmatpush1.bf16.msra.mxu0 %v4646
        %8945 = vmatprep.subr.bf16.mxu0 0
        %8946 = vmatpush1.bf16.msra.mxu0 %v4647
        %8947 = vmatprep.subr.bf16.mxu0 0
        %8948 = vmatpush1.bf16.msra.mxu0 %v4648
        %8949 = vmatprep.subr.bf16.mxu0 0
        %8950 = vmatpush1.bf16.msra.mxu0 %v4649
        %8951 = vmatprep.subr.bf16.mxu0 0
        %8952 = vmatpush1.bf16.msra.mxu0 %v4650
        %8953 = vmatprep.subr.bf16.mxu0 0
        %8954 = vmatpush1.bf16.msra.mxu0 %v4651
        %8955 = vmatprep.subr.bf16.mxu0 0
        %8956 = vmatpush1.bf16.msra.mxu0 %v4652
        %8957 = vmatprep.subr.bf16.mxu0 0
        %8958 = vmatpush1.bf16.msra.mxu0 %v4653
        %8959 = vmatprep.subr.bf16.mxu0 0
        %8960 = vmatpush1.bf16.msra.mxu0 %v4654
        %8961 = vmatprep.mubr.bf16.mxu0 %v7615
        %8962 = vmatmul.mubr.bf16.gmra.mrb[0].mxu0 %v6989
        %v8963 = vpop.f32.mrb[0].mxu0
        %v8964 = vadd.f32 %v8908, %v8963
        %v8965 = vpop.f32.mrb[0].mxu0
        %v8966 = vpop.f32.mrb[0].mxu0
        %v8967 = vadd.f32 %v8911, %v8966
        %v8968 = vpop.f32.mrb[0].mxu0
        %8969 = vmatprep.mubr.bf16.mxu0 %v7616
        %8970 = vmatmul.mubr.bf16.gmra.mrb[0].mxu0 %v6990
        %v8971 = vpop.f32.mrb[0].mxu0
        %v8972 = vadd.f32 %v8916, %v8971
        %v8973 = vpop.f32.mrb[0].mxu0
        %v8974 = vpop.f32.mrb[0].mxu0
        %v8975 = vadd.f32 %v8919, %v8974
        %v8976 = vpop.f32.mrb[0].mxu0
        %8977 = vmatprep.mubr.bf16.mxu0 %v7617
        %8978 = vmatmul.mubr.bf16.gmra.mrb[0].mxu0 %v6991
        %v8979 = vpop.f32.mrb[0].mxu0
        %v8980 = vadd.f32 %v8924, %v8979
        %v8981 = vpop.f32.mrb[0].mxu0
        %v8982 = vpop.f32.mrb[0].mxu0
        %v8983 = vpop.f32.mrb[0].mxu0
        %8984 = vdwg.mxu0
        %8985 = vmatprep.subr.bf16.mxu0 0
        %8986 = vmatpush1.bf16.msra.mxu0 %v4655
        %8987 = vmatprep.subr.bf16.mxu0 0
        %8988 = vmatpush1.bf16.msra.mxu0 %v4656
        %8989 = vmatprep.subr.bf16.mxu0 0
        %8990 = vmatpush1.bf16.msra.mxu0 %v4657
        %8991 = vmatprep.subr.bf16.mxu0 0
        %8992 = vmatpush1.bf16.msra.mxu0 %v4658
        %8993 = vmatprep.subr.bf16.mxu0 0
        %8994 = vmatpush1.bf16.msra.mxu0 %v4659
        %8995 = vmatprep.subr.bf16.mxu0 0
        %8996 = vmatpush1.bf16.msra.mxu0 %v4660
        %8997 = vmatprep.subr.bf16.mxu0 0
        %8998 = vmatpush1.bf16.msra.mxu0 %v4661
        %8999 = vmatprep.subr.bf16.mxu0 0
        %9000 = vmatpush1.bf16.msra.mxu0 %v4662
        %9001 = vmatprep.subr.bf16.mxu0 0
        %9002 = vmatpush1.bf16.msra.mxu0 %v4663
        %9003 = vmatprep.subr.bf16.mxu0 0
        %9004 = vmatpush1.bf16.msra.mxu0 %v4664
        %9005 = vmatprep.subr.bf16.mxu0 0
        %9006 = vmatpush1.bf16.msra.mxu0 %v4665
        %9007 = vmatprep.subr.bf16.mxu0 0
        %9008 = vmatpush1.bf16.msra.mxu0 %v4666
        %9009 = vmatprep.subr.bf16.mxu0 0
        %9010 = vmatpush1.bf16.msra.mxu0 %v4667
        %9011 = vmatprep.subr.bf16.mxu0 0
        %9012 = vmatpush1.bf16.msra.mxu0 %v4668
        %9013 = vmatprep.subr.bf16.mxu0 0
        %9014 = vmatpush1.bf16.msra.mxu0 %v4669
        %9015 = vmatprep.subr.bf16.mxu0 0
        %9016 = vmatpush1.bf16.msra.mxu0 %v4670
        %9017 = vmatprep.mubr.bf16.mxu0 %v8867
        %9018 = vmatmul.mubr.bf16.gmra.mrb[0].mxu0 %v8241
        %v9019 = vpop.f32.mrb[0].mxu0
        %v9020 = vadd.f32 %v8964, %v9019
        %v9021 = vpop.f32.mrb[0].mxu0
        %v9022 = vpop.f32.mrb[0].mxu0
        %v9023 = vadd.f32 %v8967, %v9022
        %v9024 = vpop.f32.mrb[0].mxu0
        %9025 = vmatprep.mubr.bf16.mxu0 %v8868
        %9026 = vmatmul.mubr.bf16.gmra.mrb[0].mxu0 %v8242
        %v9027 = vpop.f32.mrb[0].mxu0
        %v9028 = vadd.f32 %v8972, %v9027
        %v9029 = vpop.f32.mrb[0].mxu0
        %v9030 = vpop.f32.mrb[0].mxu0
        %v9031 = vadd.f32 %v8975, %v9030
        %v9032 = vpop.f32.mrb[0].mxu0
        %9033 = vmatprep.mubr.bf16.mxu0 %v8869
        %9034 = vmatmul.mubr.bf16.gmra.mrb[0].mxu0 %v8243
        %v9035 = vpop.f32.mrb[0].mxu0
        %v9036 = vadd.f32 %v8980, %v9035
        %v9037 = vpop.f32.mrb[0].mxu0
        %v9038 = vpop.f32.mrb[0].mxu0
        %v9039 = vpop.f32.mrb[0].mxu0
        %9040 = vdwg.mxu0
        %vm9041 = vcmp.ge.f32.partialorder %v9020, 0.0
        %vm9042 = vcmp.ge.f32.partialorder %v9023, 0.0
        %vm9043 = vcmp.ge.f32.partialorder %v9028, 0.0
        %vm9044 = vcmp.ge.f32.partialorder %v9031, 0.0
        %vm9045 = vcmp.ge.f32.partialorder %v9036, 0.0
        %v9046 = vmul.f32 %v9020, 0.01
        %v9047 = vmul.f32 %v9023, 0.01
        %v9048 = vmul.f32 %v9028, 0.01
        %v9049 = vmul.f32 %v9031, 0.01
        %v9050 = vmul.f32 %v9036, 0.01
        %v9051 = vsel %vm9041, %v9020, %v9046
        %v9052 = vsel %vm9042, %v9023, %v9047
        %v9053 = vsel %vm9043, %v9028, %v9048
        %v9054 = vsel %vm9044, %v9031, %v9049
        %v9055 = vsel %vm9045, %v9036, %v9050
        %v9056 = vpack.c.bf16 %v9052, %v9051
        %v9057 = vpack.c.bf16 %v9054, %v9053
        %v9058 = vpack.c.bf16 %v9055, %v9055
        %vm9059 = vsmask.f32 7424
        %v9061 = vshrl.u32 %v4902, 16
        %v9063 = vshll.u32 %v4902, 16
        %v9065 = vrot.slane %v9063, 1
        %v9066 = vor.u32 %v9061, %v9065
        %v9068 = vshll.u32 %v4903, 16
        %v9070 = vrot.slane %v9068, 1
        %v9071 = vsel %vm9059, %v9066, %v9070
        %v9072 = vshrl.u32 %v4903, 16
        %v9074 = vor.u32 %v9072, %v9070
        %v9076 = vshll.u32 %v4904, 16
        %v9078 = vrot.slane %v9076, 1
        %v9079 = vsel %vm9059, %v9074, %v9078
        %v9083 = vshrl.u32 %v9056, 16
        %v9085 = vshll.u32 %v9056, 16
        %v9087 = vrot.slane %v9085, 1
        %v9088 = vor.u32 %v9083, %v9087
        %v9090 = vshll.u32 %v9057, 16
        %v9092 = vrot.slane %v9090, 1
        %v9093 = vsel %vm9059, %v9088, %v9092
        %v9094 = vshrl.u32 %v9057, 16
        %v9096 = vor.u32 %v9094, %v9092
        %v9098 = vshll.u32 %v9058, 16
        %v9100 = vrot.slane %v9098, 1
        %v9101 = vsel %vm9059, %v9096, %v9100
        %vm9107 = vcmask 1046528
        %v9108 = vrot.slane %v4902, 1
        %v9109 = vrot.slane %v4903, 1
        %v9110 = vsel %vm9107, %v9108, %v9109
        %v9111 = vrot.slane %v4904, 1
        %v9112 = vsel %vm9107, %v9109, %v9111
        %v9118 = vrot.slane %v9056, 1
        %v9119 = vrot.slane %v9057, 1
        %v9120 = vsel %vm9107, %v9118, %v9119
        %v9121 = vrot.slane %v9058, 1
        %v9122 = vsel %vm9107, %v9119, %v9121
        %vm9125 = vsmask.f32 6400
        %v9126 = vrot.slane %v9061, 1
        %v9127 = vrot.slane %v9063, 2
        %v9128 = vor.u32 %v9126, %v9127
        %v9129 = vrot.slane %v9072, 1
        %v9130 = vrot.slane %v9068, 2
        %v9131 = vor.u32 %v9129, %v9130
        %v9132 = vsel %vm9125, %v9128, %v9131
        %v9133 = vshrl.u32 %v4904, 16
        %v9135 = vrot.slane %v9133, 1
        %v9136 = vrot.slane %v9076, 2
        %v9137 = vor.u32 %v9135, %v9136
        %v9138 = vsel %vm9125, %v9131, %v9137
        %v9141 = vrot.slane %v9083, 1
        %v9142 = vrot.slane %v9085, 2
        %v9143 = vor.u32 %v9141, %v9142
        %v9144 = vrot.slane %v9094, 1
        %v9145 = vrot.slane %v9090, 2
        %v9146 = vor.u32 %v9144, %v9145
        %v9147 = vsel %vm9125, %v9143, %v9146
        %v9148 = vshrl.u32 %v9058, 16
        %v9150 = vrot.slane %v9148, 1
        %v9151 = vrot.slane %v9098, 2
        %v9152 = vor.u32 %v9150, %v9151
        %v9153 = vsel %vm9125, %v9146, %v9152
        %vm9156 = vcmask 1045504
        %v9157 = vrot.slane %v4902, 2
        %v9158 = vrot.slane %v4903, 2
        %v9159 = vsel %vm9156, %v9157, %v9158
        %v9160 = vrot.slane %v4904, 2
        %v9161 = vsel %vm9156, %v9158, %v9160
        %v9164 = vld [vmem:[#allocation2] sm:$0xf]
        %v9165 = vld [vmem:[#allocation2 + $0x4] sm:$0xf]
        %v9166 = vld [vmem:[#allocation2 + $0x8] sm:$0xf]
        %v9167 = vld [vmem:[#allocation2 + $0xc] sm:$0xf]
        %v9168 = vld [vmem:[#allocation2 + $0x10] sm:$0xf]
        %v9169 = vld [vmem:[#allocation2 + $0x14] sm:$0xf]
        %v9170 = vld [vmem:[#allocation2 + $0x18] sm:$0xf]
        %v9171 = vld [vmem:[#allocation2 + $0x1c] sm:$0xf]
        %v9172 = vld [vmem:[#allocation2 + $0x20] sm:$0xf]
        %v9173 = vld [vmem:[#allocation2 + $0x24] sm:$0xf]
        %v9174 = vld [vmem:[#allocation2 + $0x28] sm:$0xf]
        %v9175 = vld [vmem:[#allocation2 + $0x2c] sm:$0xf]
        %v9176 = vld [vmem:[#allocation2 + $0x30] sm:$0xf]
        %v9177 = vld [vmem:[#allocation2 + $0x34] sm:$0xf]
        %v9178 = vld [vmem:[#allocation2 + $0x38] sm:$0xf]
        %v9179 = vld [vmem:[#allocation2 + $0x3c] sm:$0xf]
        %v9180 = vld [vmem:[#allocation2 + $0x40] sm:$0xf]
        %v9181 = vld [vmem:[#allocation2 + $0x44] sm:$0xf]
        %v9182 = vld [vmem:[#allocation2 + $0x48] sm:$0xf]
        %v9183 = vld [vmem:[#allocation2 + $0x4c] sm:$0xf]
        %v9184 = vld [vmem:[#allocation2 + $0x50] sm:$0xf]
        %v9185 = vld [vmem:[#allocation2 + $0x54] sm:$0xf]
        %v9186 = vld [vmem:[#allocation2 + $0x58] sm:$0xf]
        %v9187 = vld [vmem:[#allocation2 + $0x5c] sm:$0xf]
        %v9188 = vld [vmem:[#allocation2 + $0x60] sm:$0xf]
        %v9189 = vld [vmem:[#allocation2 + $0x64] sm:$0xf]
        %v9190 = vld [vmem:[#allocation2 + $0x68] sm:$0xf]
        %v9191 = vld [vmem:[#allocation2 + $0x6c] sm:$0xf]
        %v9192 = vld [vmem:[#allocation2 + $0x70] sm:$0xf]
        %v9193 = vld [vmem:[#allocation2 + $0x74] sm:$0xf]
        %v9194 = vld [vmem:[#allocation2 + $0x78] sm:$0xf]
        %v9195 = vld [vmem:[#allocation2 + $0x7c] sm:$0xf]
        %v9196 = vld [vmem:[#allocation2 + $0x80] sm:$0xf]
        %v9197 = vld [vmem:[#allocation2 + $0x84] sm:$0xf]
        %v9198 = vld [vmem:[#allocation2 + $0x88] sm:$0xf]
        %v9199 = vld [vmem:[#allocation2 + $0x8c] sm:$0xf]
        %v9200 = vld [vmem:[#allocation2 + $0x90] sm:$0xf]
        %v9201 = vld [vmem:[#allocation2 + $0x94] sm:$0xf]
        %v9202 = vld [vmem:[#allocation2 + $0x98] sm:$0xf]
        %v9203 = vld [vmem:[#allocation2 + $0x9c] sm:$0xf]
        %v9204 = vld [vmem:[#allocation2 + $0xa0] sm:$0xf]
        %v9205 = vld [vmem:[#allocation2 + $0xa4] sm:$0xf]
        %v9206 = vld [vmem:[#allocation2 + $0xa8] sm:$0xf]
        %v9207 = vld [vmem:[#allocation2 + $0xac] sm:$0xf]
        %v9208 = vld [vmem:[#allocation2 + $0xb0] sm:$0xf]
        %v9209 = vld [vmem:[#allocation2 + $0xb4] sm:$0xf]
        %v9210 = vld [vmem:[#allocation2 + $0xb8] sm:$0xf]
        %v9211 = vld [vmem:[#allocation2 + $0xbc] sm:$0xf]
        %v9212 = vld [vmem:[#allocation2 + $0xc0] sm:$0xf]
        %v9213 = vld [vmem:[#allocation2 + $0xc4] sm:$0xf]
        %v9214 = vld [vmem:[#allocation2 + $0xc8] sm:$0xf]
        %v9215 = vld [vmem:[#allocation2 + $0xcc] sm:$0xf]
        %v9216 = vld [vmem:[#allocation2 + $0xd0] sm:$0xf]
        %v9217 = vld [vmem:[#allocation2 + $0xd4] sm:$0xf]
        %v9218 = vld [vmem:[#allocation2 + $0xd8] sm:$0xf]
        %v9219 = vld [vmem:[#allocation2 + $0xdc] sm:$0xf]
        %v9220 = vld [vmem:[#allocation2 + $0xe0] sm:$0xf]
        %v9221 = vld [vmem:[#allocation2 + $0xe4] sm:$0xf]
        %v9222 = vld [vmem:[#allocation2 + $0xe8] sm:$0xf]
        %v9223 = vld [vmem:[#allocation2 + $0xec] sm:$0xf]
        %v9224 = vld [vmem:[#allocation2 + $0xf0] sm:$0xf]
        %v9225 = vld [vmem:[#allocation2 + $0xf4] sm:$0xf]
        %v9226 = vld [vmem:[#allocation2 + $0xf8] sm:$0xf]
        %v9227 = vld [vmem:[#allocation2 + $0xfc] sm:$0xf]
        %v9228 = vld [vmem:[#allocation2 + $0x100] sm:$0xf]
        %v9229 = vld [vmem:[#allocation2 + $0x104] sm:$0xf]
        %v9230 = vld [vmem:[#allocation2 + $0x108] sm:$0xf]
        %v9231 = vld [vmem:[#allocation2 + $0x10c] sm:$0xf]
        %v9232 = vld [vmem:[#allocation2 + $0x110] sm:$0xf]
        %v9233 = vld [vmem:[#allocation2 + $0x114] sm:$0xf]
        %v9234 = vld [vmem:[#allocation2 + $0x118] sm:$0xf]
        %v9235 = vld [vmem:[#allocation2 + $0x11c] sm:$0xf]
        %v9236 = vld [vmem:[#allocation2 + $0x120] sm:$0xf]
        %v9237 = vld [vmem:[#allocation2 + $0x124] sm:$0xf]
        %v9238 = vld [vmem:[#allocation2 + $0x128] sm:$0xf]
        %v9239 = vld [vmem:[#allocation2 + $0x12c] sm:$0xf]
        %v9240 = vld [vmem:[#allocation2 + $0x130] sm:$0xf]
        %v9241 = vld [vmem:[#allocation2 + $0x134] sm:$0xf]
        %v9242 = vld [vmem:[#allocation2 + $0x138] sm:$0xf]
        %v9243 = vld [vmem:[#allocation2 + $0x13c] sm:$0xf]
        %v9244 = vld [vmem:[#allocation2 + $0x140] sm:$0xf]
        %v9245 = vld [vmem:[#allocation2 + $0x144] sm:$0xf]
        %v9246 = vld [vmem:[#allocation2 + $0x148] sm:$0xf]
        %v9247 = vld [vmem:[#allocation2 + $0x14c] sm:$0xf]
        %v9248 = vld [vmem:[#allocation2 + $0x150] sm:$0xf]
        %v9249 = vld [vmem:[#allocation2 + $0x154] sm:$0xf]
        %v9250 = vld [vmem:[#allocation2 + $0x158] sm:$0xf]
        %v9251 = vld [vmem:[#allocation2 + $0x15c] sm:$0xf]
        %v9252 = vld [vmem:[#allocation2 + $0x160] sm:$0xf]
        %v9253 = vld [vmem:[#allocation2 + $0x164] sm:$0xf]
        %v9254 = vld [vmem:[#allocation2 + $0x168] sm:$0xf]
        %v9255 = vld [vmem:[#allocation2 + $0x16c] sm:$0xf]
        %v9256 = vld [vmem:[#allocation2 + $0x170] sm:$0xf]
        %v9257 = vld [vmem:[#allocation2 + $0x174] sm:$0xf]
        %v9258 = vld [vmem:[#allocation2 + $0x178] sm:$0xf]
        %v9259 = vld [vmem:[#allocation2 + $0x17c] sm:$0xf]
        %v9260 = vld [vmem:[#allocation2 + $0x180] sm:$0xf]
        %v9261 = vld [vmem:[#allocation2 + $0x184] sm:$0xf]
        %v9262 = vld [vmem:[#allocation2 + $0x188] sm:$0xf]
        %v9263 = vld [vmem:[#allocation2 + $0x18c] sm:$0xf]
        %v9264 = vld [vmem:[#allocation2 + $0x190] sm:$0xf]
        %v9265 = vld [vmem:[#allocation2 + $0x194] sm:$0xf]
        %v9266 = vld [vmem:[#allocation2 + $0x198] sm:$0xf]
        %v9267 = vld [vmem:[#allocation2 + $0x19c] sm:$0xf]
        %v9268 = vld [vmem:[#allocation2 + $0x1a0] sm:$0xf]
        %v9269 = vld [vmem:[#allocation2 + $0x1a4] sm:$0xf]
        %v9270 = vld [vmem:[#allocation2 + $0x1a8] sm:$0xf]
        %v9271 = vld [vmem:[#allocation2 + $0x1ac] sm:$0xf]
        %v9272 = vld [vmem:[#allocation2 + $0x1b0] sm:$0xf]
        %v9273 = vld [vmem:[#allocation2 + $0x1b4] sm:$0xf]
        %v9274 = vld [vmem:[#allocation2 + $0x1b8] sm:$0xf]
        %v9275 = vld [vmem:[#allocation2 + $0x1bc] sm:$0xf]
        %v9276 = vld [vmem:[#allocation2 + $0x1c0] sm:$0xf]
        %v9277 = vld [vmem:[#allocation2 + $0x1c4] sm:$0xf]
        %v9278 = vld [vmem:[#allocation2 + $0x1c8] sm:$0xf]
        %v9279 = vld [vmem:[#allocation2 + $0x1cc] sm:$0xf]
        %v9280 = vld [vmem:[#allocation2 + $0x1d0] sm:$0xf]
        %v9281 = vld [vmem:[#allocation2 + $0x1d4] sm:$0xf]
        %v9282 = vld [vmem:[#allocation2 + $0x1d8] sm:$0xf]
        %v9283 = vld [vmem:[#allocation2 + $0x1dc] sm:$0xf]
        %v9284 = vld [vmem:[#allocation2 + $0x1e0] sm:$0xf]
        %v9285 = vld [vmem:[#allocation2 + $0x1e4] sm:$0xf]
        %v9286 = vld [vmem:[#allocation2 + $0x1e8] sm:$0xf]
        %v9287 = vld [vmem:[#allocation2 + $0x1ec] sm:$0xf]
        %v9288 = vld [vmem:[#allocation2 + $0x1f0] sm:$0xf]
        %v9289 = vld [vmem:[#allocation2 + $0x1f4] sm:$0xf]
        %v9290 = vld [vmem:[#allocation2 + $0x1f8] sm:$0xf]
        %v9291 = vld [vmem:[#allocation2 + $0x1fc] sm:$0xf]
        %v9292 = vld [vmem:[#allocation2 + $0x200] sm:$0xf]
        %v9293 = vld [vmem:[#allocation2 + $0x204] sm:$0xf]
        %v9294 = vld [vmem:[#allocation2 + $0x208] sm:$0xf]
        %v9295 = vld [vmem:[#allocation2 + $0x20c] sm:$0xf]
        %v9296 = vld [vmem:[#allocation2 + $0x210] sm:$0xf]
        %v9297 = vld [vmem:[#allocation2 + $0x214] sm:$0xf]
        %v9298 = vld [vmem:[#allocation2 + $0x218] sm:$0xf]
        %v9299 = vld [vmem:[#allocation2 + $0x21c] sm:$0xf]
        %v9300 = vld [vmem:[#allocation2 + $0x220] sm:$0xf]
        %v9301 = vld [vmem:[#allocation2 + $0x224] sm:$0xf]
        %v9302 = vld [vmem:[#allocation2 + $0x228] sm:$0xf]
        %v9303 = vld [vmem:[#allocation2 + $0x22c] sm:$0xf]
        %v9304 = vld [vmem:[#allocation2 + $0x230] sm:$0xf]
        %v9305 = vld [vmem:[#allocation2 + $0x234] sm:$0xf]
        %v9306 = vld [vmem:[#allocation2 + $0x238] sm:$0xf]
        %v9307 = vld [vmem:[#allocation2 + $0x23c] sm:$0xf]
        %v9308 = vld [vmem:[%s4] sm:$0x1]
        %v9310 = vlaneseq
        %v9311 = vshrl.u32 %v9310, 7
        %v9312 = vsub.s32 0, %v9311
        %v9313 = vrot.slane %v9308, %v9312
        %v9459 = vunpack.c.l.b16 %v9164
        %v9460 = vunpack.c.l.b16 %v9165
        %v9461 = vunpack.c.l.b16 %v9166
        %v9462 = vunpack.c.l.b16 %v9167
        %v9463 = vunpack.c.l.b16 %v9168
        %v9464 = vunpack.c.l.b16 %v9169
        %v9465 = vunpack.c.l.b16 %v9170
        %v9466 = vunpack.c.l.b16 %v9171
        %v9467 = vunpack.c.l.b16 %v9172
        %v9468 = vunpack.c.l.b16 %v9173
        %v9469 = vunpack.c.l.b16 %v9174
        %v9470 = vunpack.c.l.b16 %v9175
        %v9471 = vunpack.c.l.b16 %v9176
        %v9472 = vunpack.c.l.b16 %v9177
        %v9473 = vunpack.c.l.b16 %v9178
        %v9474 = vunpack.c.l.b16 %v9179
        %v9475 = vunpack.c.l.b16 %v9180
        %v9476 = vunpack.c.l.b16 %v9181
        %v9477 = vunpack.c.l.b16 %v9182
        %v9478 = vunpack.c.l.b16 %v9183
        %v9479 = vunpack.c.l.b16 %v9184
        %v9480 = vunpack.c.l.b16 %v9185
        %v9481 = vunpack.c.l.b16 %v9186
        %v9482 = vunpack.c.l.b16 %v9187
        %v9483 = vunpack.c.l.b16 %v9188
        %v9484 = vunpack.c.l.b16 %v9189
        %v9485 = vunpack.c.l.b16 %v9190
        %v9486 = vunpack.c.l.b16 %v9191
        %v9487 = vunpack.c.l.b16 %v9192
        %v9488 = vunpack.c.l.b16 %v9193
        %v9489 = vunpack.c.l.b16 %v9194
        %v9490 = vunpack.c.l.b16 %v9195
        %v9491 = vunpack.c.l.b16 %v9196
        %v9492 = vunpack.c.l.b16 %v9197
        %v9493 = vunpack.c.l.b16 %v9198
        %v9494 = vunpack.c.l.b16 %v9199
        %v9495 = vunpack.c.l.b16 %v9200
        %v9496 = vunpack.c.l.b16 %v9201
        %v9497 = vunpack.c.l.b16 %v9202
        %v9498 = vunpack.c.l.b16 %v9203
        %v9499 = vunpack.c.l.b16 %v9204
        %v9500 = vunpack.c.l.b16 %v9205
        %v9501 = vunpack.c.l.b16 %v9206
        %v9502 = vunpack.c.l.b16 %v9207
        %v9503 = vunpack.c.l.b16 %v9208
        %v9504 = vunpack.c.l.b16 %v9209
        %v9505 = vunpack.c.l.b16 %v9210
        %v9506 = vunpack.c.l.b16 %v9211
        %v9507 = vunpack.c.l.b16 %v9212
        %v9508 = vunpack.c.l.b16 %v9213
        %v9509 = vunpack.c.l.b16 %v9214
        %v9510 = vunpack.c.l.b16 %v9215
        %v9511 = vunpack.c.l.b16 %v9216
        %v9512 = vunpack.c.l.b16 %v9217
        %v9513 = vunpack.c.l.b16 %v9218
        %v9514 = vunpack.c.l.b16 %v9219
        %v9515 = vunpack.c.l.b16 %v9220
        %v9516 = vunpack.c.l.b16 %v9221
        %v9517 = vunpack.c.l.b16 %v9222
        %v9518 = vunpack.c.l.b16 %v9223
        %v9519 = vunpack.c.l.b16 %v9224
        %v9520 = vunpack.c.l.b16 %v9225
        %v9521 = vunpack.c.l.b16 %v9226
        %v9522 = vunpack.c.l.b16 %v9227
        %v9523 = vunpack.c.l.b16 %v9228
        %v9524 = vunpack.c.l.b16 %v9229
        %v9525 = vunpack.c.l.b16 %v9230
        %v9526 = vunpack.c.l.b16 %v9231
        %v9527 = vunpack.c.l.b16 %v9232
        %v9528 = vunpack.c.l.b16 %v9233
        %v9529 = vunpack.c.l.b16 %v9234
        %v9530 = vunpack.c.l.b16 %v9235
        %v9531 = vunpack.c.l.b16 %v9236
        %v9532 = vunpack.c.l.b16 %v9237
        %v9533 = vunpack.c.l.b16 %v9238
        %v9534 = vunpack.c.l.b16 %v9239
        %v9535 = vunpack.c.l.b16 %v9240
        %v9536 = vunpack.c.l.b16 %v9241
        %v9537 = vunpack.c.l.b16 %v9242
        %v9538 = vunpack.c.l.b16 %v9243
        %v9539 = vunpack.c.l.b16 %v9244
        %v9540 = vunpack.c.l.b16 %v9245
        %v9541 = vunpack.c.l.b16 %v9246
        %v9542 = vunpack.c.l.b16 %v9247
        %v9543 = vunpack.c.l.b16 %v9248
        %v9544 = vunpack.c.l.b16 %v9249
        %v9545 = vunpack.c.l.b16 %v9250
        %v9546 = vunpack.c.l.b16 %v9251
        %v9547 = vunpack.c.l.b16 %v9252
        %v9548 = vunpack.c.l.b16 %v9253
        %v9549 = vunpack.c.l.b16 %v9254
        %v9550 = vunpack.c.l.b16 %v9255
        %v9551 = vunpack.c.l.b16 %v9256
        %v9552 = vunpack.c.l.b16 %v9257
        %v9553 = vunpack.c.l.b16 %v9258
        %v9554 = vunpack.c.l.b16 %v9259
        %v9555 = vunpack.c.l.b16 %v9260
        %v9556 = vunpack.c.l.b16 %v9261
        %v9557 = vunpack.c.l.b16 %v9262
        %v9558 = vunpack.c.l.b16 %v9263
        %v9559 = vunpack.c.l.b16 %v9264
        %v9560 = vunpack.c.l.b16 %v9265
        %v9561 = vunpack.c.l.b16 %v9266
        %v9562 = vunpack.c.l.b16 %v9267
        %v9563 = vunpack.c.l.b16 %v9268
        %v9564 = vunpack.c.l.b16 %v9269
        %v9565 = vunpack.c.l.b16 %v9270
        %v9566 = vunpack.c.l.b16 %v9271
        %v9567 = vunpack.c.l.b16 %v9272
        %v9568 = vunpack.c.l.b16 %v9273
        %v9569 = vunpack.c.l.b16 %v9274
        %v9570 = vunpack.c.l.b16 %v9275
        %v9571 = vunpack.c.l.b16 %v9276
        %v9572 = vunpack.c.l.b16 %v9277
        %v9573 = vunpack.c.l.b16 %v9278
        %v9574 = vunpack.c.l.b16 %v9279
        %v9575 = vunpack.c.l.b16 %v9280
        %v9576 = vunpack.c.l.b16 %v9281
        %v9577 = vunpack.c.l.b16 %v9282
        %v9578 = vunpack.c.l.b16 %v9283
        %v9579 = vunpack.c.l.b16 %v9284
        %v9580 = vunpack.c.l.b16 %v9285
        %v9581 = vunpack.c.l.b16 %v9286
        %v9582 = vunpack.c.l.b16 %v9287
        %v9583 = vunpack.c.l.b16 %v9288
        %v9584 = vunpack.c.l.b16 %v9289
        %v9585 = vunpack.c.l.b16 %v9290
        %v9586 = vunpack.c.l.b16 %v9291
        %v9587 = vunpack.c.l.b16 %v9292
        %v9588 = vunpack.c.l.b16 %v9293
        %v9589 = vunpack.c.l.b16 %v9294
        %v9590 = vunpack.c.l.b16 %v9295
        %v9591 = vunpack.c.l.b16 %v9296
        %v9592 = vunpack.c.l.b16 %v9297
        %v9593 = vunpack.c.l.b16 %v9298
        %v9594 = vunpack.c.l.b16 %v9299
        %v9595 = vunpack.c.l.b16 %v9300
        %v9596 = vunpack.c.l.b16 %v9301
        %v9597 = vunpack.c.l.b16 %v9302
        %v9598 = vunpack.c.l.b16 %v9303
        %v9599 = vunpack.c.l.b16 %v9304
        %v9600 = vunpack.c.l.b16 %v9305
        %v9601 = vunpack.c.l.b16 %v9306
        %v9602 = vunpack.c.l.b16 %v9307
        %v9603 = vpack.c.b16 %v9460, %v9459
        %v9604 = vpack.c.b16 %v9462, %v9461
        %v9605 = vpack.c.b16 %v9464, %v9463
        %v9606 = vpack.c.b16 %v9466, %v9465
        %v9607 = vpack.c.b16 %v9468, %v9467
        %v9608 = vpack.c.b16 %v9470, %v9469
        %v9609 = vpack.c.b16 %v9472, %v9471
        %v9610 = vpack.c.b16 %v9474, %v9473
        %v9611 = vpack.c.b16 %v9476, %v9475
        %v9612 = vpack.c.b16 %v9478, %v9477
        %v9613 = vpack.c.b16 %v9480, %v9479
        %v9614 = vpack.c.b16 %v9482, %v9481
        %v9615 = vpack.c.b16 %v9484, %v9483
        %v9616 = vpack.c.b16 %v9486, %v9485
        %v9617 = vpack.c.b16 %v9488, %v9487
        %v9618 = vpack.c.b16 %v9490, %v9489
        %v9619 = vpack.c.b16 %v9492, %v9491
        %v9620 = vpack.c.b16 %v9494, %v9493
        %v9621 = vpack.c.b16 %v9496, %v9495
        %v9622 = vpack.c.b16 %v9498, %v9497
        %v9623 = vpack.c.b16 %v9500, %v9499
        %v9624 = vpack.c.b16 %v9502, %v9501
        %v9625 = vpack.c.b16 %v9504, %v9503
        %v9626 = vpack.c.b16 %v9506, %v9505
        %v9627 = vpack.c.b16 %v9508, %v9507
        %v9628 = vpack.c.b16 %v9510, %v9509
        %v9629 = vpack.c.b16 %v9512, %v9511
        %v9630 = vpack.c.b16 %v9514, %v9513
        %v9631 = vpack.c.b16 %v9516, %v9515
        %v9632 = vpack.c.b16 %v9518, %v9517
        %v9633 = vpack.c.b16 %v9520, %v9519
        %v9634 = vpack.c.b16 %v9522, %v9521
        %v9635 = vpack.c.b16 %v9524, %v9523
        %v9636 = vpack.c.b16 %v9526, %v9525
        %v9637 = vpack.c.b16 %v9528, %v9527
        %v9638 = vpack.c.b16 %v9530, %v9529
        %v9639 = vpack.c.b16 %v9532, %v9531
        %v9640 = vpack.c.b16 %v9534, %v9533
        %v9641 = vpack.c.b16 %v9536, %v9535
        %v9642 = vpack.c.b16 %v9538, %v9537
        %v9643 = vpack.c.b16 %v9540, %v9539
        %v9644 = vpack.c.b16 %v9542, %v9541
        %v9645 = vpack.c.b16 %v9544, %v9543
        %v9646 = vpack.c.b16 %v9546, %v9545
        %v9647 = vpack.c.b16 %v9548, %v9547
        %v9648 = vpack.c.b16 %v9550, %v9549
        %v9649 = vpack.c.b16 %v9552, %v9551
        %v9650 = vpack.c.b16 %v9554, %v9553
        %v9651 = vpack.c.b16 %v9556, %v9555
        %v9652 = vpack.c.b16 %v9558, %v9557
        %v9653 = vpack.c.b16 %v9560, %v9559
        %v9654 = vpack.c.b16 %v9562, %v9561
        %v9655 = vpack.c.b16 %v9564, %v9563
        %v9656 = vpack.c.b16 %v9566, %v9565
        %v9657 = vpack.c.b16 %v9568, %v9567
        %v9658 = vpack.c.b16 %v9570, %v9569
        %v9659 = vpack.c.b16 %v9572, %v9571
        %v9660 = vpack.c.b16 %v9574, %v9573
        %v9661 = vpack.c.b16 %v9576, %v9575
        %v9662 = vpack.c.b16 %v9578, %v9577
        %v9663 = vpack.c.b16 %v9580, %v9579
        %v9664 = vpack.c.b16 %v9582, %v9581
        %v9665 = vpack.c.b16 %v9584, %v9583
        %v9666 = vpack.c.b16 %v9586, %v9585
        %v9667 = vpack.c.b16 %v9588, %v9587
        %v9668 = vpack.c.b16 %v9590, %v9589
        %v9669 = vpack.c.b16 %v9592, %v9591
        %v9670 = vpack.c.b16 %v9594, %v9593
        %v9671 = vpack.c.b16 %v9596, %v9595
        %v9672 = vpack.c.b16 %v9598, %v9597
        %v9673 = vpack.c.b16 %v9600, %v9599
        %v9674 = vpack.c.b16 %v9602, %v9601
        %9747 = vmatprep.subr.bf16.mxu0 0
        %9748 = vmatpush1.bf16.msra.mxu0 %v9603
        %9749 = vmatprep.subr.bf16.mxu0 0
        %9750 = vmatpush1.bf16.msra.mxu0 %v9604
        %9751 = vmatprep.subr.bf16.mxu0 0
        %9752 = vmatpush1.bf16.msra.mxu0 %v9605
        %9753 = vmatprep.subr.bf16.mxu0 0
        %9754 = vmatpush1.bf16.msra.mxu0 %v9606
        %9755 = vmatprep.subr.bf16.mxu0 0
        %9756 = vmatpush1.bf16.msra.mxu0 %v9607
        %9757 = vmatprep.subr.bf16.mxu0 0
        %9758 = vmatpush1.bf16.msra.mxu0 %v9608
        %9759 = vmatprep.subr.bf16.mxu0 0
        %9760 = vmatpush1.bf16.msra.mxu0 %v9609
        %9761 = vmatprep.subr.bf16.mxu0 0
        %9762 = vmatpush1.bf16.msra.mxu0 %v9610
        %9763 = vmatprep.subr.bf16.mxu0 0
        %9764 = vmatpush1.bf16.msra.mxu0 %v9611
        %9765 = vmatprep.subr.bf16.mxu0 0
        %9766 = vmatpush1.bf16.msra.mxu0 %v9612
        %9767 = vmatprep.subr.bf16.mxu0 0
        %9768 = vmatpush1.bf16.msra.mxu0 %v9613
        %9769 = vmatprep.subr.bf16.mxu0 0
        %9770 = vmatpush1.bf16.msra.mxu0 %v9614
        %9771 = vmatprep.subr.bf16.mxu0 0
        %9772 = vmatpush1.bf16.msra.mxu0 %v9615
        %9773 = vmatprep.subr.bf16.mxu0 0
        %9774 = vmatpush1.bf16.msra.mxu0 %v9616
        %9775 = vmatprep.subr.bf16.mxu0 0
        %9776 = vmatpush1.bf16.msra.mxu0 %v9617
        %9777 = vmatprep.subr.bf16.mxu0 0
        %9778 = vmatpush1.bf16.msra.mxu0 %v9618
        %9779 = vmatprep.mubr.bf16.mxu0 %v9056
        %9780 = vmatmul.mubr.bf16.gmra.mrb[0].mxu0 %v4902
        %v9781 = vpop.f32.mrb[0].mxu0
        %v9782 = vadd.f32 %v9313, %v9781
        %v9783 = vpop.f32.mrb[0].mxu0
        %v9784 = vpop.f32.mrb[0].mxu0
        %v9785 = vadd.f32 %v9313, %v9784
        %v9786 = vpop.f32.mrb[0].mxu0
        %9787 = vmatprep.mubr.bf16.mxu0 %v9057
        %9788 = vmatmul.mubr.bf16.gmra.mrb[0].mxu0 %v4903
        %v9789 = vpop.f32.mrb[0].mxu0
        %v9790 = vadd.f32 %v9313, %v9789
        %v9791 = vpop.f32.mrb[0].mxu0
        %v9792 = vpop.f32.mrb[0].mxu0
        %v9793 = vadd.f32 %v9313, %v9792
        %v9794 = vpop.f32.mrb[0].mxu0
        %9795 = vdwg.mxu0
        %9796 = vmatprep.subr.bf16.mxu0 0
        %9797 = vmatpush1.bf16.msra.mxu0 %v9619
        %9798 = vmatprep.subr.bf16.mxu0 0
        %9799 = vmatpush1.bf16.msra.mxu0 %v9620
        %9800 = vmatprep.subr.bf16.mxu0 0
        %9801 = vmatpush1.bf16.msra.mxu0 %v9621
        %9802 = vmatprep.subr.bf16.mxu0 0
        %9803 = vmatpush1.bf16.msra.mxu0 %v9622
        %9804 = vmatprep.subr.bf16.mxu0 0
        %9805 = vmatpush1.bf16.msra.mxu0 %v9623
        %9806 = vmatprep.subr.bf16.mxu0 0
        %9807 = vmatpush1.bf16.msra.mxu0 %v9624
        %9808 = vmatprep.subr.bf16.mxu0 0
        %9809 = vmatpush1.bf16.msra.mxu0 %v9625
        %9810 = vmatprep.subr.bf16.mxu0 0
        %9811 = vmatpush1.bf16.msra.mxu0 %v9626
        %9812 = vmatprep.subr.bf16.mxu0 0
        %9813 = vmatpush1.bf16.msra.mxu0 %v9627
        %9814 = vmatprep.subr.bf16.mxu0 0
        %9815 = vmatpush1.bf16.msra.mxu0 %v9628
        %9816 = vmatprep.subr.bf16.mxu0 0
        %9817 = vmatpush1.bf16.msra.mxu0 %v9629
        %9818 = vmatprep.subr.bf16.mxu0 0
        %9819 = vmatpush1.bf16.msra.mxu0 %v9630
        %9820 = vmatprep.subr.bf16.mxu0 0
        %9821 = vmatpush1.bf16.msra.mxu0 %v9631
        %9822 = vmatprep.subr.bf16.mxu0 0
        %9823 = vmatpush1.bf16.msra.mxu0 %v9632
        %9824 = vmatprep.subr.bf16.mxu0 0
        %9825 = vmatpush1.bf16.msra.mxu0 %v9633
        %9826 = vmatprep.subr.bf16.mxu0 0
        %9827 = vmatpush1.bf16.msra.mxu0 %v9634
        %9828 = vmatprep.mubr.bf16.mxu0 %v9093
        %9829 = vmatmul.mubr.bf16.gmra.mrb[0].mxu0 %v9071
        %v9830 = vpop.f32.mrb[0].mxu0
        %v9831 = vadd.f32 %v9782, %v9830
        %v9832 = vpop.f32.mrb[0].mxu0
        %v9833 = vpop.f32.mrb[0].mxu0
        %v9834 = vadd.f32 %v9785, %v9833
        %v9835 = vpop.f32.mrb[0].mxu0
        %9836 = vmatprep.mubr.bf16.mxu0 %v9101
        %9837 = vmatmul.mubr.bf16.gmra.mrb[0].mxu0 %v9079
        %v9838 = vpop.f32.mrb[0].mxu0
        %v9839 = vadd.f32 %v9790, %v9838
        %v9840 = vpop.f32.mrb[0].mxu0
        %v9841 = vpop.f32.mrb[0].mxu0
        %v9842 = vadd.f32 %v9793, %v9841
        %v9843 = vpop.f32.mrb[0].mxu0
        %9844 = vdwg.mxu0
        %9845 = vmatprep.subr.bf16.mxu0 0
        %9846 = vmatpush1.bf16.msra.mxu0 %v9635
        %9847 = vmatprep.subr.bf16.mxu0 0
        %9848 = vmatpush1.bf16.msra.mxu0 %v9636
        %9849 = vmatprep.subr.bf16.mxu0 0
        %9850 = vmatpush1.bf16.msra.mxu0 %v9637
        %9851 = vmatprep.subr.bf16.mxu0 0
        %9852 = vmatpush1.bf16.msra.mxu0 %v9638
        %9853 = vmatprep.subr.bf16.mxu0 0
        %9854 = vmatpush1.bf16.msra.mxu0 %v9639
        %9855 = vmatprep.subr.bf16.mxu0 0
        %9856 = vmatpush1.bf16.msra.mxu0 %v9640
        %9857 = vmatprep.subr.bf16.mxu0 0
        %9858 = vmatpush1.bf16.msra.mxu0 %v9641
        %9859 = vmatprep.subr.bf16.mxu0 0
        %9860 = vmatpush1.bf16.msra.mxu0 %v9642
        %9861 = vmatprep.subr.bf16.mxu0 0
        %9862 = vmatpush1.bf16.msra.mxu0 %v9643
        %9863 = vmatprep.subr.bf16.mxu0 0
        %9864 = vmatpush1.bf16.msra.mxu0 %v9644
        %9865 = vmatprep.subr.bf16.mxu0 0
        %9866 = vmatpush1.bf16.msra.mxu0 %v9645
        %9867 = vmatprep.subr.bf16.mxu0 0
        %9868 = vmatpush1.bf16.msra.mxu0 %v9646
        %9869 = vmatprep.subr.bf16.mxu0 0
        %9870 = vmatpush1.bf16.msra.mxu0 %v9647
        %9871 = vmatprep.subr.bf16.mxu0 0
        %9872 = vmatpush1.bf16.msra.mxu0 %v9648
        %9873 = vmatprep.subr.bf16.mxu0 0
        %9874 = vmatpush1.bf16.msra.mxu0 %v9649
        %9875 = vmatprep.subr.bf16.mxu0 0
        %9876 = vmatpush1.bf16.msra.mxu0 %v9650
        %9877 = vmatprep.mubr.bf16.mxu0 %v9120
        %9878 = vmatmul.mubr.bf16.gmra.mrb[0].mxu0 %v9110
        %v9879 = vpop.f32.mrb[0].mxu0
        %v9880 = vadd.f32 %v9831, %v9879
        %v9881 = vpop.f32.mrb[0].mxu0
        %v9882 = vpop.f32.mrb[0].mxu0
        %v9883 = vadd.f32 %v9834, %v9882
        %v9884 = vpop.f32.mrb[0].mxu0
        %9885 = vmatprep.mubr.bf16.mxu0 %v9122
        %9886 = vmatmul.mubr.bf16.gmra.mrb[0].mxu0 %v9112
        %v9887 = vpop.f32.mrb[0].mxu0
        %v9888 = vadd.f32 %v9839, %v9887
        %v9889 = vpop.f32.mrb[0].mxu0
        %v9890 = vpop.f32.mrb[0].mxu0
        %v9891 = vadd.f32 %v9842, %v9890
        %v9892 = vpop.f32.mrb[0].mxu0
        %9893 = vdwg.mxu0
        %9894 = vmatprep.subr.bf16.mxu0 0
        %9895 = vmatpush1.bf16.msra.mxu0 %v9651
        %9896 = vmatprep.subr.bf16.mxu0 0
        %9897 = vmatpush1.bf16.msra.mxu0 %v9652
        %9898 = vmatprep.subr.bf16.mxu0 0
        %9899 = vmatpush1.bf16.msra.mxu0 %v9653
        %9900 = vmatprep.subr.bf16.mxu0 0
        %9901 = vmatpush1.bf16.msra.mxu0 %v9654
        %9902 = vmatprep.subr.bf16.mxu0 0
        %9903 = vmatpush1.bf16.msra.mxu0 %v9655
        %9904 = vmatprep.subr.bf16.mxu0 0
        %9905 = vmatpush1.bf16.msra.mxu0 %v9656
        %9906 = vmatprep.subr.bf16.mxu0 0
        %9907 = vmatpush1.bf16.msra.mxu0 %v9657
        %9908 = vmatprep.subr.bf16.mxu0 0
        %9909 = vmatpush1.bf16.msra.mxu0 %v9658
        %9910 = vmatprep.subr.bf16.mxu0 0
        %9911 = vmatpush1.bf16.msra.mxu0 %v9659
        %9912 = vmatprep.subr.bf16.mxu0 0
        %9913 = vmatpush1.bf16.msra.mxu0 %v9660
        %9914 = vmatprep.subr.bf16.mxu0 0
        %9915 = vmatpush1.bf16.msra.mxu0 %v9661
        %9916 = vmatprep.subr.bf16.mxu0 0
        %9917 = vmatpush1.bf16.msra.mxu0 %v9662
        %9918 = vmatprep.subr.bf16.mxu0 0
        %9919 = vmatpush1.bf16.msra.mxu0 %v9663
        %9920 = vmatprep.subr.bf16.mxu0 0
        %9921 = vmatpush1.bf16.msra.mxu0 %v9664
        %9922 = vmatprep.subr.bf16.mxu0 0
        %9923 = vmatpush1.bf16.msra.mxu0 %v9665
        %9924 = vmatprep.subr.bf16.mxu0 0
        %9925 = vmatpush1.bf16.msra.mxu0 %v9666
        %9926 = vmatprep.mubr.bf16.mxu0 %v9147
        %9927 = vmatmul.mubr.bf16.gmra.mrb[0].mxu0 %v9132
        %v9928 = vpop.f32.mrb[0].mxu0
        %v9929 = vadd.f32 %v9880, %v9928
        %v9930 = vpop.f32.mrb[0].mxu0
        %v9931 = vpop.f32.mrb[0].mxu0
        %v9932 = vadd.f32 %v9883, %v9931
        %v9933 = vpop.f32.mrb[0].mxu0
        %9934 = vmatprep.mubr.bf16.mxu0 %v9153
        %9935 = vmatmul.mubr.bf16.gmra.mrb[0].mxu0 %v9138
        %v9936 = vpop.f32.mrb[0].mxu0
        %v9937 = vadd.f32 %v9888, %v9936
        %v9938 = vpop.f32.mrb[0].mxu0
        %v9939 = vpop.f32.mrb[0].mxu0
        %v9940 = vadd.f32 %v9891, %v9939
        %v9941 = vpop.f32.mrb[0].mxu0
        %9942 = vdwg.mxu0
        %9943 = vmatprep.subr.bf16.mxu0 0
        %9944 = vmatpush1.bf16.msra.mxu0 %v9667
        %9945 = vmatprep.subr.bf16.mxu0 0
        %9946 = vmatpush1.bf16.msra.mxu0 %v9668
        %9947 = vmatprep.subr.bf16.mxu0 0
        %9948 = vmatpush1.bf16.msra.mxu0 %v9669
        %9949 = vmatprep.subr.bf16.mxu0 0
        %9950 = vmatpush1.bf16.msra.mxu0 %v9670
        %9951 = vmatprep.subr.bf16.mxu0 0
        %9952 = vmatpush1.bf16.msra.mxu0 %v9671
        %9953 = vmatprep.subr.bf16.mxu0 0
        %9954 = vmatpush1.bf16.msra.mxu0 %v9672
        %9955 = vmatprep.subr.bf16.mxu0 0
        %9956 = vmatpush1.bf16.msra.mxu0 %v9673
        %9957 = vmatprep.subr.bf16.mxu0 0
        %9958 = vmatpush1.bf16.msra.mxu0 %v9674
        %9959 = vmatprep.subr.bf16.mxu0 0
        %9960 = vmatpush1.bf16.msra.mxu0 0
        %9961 = vmatprep.subr.bf16.mxu0 0
        %9962 = vmatpush1.bf16.msra.mxu0 0
        %9963 = vmatprep.subr.bf16.mxu0 0
        %9964 = vmatpush1.bf16.msra.mxu0 0
        %9965 = vmatprep.subr.bf16.mxu0 0
        %9966 = vmatpush1.bf16.msra.mxu0 0
        %9967 = vmatprep.subr.bf16.mxu0 0
        %9968 = vmatpush1.bf16.msra.mxu0 0
        %9969 = vmatprep.subr.bf16.mxu0 0
        %9970 = vmatpush1.bf16.msra.mxu0 0
        %9971 = vmatprep.subr.bf16.mxu0 0
        %9972 = vmatpush1.bf16.msra.mxu0 0
        %9973 = vmatprep.subr.bf16.mxu0 0
        %9974 = vmatpush1.bf16.msra.mxu0 0
        %9975 = vmatprep.mubr.bf16.mxu0 0
        %9976 = vmatmul.mubr.bf16.gmra.mrb[0].mxu0 %v9159
        %v9977 = vpop.f32.mrb[0].mxu0
        %v9978 = vadd.f32 %v9929, %v9977
        %v9979 = vpop.f32.mrb[0].mxu0
        %v9980 = vpop.f32.mrb[0].mxu0
        %v9981 = vadd.f32 %v9932, %v9980
        %v9982 = vpop.f32.mrb[0].mxu0
        %9983 = vmatprep.mubr.bf16.mxu0 0
        %9984 = vmatmul.mubr.bf16.gmra.mrb[0].mxu0 %v9161
        %v9985 = vpop.f32.mrb[0].mxu0
        %v9986 = vadd.f32 %v9937, %v9985
        %v9987 = vpop.f32.mrb[0].mxu0
        %v9988 = vpop.f32.mrb[0].mxu0
        %v9989 = vadd.f32 %v9940, %v9988
        %v9990 = vpop.f32.mrb[0].mxu0
        %9991 = vdwg.mxu0
        %v9992 = vxor.u32 %v9978, 2147483648
        %v9993 = vxor.u32 %v9981, 2147483648
        %v9994 = vxor.u32 %v9986, 2147483648
        %v9995 = vxor.u32 %v9989, 2147483648
        %v9996 = vmul.f32 %v9992, 1.442695
        %v9997 = vpow.pop %v9996
        %v9998 = vmul.f32 %v9993, 1.442695
        %v9999 = vpow.pop %v9998
        %v10000 = vmul.f32 %v9994, 1.442695
        %v10001 = vpow.pop %v10000
        %v10002 = vmul.f32 %v9995, 1.442695
        %v10003 = vpow.pop %v10002
        %v10004 = vadd.f32 %v9997, 1.0
        %v10005 = vadd.f32 %v9999, 1.0
        %v10006 = vadd.f32 %v10001, 1.0
        %v10007 = vadd.f32 %v10003, 1.0
        %v10008 = vrcp.pop %v10004
        %v10009 = vmul.f32 1.0, %v10008
        %v10010 = vrcp.pop %v10005
        %v10011 = vmul.f32 1.0, %v10010
        %v10012 = vrcp.pop %v10006
        %v10013 = vmul.f32 1.0, %v10012
        %v10014 = vrcp.pop %v10007
        %v10015 = vmul.f32 1.0, %v10014
        %10016 = vst [vmem:[%s230] sm:$0xff] %v10009
        %10017 = vst [vmem:[%s230 + $0x8] sm:$0xff] %v10011
        %10018 = vst [vmem:[%s230 + $0x10] sm:$0xff] %v10013
        %10019 = vst [vmem:[%s230 + $0x18] sm:$0xff] %v10015
        %s10020 = sand.u32 %s138, 1
        %s10021 = scalar_lea.sflag [#allocation4], %s10020
        %s10022 = sand.u32 %s138, 1
        %s10023 = smul.addr %s10022, 32
        %s10024 = scalar_lea.vmem [#allocation5], %s10023
        // Predicated region
        $region45: #{tpu_custom_call.1} parent=39 // pred_check
          %p10025 = pneg %p148
        $region46: #{tpu_custom_call.1} parent=39 // pred_check_branch
          %10027 = sbr.rel (%p10025) target = $region48
        $region47: #{tpu_custom_call.1} parent=39 // pred_region
          %s10029 = ssub.s32 512, 512
          %10030 = vsyncadd %s10021, %s10029
          %s10031 = smul.addr %s20, 4
          %s10032 = smul.addr %s10031, 128
          %s10033 = scalar_lea.hbm %s5, %s10032
          %s10034 = sshll.u32 %s10024, 4
          %s10035 = int_to_ptr.vmem [resolvable:$true] %s10034
          %10040 = dma.vmem_to_hbm [thread:$0]  %s10035, 512, %s10033, %s10021, 128, 128, 8
        $region48: #{tpu_custom_call.1} parent=39 // pred_fallthru
          _
      $region40: #{tpu_custom_call.1} parent=5 // pred_fallthru
        _
      %p10041 = scmp.le.s32.totalorder 2, %s15
      // Predicated region
      $region49: #{tpu_custom_call.1} parent=5 // pred_check
        %p10042 = pneg %p10041
      $region50: #{tpu_custom_call.1} parent=5 // pred_check_branch
        %10044 = sbr.rel (%p10042) target = $region52
      $region51: #{tpu_custom_call.1} parent=5 // pred_region
        %s10045 = ssub.s32 %s15, 2
        // Predicated region
        $region53: #{tpu_custom_call.1} parent=51 // pred_check
          %p10046 = pneg %p154
        $region54: #{tpu_custom_call.1} parent=51 // pred_check_branch
          %10048 = sbr.rel (%p10046) target = $region56
        $region55: #{tpu_custom_call.1} parent=51 // pred_region
          %s10049 = sand.u32 %s139, 1
          %s10050 = scalar_lea.sflag [#allocation4], %s10049
          %s10051 = sand.u32 %s139, 1
          %s10052 = smul.addr %s10051, 32
          %s10053 = scalar_lea.vmem [#allocation5], %s10052
          %10054 = dma.done %s10050, 512
        $region56: #{tpu_custom_call.1} parent=51 // pred_fallthru
          _
      $region52: #{tpu_custom_call.1} parent=5 // pred_fallthru
        _
    $region6: #{tpu_custom_call.1} parent=1 // loop_footer
      %s19 = sadd.s32 1, %s15
    $region7: #{tpu_custom_call.1} parent=1 // loop_footer_branch
      %14 = sbr.rel target = $region3
    $region8: #{tpu_custom_call.1} parent=1 // loop_exit
      _
    %10055 = vsyncpa [#allocation3], 1
    %s10056 = scalar_lea.sflag [#allocation3], 1
    %10057 = vsyncpa %s10056, 1
    %10058 = vsyncpa [#allocation4], 1
    %s10059 = scalar_lea.sflag [#allocation4], 1
    %10060 = vsyncpa %s10059, 1

</llo_original>
